<compile_context>
chip_gen: v6e
topology: v6e:2x2x1
jax: 0.10.0
libtpu: 0.0.40
codegen_flags: <defaults>
</compile_context>

<pallas_src>
import jax
import jax.numpy as jnp
from jax.experimental import pallas as pl
from jax.experimental.pallas import tpu as pltpu

C_IN, C_OUT = 768, 1536
H_IN, W_IN = 14, 14
K1 = 2                            # patchify conv kernel = stride
H1, W1 = H_IN // K1, W_IN // K1   # 7, 7
K2, PAD2 = 7, 3                   # depthwise conv
HP, WP = H1 + 2 * PAD2, W1 + 2 * PAD2   # 13, 13
TN = 256                          # channel tile -> 6 grid steps (even split on 2 TCs)


# ---------------------------------------------------------------------------
# Fused kernel: patchify matmul (MXU) + depthwise 7x7 epilogue (VPU) per channel tile.
# ---------------------------------------------------------------------------
def fused_kernel(a_ref, w1_ref, b1_ref, w2_ref, b2_ref, o_ref, pad_ref):
    tn = o_ref.shape[-1]

    # conv2d36: (49, 3072) @ (3072, tn) + bias  -> (49, tn), f32 accumulate on MXU
    y = (
        jnp.dot(a_ref[...], w1_ref[...], preferred_element_type=jnp.float32)
        + b1_ref[...]
    )

    # Scatter the 49 spatial rows into a zero-padded (13, 13, tn) VMEM scratch
    # (row-by-row stores avoid an in-kernel (49,tn)->(7,7,tn) reshape).
    pad_ref[...] = jnp.zeros_like(pad_ref)
    for r in range(H1):
        pad_ref[PAD2 + r, PAD2:PAD2 + W1, :] = y[r * W1:(r + 1) * W1, :]

    xpad = pad_ref[...]            # (13, 13, tn)
    w2 = w2_ref[...]               # (7, 7, tn)

    # conv2d37: depthwise 7x7, stride 1, pad 3, channels on lanes.
    # Hoist the kw (sublane) shift: 7 unaligned sublane slices total, kh is a cheap
    # leading-dim slice inside the inner loop.
    acc = jnp.broadcast_to(b2_ref[...].reshape(1, 1, tn), (H1, W1, tn))
    for kw in range(K2):
        x_kw = xpad[:, kw:kw + W1, :]              # (13, 7, tn)
        for kh in range(K2):
            acc = acc + x_kw[kh:kh + H1, :, :] * w2[kh, kw, :][None, None, :]

    o_ref[...] = acc


# ---------------------------------------------------------------------------
# Parameter layout prep: done ONCE at load time (kept outside the jitted forward).
# ---------------------------------------------------------------------------
def prepare_params(w1, b1, w2, b2):
    # conv1 weight (O, I, kh, kw) -> (kh, kw, I, O) -> (kh*kw*I, O); matches patch order below
    w1_mat = jnp.transpose(w1, (2, 3, 1, 0)).reshape(K1 * K1 * C_IN, C_OUT)
    b1_row = b1.reshape(1, C_OUT)
    # depthwise weight (O, 1, kh, kw) -> (kh, kw, O)  (channels on lanes)
    w2_hwc = jnp.transpose(w2[:, 0, :, :], (1, 2, 0))
    b2_row = b2.reshape(1, C_OUT)
    return w1_mat, b1_row, w2_hwc, b2_row


@jax.jit
def forward(x_nchw, w1_mat, b1_row, w2_hwc, b2_row):
    # NCHW -> HWC, extract non-overlapping 2x2 patches -> (49, kh*kw*Cin), order (kh, kw, c)
    x_hwc = jnp.transpose(x_nchw[0], (1, 2, 0))                               # (14, 14, 768)
    patches = x_hwc.reshape(H1, K1, W1, K1, C_IN).transpose(0, 2, 1, 3, 4)
    a = patches.reshape(H1 * W1, K1 * K1 * C_IN)                              # (49, 3072)

    out_hwc = pl.pallas_call(
        fused_kernel,
        out_shape=jax.ShapeDtypeStruct((H1, W1, C_OUT), jnp.float32),
        grid_spec=pltpu.PrefetchScalarGridSpec(
            num_scalar_prefetch=0,
            grid=(C_OUT // TN,),
            in_specs=[
                pl.BlockSpec((H1 * W1, K1 * K1 * C_IN), lambda j: (0, 0)),    # activations (shared)
                pl.BlockSpec((K1 * K1 * C_IN, TN), lambda j: (0, j)),         # conv1 weight tile
                pl.BlockSpec((1, TN), lambda j: (0, j)),                      # conv1 bias tile
                pl.BlockSpec((K2, K2, TN), lambda j: (0, 0, j)),              # depthwise weight tile
                pl.BlockSpec((1, TN), lambda j: (0, j)),                      # depthwise bias tile
            ],
            out_specs=pl.BlockSpec((H1, W1, TN), lambda j: (0, 0, j)),
            scratch_shapes=[pltpu.VMEM((HP, WP, TN), jnp.float32)],           # padded tile scratch
        ),
        compiler_params=pltpu.CompilerParams(dimension_semantics=("parallel",)),
    )(a, w1_mat, b1_row, w2_hwc, b2_row)

    # HWC -> NCHW to match PyTorch output semantics
    return jnp.transpose(out_hwc, (2, 0, 1))[None]


if __name__ == "__main__":
    key = jax.random.PRNGKey(0)
    kx, kw1, kb1, kw2, kb2 = jax.random.split(key, 5)

    x_nchw = jax.random.normal(kx, (1, C_IN, H_IN, W_IN), jnp.float32)

    # deterministic PyTorch-style (uniform +/- 1/sqrt(fan_in)) init
    fan1 = C_IN * K1 * K1
    w1 = jax.random.uniform(kw1, (C_OUT, C_IN, K1, K1), jnp.float32, -1.0, 1.0) / jnp.sqrt(fan1)
    b1 = jax.random.uniform(kb1, (C_OUT,), jnp.float32, -1.0, 1.0) / jnp.sqrt(fan1)
    fan2 = 1 * K2 * K2  # depthwise: C_in per group = 1
    w2 = jax.random.uniform(kw2, (C_OUT, 1, K2, K2), jnp.float32, -1.0, 1.0) / jnp.sqrt(fan2)
    b2 = jax.random.uniform(kb2, (C_OUT,), jnp.float32, -1.0, 1.0) / jnp.sqrt(fan2)

    # layout prep done once, outside the jitted forward (per perf review)
    w1_mat, b1_row, w2_hwc, b2_row = prepare_params(w1, b1, w2, b2)

    y = forward(x_nchw, w1_mat, b1_row, w2_hwc, b2_row)
    y = jax.block_until_ready(y)

    # reference: XLA convs in NCHW (PyTorch semantics)
    ref1 = jax.lax.conv_general_dilated(
        x_nchw, w1, window_strides=(2, 2), padding="VALID",
        dimension_numbers=("NCHW", "OIHW", "NCHW")) + b1[None, :, None, None]
    ref2 = jax.lax.conv_general_dilated(
        ref1, w2, window_strides=(1, 1), padding=((PAD2, PAD2), (PAD2, PAD2)),
        dimension_numbers=("NCHW", "OIHW", "NCHW"),
        feature_group_count=C_OUT) + b2[None, :, None, None]

    assert y.shape == (1, C_OUT, H1, W1), y.shape
    assert bool(jnp.allclose(y, ref2, rtol=2e-2, atol=2e-2)), float(jnp.max(jnp.abs(y - ref2)))
    print("KERNEL_OK")
</pallas_src>

<mosaic_0001>
module attributes {stable_mosaic.version = 11 : i64} {
  func.func @fused_kernel(%arg0: i32, %arg1: memref<49x3072xf32, #tpu.memory_space<vmem>>, %arg2: memref<3072x256xf32, #tpu.memory_space<vmem>>, %arg3: memref<1x256xf32, #tpu.memory_space<vmem>>, %arg4: memref<7x7x256xf32, #tpu.memory_space<vmem>>, %arg5: memref<1x256xf32, #tpu.memory_space<vmem>>, %arg6: memref<7x7x256xf32, #tpu.memory_space<vmem>>, %arg7: memref<13x13x256xf32, #tpu.memory_space<vmem>>) attributes {dimension_semantics = [#tpu.dimension_semantics<parallel>], iteration_bounds = array<i64: 6>, scalar_prefetch = 0 : i64, scratch_operands = 1 : i64, tpu.core_type = #tpu.core_type<tc>, window_params = [{pipeline_mode = #tpu.pipeline_mode<synchronous>, transform_indices = @transform_0, window_bounds = array<i64: 49, 3072>}, {transform_indices = @transform_1, window_bounds = array<i64: 3072, 256>}, {transform_indices = @transform_2, window_bounds = array<i64: 1, 256>}, {transform_indices = @transform_3, window_bounds = array<i64: 7, 7, 256>}, {transform_indices = @transform_4, window_bounds = array<i64: 1, 256>}, {transform_indices = @transform_5, window_bounds = array<i64: 7, 7, 256>}]} {
    %c0 = arith.constant 0 : index
    %c0_0 = arith.constant 0 : index
    %0 = vector.load %arg1[%c0, %c0_0] : memref<49x3072xf32, #tpu.memory_space<vmem>>, vector<49x3072xf32>
    %c0_1 = arith.constant 0 : index
    %c0_2 = arith.constant 0 : index
    %1 = vector.load %arg2[%c0_1, %c0_2] : memref<3072x256xf32, #tpu.memory_space<vmem>>, vector<3072x256xf32>
    %cst = arith.constant dense<0.000000e+00> : vector<49x256xf32>
    %2 = tpu.matmul %0, %1, %cst {dimension_numbers = #tpu.dot_dimension_numbers<[1], [0], [0], [1], [0, 0, 1, 1], [], []>} : vector<49x3072xf32>, vector<3072x256xf32>, vector<49x256xf32> -> vector<49x256xf32>
    %c0_3 = arith.constant 0 : index
    %c0_4 = arith.constant 0 : index
    %3 = vector.load %arg3[%c0_3, %c0_4] : memref<1x256xf32, #tpu.memory_space<vmem>>, vector<1x256xf32>
    %4 = vector.broadcast %3 : vector<1x256xf32> to vector<49x256xf32>
    %5 = arith.addf %2, %4 : vector<49x256xf32>
    %cst_5 = arith.constant 0.000000e+00 : f32
    %6 = vector.broadcast %cst_5 : f32 to vector<13x13x256xf32>
    %c0_6 = arith.constant 0 : index
    %c0_7 = arith.constant 0 : index
    %c0_8 = arith.constant 0 : index
    %7 = vector.load %arg7[%c0_6, %c0_7, %c0_8] : memref<13x13x256xf32, #tpu.memory_space<vmem>>, vector<13x13x256xf32>
    tpu.vector_store %arg7[%c0_6, %c0_7, %c0_8], %6 {strides = array<i32>} : memref<13x13x256xf32, #tpu.memory_space<vmem>>, vector<13x13x256xf32>,
    %8 = vector.extract_strided_slice %5 {offsets = [0, 0], sizes = [7, 256], strides = [1, 1]} : vector<49x256xf32> to vector<7x256xf32>
    %c3 = arith.constant 3 : index
    %c3_9 = arith.constant 3 : index
    %c0_10 = arith.constant 0 : index
    %9 = vector.load %arg7[%c3, %c3_9, %c0_10] : memref<13x13x256xf32, #tpu.memory_space<vmem>>, vector<1x7x256xf32>
    %10 = vector.shape_cast %9 : vector<1x7x256xf32> to vector<7x256xf32>
    %11 = vector.shape_cast %8 : vector<7x256xf32> to vector<1x7x256xf32>
    tpu.vector_store %arg7[%c3, %c3_9, %c0_10], %11 {strides = array<i32>} : memref<13x13x256xf32, #tpu.memory_space<vmem>>, vector<1x7x256xf32>,
    %12 = vector.extract_strided_slice %5 {offsets = [7, 0], sizes = [7, 256], strides = [1, 1]} : vector<49x256xf32> to vector<7x256xf32>
    %c4 = arith.constant 4 : index
    %c3_11 = arith.constant 3 : index
    %c0_12 = arith.constant 0 : index
    %13 = vector.load %arg7[%c4, %c3_11, %c0_12] : memref<13x13x256xf32, #tpu.memory_space<vmem>>, vector<1x7x256xf32>
    %14 = vector.shape_cast %13 : vector<1x7x256xf32> to vector<7x256xf32>
    %15 = vector.shape_cast %12 : vector<7x256xf32> to vector<1x7x256xf32>
    tpu.vector_store %arg7[%c4, %c3_11, %c0_12], %15 {strides = array<i32>} : memref<13x13x256xf32, #tpu.memory_space<vmem>>, vector<1x7x256xf32>,
    %16 = vector.extract_strided_slice %5 {offsets = [14, 0], sizes = [7, 256], strides = [1, 1]} : vector<49x256xf32> to vector<7x256xf32>
    %c5 = arith.constant 5 : index
    %c3_13 = arith.constant 3 : index
    %c0_14 = arith.constant 0 : index
    %17 = vector.load %arg7[%c5, %c3_13, %c0_14] : memref<13x13x256xf32, #tpu.memory_space<vmem>>, vector<1x7x256xf32>
    %18 = vector.shape_cast %17 : vector<1x7x256xf32> to vector<7x256xf32>
    %19 = vector.shape_cast %16 : vector<7x256xf32> to vector<1x7x256xf32>
    tpu.vector_store %arg7[%c5, %c3_13, %c0_14], %19 {strides = array<i32>} : memref<13x13x256xf32, #tpu.memory_space<vmem>>, vector<1x7x256xf32>,
    %20 = vector.extract_strided_slice %5 {offsets = [21, 0], sizes = [7, 256], strides = [1, 1]} : vector<49x256xf32> to vector<7x256xf32>
    %c6 = arith.constant 6 : index
    %c3_15 = arith.constant 3 : index
    %c0_16 = arith.constant 0 : index
    %21 = vector.load %arg7[%c6, %c3_15, %c0_16] : memref<13x13x256xf32, #tpu.memory_space<vmem>>, vector<1x7x256xf32>
    %22 = vector.shape_cast %21 : vector<1x7x256xf32> to vector<7x256xf32>
    %23 = vector.shape_cast %20 : vector<7x256xf32> to vector<1x7x256xf32>
    tpu.vector_store %arg7[%c6, %c3_15, %c0_16], %23 {strides = array<i32>} : memref<13x13x256xf32, #tpu.memory_space<vmem>>, vector<1x7x256xf32>,
    %24 = vector.extract_strided_slice %5 {offsets = [28, 0], sizes = [7, 256], strides = [1, 1]} : vector<49x256xf32> to vector<7x256xf32>
    %c7 = arith.constant 7 : index
    %c3_17 = arith.constant 3 : index
    %c0_18 = arith.constant 0 : index
    %25 = vector.load %arg7[%c7, %c3_17, %c0_18] : memref<13x13x256xf32, #tpu.memory_space<vmem>>, vector<1x7x256xf32>
    %26 = vector.shape_cast %25 : vector<1x7x256xf32> to vector<7x256xf32>
    %27 = vector.shape_cast %24 : vector<7x256xf32> to vector<1x7x256xf32>
    tpu.vector_store %arg7[%c7, %c3_17, %c0_18], %27 {strides = array<i32>} : memref<13x13x256xf32, #tpu.memory_space<vmem>>, vector<1x7x256xf32>,
    %28 = vector.extract_strided_slice %5 {offsets = [35, 0], sizes = [7, 256], strides = [1, 1]} : vector<49x256xf32> to vector<7x256xf32>
    %c8 = arith.constant 8 : index
    %c3_19 = arith.constant 3 : index
    %c0_20 = arith.constant 0 : index
    %29 = vector.load %arg7[%c8, %c3_19, %c0_20] : memref<13x13x256xf32, #tpu.memory_space<vmem>>, vector<1x7x256xf32>
    %30 = vector.shape_cast %29 : vector<1x7x256xf32> to vector<7x256xf32>
    %31 = vector.shape_cast %28 : vector<7x256xf32> to vector<1x7x256xf32>
    tpu.vector_store %arg7[%c8, %c3_19, %c0_20], %31 {strides = array<i32>} : memref<13x13x256xf32, #tpu.memory_space<vmem>>, vector<1x7x256xf32>,
    %32 = vector.extract_strided_slice %5 {offsets = [42, 0], sizes = [7, 256], strides = [1, 1]} : vector<49x256xf32> to vector<7x256xf32>
    %c9 = arith.constant 9 : index
    %c3_21 = arith.constant 3 : index
    %c0_22 = arith.constant 0 : index
    %33 = vector.load %arg7[%c9, %c3_21, %c0_22] : memref<13x13x256xf32, #tpu.memory_space<vmem>>, vector<1x7x256xf32>
    %34 = vector.shape_cast %33 : vector<1x7x256xf32> to vector<7x256xf32>
    %35 = vector.shape_cast %32 : vector<7x256xf32> to vector<1x7x256xf32>
    tpu.vector_store %arg7[%c9, %c3_21, %c0_22], %35 {strides = array<i32>} : memref<13x13x256xf32, #tpu.memory_space<vmem>>, vector<1x7x256xf32>,
    %c0_23 = arith.constant 0 : index
    %c0_24 = arith.constant 0 : index
    %c0_25 = arith.constant 0 : index
    %36 = vector.load %arg7[%c0_23, %c0_24, %c0_25] : memref<13x13x256xf32, #tpu.memory_space<vmem>>, vector<13x13x256xf32>
    %c0_26 = arith.constant 0 : index
    %c0_27 = arith.constant 0 : index
    %c0_28 = arith.constant 0 : index
    %37 = vector.load %arg4[%c0_26, %c0_27, %c0_28] : memref<7x7x256xf32, #tpu.memory_space<vmem>>, vector<7x7x256xf32>
    %c0_29 = arith.constant 0 : index
    %c0_30 = arith.constant 0 : index
    %38 = vector.load %arg5[%c0_29, %c0_30] : memref<1x256xf32, #tpu.memory_space<vmem>>, vector<1x256xf32>
    %39 = vector.shape_cast %38 : vector<1x256xf32> to vector<1x1x256xf32>
    %40 = vector.shape_cast %39 : vector<1x1x256xf32> to vector<1x1x256xf32>
    %41 = vector.broadcast %40 : vector<1x1x256xf32> to vector<7x7x256xf32>
    %42 = vector.extract_strided_slice %36 {offsets = [0, 0, 0], sizes = [13, 7, 256], strides = [1, 1, 1]} : vector<13x13x256xf32> to vector<13x7x256xf32>
    %43 = vector.extract_strided_slice %42 {offsets = [0, 0, 0], sizes = [7, 7, 256], strides = [1, 1, 1]} : vector<13x7x256xf32> to vector<7x7x256xf32>
    %44 = vector.extract_strided_slice %37 {offsets = [0, 0, 0], sizes = [1, 1, 256], strides = [1, 1, 1]} : vector<7x7x256xf32> to vector<1x1x256xf32>
    %45 = vector.shape_cast %44 : vector<1x1x256xf32> to vector<256xf32>
    %46 = vector.shape_cast %45 : vector<256xf32> to vector<1x1x256xf32>
    %47 = vector.broadcast %46 : vector<1x1x256xf32> to vector<7x7x256xf32>
    %48 = arith.mulf %43, %47 : vector<7x7x256xf32>
    %49 = arith.addf %41, %48 : vector<7x7x256xf32>
    %50 = vector.extract_strided_slice %42 {offsets = [1, 0, 0], sizes = [7, 7, 256], strides = [1, 1, 1]} : vector<13x7x256xf32> to vector<7x7x256xf32>
    %51 = vector.extract_strided_slice %37 {offsets = [1, 0, 0], sizes = [1, 1, 256], strides = [1, 1, 1]} : vector<7x7x256xf32> to vector<1x1x256xf32>
    %52 = vector.shape_cast %51 : vector<1x1x256xf32> to vector<256xf32>
    %53 = vector.shape_cast %52 : vector<256xf32> to vector<1x1x256xf32>
    %54 = vector.broadcast %53 : vector<1x1x256xf32> to vector<7x7x256xf32>
    %55 = arith.mulf %50, %54 : vector<7x7x256xf32>
    %56 = arith.addf %49, %55 : vector<7x7x256xf32>
    %57 = vector.extract_strided_slice %42 {offsets = [2, 0, 0], sizes = [7, 7, 256], strides = [1, 1, 1]} : vector<13x7x256xf32> to vector<7x7x256xf32>
    %58 = vector.extract_strided_slice %37 {offsets = [2, 0, 0], sizes = [1, 1, 256], strides = [1, 1, 1]} : vector<7x7x256xf32> to vector<1x1x256xf32>
    %59 = vector.shape_cast %58 : vector<1x1x256xf32> to vector<256xf32>
    %60 = vector.shape_cast %59 : vector<256xf32> to vector<1x1x256xf32>
    %61 = vector.broadcast %60 : vector<1x1x256xf32> to vector<7x7x256xf32>
    %62 = arith.mulf %57, %61 : vector<7x7x256xf32>
    %63 = arith.addf %56, %62 : vector<7x7x256xf32>
    %64 = vector.extract_strided_slice %42 {offsets = [3, 0, 0], sizes = [7, 7, 256], strides = [1, 1, 1]} : vector<13x7x256xf32> to vector<7x7x256xf32>
    %65 = vector.extract_strided_slice %37 {offsets = [3, 0, 0], sizes = [1, 1, 256], strides = [1, 1, 1]} : vector<7x7x256xf32> to vector<1x1x256xf32>
    %66 = vector.shape_cast %65 : vector<1x1x256xf32> to vector<256xf32>
    %67 = vector.shape_cast %66 : vector<256xf32> to vector<1x1x256xf32>
    %68 = vector.broadcast %67 : vector<1x1x256xf32> to vector<7x7x256xf32>
    %69 = arith.mulf %64, %68 : vector<7x7x256xf32>
    %70 = arith.addf %63, %69 : vector<7x7x256xf32>
    %71 = vector.extract_strided_slice %42 {offsets = [4, 0, 0], sizes = [7, 7, 256], strides = [1, 1, 1]} : vector<13x7x256xf32> to vector<7x7x256xf32>
    %72 = vector.extract_strided_slice %37 {offsets = [4, 0, 0], sizes = [1, 1, 256], strides = [1, 1, 1]} : vector<7x7x256xf32> to vector<1x1x256xf32>
    %73 = vector.shape_cast %72 : vector<1x1x256xf32> to vector<256xf32>
    %74 = vector.shape_cast %73 : vector<256xf32> to vector<1x1x256xf32>
    %75 = vector.broadcast %74 : vector<1x1x256xf32> to vector<7x7x256xf32>
    %76 = arith.mulf %71, %75 : vector<7x7x256xf32>
    %77 = arith.addf %70, %76 : vector<7x7x256xf32>
    %78 = vector.extract_strided_slice %42 {offsets = [5, 0, 0], sizes = [7, 7, 256], strides = [1, 1, 1]} : vector<13x7x256xf32> to vector<7x7x256xf32>
    %79 = vector.extract_strided_slice %37 {offsets = [5, 0, 0], sizes = [1, 1, 256], strides = [1, 1, 1]} : vector<7x7x256xf32> to vector<1x1x256xf32>
    %80 = vector.shape_cast %79 : vector<1x1x256xf32> to vector<256xf32>
    %81 = vector.shape_cast %80 : vector<256xf32> to vector<1x1x256xf32>
    %82 = vector.broadcast %81 : vector<1x1x256xf32> to vector<7x7x256xf32>
    %83 = arith.mulf %78, %82 : vector<7x7x256xf32>
    %84 = arith.addf %77, %83 : vector<7x7x256xf32>
    %85 = vector.extract_strided_slice %42 {offsets = [6, 0, 0], sizes = [7, 7, 256], strides = [1, 1, 1]} : vector<13x7x256xf32> to vector<7x7x256xf32>
    %86 = vector.extract_strided_slice %37 {offsets = [6, 0, 0], sizes = [1, 1, 256], strides = [1, 1, 1]} : vector<7x7x256xf32> to vector<1x1x256xf32>
    %87 = vector.shape_cast %86 : vector<1x1x256xf32> to vector<256xf32>
    %88 = vector.shape_cast %87 : vector<256xf32> to vector<1x1x256xf32>
    %89 = vector.broadcast %88 : vector<1x1x256xf32> to vector<7x7x256xf32>
    %90 = arith.mulf %85, %89 : vector<7x7x256xf32>
    %91 = arith.addf %84, %90 : vector<7x7x256xf32>
    %92 = vector.extract_strided_slice %36 {offsets = [0, 1, 0], sizes = [13, 7, 256], strides = [1, 1, 1]} : vector<13x13x256xf32> to vector<13x7x256xf32>
    %93 = vector.extract_strided_slice %92 {offsets = [0, 0, 0], sizes = [7, 7, 256], strides = [1, 1, 1]} : vector<13x7x256xf32> to vector<7x7x256xf32>
    %94 = vector.extract_strided_slice %37 {offsets = [0, 1, 0], sizes = [1, 1, 256], strides = [1, 1, 1]} : vector<7x7x256xf32> to vector<1x1x256xf32>
    %95 = vector.shape_cast %94 : vector<1x1x256xf32> to vector<256xf32>
    %96 = vector.shape_cast %95 : vector<256xf32> to vector<1x1x256xf32>
    %97 = vector.broadcast %96 : vector<1x1x256xf32> to vector<7x7x256xf32>
    %98 = arith.mulf %93, %97 : vector<7x7x256xf32>
    %99 = arith.addf %91, %98 : vector<7x7x256xf32>
    %100 = vector.extract_strided_slice %92 {offsets = [1, 0, 0], sizes = [7, 7, 256], strides = [1, 1, 1]} : vector<13x7x256xf32> to vector<7x7x256xf32>
    %101 = vector.extract_strided_slice %37 {offsets = [1, 1, 0], sizes = [1, 1, 256], strides = [1, 1, 1]} : vector<7x7x256xf32> to vector<1x1x256xf32>
    %102 = vector.shape_cast %101 : vector<1x1x256xf32> to vector<256xf32>
    %103 = vector.shape_cast %102 : vector<256xf32> to vector<1x1x256xf32>
    %104 = vector.broadcast %103 : vector<1x1x256xf32> to vector<7x7x256xf32>
    %105 = arith.mulf %100, %104 : vector<7x7x256xf32>
    %106 = arith.addf %99, %105 : vector<7x7x256xf32>
    %107 = vector.extract_strided_slice %92 {offsets = [2, 0, 0], sizes = [7, 7, 256], strides = [1, 1, 1]} : vector<13x7x256xf32> to vector<7x7x256xf32>
    %108 = vector.extract_strided_slice %37 {offsets = [2, 1, 0], sizes = [1, 1, 256], strides = [1, 1, 1]} : vector<7x7x256xf32> to vector<1x1x256xf32>
    %109 = vector.shape_cast %108 : vector<1x1x256xf32> to vector<256xf32>
    %110 = vector.shape_cast %109 : vector<256xf32> to vector<1x1x256xf32>
    %111 = vector.broadcast %110 : vector<1x1x256xf32> to vector<7x7x256xf32>
    %112 = arith.mulf %107, %111 : vector<7x7x256xf32>
    %113 = arith.addf %106, %112 : vector<7x7x256xf32>
    %114 = vector.extract_strided_slice %92 {offsets = [3, 0, 0], sizes = [7, 7, 256], strides = [1, 1, 1]} : vector<13x7x256xf32> to vector<7x7x256xf32>
    %115 = vector.extract_strided_slice %37 {offsets = [3, 1, 0], sizes = [1, 1, 256], strides = [1, 1, 1]} : vector<7x7x256xf32> to vector<1x1x256xf32>
    %116 = vector.shape_cast %115 : vector<1x1x256xf32> to vector<256xf32>
    %117 = vector.shape_cast %116 : vector<256xf32> to vector<1x1x256xf32>
    %118 = vector.broadcast %117 : vector<1x1x256xf32> to vector<7x7x256xf32>
    %119 = arith.mulf %114, %118 : vector<7x7x256xf32>
    %120 = arith.addf %113, %119 : vector<7x7x256xf32>
    %121 = vector.extract_strided_slice %92 {offsets = [4, 0, 0], sizes = [7, 7, 256], strides = [1, 1, 1]} : vector<13x7x256xf32> to vector<7x7x256xf32>
    %122 = vector.extract_strided_slice %37 {offsets = [4, 1, 0], sizes = [1, 1, 256], strides = [1, 1, 1]} : vector<7x7x256xf32> to vector<1x1x256xf32>
    %123 = vector.shape_cast %122 : vector<1x1x256xf32> to vector<256xf32>
    %124 = vector.shape_cast %123 : vector<256xf32> to vector<1x1x256xf32>
    %125 = vector.broadcast %124 : vector<1x1x256xf32> to vector<7x7x256xf32>
    %126 = arith.mulf %121, %125 : vector<7x7x256xf32>
    %127 = arith.addf %120, %126 : vector<7x7x256xf32>
    %128 = vector.extract_strided_slice %92 {offsets = [5, 0, 0], sizes = [7, 7, 256], strides = [1, 1, 1]} : vector<13x7x256xf32> to vector<7x7x256xf32>
    %129 = vector.extract_strided_slice %37 {offsets = [5, 1, 0], sizes = [1, 1, 256], strides = [1, 1, 1]} : vector<7x7x256xf32> to vector<1x1x256xf32>
    %130 = vector.shape_cast %129 : vector<1x1x256xf32> to vector<256xf32>
    %131 = vector.shape_cast %130 : vector<256xf32> to vector<1x1x256xf32>
    %132 = vector.broadcast %131 : vector<1x1x256xf32> to vector<7x7x256xf32>
    %133 = arith.mulf %128, %132 : vector<7x7x256xf32>
    %134 = arith.addf %127, %133 : vector<7x7x256xf32>
    %135 = vector.extract_strided_slice %92 {offsets = [6, 0, 0], sizes = [7, 7, 256], strides = [1, 1, 1]} : vector<13x7x256xf32> to vector<7x7x256xf32>
    %136 = vector.extract_strided_slice %37 {offsets = [6, 1, 0], sizes = [1, 1, 256], strides = [1, 1, 1]} : vector<7x7x256xf32> to vector<1x1x256xf32>
    %137 = vector.shape_cast %136 : vector<1x1x256xf32> to vector<256xf32>
    %138 = vector.shape_cast %137 : vector<256xf32> to vector<1x1x256xf32>
    %139 = vector.broadcast %138 : vector<1x1x256xf32> to vector<7x7x256xf32>
    %140 = arith.mulf %135, %139 : vector<7x7x256xf32>
    %141 = arith.addf %134, %140 : vector<7x7x256xf32>
    %142 = vector.extract_strided_slice %36 {offsets = [0, 2, 0], sizes = [13, 7, 256], strides = [1, 1, 1]} : vector<13x13x256xf32> to vector<13x7x256xf32>
    %143 = vector.extract_strided_slice %142 {offsets = [0, 0, 0], sizes = [7, 7, 256], strides = [1, 1, 1]} : vector<13x7x256xf32> to vector<7x7x256xf32>
    %144 = vector.extract_strided_slice %37 {offsets = [0, 2, 0], sizes = [1, 1, 256], strides = [1, 1, 1]} : vector<7x7x256xf32> to vector<1x1x256xf32>
    %145 = vector.shape_cast %144 : vector<1x1x256xf32> to vector<256xf32>
    %146 = vector.shape_cast %145 : vector<256xf32> to vector<1x1x256xf32>
    %147 = vector.broadcast %146 : vector<1x1x256xf32> to vector<7x7x256xf32>
    %148 = arith.mulf %143, %147 : vector<7x7x256xf32>
    %149 = arith.addf %141, %148 : vector<7x7x256xf32>
    %150 = vector.extract_strided_slice %142 {offsets = [1, 0, 0], sizes = [7, 7, 256], strides = [1, 1, 1]} : vector<13x7x256xf32> to vector<7x7x256xf32>
    %151 = vector.extract_strided_slice %37 {offsets = [1, 2, 0], sizes = [1, 1, 256], strides = [1, 1, 1]} : vector<7x7x256xf32> to vector<1x1x256xf32>
    %152 = vector.shape_cast %151 : vector<1x1x256xf32> to vector<256xf32>
    %153 = vector.shape_cast %152 : vector<256xf32> to vector<1x1x256xf32>
    %154 = vector.broadcast %153 : vector<1x1x256xf32> to vector<7x7x256xf32>
    %155 = arith.mulf %150, %154 : vector<7x7x256xf32>
    %156 = arith.addf %149, %155 : vector<7x7x256xf32>
    %157 = vector.extract_strided_slice %142 {offsets = [2, 0, 0], sizes = [7, 7, 256], strides = [1, 1, 1]} : vector<13x7x256xf32> to vector<7x7x256xf32>
    %158 = vector.extract_strided_slice %37 {offsets = [2, 2, 0], sizes = [1, 1, 256], strides = [1, 1, 1]} : vector<7x7x256xf32> to vector<1x1x256xf32>
    %159 = vector.shape_cast %158 : vector<1x1x256xf32> to vector<256xf32>
    %160 = vector.shape_cast %159 : vector<256xf32> to vector<1x1x256xf32>
    %161 = vector.broadcast %160 : vector<1x1x256xf32> to vector<7x7x256xf32>
    %162 = arith.mulf %157, %161 : vector<7x7x256xf32>
    %163 = arith.addf %156, %162 : vector<7x7x256xf32>
    %164 = vector.extract_strided_slice %142 {offsets = [3, 0, 0], sizes = [7, 7, 256], strides = [1, 1, 1]} : vector<13x7x256xf32> to vector<7x7x256xf32>
    %165 = vector.extract_strided_slice %37 {offsets = [3, 2, 0], sizes = [1, 1, 256], strides = [1, 1, 1]} : vector<7x7x256xf32> to vector<1x1x256xf32>
    %166 = vector.shape_cast %165 : vector<1x1x256xf32> to vector<256xf32>
    %167 = vector.shape_cast %166 : vector<256xf32> to vector<1x1x256xf32>
    %168 = vector.broadcast %167 : vector<1x1x256xf32> to vector<7x7x256xf32>
    %169 = arith.mulf %164, %168 : vector<7x7x256xf32>
    %170 = arith.addf %163, %169 : vector<7x7x256xf32>
    %171 = vector.extract_strided_slice %142 {offsets = [4, 0, 0], sizes = [7, 7, 256], strides = [1, 1, 1]} : vector<13x7x256xf32> to vector<7x7x256xf32>
    %172 = vector.extract_strided_slice %37 {offsets = [4, 2, 0], sizes = [1, 1, 256], strides = [1, 1, 1]} : vector<7x7x256xf32> to vector<1x1x256xf32>
    %173 = vector.shape_cast %172 : vector<1x1x256xf32> to vector<256xf32>
    %174 = vector.shape_cast %173 : vector<256xf32> to vector<1x1x256xf32>
    %175 = vector.broadcast %174 : vector<1x1x256xf32> to vector<7x7x256xf32>
    %176 = arith.mulf %171, %175 : vector<7x7x256xf32>
    %177 = arith.addf %170, %176 : vector<7x7x256xf32>
    %178 = vector.extract_strided_slice %142 {offsets = [5, 0, 0], sizes = [7, 7, 256], strides = [1, 1, 1]} : vector<13x7x256xf32> to vector<7x7x256xf32>
    %179 = vector.extract_strided_slice %37 {offsets = [5, 2, 0], sizes = [1, 1, 256], strides = [1, 1, 1]} : vector<7x7x256xf32> to vector<1x1x256xf32>
    %180 = vector.shape_cast %179 : vector<1x1x256xf32> to vector<256xf32>
    %181 = vector.shape_cast %180 : vector<256xf32> to vector<1x1x256xf32>
    %182 = vector.broadcast %181 : vector<1x1x256xf32> to vector<7x7x256xf32>
    %183 = arith.mulf %178, %182 : vector<7x7x256xf32>
    %184 = arith.addf %177, %183 : vector<7x7x256xf32>
    %185 = vector.extract_strided_slice %142 {offsets = [6, 0, 0], sizes = [7, 7, 256], strides = [1, 1, 1]} : vector<13x7x256xf32> to vector<7x7x256xf32>
    %186 = vector.extract_strided_slice %37 {offsets = [6, 2, 0], sizes = [1, 1, 256], strides = [1, 1, 1]} : vector<7x7x256xf32> to vector<1x1x256xf32>
    %187 = vector.shape_cast %186 : vector<1x1x256xf32> to vector<256xf32>
    %188 = vector.shape_cast %187 : vector<256xf32> to vector<1x1x256xf32>
    %189 = vector.broadcast %188 : vector<1x1x256xf32> to vector<7x7x256xf32>
    %190 = arith.mulf %185, %189 : vector<7x7x256xf32>
    %191 = arith.addf %184, %190 : vector<7x7x256xf32>
    %192 = vector.extract_strided_slice %36 {offsets = [0, 3, 0], sizes = [13, 7, 256], strides = [1, 1, 1]} : vector<13x13x256xf32> to vector<13x7x256xf32>
    %193 = vector.extract_strided_slice %192 {offsets = [0, 0, 0], sizes = [7, 7, 256], strides = [1, 1, 1]} : vector<13x7x256xf32> to vector<7x7x256xf32>
    %194 = vector.extract_strided_slice %37 {offsets = [0, 3, 0], sizes = [1, 1, 256], strides = [1, 1, 1]} : vector<7x7x256xf32> to vector<1x1x256xf32>
    %195 = vector.shape_cast %194 : vector<1x1x256xf32> to vector<256xf32>
    %196 = vector.shape_cast %195 : vector<256xf32> to vector<1x1x256xf32>
    %197 = vector.broadcast %196 : vector<1x1x256xf32> to vector<7x7x256xf32>
    %198 = arith.mulf %193, %197 : vector<7x7x256xf32>
    %199 = arith.addf %191, %198 : vector<7x7x256xf32>
    %200 = vector.extract_strided_slice %192 {offsets = [1, 0, 0], sizes = [7, 7, 256], strides = [1, 1, 1]} : vector<13x7x256xf32> to vector<7x7x256xf32>
    %201 = vector.extract_strided_slice %37 {offsets = [1, 3, 0], sizes = [1, 1, 256], strides = [1, 1, 1]} : vector<7x7x256xf32> to vector<1x1x256xf32>
    %202 = vector.shape_cast %201 : vector<1x1x256xf32> to vector<256xf32>
    %203 = vector.shape_cast %202 : vector<256xf32> to vector<1x1x256xf32>
    %204 = vector.broadcast %203 : vector<1x1x256xf32> to vector<7x7x256xf32>
    %205 = arith.mulf %200, %204 : vector<7x7x256xf32>
    %206 = arith.addf %199, %205 : vector<7x7x256xf32>
    %207 = vector.extract_strided_slice %192 {offsets = [2, 0, 0], sizes = [7, 7, 256], strides = [1, 1, 1]} : vector<13x7x256xf32> to vector<7x7x256xf32>
    %208 = vector.extract_strided_slice %37 {offsets = [2, 3, 0], sizes = [1, 1, 256], strides = [1, 1, 1]} : vector<7x7x256xf32> to vector<1x1x256xf32>
    %209 = vector.shape_cast %208 : vector<1x1x256xf32> to vector<256xf32>
    %210 = vector.shape_cast %209 : vector<256xf32> to vector<1x1x256xf32>
    %211 = vector.broadcast %210 : vector<1x1x256xf32> to vector<7x7x256xf32>
    %212 = arith.mulf %207, %211 : vector<7x7x256xf32>
    %213 = arith.addf %206, %212 : vector<7x7x256xf32>
    %214 = vector.extract_strided_slice %192 {offsets = [3, 0, 0], sizes = [7, 7, 256], strides = [1, 1, 1]} : vector<13x7x256xf32> to vector<7x7x256xf32>
    %215 = vector.extract_strided_slice %37 {offsets = [3, 3, 0], sizes = [1, 1, 256], strides = [1, 1, 1]} : vector<7x7x256xf32> to vector<1x1x256xf32>
    %216 = vector.shape_cast %215 : vector<1x1x256xf32> to vector<256xf32>
    %217 = vector.shape_cast %216 : vector<256xf32> to vector<1x1x256xf32>
    %218 = vector.broadcast %217 : vector<1x1x256xf32> to vector<7x7x256xf32>
    %219 = arith.mulf %214, %218 : vector<7x7x256xf32>
    %220 = arith.addf %213, %219 : vector<7x7x256xf32>
    %221 = vector.extract_strided_slice %192 {offsets = [4, 0, 0], sizes = [7, 7, 256], strides = [1, 1, 1]} : vector<13x7x256xf32> to vector<7x7x256xf32>
    %222 = vector.extract_strided_slice %37 {offsets = [4, 3, 0], sizes = [1, 1, 256], strides = [1, 1, 1]} : vector<7x7x256xf32> to vector<1x1x256xf32>
    %223 = vector.shape_cast %222 : vector<1x1x256xf32> to vector<256xf32>
    %224 = vector.shape_cast %223 : vector<256xf32> to vector<1x1x256xf32>
    %225 = vector.broadcast %224 : vector<1x1x256xf32> to vector<7x7x256xf32>
    %226 = arith.mulf %221, %225 : vector<7x7x256xf32>
    %227 = arith.addf %220, %226 : vector<7x7x256xf32>
    %228 = vector.extract_strided_slice %192 {offsets = [5, 0, 0], sizes = [7, 7, 256], strides = [1, 1, 1]} : vector<13x7x256xf32> to vector<7x7x256xf32>
    %229 = vector.extract_strided_slice %37 {offsets = [5, 3, 0], sizes = [1, 1, 256], strides = [1, 1, 1]} : vector<7x7x256xf32> to vector<1x1x256xf32>
    %230 = vector.shape_cast %229 : vector<1x1x256xf32> to vector<256xf32>
    %231 = vector.shape_cast %230 : vector<256xf32> to vector<1x1x256xf32>
    %232 = vector.broadcast %231 : vector<1x1x256xf32> to vector<7x7x256xf32>
    %233 = arith.mulf %228, %232 : vector<7x7x256xf32>
    %234 = arith.addf %227, %233 : vector<7x7x256xf32>
    %235 = vector.extract_strided_slice %192 {offsets = [6, 0, 0], sizes = [7, 7, 256], strides = [1, 1, 1]} : vector<13x7x256xf32> to vector<7x7x256xf32>
    %236 = vector.extract_strided_slice %37 {offsets = [6, 3, 0], sizes = [1, 1, 256], strides = [1, 1, 1]} : vector<7x7x256xf32> to vector<1x1x256xf32>
    %237 = vector.shape_cast %236 : vector<1x1x256xf32> to vector<256xf32>
    %238 = vector.shape_cast %237 : vector<256xf32> to vector<1x1x256xf32>
    %239 = vector.broadcast %238 : vector<1x1x256xf32> to vector<7x7x256xf32>
    %240 = arith.mulf %235, %239 : vector<7x7x256xf32>
    %241 = arith.addf %234, %240 : vector<7x7x256xf32>
    %242 = vector.extract_strided_slice %36 {offsets = [0, 4, 0], sizes = [13, 7, 256], strides = [1, 1, 1]} : vector<13x13x256xf32> to vector<13x7x256xf32>
    %243 = vector.extract_strided_slice %242 {offsets = [0, 0, 0], sizes = [7, 7, 256], strides = [1, 1, 1]} : vector<13x7x256xf32> to vector<7x7x256xf32>
    %244 = vector.extract_strided_slice %37 {offsets = [0, 4, 0], sizes = [1, 1, 256], strides = [1, 1, 1]} : vector<7x7x256xf32> to vector<1x1x256xf32>
    %245 = vector.shape_cast %244 : vector<1x1x256xf32> to vector<256xf32>
    %246 = vector.shape_cast %245 : vector<256xf32> to vector<1x1x256xf32>
    %247 = vector.broadcast %246 : vector<1x1x256xf32> to vector<7x7x256xf32>
    %248 = arith.mulf %243, %247 : vector<7x7x256xf32>
    %249 = arith.addf %241, %248 : vector<7x7x256xf32>
    %250 = vector.extract_strided_slice %242 {offsets = [1, 0, 0], sizes = [7, 7, 256], strides = [1, 1, 1]} : vector<13x7x256xf32> to vector<7x7x256xf32>
    %251 = vector.extract_strided_slice %37 {offsets = [1, 4, 0], sizes = [1, 1, 256], strides = [1, 1, 1]} : vector<7x7x256xf32> to vector<1x1x256xf32>
    %252 = vector.shape_cast %251 : vector<1x1x256xf32> to vector<256xf32>
    %253 = vector.shape_cast %252 : vector<256xf32> to vector<1x1x256xf32>
    %254 = vector.broadcast %253 : vector<1x1x256xf32> to vector<7x7x256xf32>
    %255 = arith.mulf %250, %254 : vector<7x7x256xf32>
    %256 = arith.addf %249, %255 : vector<7x7x256xf32>
    %257 = vector.extract_strided_slice %242 {offsets = [2, 0, 0], sizes = [7, 7, 256], strides = [1, 1, 1]} : vector<13x7x256xf32> to vector<7x7x256xf32>
    %258 = vector.extract_strided_slice %37 {offsets = [2, 4, 0], sizes = [1, 1, 256], strides = [1, 1, 1]} : vector<7x7x256xf32> to vector<1x1x256xf32>
    %259 = vector.shape_cast %258 : vector<1x1x256xf32> to vector<256xf32>
    %260 = vector.shape_cast %259 : vector<256xf32> to vector<1x1x256xf32>
    %261 = vector.broadcast %260 : vector<1x1x256xf32> to vector<7x7x256xf32>
    %262 = arith.mulf %257, %261 : vector<7x7x256xf32>
    %263 = arith.addf %256, %262 : vector<7x7x256xf32>
    %264 = vector.extract_strided_slice %242 {offsets = [3, 0, 0], sizes = [7, 7, 256], strides = [1, 1, 1]} : vector<13x7x256xf32> to vector<7x7x256xf32>
    %265 = vector.extract_strided_slice %37 {offsets = [3, 4, 0], sizes = [1, 1, 256], strides = [1, 1, 1]} : vector<7x7x256xf32> to vector<1x1x256xf32>
    %266 = vector.shape_cast %265 : vector<1x1x256xf32> to vector<256xf32>
    %267 = vector.shape_cast %266 : vector<256xf32> to vector<1x1x256xf32>
    %268 = vector.broadcast %267 : vector<1x1x256xf32> to vector<7x7x256xf32>
    %269 = arith.mulf %264, %268 : vector<7x7x256xf32>
    %270 = arith.addf %263, %269 : vector<7x7x256xf32>
    %271 = vector.extract_strided_slice %242 {offsets = [4, 0, 0], sizes = [7, 7, 256], strides = [1, 1, 1]} : vector<13x7x256xf32> to vector<7x7x256xf32>
    %272 = vector.extract_strided_slice %37 {offsets = [4, 4, 0], sizes = [1, 1, 256], strides = [1, 1, 1]} : vector<7x7x256xf32> to vector<1x1x256xf32>
    %273 = vector.shape_cast %272 : vector<1x1x256xf32> to vector<256xf32>
    %274 = vector.shape_cast %273 : vector<256xf32> to vector<1x1x256xf32>
    %275 = vector.broadcast %274 : vector<1x1x256xf32> to vector<7x7x256xf32>
    %276 = arith.mulf %271, %275 : vector<7x7x256xf32>
    %277 = arith.addf %270, %276 : vector<7x7x256xf32>
    %278 = vector.extract_strided_slice %242 {offsets = [5, 0, 0], sizes = [7, 7, 256], strides = [1, 1, 1]} : vector<13x7x256xf32> to vector<7x7x256xf32>
    %279 = vector.extract_strided_slice %37 {offsets = [5, 4, 0], sizes = [1, 1, 256], strides = [1, 1, 1]} : vector<7x7x256xf32> to vector<1x1x256xf32>
    %280 = vector.shape_cast %279 : vector<1x1x256xf32> to vector<256xf32>
    %281 = vector.shape_cast %280 : vector<256xf32> to vector<1x1x256xf32>
    %282 = vector.broadcast %281 : vector<1x1x256xf32> to vector<7x7x256xf32>
    %283 = arith.mulf %278, %282 : vector<7x7x256xf32>
    %284 = arith.addf %277, %283 : vector<7x7x256xf32>
    %285 = vector.extract_strided_slice %242 {offsets = [6, 0, 0], sizes = [7, 7, 256], strides = [1, 1, 1]} : vector<13x7x256xf32> to vector<7x7x256xf32>
    %286 = vector.extract_strided_slice %37 {offsets = [6, 4, 0], sizes = [1, 1, 256], strides = [1, 1, 1]} : vector<7x7x256xf32> to vector<1x1x256xf32>
    %287 = vector.shape_cast %286 : vector<1x1x256xf32> to vector<256xf32>
    %288 = vector.shape_cast %287 : vector<256xf32> to vector<1x1x256xf32>
    %289 = vector.broadcast %288 : vector<1x1x256xf32> to vector<7x7x256xf32>
    %290 = arith.mulf %285, %289 : vector<7x7x256xf32>
    %291 = arith.addf %284, %290 : vector<7x7x256xf32>
    %292 = vector.extract_strided_slice %36 {offsets = [0, 5, 0], sizes = [13, 7, 256], strides = [1, 1, 1]} : vector<13x13x256xf32> to vector<13x7x256xf32>
    %293 = vector.extract_strided_slice %292 {offsets = [0, 0, 0], sizes = [7, 7, 256], strides = [1, 1, 1]} : vector<13x7x256xf32> to vector<7x7x256xf32>
    %294 = vector.extract_strided_slice %37 {offsets = [0, 5, 0], sizes = [1, 1, 256], strides = [1, 1, 1]} : vector<7x7x256xf32> to vector<1x1x256xf32>
    %295 = vector.shape_cast %294 : vector<1x1x256xf32> to vector<256xf32>
    %296 = vector.shape_cast %295 : vector<256xf32> to vector<1x1x256xf32>
    %297 = vector.broadcast %296 : vector<1x1x256xf32> to vector<7x7x256xf32>
    %298 = arith.mulf %293, %297 : vector<7x7x256xf32>
    %299 = arith.addf %291, %298 : vector<7x7x256xf32>
    %300 = vector.extract_strided_slice %292 {offsets = [1, 0, 0], sizes = [7, 7, 256], strides = [1, 1, 1]} : vector<13x7x256xf32> to vector<7x7x256xf32>
    %301 = vector.extract_strided_slice %37 {offsets = [1, 5, 0], sizes = [1, 1, 256], strides = [1, 1, 1]} : vector<7x7x256xf32> to vector<1x1x256xf32>
    %302 = vector.shape_cast %301 : vector<1x1x256xf32> to vector<256xf32>
    %303 = vector.shape_cast %302 : vector<256xf32> to vector<1x1x256xf32>
    %304 = vector.broadcast %303 : vector<1x1x256xf32> to vector<7x7x256xf32>
    %305 = arith.mulf %300, %304 : vector<7x7x256xf32>
    %306 = arith.addf %299, %305 : vector<7x7x256xf32>
    %307 = vector.extract_strided_slice %292 {offsets = [2, 0, 0], sizes = [7, 7, 256], strides = [1, 1, 1]} : vector<13x7x256xf32> to vector<7x7x256xf32>
    %308 = vector.extract_strided_slice %37 {offsets = [2, 5, 0], sizes = [1, 1, 256], strides = [1, 1, 1]} : vector<7x7x256xf32> to vector<1x1x256xf32>
    %309 = vector.shape_cast %308 : vector<1x1x256xf32> to vector<256xf32>
    %310 = vector.shape_cast %309 : vector<256xf32> to vector<1x1x256xf32>
    %311 = vector.broadcast %310 : vector<1x1x256xf32> to vector<7x7x256xf32>
    %312 = arith.mulf %307, %311 : vector<7x7x256xf32>
    %313 = arith.addf %306, %312 : vector<7x7x256xf32>
    %314 = vector.extract_strided_slice %292 {offsets = [3, 0, 0], sizes = [7, 7, 256], strides = [1, 1, 1]} : vector<13x7x256xf32> to vector<7x7x256xf32>
    %315 = vector.extract_strided_slice %37 {offsets = [3, 5, 0], sizes = [1, 1, 256], strides = [1, 1, 1]} : vector<7x7x256xf32> to vector<1x1x256xf32>
    %316 = vector.shape_cast %315 : vector<1x1x256xf32> to vector<256xf32>
    %317 = vector.shape_cast %316 : vector<256xf32> to vector<1x1x256xf32>
    %318 = vector.broadcast %317 : vector<1x1x256xf32> to vector<7x7x256xf32>
    %319 = arith.mulf %314, %318 : vector<7x7x256xf32>
    %320 = arith.addf %313, %319 : vector<7x7x256xf32>
    %321 = vector.extract_strided_slice %292 {offsets = [4, 0, 0], sizes = [7, 7, 256], strides = [1, 1, 1]} : vector<13x7x256xf32> to vector<7x7x256xf32>
    %322 = vector.extract_strided_slice %37 {offsets = [4, 5, 0], sizes = [1, 1, 256], strides = [1, 1, 1]} : vector<7x7x256xf32> to vector<1x1x256xf32>
    %323 = vector.shape_cast %322 : vector<1x1x256xf32> to vector<256xf32>
    %324 = vector.shape_cast %323 : vector<256xf32> to vector<1x1x256xf32>
    %325 = vector.broadcast %324 : vector<1x1x256xf32> to vector<7x7x256xf32>
    %326 = arith.mulf %321, %325 : vector<7x7x256xf32>
    %327 = arith.addf %320, %326 : vector<7x7x256xf32>
    %328 = vector.extract_strided_slice %292 {offsets = [5, 0, 0], sizes = [7, 7, 256], strides = [1, 1, 1]} : vector<13x7x256xf32> to vector<7x7x256xf32>
    %329 = vector.extract_strided_slice %37 {offsets = [5, 5, 0], sizes = [1, 1, 256], strides = [1, 1, 1]} : vector<7x7x256xf32> to vector<1x1x256xf32>
    %330 = vector.shape_cast %329 : vector<1x1x256xf32> to vector<256xf32>
    %331 = vector.shape_cast %330 : vector<256xf32> to vector<1x1x256xf32>
    %332 = vector.broadcast %331 : vector<1x1x256xf32> to vector<7x7x256xf32>
    %333 = arith.mulf %328, %332 : vector<7x7x256xf32>
    %334 = arith.addf %327, %333 : vector<7x7x256xf32>
    %335 = vector.extract_strided_slice %292 {offsets = [6, 0, 0], sizes = [7, 7, 256], strides = [1, 1, 1]} : vector<13x7x256xf32> to vector<7x7x256xf32>
    %336 = vector.extract_strided_slice %37 {offsets = [6, 5, 0], sizes = [1, 1, 256], strides = [1, 1, 1]} : vector<7x7x256xf32> to vector<1x1x256xf32>
    %337 = vector.shape_cast %336 : vector<1x1x256xf32> to vector<256xf32>
    %338 = vector.shape_cast %337 : vector<256xf32> to vector<1x1x256xf32>
    %339 = vector.broadcast %338 : vector<1x1x256xf32> to vector<7x7x256xf32>
    %340 = arith.mulf %335, %339 : vector<7x7x256xf32>
    %341 = arith.addf %334, %340 : vector<7x7x256xf32>
    %342 = vector.extract_strided_slice %36 {offsets = [0, 6, 0], sizes = [13, 7, 256], strides = [1, 1, 1]} : vector<13x13x256xf32> to vector<13x7x256xf32>
    %343 = vector.extract_strided_slice %342 {offsets = [0, 0, 0], sizes = [7, 7, 256], strides = [1, 1, 1]} : vector<13x7x256xf32> to vector<7x7x256xf32>
    %344 = vector.extract_strided_slice %37 {offsets = [0, 6, 0], sizes = [1, 1, 256], strides = [1, 1, 1]} : vector<7x7x256xf32> to vector<1x1x256xf32>
    %345 = vector.shape_cast %344 : vector<1x1x256xf32> to vector<256xf32>
    %346 = vector.shape_cast %345 : vector<256xf32> to vector<1x1x256xf32>
    %347 = vector.broadcast %346 : vector<1x1x256xf32> to vector<7x7x256xf32>
    %348 = arith.mulf %343, %347 : vector<7x7x256xf32>
    %349 = arith.addf %341, %348 : vector<7x7x256xf32>
    %350 = vector.extract_strided_slice %342 {offsets = [1, 0, 0], sizes = [7, 7, 256], strides = [1, 1, 1]} : vector<13x7x256xf32> to vector<7x7x256xf32>
    %351 = vector.extract_strided_slice %37 {offsets = [1, 6, 0], sizes = [1, 1, 256], strides = [1, 1, 1]} : vector<7x7x256xf32> to vector<1x1x256xf32>
    %352 = vector.shape_cast %351 : vector<1x1x256xf32> to vector<256xf32>
    %353 = vector.shape_cast %352 : vector<256xf32> to vector<1x1x256xf32>
    %354 = vector.broadcast %353 : vector<1x1x256xf32> to vector<7x7x256xf32>
    %355 = arith.mulf %350, %354 : vector<7x7x256xf32>
    %356 = arith.addf %349, %355 : vector<7x7x256xf32>
    %357 = vector.extract_strided_slice %342 {offsets = [2, 0, 0], sizes = [7, 7, 256], strides = [1, 1, 1]} : vector<13x7x256xf32> to vector<7x7x256xf32>
    %358 = vector.extract_strided_slice %37 {offsets = [2, 6, 0], sizes = [1, 1, 256], strides = [1, 1, 1]} : vector<7x7x256xf32> to vector<1x1x256xf32>
    %359 = vector.shape_cast %358 : vector<1x1x256xf32> to vector<256xf32>
    %360 = vector.shape_cast %359 : vector<256xf32> to vector<1x1x256xf32>
    %361 = vector.broadcast %360 : vector<1x1x256xf32> to vector<7x7x256xf32>
    %362 = arith.mulf %357, %361 : vector<7x7x256xf32>
    %363 = arith.addf %356, %362 : vector<7x7x256xf32>
    %364 = vector.extract_strided_slice %342 {offsets = [3, 0, 0], sizes = [7, 7, 256], strides = [1, 1, 1]} : vector<13x7x256xf32> to vector<7x7x256xf32>
    %365 = vector.extract_strided_slice %37 {offsets = [3, 6, 0], sizes = [1, 1, 256], strides = [1, 1, 1]} : vector<7x7x256xf32> to vector<1x1x256xf32>
    %366 = vector.shape_cast %365 : vector<1x1x256xf32> to vector<256xf32>
    %367 = vector.shape_cast %366 : vector<256xf32> to vector<1x1x256xf32>
    %368 = vector.broadcast %367 : vector<1x1x256xf32> to vector<7x7x256xf32>
    %369 = arith.mulf %364, %368 : vector<7x7x256xf32>
    %370 = arith.addf %363, %369 : vector<7x7x256xf32>
    %371 = vector.extract_strided_slice %342 {offsets = [4, 0, 0], sizes = [7, 7, 256], strides = [1, 1, 1]} : vector<13x7x256xf32> to vector<7x7x256xf32>
    %372 = vector.extract_strided_slice %37 {offsets = [4, 6, 0], sizes = [1, 1, 256], strides = [1, 1, 1]} : vector<7x7x256xf32> to vector<1x1x256xf32>
    %373 = vector.shape_cast %372 : vector<1x1x256xf32> to vector<256xf32>
    %374 = vector.shape_cast %373 : vector<256xf32> to vector<1x1x256xf32>
    %375 = vector.broadcast %374 : vector<1x1x256xf32> to vector<7x7x256xf32>
    %376 = arith.mulf %371, %375 : vector<7x7x256xf32>
    %377 = arith.addf %370, %376 : vector<7x7x256xf32>
    %378 = vector.extract_strided_slice %342 {offsets = [5, 0, 0], sizes = [7, 7, 256], strides = [1, 1, 1]} : vector<13x7x256xf32> to vector<7x7x256xf32>
    %379 = vector.extract_strided_slice %37 {offsets = [5, 6, 0], sizes = [1, 1, 256], strides = [1, 1, 1]} : vector<7x7x256xf32> to vector<1x1x256xf32>
    %380 = vector.shape_cast %379 : vector<1x1x256xf32> to vector<256xf32>
    %381 = vector.shape_cast %380 : vector<256xf32> to vector<1x1x256xf32>
    %382 = vector.broadcast %381 : vector<1x1x256xf32> to vector<7x7x256xf32>
    %383 = arith.mulf %378, %382 : vector<7x7x256xf32>
    %384 = arith.addf %377, %383 : vector<7x7x256xf32>
    %385 = vector.extract_strided_slice %342 {offsets = [6, 0, 0], sizes = [7, 7, 256], strides = [1, 1, 1]} : vector<13x7x256xf32> to vector<7x7x256xf32>
    %386 = vector.extract_strided_slice %37 {offsets = [6, 6, 0], sizes = [1, 1, 256], strides = [1, 1, 1]} : vector<7x7x256xf32> to vector<1x1x256xf32>
    %387 = vector.shape_cast %386 : vector<1x1x256xf32> to vector<256xf32>
    %388 = vector.shape_cast %387 : vector<256xf32> to vector<1x1x256xf32>
    %389 = vector.broadcast %388 : vector<1x1x256xf32> to vector<7x7x256xf32>
    %390 = arith.mulf %385, %389 : vector<7x7x256xf32>
    %391 = arith.addf %384, %390 : vector<7x7x256xf32>
    %c0_31 = arith.constant 0 : index
    %c0_32 = arith.constant 0 : index
    %c0_33 = arith.constant 0 : index
    %392 = vector.load %arg6[%c0_31, %c0_32, %c0_33] : memref<7x7x256xf32, #tpu.memory_space<vmem>>, vector<7x7x256xf32>
    tpu.vector_store %arg6[%c0_31, %c0_32, %c0_33], %391 {strides = array<i32>} : memref<7x7x256xf32, #tpu.memory_space<vmem>>, vector<7x7x256xf32>,
    return
  }
  func.func @transform_0(%arg0: i32) -> (i32, i32) {
    %c0_i32 = arith.constant 0 : i32
    %c0_i32_0 = arith.constant 0 : i32
    %c0_i32_1 = arith.constant 0 : i32
    return %c0_i32, %c0_i32_0 : i32, i32
  }
  func.func @transform_1(%arg0: i32) -> (i32, i32) {
    %c0_i32 = arith.constant 0 : i32
    %c0_i32_0 = arith.constant 0 : i32
    return %c0_i32, %arg0 : i32, i32
  }
  func.func @transform_2(%arg0: i32) -> (i32, i32) {
    %c0_i32 = arith.constant 0 : i32
    %c0_i32_0 = arith.constant 0 : i32
    return %c0_i32, %arg0 : i32, i32
  }
  func.func @transform_3(%arg0: i32) -> (i32, i32, i32) {
    %c0_i32 = arith.constant 0 : i32
    %c0_i32_0 = arith.constant 0 : i32
    %c0_i32_1 = arith.constant 0 : i32
    return %c0_i32, %c0_i32_0, %arg0 : i32, i32, i32
  }
  func.func @transform_4(%arg0: i32) -> (i32, i32) {
    %c0_i32 = arith.constant 0 : i32
    %c0_i32_0 = arith.constant 0 : i32
    return %c0_i32, %arg0 : i32, i32
  }
  func.func @transform_5(%arg0: i32) -> (i32, i32, i32) {
    %c0_i32 = arith.constant 0 : i32
    %c0_i32_0 = arith.constant 0 : i32
    %c0_i32_1 = arith.constant 0 : i32
    return %c0_i32, %c0_i32_0, %arg0 : i32, i32, i32
  }
}

</mosaic_0001>

<llo_original>
// kernel: forward.1
$region0: #{forward.1}
  #allocation0 [shape = 'u32[]', space=smem, size = 0x4, offset = 0x4, fixed_abs, tag = 'smem constant byte address 0x4 - core index']
  #allocation1 [shape = 'u32[144,128]{1,0:T(1,128)}', space=vmem, size = 0x12000, scoped, tag = 'internal scratch']
  #allocation2 [shape = 'f32[13,13,256]{2,1,0:T(8,128)}', space=vmem, size = 0x34000, scoped, tag = 'scratch operand']
  %s0 = inlined_call_operand.vmem [shape: f32[49,3072], index: 0, kind: input, shape index: {}]
  %s1 = inlined_call_operand.hbm [shape: f32[3072,1536], index: 1, kind: input, shape index: {}]
  %s2 = inlined_call_operand.hbm [shape: f32[1,1536], index: 2, kind: input, shape index: {}]
  %s3 = inlined_call_operand.hbm [shape: f32[7,7,1536], index: 3, kind: input, shape index: {}]
  %s4 = inlined_call_operand.hbm [shape: f32[1,1536], index: 4, kind: input, shape index: {}]
  %s5 = inlined_call_operand.vmem [shape: f32[7,7,1536], index: 5, kind: output, shape index: {}]
  %s6 = sld [smem:[#allocation0]]
  $region88: #{forward.1} parent=0
    _
  %s8 = ssub.s32 1, %s6
  %s9 = scalar_select 0, %s8, %s6
  $region1: #{forward.1} parent=0
    #allocation3 [shape = 'u8[6291456]{0}', space=vmem, size = 0x600000, scoped, tag = 'input window, operand 1']
    #allocation4 [shape = 's32[2]{0}', space=sflag, size = 0x8, scoped, tag = 'scoped memory for forward.1']
    #allocation5 [shape = 'u8[2048]{0}', space=vmem, size = 0x800, scoped, tag = 'input window, operand 2']
    #allocation6 [shape = 's32[2]{0}', space=sflag, size = 0x8, scoped, tag = 'scoped memory for forward.1']
    #allocation7 [shape = 'u8[114688]{0}', space=vmem, size = 0x1c000, scoped, tag = 'input window, operand 3']
    #allocation8 [shape = 'u8[2048]{0}', space=vmem, size = 0x800, scoped, tag = 'input window, operand 4']
    #allocation9 [shape = 's32[2]{0}', space=sflag, size = 0x8, scoped, tag = 'scoped memory for forward.1']
    #allocation10 [shape = 'u8[114688]{0}', space=vmem, size = 0x1c000, scoped, tag = 'output window, operand 0']
    %10 = vsyncpa [#allocation4], 0
    %s11 = scalar_lea.sflag [#allocation4], 1
    %12 = vsyncpa %s11, 0
    %13 = vsyncpa [#allocation6], 0
    %s14 = scalar_lea.sflag [#allocation6], 1
    %15 = vsyncpa %s14, 0
    %16 = vsyncpa [#allocation9], 0
    %s17 = scalar_lea.sflag [#allocation9], 1
    %18 = vsyncpa %s17, 0
    loop: start=0, step=1, limit=8
    $region2: #{forward.1} parent=1 // loop_pre_header
      _
    $region3: #{forward.1} parent=1 // loop_header
      %s20 = sphi 0, %s24
      %p21 = scmp.ge.s32.totalorder %s20, 8
      %s28 = sphi 0, %s28
      %s30 = sphi 0, %s28
      %s31 = sphi 0, %s30
      %s45 = sphi 0, %s31
      %s51 = sphi 0, %s53
      %s54 = sphi 0, %s51
      %s55 = sphi 0, %s54
      %s71 = sphi 0, %s55
      %s77 = sphi 0, %s79
      %s80 = sphi 0, %s77
      %s81 = sphi 0, %s80
      %s97 = sphi 0, %s81
      %s103 = sphi 0, %s105
      %s106 = sphi 0, %s103
      %s107 = sphi 0, %s106
      %s123 = sphi 0, %s107
      %s129 = sphi 0, %s131
      %s132 = sphi 0, %s129
      %s133 = sphi 0, %s132
      %s149 = sphi 0, %s133
      %s155 = sphi 0, %s157
      %s158 = sphi 0, %s155
      %s159 = sphi 0, %s158
      %s175 = sphi 0, %s159
    $region4: #{forward.1} parent=1 // loop_header_branch
      %23 = sbr.rel (%p21) target = $region8
    $region5: #{forward.1} parent=1 // loop_body
      %s25 = ssub.s32 %s20, 1
      %s26 = ssub.s32 %s20, 2
      %s27 = sadd.s32 %s20, 1
      %s29 = sadd.s32 %s28, 1
      %p32 = scmp.eq.s32.totalorder %s20, 5
      %p33 = scmp.ne.s32.totalorder %s28, %s30
      %p34 = scmp.eq.s32.totalorder %s20, 0
      %p35 = por %p33, %p34
      %p36 = scmp.ne.s32.totalorder %s28, %s30
      %p37 = scmp.eq.s32.totalorder %s25, 5
      %p38 = por %p36, %p37
      %p39 = scmp.ne.s32.totalorder %s30, %s31
      %p40 = scmp.eq.s32.totalorder %s25, 0
      %p41 = por %p39, %p40
      %p42 = scmp.ne.s32.totalorder %s30, %s31
      %p43 = scmp.eq.s32.totalorder %s26, 5
      %p44 = por %p42, %p43
      %p46 = scmp.ne.s32.totalorder %s31, %s45
      %p47 = scmp.eq.s32.totalorder %s26, 0
      %p48 = por %p46, %p47
      %s49 = ssub.s32 %s20, %s27
      %p50 = scmp.eq.s32.totalorder %s49, 0
      %s52 = sadd.s32 %s51, 1
      %s53 = scalar_select %p50, %s51, %s52
      %p56 = pneg %p50
      %p57 = scmp.eq.s32.totalorder %s20, 5
      %p58 = por %p56, %p57
      %p59 = scmp.ne.s32.totalorder %s51, %s54
      %p60 = scmp.eq.s32.totalorder %s20, 0
      %p61 = por %p59, %p60
      %p62 = scmp.ne.s32.totalorder %s51, %s54
      %p63 = scmp.eq.s32.totalorder %s25, 5
      %p64 = por %p62, %p63
      %p65 = scmp.ne.s32.totalorder %s54, %s55
      %p66 = scmp.eq.s32.totalorder %s25, 0
      %p67 = por %p65, %p66
      %p68 = scmp.ne.s32.totalorder %s54, %s55
      %p69 = scmp.eq.s32.totalorder %s26, 5
      %p70 = por %p68, %p69
      %p72 = scmp.ne.s32.totalorder %s55, %s71
      %p73 = scmp.eq.s32.totalorder %s26, 0
      %p74 = por %p72, %p73
      %s75 = ssub.s32 %s20, %s27
      %p76 = scmp.eq.s32.totalorder %s75, 0
      %s78 = sadd.s32 %s77, 1
      %s79 = scalar_select %p76, %s77, %s78
      %p82 = pneg %p76
      %p83 = scmp.eq.s32.totalorder %s20, 5
      %p84 = por %p82, %p83
      %p85 = scmp.ne.s32.totalorder %s77, %s80
      %p86 = scmp.eq.s32.totalorder %s20, 0
      %p87 = por %p85, %p86
      %p88 = scmp.ne.s32.totalorder %s77, %s80
      %p89 = scmp.eq.s32.totalorder %s25, 5
      %p90 = por %p88, %p89
      %p91 = scmp.ne.s32.totalorder %s80, %s81
      %p92 = scmp.eq.s32.totalorder %s25, 0
      %p93 = por %p91, %p92
      %p94 = scmp.ne.s32.totalorder %s80, %s81
      %p95 = scmp.eq.s32.totalorder %s26, 5
      %p96 = por %p94, %p95
      %p98 = scmp.ne.s32.totalorder %s81, %s97
      %p99 = scmp.eq.s32.totalorder %s26, 0
      %p100 = por %p98, %p99
      %s101 = ssub.s32 %s20, %s27
      %p102 = scmp.eq.s32.totalorder %s101, 0
      %s104 = sadd.s32 %s103, 1
      %s105 = scalar_select %p102, %s103, %s104
      %p108 = pneg %p102
      %p109 = scmp.eq.s32.totalorder %s20, 5
      %p110 = por %p108, %p109
      %p111 = scmp.ne.s32.totalorder %s103, %s106
      %p112 = scmp.eq.s32.totalorder %s20, 0
      %p113 = por %p111, %p112
      %p114 = scmp.ne.s32.totalorder %s103, %s106
      %p115 = scmp.eq.s32.totalorder %s25, 5
      %p116 = por %p114, %p115
      %p117 = scmp.ne.s32.totalorder %s106, %s107
      %p118 = scmp.eq.s32.totalorder %s25, 0
      %p119 = por %p117, %p118
      %p120 = scmp.ne.s32.totalorder %s106, %s107
      %p121 = scmp.eq.s32.totalorder %s26, 5
      %p122 = por %p120, %p121
      %p124 = scmp.ne.s32.totalorder %s107, %s123
      %p125 = scmp.eq.s32.totalorder %s26, 0
      %p126 = por %p124, %p125
      %s127 = ssub.s32 %s20, %s27
      %p128 = scmp.eq.s32.totalorder %s127, 0
      %s130 = sadd.s32 %s129, 1
      %s131 = scalar_select %p128, %s129, %s130
      %p134 = pneg %p128
      %p135 = scmp.eq.s32.totalorder %s20, 5
      %p136 = por %p134, %p135
      %p137 = scmp.ne.s32.totalorder %s129, %s132
      %p138 = scmp.eq.s32.totalorder %s20, 0
      %p139 = por %p137, %p138
      %p140 = scmp.ne.s32.totalorder %s129, %s132
      %p141 = scmp.eq.s32.totalorder %s25, 5
      %p142 = por %p140, %p141
      %p143 = scmp.ne.s32.totalorder %s132, %s133
      %p144 = scmp.eq.s32.totalorder %s25, 0
      %p145 = por %p143, %p144
      %p146 = scmp.ne.s32.totalorder %s132, %s133
      %p147 = scmp.eq.s32.totalorder %s26, 5
      %p148 = por %p146, %p147
      %p150 = scmp.ne.s32.totalorder %s133, %s149
      %p151 = scmp.eq.s32.totalorder %s26, 0
      %p152 = por %p150, %p151
      %s153 = ssub.s32 %s20, %s27
      %p154 = scmp.eq.s32.totalorder %s153, 0
      %s156 = sadd.s32 %s155, 1
      %s157 = scalar_select %p154, %s155, %s156
      %p160 = pneg %p154
      %p161 = scmp.eq.s32.totalorder %s20, 5
      %p162 = por %p160, %p161
      %p163 = scmp.ne.s32.totalorder %s155, %s158
      %p164 = scmp.eq.s32.totalorder %s20, 0
      %p165 = por %p163, %p164
      %p166 = scmp.ne.s32.totalorder %s155, %s158
      %p167 = scmp.eq.s32.totalorder %s25, 5
      %p168 = por %p166, %p167
      %p169 = scmp.ne.s32.totalorder %s158, %s159
      %p170 = scmp.eq.s32.totalorder %s25, 0
      %p171 = por %p169, %p170
      %p172 = scmp.ne.s32.totalorder %s158, %s159
      %p173 = scmp.eq.s32.totalorder %s26, 5
      %p174 = por %p172, %p173
      %p176 = scmp.ne.s32.totalorder %s159, %s175
      %p177 = scmp.eq.s32.totalorder %s26, 0
      %p178 = por %p176, %p177
      %p179 = scmp.le.s32.totalorder 1, %s20
      %p180 = scmp.lt.s32.totalorder %s20, 7
      %p181 = pnand %p179, %p180
      %p182 = pneg %p181
      // Predicated region
      $region9: #{forward.1} parent=5 // pred_check
        _
      $region10: #{forward.1} parent=5 // pred_check_branch
        %184 = sbr.rel (%p181) target = $region12
      $region11: #{forward.1} parent=5 // pred_region
        %s185 = ssub.s32 %s20, 1
        // Predicated region
        $region13: #{forward.1} parent=11 // pred_check
          %p186 = pneg %p41
        $region14: #{forward.1} parent=11 // pred_check_branch
          %188 = sbr.rel (%p186) target = $region16
        $region15: #{forward.1} parent=11 // pred_region
          _
        $region16: #{forward.1} parent=11 // pred_fallthru
          _
      $region12: #{forward.1} parent=5 // pred_fallthru
        _
      %p189 = scmp.lt.s32.totalorder %s20, 6
      // Predicated region
      $region17: #{forward.1} parent=5 // pred_check
        %p190 = pneg %p189
      $region18: #{forward.1} parent=5 // pred_check_branch
        %192 = sbr.rel (%p190) target = $region20
      $region19: #{forward.1} parent=5 // pred_region
        // Predicated region
        $region21: #{forward.1} parent=19 // pred_check
          %p193 = pneg %p61
        $region22: #{forward.1} parent=19 // pred_check_branch
          %195 = sbr.rel (%p193) target = $region24
        $region23: #{forward.1} parent=19 // pred_region
          %s196 = sand.u32 %s51, 1
          %s197 = scalar_lea.sflag [#allocation4], %s196
          %s198 = sand.u32 %s51, 1
          %s199 = smul.addr %s198, 6144
          %s200 = scalar_lea.vmem [#allocation3], %s199
          %s201 = smul.u32 2, %s20
          %s203 = ssub.s32 98304, 98304
          %204 = vsyncadd %s197, %s203
          %s205 = smul.addr %s201, 128
          %s206 = scalar_lea.hbm %s1, %s205
          %s207 = sshll.u32 %s200, 4
          %s208 = int_to_ptr.vmem [resolvable:$true] %s207
          %213 = dma.hbm_to_vmem [thread:$0]  %s206, 98304, %s208, %s197, 1536, 256, 16
        $region24: #{forward.1} parent=19 // pred_fallthru
          _
        // Predicated region
        $region25: #{forward.1} parent=19 // pred_check
          %p214 = pneg %p87
        $region26: #{forward.1} parent=19 // pred_check_branch
          %216 = sbr.rel (%p214) target = $region28
        $region27: #{forward.1} parent=19 // pred_region
          %s217 = sand.u32 %s20, 1
          %s218 = scalar_lea.sflag [#allocation6], %s217
          %s219 = sand.u32 %s77, 1
          %s220 = smul.addr %s219, 2
          %s221 = scalar_lea.vmem [#allocation5], %s220
          %s222 = smul.u32 2, %s20
          %s224 = ssub.s32 32, 32
          %225 = vsyncadd %s218, %s224
          %s226 = smul.addr %s222, 16
          %s227 = scalar_lea.hbm %s2, %s226
          %s229 = sshll.u32 %s221, 4
          %s230 = int_to_ptr.vmem [resolvable:$true] %s229
          %232 = dma.hbm_to_vmem [thread:$0]  %s227, 32, %s230, %s218
        $region28: #{forward.1} parent=19 // pred_fallthru
          _
        // Predicated region
        $region29: #{forward.1} parent=19 // pred_check
          %p233 = pneg %p113
        $region30: #{forward.1} parent=19 // pred_check_branch
          %235 = sbr.rel (%p233) target = $region32
        $region31: #{forward.1} parent=19 // pred_region
          %s236 = sand.u32 %s20, 1
          %s237 = scalar_lea.sflag [#allocation6], %s236
          %s238 = sand.u32 %s103, 1
          %s239 = smul.addr %s238, 112
          %s240 = scalar_lea.vmem [#allocation7], %s239
          %s241 = smul.u32 2, %s20
          %s243 = ssub.s32 1792, 1792
          %244 = vsyncadd %s237, %s243
          %s245 = smul.addr %s241, 128
          %s246 = scalar_lea.hbm %s3, %s245
          %s247 = sshll.u32 %s240, 4
          %s248 = int_to_ptr.vmem [resolvable:$true] %s247
          %253 = dma.hbm_to_vmem [thread:$0]  %s246, 1792, %s248, %s237, 1536, 256, 16
        $region32: #{forward.1} parent=19 // pred_fallthru
          _
        // Predicated region
        $region33: #{forward.1} parent=19 // pred_check
          %p254 = pneg %p139
        $region34: #{forward.1} parent=19 // pred_check_branch
          %256 = sbr.rel (%p254) target = $region36
        $region35: #{forward.1} parent=19 // pred_region
          %s257 = sand.u32 %s129, 1
          %s258 = scalar_lea.sflag [#allocation9], %s257
          %s259 = sand.u32 %s129, 1
          %s260 = smul.addr %s259, 2
          %s261 = scalar_lea.vmem [#allocation8], %s260
          %s262 = smul.u32 2, %s20
          %s264 = ssub.s32 32, 32
          %265 = vsyncadd %s258, %s264
          %s266 = smul.addr %s262, 16
          %s267 = scalar_lea.hbm %s4, %s266
          %s269 = sshll.u32 %s261, 4
          %s270 = int_to_ptr.vmem [resolvable:$true] %s269
          %272 = dma.hbm_to_vmem [thread:$0]  %s267, 32, %s270, %s258
        $region36: #{forward.1} parent=19 // pred_fallthru
          _
      $region20: #{forward.1} parent=5 // pred_fallthru
        _
      %p273 = scmp.le.s32.totalorder 1, %s20
      %p274 = scmp.lt.s32.totalorder %s20, 7
      %p275 = pnand %p273, %p274
      %p276 = pneg %p275
      // Predicated region
      $region37: #{forward.1} parent=5 // pred_check
        _
      $region38: #{forward.1} parent=5 // pred_check_branch
        %278 = sbr.rel (%p275) target = $region40
      $region39: #{forward.1} parent=5 // pred_region
        %s279 = ssub.s32 %s20, 1
        %s280 = sand.u32 %s54, 1
        %s281 = scalar_lea.sflag [#allocation4], %s280
        %s282 = sand.u32 %s54, 1
        %s283 = smul.addr %s282, 6144
        %s284 = scalar_lea.vmem [#allocation3], %s283
        // Predicated region
        $region41: #{forward.1} parent=39 // pred_check
          %p285 = pneg %p67
        $region42: #{forward.1} parent=39 // pred_check_branch
          %287 = sbr.rel (%p285) target = $region44
        $region43: #{forward.1} parent=39 // pred_region
          %288 = dma.done %s281, 98304
        $region44: #{forward.1} parent=39 // pred_fallthru
          _
        %s289 = sand.u32 %s25, 1
        %s290 = scalar_lea.sflag [#allocation6], %s289
        %s291 = sand.u32 %s80, 1
        %s292 = smul.addr %s291, 2
        %s293 = scalar_lea.vmem [#allocation5], %s292
        // Predicated region
        $region45: #{forward.1} parent=39 // pred_check
          %p294 = pneg %p93
        $region46: #{forward.1} parent=39 // pred_check_branch
          %296 = sbr.rel (%p294) target = $region48
        $region47: #{forward.1} parent=39 // pred_region
          %297 = dma.done %s290, 32
        $region48: #{forward.1} parent=39 // pred_fallthru
          _
        %s298 = sand.u32 %s25, 1
        %s299 = scalar_lea.sflag [#allocation6], %s298
        %s300 = sand.u32 %s106, 1
        %s301 = smul.addr %s300, 112
        %s302 = scalar_lea.vmem [#allocation7], %s301
        // Predicated region
        $region49: #{forward.1} parent=39 // pred_check
          %p303 = pneg %p119
        $region50: #{forward.1} parent=39 // pred_check_branch
          %305 = sbr.rel (%p303) target = $region52
        $region51: #{forward.1} parent=39 // pred_region
          %306 = dma.done %s299, 1792
        $region52: #{forward.1} parent=39 // pred_fallthru
          _
        %s307 = sand.u32 %s132, 1
        %s308 = scalar_lea.sflag [#allocation9], %s307
        %s309 = sand.u32 %s132, 1
        %s310 = smul.addr %s309, 2
        %s311 = scalar_lea.vmem [#allocation8], %s310
        // Predicated region
        $region53: #{forward.1} parent=39 // pred_check
          %p312 = pneg %p145
        $region54: #{forward.1} parent=39 // pred_check_branch
          %314 = sbr.rel (%p312) target = $region56
        $region55: #{forward.1} parent=39 // pred_region
          %315 = dma.done %s308, 32
        $region56: #{forward.1} parent=39 // pred_fallthru
          _
        %p316 = pneg %p41
        %p317 = pneg %p38
        %s318 = sand.u32 %s54, 1
        %s319 = scalar_lea.sflag [#allocation4], %s318
        %s320 = sand.u32 %s54, 1
        %s321 = smul.addr %s320, 6144
        %s322 = scalar_lea.vmem [#allocation3], %s321
        %p323 = pneg %p67
        %p324 = pneg %p64
        %s325 = sand.u32 %s25, 1
        %s326 = scalar_lea.sflag [#allocation6], %s325
        %s327 = sand.u32 %s80, 1
        %s328 = smul.addr %s327, 2
        %s329 = scalar_lea.vmem [#allocation5], %s328
        %p330 = pneg %p93
        %p331 = pneg %p90
        %s332 = sand.u32 %s25, 1
        %s333 = scalar_lea.sflag [#allocation6], %s332
        %s334 = sand.u32 %s106, 1
        %s335 = smul.addr %s334, 112
        %s336 = scalar_lea.vmem [#allocation7], %s335
        %p337 = pneg %p119
        %p338 = pneg %p116
        %s339 = sand.u32 %s132, 1
        %s340 = scalar_lea.sflag [#allocation9], %s339
        %s341 = sand.u32 %s132, 1
        %s342 = smul.addr %s341, 2
        %s343 = scalar_lea.vmem [#allocation8], %s342
        %p344 = pneg %p145
        %p345 = pneg %p142
        %p346 = pneg %p171
        %p347 = pneg %p168
        %s348 = sand.u32 %s158, 1
        %s349 = sand.u32 %s158, 1
        %s350 = smul.addr %s349, 112
        %s351 = scalar_lea.vmem [#allocation10], %s350
        %s352 = smul.u32 2, %s25
        %s353 = smul.u32 2, %s25
        %s354 = smul.u32 2, %s25
        %s355 = smul.u32 2, %s25
        %s356 = smul.u32 2, %s25
        %v357 = vld [vmem:[%s0] sm:$0xff]
        %v358 = vld [vmem:[%s0 + $0x8] sm:$0xff]
        %v359 = vld [vmem:[%s0 + $0x10] sm:$0xff]
        %v360 = vld [vmem:[%s0 + $0x18] sm:$0xff]
        %v361 = vld [vmem:[%s0 + $0x20] sm:$0xff]
        %v362 = vld [vmem:[%s0 + $0x28] sm:$0xff]
        %v363 = vld [vmem:[%s0 + $0x30] sm:$0xff]
        %v364 = vld [vmem:[%s0 + $0x38] sm:$0xff]
        %v365 = vld [vmem:[%s0 + $0x40] sm:$0xff]
        %v366 = vld [vmem:[%s0 + $0x48] sm:$0xff]
        %v367 = vld [vmem:[%s0 + $0x50] sm:$0xff]
        %v368 = vld [vmem:[%s0 + $0x58] sm:$0xff]
        %v369 = vld [vmem:[%s0 + $0x60] sm:$0xff]
        %v370 = vld [vmem:[%s0 + $0x68] sm:$0xff]
        %v371 = vld [vmem:[%s0 + $0x70] sm:$0xff]
        %v372 = vld [vmem:[%s0 + $0x78] sm:$0xff]
        %v373 = vld [vmem:[%s0 + $0x80] sm:$0xff]
        %v374 = vld [vmem:[%s0 + $0x88] sm:$0xff]
        %v375 = vld [vmem:[%s0 + $0x90] sm:$0xff]
        %v376 = vld [vmem:[%s0 + $0x98] sm:$0xff]
        %v377 = vld [vmem:[%s0 + $0xa0] sm:$0xff]
        %v378 = vld [vmem:[%s0 + $0xa8] sm:$0xff]
        %v379 = vld [vmem:[%s0 + $0xb0] sm:$0xff]
        %v380 = vld [vmem:[%s0 + $0xb8] sm:$0xff]
        %v381 = vld [vmem:[%s0 + $0xc0] sm:$0xff]
        %v382 = vld [vmem:[%s0 + $0xc8] sm:$0xff]
        %v383 = vld [vmem:[%s0 + $0xd0] sm:$0xff]
        %v384 = vld [vmem:[%s0 + $0xd8] sm:$0xff]
        %v385 = vld [vmem:[%s0 + $0xe0] sm:$0xff]
        %v386 = vld [vmem:[%s0 + $0xe8] sm:$0xff]
        %v387 = vld [vmem:[%s0 + $0xf0] sm:$0xff]
        %v388 = vld [vmem:[%s0 + $0xf8] sm:$0xff]
        %v389 = vld [vmem:[%s0 + $0x100] sm:$0xff]
        %v390 = vld [vmem:[%s0 + $0x108] sm:$0xff]
        %v391 = vld [vmem:[%s0 + $0x110] sm:$0xff]
        %v392 = vld [vmem:[%s0 + $0x118] sm:$0xff]
        %v393 = vld [vmem:[%s0 + $0x120] sm:$0xff]
        %v394 = vld [vmem:[%s0 + $0x128] sm:$0xff]
        %v395 = vld [vmem:[%s0 + $0x130] sm:$0xff]
        %v396 = vld [vmem:[%s0 + $0x138] sm:$0xff]
        %v397 = vld [vmem:[%s0 + $0x140] sm:$0xff]
        %v398 = vld [vmem:[%s0 + $0x148] sm:$0xff]
        %v399 = vld [vmem:[%s0 + $0x150] sm:$0xff]
        %v400 = vld [vmem:[%s0 + $0x158] sm:$0xff]
        %v401 = vld [vmem:[%s0 + $0x160] sm:$0xff]
        %v402 = vld [vmem:[%s0 + $0x168] sm:$0xff]
        %v403 = vld [vmem:[%s0 + $0x170] sm:$0xff]
        %v404 = vld [vmem:[%s0 + $0x178] sm:$0xff]
        %v405 = vld [vmem:[%s0 + $0x180] sm:$0xff]
        %v406 = vld [vmem:[%s0 + $0x188] sm:$0xff]
        %v407 = vld [vmem:[%s0 + $0x190] sm:$0xff]
        %v408 = vld [vmem:[%s0 + $0x198] sm:$0xff]
        %v409 = vld [vmem:[%s0 + $0x1a0] sm:$0xff]
        %v410 = vld [vmem:[%s0 + $0x1a8] sm:$0xff]
        %v411 = vld [vmem:[%s0 + $0x1b0] sm:$0xff]
        %v412 = vld [vmem:[%s0 + $0x1b8] sm:$0xff]
        %v413 = vld [vmem:[%s0 + $0x1c0] sm:$0xff]
        %v414 = vld [vmem:[%s0 + $0x1c8] sm:$0xff]
        %v415 = vld [vmem:[%s0 + $0x1d0] sm:$0xff]
        %v416 = vld [vmem:[%s0 + $0x1d8] sm:$0xff]
        %v417 = vld [vmem:[%s0 + $0x1e0] sm:$0xff]
        %v418 = vld [vmem:[%s0 + $0x1e8] sm:$0xff]
        %v419 = vld [vmem:[%s0 + $0x1f0] sm:$0xff]
        %v420 = vld [vmem:[%s0 + $0x1f8] sm:$0xff]
        %v421 = vld [vmem:[%s0 + $0x200] sm:$0xff]
        %v422 = vld [vmem:[%s0 + $0x208] sm:$0xff]
        %v423 = vld [vmem:[%s0 + $0x210] sm:$0xff]
        %v424 = vld [vmem:[%s0 + $0x218] sm:$0xff]
        %v425 = vld [vmem:[%s0 + $0x220] sm:$0xff]
        %v426 = vld [vmem:[%s0 + $0x228] sm:$0xff]
        %v427 = vld [vmem:[%s0 + $0x230] sm:$0xff]
        %v428 = vld [vmem:[%s0 + $0x238] sm:$0xff]
        %v429 = vld [vmem:[%s0 + $0x240] sm:$0xff]
        %v430 = vld [vmem:[%s0 + $0x248] sm:$0xff]
        %v431 = vld [vmem:[%s0 + $0x250] sm:$0xff]
        %v432 = vld [vmem:[%s0 + $0x258] sm:$0xff]
        %v433 = vld [vmem:[%s0 + $0x260] sm:$0xff]
        %v434 = vld [vmem:[%s0 + $0x268] sm:$0xff]
        %v435 = vld [vmem:[%s0 + $0x270] sm:$0xff]
        %v436 = vld [vmem:[%s0 + $0x278] sm:$0xff]
        %v437 = vld [vmem:[%s0 + $0x280] sm:$0xff]
        %v438 = vld [vmem:[%s0 + $0x288] sm:$0xff]
        %v439 = vld [vmem:[%s0 + $0x290] sm:$0xff]
        %v440 = vld [vmem:[%s0 + $0x298] sm:$0xff]
        %v441 = vld [vmem:[%s0 + $0x2a0] sm:$0xff]
        %v442 = vld [vmem:[%s0 + $0x2a8] sm:$0xff]
        %v443 = vld [vmem:[%s0 + $0x2b0] sm:$0xff]
        %v444 = vld [vmem:[%s0 + $0x2b8] sm:$0xff]
        %v445 = vld [vmem:[%s0 + $0x2c0] sm:$0xff]
        %v446 = vld [vmem:[%s0 + $0x2c8] sm:$0xff]
        %v447 = vld [vmem:[%s0 + $0x2d0] sm:$0xff]
        %v448 = vld [vmem:[%s0 + $0x2d8] sm:$0xff]
        %v449 = vld [vmem:[%s0 + $0x2e0] sm:$0xff]
        %v450 = vld [vmem:[%s0 + $0x2e8] sm:$0xff]
        %v451 = vld [vmem:[%s0 + $0x2f0] sm:$0xff]
        %v452 = vld [vmem:[%s0 + $0x2f8] sm:$0xff]
        %v453 = vld [vmem:[%s0 + $0x300] sm:$0xff]
        %v454 = vld [vmem:[%s0 + $0x308] sm:$0xff]
        %v455 = vld [vmem:[%s0 + $0x310] sm:$0xff]
        %v456 = vld [vmem:[%s0 + $0x318] sm:$0xff]
        %v457 = vld [vmem:[%s0 + $0x320] sm:$0xff]
        %v458 = vld [vmem:[%s0 + $0x328] sm:$0xff]
        %v459 = vld [vmem:[%s0 + $0x330] sm:$0xff]
        %v460 = vld [vmem:[%s0 + $0x338] sm:$0xff]
        %v461 = vld [vmem:[%s0 + $0x340] sm:$0xff]
        %v462 = vld [vmem:[%s0 + $0x348] sm:$0xff]
        %v463 = vld [vmem:[%s0 + $0x350] sm:$0xff]
        %v464 = vld [vmem:[%s0 + $0x358] sm:$0xff]
        %v465 = vld [vmem:[%s0 + $0x360] sm:$0xff]
        %v466 = vld [vmem:[%s0 + $0x368] sm:$0xff]
        %v467 = vld [vmem:[%s0 + $0x370] sm:$0xff]
        %v468 = vld [vmem:[%s0 + $0x378] sm:$0xff]
        %v469 = vld [vmem:[%s0 + $0x380] sm:$0xff]
        %v470 = vld [vmem:[%s0 + $0x388] sm:$0xff]
        %v471 = vld [vmem:[%s0 + $0x390] sm:$0xff]
        %v472 = vld [vmem:[%s0 + $0x398] sm:$0xff]
        %v473 = vld [vmem:[%s0 + $0x3a0] sm:$0xff]
        %v474 = vld [vmem:[%s0 + $0x3a8] sm:$0xff]
        %v475 = vld [vmem:[%s0 + $0x3b0] sm:$0xff]
        %v476 = vld [vmem:[%s0 + $0x3b8] sm:$0xff]
        %v477 = vld [vmem:[%s0 + $0x3c0] sm:$0xff]
        %v478 = vld [vmem:[%s0 + $0x3c8] sm:$0xff]
        %v479 = vld [vmem:[%s0 + $0x3d0] sm:$0xff]
        %v480 = vld [vmem:[%s0 + $0x3d8] sm:$0xff]
        %v481 = vld [vmem:[%s0 + $0x3e0] sm:$0xff]
        %v482 = vld [vmem:[%s0 + $0x3e8] sm:$0xff]
        %v483 = vld [vmem:[%s0 + $0x3f0] sm:$0xff]
        %v484 = vld [vmem:[%s0 + $0x3f8] sm:$0xff]
        %v485 = vld [vmem:[%s0 + $0x400] sm:$0xff]
        %v486 = vld [vmem:[%s0 + $0x408] sm:$0xff]
        %v487 = vld [vmem:[%s0 + $0x410] sm:$0xff]
        %v488 = vld [vmem:[%s0 + $0x418] sm:$0xff]
        %v489 = vld [vmem:[%s0 + $0x420] sm:$0xff]
        %v490 = vld [vmem:[%s0 + $0x428] sm:$0xff]
        %v491 = vld [vmem:[%s0 + $0x430] sm:$0xff]
        %v492 = vld [vmem:[%s0 + $0x438] sm:$0xff]
        %v493 = vld [vmem:[%s0 + $0x440] sm:$0xff]
        %v494 = vld [vmem:[%s0 + $0x448] sm:$0xff]
        %v495 = vld [vmem:[%s0 + $0x450] sm:$0xff]
        %v496 = vld [vmem:[%s0 + $0x458] sm:$0xff]
        %v497 = vld [vmem:[%s0 + $0x460] sm:$0xff]
        %v498 = vld [vmem:[%s0 + $0x468] sm:$0xff]
        %v499 = vld [vmem:[%s0 + $0x470] sm:$0xff]
        %v500 = vld [vmem:[%s0 + $0x478] sm:$0xff]
        %v501 = vld [vmem:[%s0 + $0x480] sm:$0x1]
        %v502 = vld [vmem:[%s0 + $0x488] sm:$0x1]
        %v503 = vld [vmem:[%s0 + $0x490] sm:$0x1]
        %v504 = vld [vmem:[%s0 + $0x498] sm:$0x1]
        %v505 = vld [vmem:[%s0 + $0x4a0] sm:$0x1]
        %v506 = vld [vmem:[%s0 + $0x4a8] sm:$0x1]
        %v507 = vld [vmem:[%s0 + $0x4b0] sm:$0x1]
        %v508 = vld [vmem:[%s0 + $0x4b8] sm:$0x1]
        %v509 = vld [vmem:[%s0 + $0x4c0] sm:$0x1]
        %v510 = vld [vmem:[%s0 + $0x4c8] sm:$0x1]
        %v511 = vld [vmem:[%s0 + $0x4d0] sm:$0x1]
        %v512 = vld [vmem:[%s0 + $0x4d8] sm:$0x1]
        %v513 = vld [vmem:[%s0 + $0x4e0] sm:$0x1]
        %v514 = vld [vmem:[%s0 + $0x4e8] sm:$0x1]
        %v515 = vld [vmem:[%s0 + $0x4f0] sm:$0x1]
        %v516 = vld [vmem:[%s0 + $0x4f8] sm:$0x1]
        %v517 = vld [vmem:[%s0 + $0x500] sm:$0x1]
        %v518 = vld [vmem:[%s0 + $0x508] sm:$0x1]
        %v519 = vld [vmem:[%s0 + $0x510] sm:$0x1]
        %v520 = vld [vmem:[%s0 + $0x518] sm:$0x1]
        %v521 = vld [vmem:[%s0 + $0x520] sm:$0x1]
        %v522 = vld [vmem:[%s0 + $0x528] sm:$0x1]
        %v523 = vld [vmem:[%s0 + $0x530] sm:$0x1]
        %v524 = vld [vmem:[%s0 + $0x538] sm:$0x1]
        %v525 = vld [vmem:[%s284] sm:$0xff]
        %v526 = vld [vmem:[%s284 + $0x8] sm:$0xff]
        %v527 = vld [vmem:[%s284 + $0x10] sm:$0xff]
        %v528 = vld [vmem:[%s284 + $0x18] sm:$0xff]
        %v529 = vld [vmem:[%s284 + $0x20] sm:$0xff]
        %v530 = vld [vmem:[%s284 + $0x28] sm:$0xff]
        %v531 = vld [vmem:[%s284 + $0x30] sm:$0xff]
        %v532 = vld [vmem:[%s284 + $0x38] sm:$0xff]
        %v533 = vld [vmem:[%s284 + $0x40] sm:$0xff]
        %v534 = vld [vmem:[%s284 + $0x48] sm:$0xff]
        %v535 = vld [vmem:[%s284 + $0x50] sm:$0xff]
        %v536 = vld [vmem:[%s284 + $0x58] sm:$0xff]
        %v537 = vld [vmem:[%s284 + $0x60] sm:$0xff]
        %v538 = vld [vmem:[%s284 + $0x68] sm:$0xff]
        %v539 = vld [vmem:[%s284 + $0x70] sm:$0xff]
        %v540 = vld [vmem:[%s284 + $0x78] sm:$0xff]
        %v541 = vld [vmem:[%s284 + $0x80] sm:$0xff]
        %v542 = vld [vmem:[%s284 + $0x88] sm:$0xff]
        %v543 = vld [vmem:[%s284 + $0x90] sm:$0xff]
        %v544 = vld [vmem:[%s284 + $0x98] sm:$0xff]
        %v545 = vld [vmem:[%s284 + $0xa0] sm:$0xff]
        %v546 = vld [vmem:[%s284 + $0xa8] sm:$0xff]
        %v547 = vld [vmem:[%s284 + $0xb0] sm:$0xff]
        %v548 = vld [vmem:[%s284 + $0xb8] sm:$0xff]
        %v549 = vld [vmem:[%s284 + $0xc0] sm:$0xff]
        %v550 = vld [vmem:[%s284 + $0xc8] sm:$0xff]
        %v551 = vld [vmem:[%s284 + $0xd0] sm:$0xff]
        %v552 = vld [vmem:[%s284 + $0xd8] sm:$0xff]
        %v553 = vld [vmem:[%s284 + $0xe0] sm:$0xff]
        %v554 = vld [vmem:[%s284 + $0xe8] sm:$0xff]
        %v555 = vld [vmem:[%s284 + $0xf0] sm:$0xff]
        %v556 = vld [vmem:[%s284 + $0xf8] sm:$0xff]
        %v557 = vld [vmem:[%s284 + $0x100] sm:$0xff]
        %v558 = vld [vmem:[%s284 + $0x108] sm:$0xff]
        %v559 = vld [vmem:[%s284 + $0x110] sm:$0xff]
        %v560 = vld [vmem:[%s284 + $0x118] sm:$0xff]
        %v561 = vld [vmem:[%s284 + $0x120] sm:$0xff]
        %v562 = vld [vmem:[%s284 + $0x128] sm:$0xff]
        %v563 = vld [vmem:[%s284 + $0x130] sm:$0xff]
        %v564 = vld [vmem:[%s284 + $0x138] sm:$0xff]
        %v565 = vld [vmem:[%s284 + $0x140] sm:$0xff]
        %v566 = vld [vmem:[%s284 + $0x148] sm:$0xff]
        %v567 = vld [vmem:[%s284 + $0x150] sm:$0xff]
        %v568 = vld [vmem:[%s284 + $0x158] sm:$0xff]
        %v569 = vld [vmem:[%s284 + $0x160] sm:$0xff]
        %v570 = vld [vmem:[%s284 + $0x168] sm:$0xff]
        %v571 = vld [vmem:[%s284 + $0x170] sm:$0xff]
        %v572 = vld [vmem:[%s284 + $0x178] sm:$0xff]
        %v573 = vld [vmem:[%s284 + $0x180] sm:$0xff]
        %v574 = vld [vmem:[%s284 + $0x188] sm:$0xff]
        %v575 = vld [vmem:[%s284 + $0x190] sm:$0xff]
        %v576 = vld [vmem:[%s284 + $0x198] sm:$0xff]
        %v577 = vld [vmem:[%s284 + $0x1a0] sm:$0xff]
        %v578 = vld [vmem:[%s284 + $0x1a8] sm:$0xff]
        %v579 = vld [vmem:[%s284 + $0x1b0] sm:$0xff]
        %v580 = vld [vmem:[%s284 + $0x1b8] sm:$0xff]
        %v581 = vld [vmem:[%s284 + $0x1c0] sm:$0xff]
        %v582 = vld [vmem:[%s284 + $0x1c8] sm:$0xff]
        %v583 = vld [vmem:[%s284 + $0x1d0] sm:$0xff]
        %v584 = vld [vmem:[%s284 + $0x1d8] sm:$0xff]
        %v585 = vld [vmem:[%s284 + $0x1e0] sm:$0xff]
        %v586 = vld [vmem:[%s284 + $0x1e8] sm:$0xff]
        %v587 = vld [vmem:[%s284 + $0x1f0] sm:$0xff]
        %v588 = vld [vmem:[%s284 + $0x1f8] sm:$0xff]
        %v589 = vld [vmem:[%s284 + $0x200] sm:$0xff]
        %v590 = vld [vmem:[%s284 + $0x208] sm:$0xff]
        %v591 = vld [vmem:[%s284 + $0x210] sm:$0xff]
        %v592 = vld [vmem:[%s284 + $0x218] sm:$0xff]
        %v593 = vld [vmem:[%s284 + $0x220] sm:$0xff]
        %v594 = vld [vmem:[%s284 + $0x228] sm:$0xff]
        %v595 = vld [vmem:[%s284 + $0x230] sm:$0xff]
        %v596 = vld [vmem:[%s284 + $0x238] sm:$0xff]
        %v597 = vld [vmem:[%s284 + $0x240] sm:$0xff]
        %v598 = vld [vmem:[%s284 + $0x248] sm:$0xff]
        %v599 = vld [vmem:[%s284 + $0x250] sm:$0xff]
        %v600 = vld [vmem:[%s284 + $0x258] sm:$0xff]
        %v601 = vld [vmem:[%s284 + $0x260] sm:$0xff]
        %v602 = vld [vmem:[%s284 + $0x268] sm:$0xff]
        %v603 = vld [vmem:[%s284 + $0x270] sm:$0xff]
        %v604 = vld [vmem:[%s284 + $0x278] sm:$0xff]
        %v605 = vld [vmem:[%s284 + $0x280] sm:$0xff]
        %v606 = vld [vmem:[%s284 + $0x288] sm:$0xff]
        %v607 = vld [vmem:[%s284 + $0x290] sm:$0xff]
        %v608 = vld [vmem:[%s284 + $0x298] sm:$0xff]
        %v609 = vld [vmem:[%s284 + $0x2a0] sm:$0xff]
        %v610 = vld [vmem:[%s284 + $0x2a8] sm:$0xff]
        %v611 = vld [vmem:[%s284 + $0x2b0] sm:$0xff]
        %v612 = vld [vmem:[%s284 + $0x2b8] sm:$0xff]
        %v613 = vld [vmem:[%s284 + $0x2c0] sm:$0xff]
        %v614 = vld [vmem:[%s284 + $0x2c8] sm:$0xff]
        %v615 = vld [vmem:[%s284 + $0x2d0] sm:$0xff]
        %v616 = vld [vmem:[%s284 + $0x2d8] sm:$0xff]
        %v617 = vld [vmem:[%s284 + $0x2e0] sm:$0xff]
        %v618 = vld [vmem:[%s284 + $0x2e8] sm:$0xff]
        %v619 = vld [vmem:[%s284 + $0x2f0] sm:$0xff]
        %v620 = vld [vmem:[%s284 + $0x2f8] sm:$0xff]
        %v621 = vld [vmem:[%s284 + $0x300] sm:$0xff]
        %v622 = vld [vmem:[%s284 + $0x308] sm:$0xff]
        %v623 = vld [vmem:[%s284 + $0x310] sm:$0xff]
        %v624 = vld [vmem:[%s284 + $0x318] sm:$0xff]
        %v625 = vld [vmem:[%s284 + $0x320] sm:$0xff]
        %v626 = vld [vmem:[%s284 + $0x328] sm:$0xff]
        %v627 = vld [vmem:[%s284 + $0x330] sm:$0xff]
        %v628 = vld [vmem:[%s284 + $0x338] sm:$0xff]
        %v629 = vld [vmem:[%s284 + $0x340] sm:$0xff]
        %v630 = vld [vmem:[%s284 + $0x348] sm:$0xff]
        %v631 = vld [vmem:[%s284 + $0x350] sm:$0xff]
        %v632 = vld [vmem:[%s284 + $0x358] sm:$0xff]
        %v633 = vld [vmem:[%s284 + $0x360] sm:$0xff]
        %v634 = vld [vmem:[%s284 + $0x368] sm:$0xff]
        %v635 = vld [vmem:[%s284 + $0x370] sm:$0xff]
        %v636 = vld [vmem:[%s284 + $0x378] sm:$0xff]
        %v637 = vld [vmem:[%s284 + $0x380] sm:$0xff]
        %v638 = vld [vmem:[%s284 + $0x388] sm:$0xff]
        %v639 = vld [vmem:[%s284 + $0x390] sm:$0xff]
        %v640 = vld [vmem:[%s284 + $0x398] sm:$0xff]
        %v641 = vld [vmem:[%s284 + $0x3a0] sm:$0xff]
        %v642 = vld [vmem:[%s284 + $0x3a8] sm:$0xff]
        %v643 = vld [vmem:[%s284 + $0x3b0] sm:$0xff]
        %v644 = vld [vmem:[%s284 + $0x3b8] sm:$0xff]
        %v645 = vld [vmem:[%s284 + $0x3c0] sm:$0xff]
        %v646 = vld [vmem:[%s284 + $0x3c8] sm:$0xff]
        %v647 = vld [vmem:[%s284 + $0x3d0] sm:$0xff]
        %v648 = vld [vmem:[%s284 + $0x3d8] sm:$0xff]
        %v649 = vld [vmem:[%s284 + $0x3e0] sm:$0xff]
        %v650 = vld [vmem:[%s284 + $0x3e8] sm:$0xff]
        %v651 = vld [vmem:[%s284 + $0x3f0] sm:$0xff]
        %v652 = vld [vmem:[%s284 + $0x3f8] sm:$0xff]
        %v653 = vld [vmem:[%s284 + $0x400] sm:$0xff]
        %v654 = vld [vmem:[%s284 + $0x408] sm:$0xff]
        %v655 = vld [vmem:[%s284 + $0x410] sm:$0xff]
        %v656 = vld [vmem:[%s284 + $0x418] sm:$0xff]
        %v657 = vld [vmem:[%s284 + $0x420] sm:$0xff]
        %v658 = vld [vmem:[%s284 + $0x428] sm:$0xff]
        %v659 = vld [vmem:[%s284 + $0x430] sm:$0xff]
        %v660 = vld [vmem:[%s284 + $0x438] sm:$0xff]
        %v661 = vld [vmem:[%s284 + $0x440] sm:$0xff]
        %v662 = vld [vmem:[%s284 + $0x448] sm:$0xff]
        %v663 = vld [vmem:[%s284 + $0x450] sm:$0xff]
        %v664 = vld [vmem:[%s284 + $0x458] sm:$0xff]
        %v665 = vld [vmem:[%s284 + $0x460] sm:$0xff]
        %v666 = vld [vmem:[%s284 + $0x468] sm:$0xff]
        %v667 = vld [vmem:[%s284 + $0x470] sm:$0xff]
        %v668 = vld [vmem:[%s284 + $0x478] sm:$0xff]
        %v669 = vld [vmem:[%s284 + $0x480] sm:$0xff]
        %v670 = vld [vmem:[%s284 + $0x488] sm:$0xff]
        %v671 = vld [vmem:[%s284 + $0x490] sm:$0xff]
        %v672 = vld [vmem:[%s284 + $0x498] sm:$0xff]
        %v673 = vld [vmem:[%s284 + $0x4a0] sm:$0xff]
        %v674 = vld [vmem:[%s284 + $0x4a8] sm:$0xff]
        %v675 = vld [vmem:[%s284 + $0x4b0] sm:$0xff]
        %v676 = vld [vmem:[%s284 + $0x4b8] sm:$0xff]
        %v677 = vld [vmem:[%s284 + $0x4c0] sm:$0xff]
        %v678 = vld [vmem:[%s284 + $0x4c8] sm:$0xff]
        %v679 = vld [vmem:[%s284 + $0x4d0] sm:$0xff]
        %v680 = vld [vmem:[%s284 + $0x4d8] sm:$0xff]
        %v681 = vld [vmem:[%s284 + $0x4e0] sm:$0xff]
        %v682 = vld [vmem:[%s284 + $0x4e8] sm:$0xff]
        %v683 = vld [vmem:[%s284 + $0x4f0] sm:$0xff]
        %v684 = vld [vmem:[%s284 + $0x4f8] sm:$0xff]
        %v685 = vld [vmem:[%s284 + $0x500] sm:$0xff]
        %v686 = vld [vmem:[%s284 + $0x508] sm:$0xff]
        %v687 = vld [vmem:[%s284 + $0x510] sm:$0xff]
        %v688 = vld [vmem:[%s284 + $0x518] sm:$0xff]
        %v689 = vld [vmem:[%s284 + $0x520] sm:$0xff]
        %v690 = vld [vmem:[%s284 + $0x528] sm:$0xff]
        %v691 = vld [vmem:[%s284 + $0x530] sm:$0xff]
        %v692 = vld [vmem:[%s284 + $0x538] sm:$0xff]
        %v693 = vld [vmem:[%s284 + $0x540] sm:$0xff]
        %v694 = vld [vmem:[%s284 + $0x548] sm:$0xff]
        %v695 = vld [vmem:[%s284 + $0x550] sm:$0xff]
        %v696 = vld [vmem:[%s284 + $0x558] sm:$0xff]
        %v697 = vld [vmem:[%s284 + $0x560] sm:$0xff]
        %v698 = vld [vmem:[%s284 + $0x568] sm:$0xff]
        %v699 = vld [vmem:[%s284 + $0x570] sm:$0xff]
        %v700 = vld [vmem:[%s284 + $0x578] sm:$0xff]
        %v701 = vld [vmem:[%s284 + $0x580] sm:$0xff]
        %v702 = vld [vmem:[%s284 + $0x588] sm:$0xff]
        %v703 = vld [vmem:[%s284 + $0x590] sm:$0xff]
        %v704 = vld [vmem:[%s284 + $0x598] sm:$0xff]
        %v705 = vld [vmem:[%s284 + $0x5a0] sm:$0xff]
        %v706 = vld [vmem:[%s284 + $0x5a8] sm:$0xff]
        %v707 = vld [vmem:[%s284 + $0x5b0] sm:$0xff]
        %v708 = vld [vmem:[%s284 + $0x5b8] sm:$0xff]
        %v709 = vld [vmem:[%s284 + $0x5c0] sm:$0xff]
        %v710 = vld [vmem:[%s284 + $0x5c8] sm:$0xff]
        %v711 = vld [vmem:[%s284 + $0x5d0] sm:$0xff]
        %v712 = vld [vmem:[%s284 + $0x5d8] sm:$0xff]
        %v713 = vld [vmem:[%s284 + $0x5e0] sm:$0xff]
        %v714 = vld [vmem:[%s284 + $0x5e8] sm:$0xff]
        %v715 = vld [vmem:[%s284 + $0x5f0] sm:$0xff]
        %v716 = vld [vmem:[%s284 + $0x5f8] sm:$0xff]
        %v717 = vld [vmem:[%s284 + $0x600] sm:$0xff]
        %v718 = vld [vmem:[%s284 + $0x608] sm:$0xff]
        %v719 = vld [vmem:[%s284 + $0x610] sm:$0xff]
        %v720 = vld [vmem:[%s284 + $0x618] sm:$0xff]
        %v721 = vld [vmem:[%s284 + $0x620] sm:$0xff]
        %v722 = vld [vmem:[%s284 + $0x628] sm:$0xff]
        %v723 = vld [vmem:[%s284 + $0x630] sm:$0xff]
        %v724 = vld [vmem:[%s284 + $0x638] sm:$0xff]
        %v725 = vld [vmem:[%s284 + $0x640] sm:$0xff]
        %v726 = vld [vmem:[%s284 + $0x648] sm:$0xff]
        %v727 = vld [vmem:[%s284 + $0x650] sm:$0xff]
        %v728 = vld [vmem:[%s284 + $0x658] sm:$0xff]
        %v729 = vld [vmem:[%s284 + $0x660] sm:$0xff]
        %v730 = vld [vmem:[%s284 + $0x668] sm:$0xff]
        %v731 = vld [vmem:[%s284 + $0x670] sm:$0xff]
        %v732 = vld [vmem:[%s284 + $0x678] sm:$0xff]
        %v733 = vld [vmem:[%s284 + $0x680] sm:$0xff]
        %v734 = vld [vmem:[%s284 + $0x688] sm:$0xff]
        %v735 = vld [vmem:[%s284 + $0x690] sm:$0xff]
        %v736 = vld [vmem:[%s284 + $0x698] sm:$0xff]
        %v737 = vld [vmem:[%s284 + $0x6a0] sm:$0xff]
        %v738 = vld [vmem:[%s284 + $0x6a8] sm:$0xff]
        %v739 = vld [vmem:[%s284 + $0x6b0] sm:$0xff]
        %v740 = vld [vmem:[%s284 + $0x6b8] sm:$0xff]
        %v741 = vld [vmem:[%s284 + $0x6c0] sm:$0xff]
        %v742 = vld [vmem:[%s284 + $0x6c8] sm:$0xff]
        %v743 = vld [vmem:[%s284 + $0x6d0] sm:$0xff]
        %v744 = vld [vmem:[%s284 + $0x6d8] sm:$0xff]
        %v745 = vld [vmem:[%s284 + $0x6e0] sm:$0xff]
        %v746 = vld [vmem:[%s284 + $0x6e8] sm:$0xff]
        %v747 = vld [vmem:[%s284 + $0x6f0] sm:$0xff]
        %v748 = vld [vmem:[%s284 + $0x6f8] sm:$0xff]
        %v749 = vld [vmem:[%s284 + $0x700] sm:$0xff]
        %v750 = vld [vmem:[%s284 + $0x708] sm:$0xff]
        %v751 = vld [vmem:[%s284 + $0x710] sm:$0xff]
        %v752 = vld [vmem:[%s284 + $0x718] sm:$0xff]
        %v753 = vld [vmem:[%s284 + $0x720] sm:$0xff]
        %v754 = vld [vmem:[%s284 + $0x728] sm:$0xff]
        %v755 = vld [vmem:[%s284 + $0x730] sm:$0xff]
        %v756 = vld [vmem:[%s284 + $0x738] sm:$0xff]
        %v757 = vld [vmem:[%s284 + $0x740] sm:$0xff]
        %v758 = vld [vmem:[%s284 + $0x748] sm:$0xff]
        %v759 = vld [vmem:[%s284 + $0x750] sm:$0xff]
        %v760 = vld [vmem:[%s284 + $0x758] sm:$0xff]
        %v761 = vld [vmem:[%s284 + $0x760] sm:$0xff]
        %v762 = vld [vmem:[%s284 + $0x768] sm:$0xff]
        %v763 = vld [vmem:[%s284 + $0x770] sm:$0xff]
        %v764 = vld [vmem:[%s284 + $0x778] sm:$0xff]
        %v765 = vld [vmem:[%s284 + $0x780] sm:$0xff]
        %v766 = vld [vmem:[%s284 + $0x788] sm:$0xff]
        %v767 = vld [vmem:[%s284 + $0x790] sm:$0xff]
        %v768 = vld [vmem:[%s284 + $0x798] sm:$0xff]
        %v769 = vld [vmem:[%s284 + $0x7a0] sm:$0xff]
        %v770 = vld [vmem:[%s284 + $0x7a8] sm:$0xff]
        %v771 = vld [vmem:[%s284 + $0x7b0] sm:$0xff]
        %v772 = vld [vmem:[%s284 + $0x7b8] sm:$0xff]
        %v773 = vld [vmem:[%s284 + $0x7c0] sm:$0xff]
        %v774 = vld [vmem:[%s284 + $0x7c8] sm:$0xff]
        %v775 = vld [vmem:[%s284 + $0x7d0] sm:$0xff]
        %v776 = vld [vmem:[%s284 + $0x7d8] sm:$0xff]
        %v777 = vld [vmem:[%s284 + $0x7e0] sm:$0xff]
        %v778 = vld [vmem:[%s284 + $0x7e8] sm:$0xff]
        %v779 = vld [vmem:[%s284 + $0x7f0] sm:$0xff]
        %v780 = vld [vmem:[%s284 + $0x7f8] sm:$0xff]
        %v781 = vld [vmem:[%s284 + $0x800] sm:$0xff]
        %v782 = vld [vmem:[%s284 + $0x808] sm:$0xff]
        %v783 = vld [vmem:[%s284 + $0x810] sm:$0xff]
        %v784 = vld [vmem:[%s284 + $0x818] sm:$0xff]
        %v785 = vld [vmem:[%s284 + $0x820] sm:$0xff]
        %v786 = vld [vmem:[%s284 + $0x828] sm:$0xff]
        %v787 = vld [vmem:[%s284 + $0x830] sm:$0xff]
        %v788 = vld [vmem:[%s284 + $0x838] sm:$0xff]
        %v789 = vld [vmem:[%s284 + $0x840] sm:$0xff]
        %v790 = vld [vmem:[%s284 + $0x848] sm:$0xff]
        %v791 = vld [vmem:[%s284 + $0x850] sm:$0xff]
        %v792 = vld [vmem:[%s284 + $0x858] sm:$0xff]
        %v793 = vld [vmem:[%s284 + $0x860] sm:$0xff]
        %v794 = vld [vmem:[%s284 + $0x868] sm:$0xff]
        %v795 = vld [vmem:[%s284 + $0x870] sm:$0xff]
        %v796 = vld [vmem:[%s284 + $0x878] sm:$0xff]
        %v797 = vld [vmem:[%s284 + $0x880] sm:$0xff]
        %v798 = vld [vmem:[%s284 + $0x888] sm:$0xff]
        %v799 = vld [vmem:[%s284 + $0x890] sm:$0xff]
        %v800 = vld [vmem:[%s284 + $0x898] sm:$0xff]
        %v801 = vld [vmem:[%s284 + $0x8a0] sm:$0xff]
        %v802 = vld [vmem:[%s284 + $0x8a8] sm:$0xff]
        %v803 = vld [vmem:[%s284 + $0x8b0] sm:$0xff]
        %v804 = vld [vmem:[%s284 + $0x8b8] sm:$0xff]
        %v805 = vld [vmem:[%s284 + $0x8c0] sm:$0xff]
        %v806 = vld [vmem:[%s284 + $0x8c8] sm:$0xff]
        %v807 = vld [vmem:[%s284 + $0x8d0] sm:$0xff]
        %v808 = vld [vmem:[%s284 + $0x8d8] sm:$0xff]
        %v809 = vld [vmem:[%s284 + $0x8e0] sm:$0xff]
        %v810 = vld [vmem:[%s284 + $0x8e8] sm:$0xff]
        %v811 = vld [vmem:[%s284 + $0x8f0] sm:$0xff]
        %v812 = vld [vmem:[%s284 + $0x8f8] sm:$0xff]
        %v813 = vld [vmem:[%s284 + $0x900] sm:$0xff]
        %v814 = vld [vmem:[%s284 + $0x908] sm:$0xff]
        %v815 = vld [vmem:[%s284 + $0x910] sm:$0xff]
        %v816 = vld [vmem:[%s284 + $0x918] sm:$0xff]
        %v817 = vld [vmem:[%s284 + $0x920] sm:$0xff]
        %v818 = vld [vmem:[%s284 + $0x928] sm:$0xff]
        %v819 = vld [vmem:[%s284 + $0x930] sm:$0xff]
        %v820 = vld [vmem:[%s284 + $0x938] sm:$0xff]
        %v821 = vld [vmem:[%s284 + $0x940] sm:$0xff]
        %v822 = vld [vmem:[%s284 + $0x948] sm:$0xff]
        %v823 = vld [vmem:[%s284 + $0x950] sm:$0xff]
        %v824 = vld [vmem:[%s284 + $0x958] sm:$0xff]
        %v825 = vld [vmem:[%s284 + $0x960] sm:$0xff]
        %v826 = vld [vmem:[%s284 + $0x968] sm:$0xff]
        %v827 = vld [vmem:[%s284 + $0x970] sm:$0xff]
        %v828 = vld [vmem:[%s284 + $0x978] sm:$0xff]
        %v829 = vld [vmem:[%s284 + $0x980] sm:$0xff]
        %v830 = vld [vmem:[%s284 + $0x988] sm:$0xff]
        %v831 = vld [vmem:[%s284 + $0x990] sm:$0xff]
        %v832 = vld [vmem:[%s284 + $0x998] sm:$0xff]
        %v833 = vld [vmem:[%s284 + $0x9a0] sm:$0xff]
        %v834 = vld [vmem:[%s284 + $0x9a8] sm:$0xff]
        %v835 = vld [vmem:[%s284 + $0x9b0] sm:$0xff]
        %v836 = vld [vmem:[%s284 + $0x9b8] sm:$0xff]
        %v837 = vld [vmem:[%s284 + $0x9c0] sm:$0xff]
        %v838 = vld [vmem:[%s284 + $0x9c8] sm:$0xff]
        %v839 = vld [vmem:[%s284 + $0x9d0] sm:$0xff]
        %v840 = vld [vmem:[%s284 + $0x9d8] sm:$0xff]
        %v841 = vld [vmem:[%s284 + $0x9e0] sm:$0xff]
        %v842 = vld [vmem:[%s284 + $0x9e8] sm:$0xff]
        %v843 = vld [vmem:[%s284 + $0x9f0] sm:$0xff]
        %v844 = vld [vmem:[%s284 + $0x9f8] sm:$0xff]
        %v845 = vld [vmem:[%s284 + $0xa00] sm:$0xff]
        %v846 = vld [vmem:[%s284 + $0xa08] sm:$0xff]
        %v847 = vld [vmem:[%s284 + $0xa10] sm:$0xff]
        %v848 = vld [vmem:[%s284 + $0xa18] sm:$0xff]
        %v849 = vld [vmem:[%s284 + $0xa20] sm:$0xff]
        %v850 = vld [vmem:[%s284 + $0xa28] sm:$0xff]
        %v851 = vld [vmem:[%s284 + $0xa30] sm:$0xff]
        %v852 = vld [vmem:[%s284 + $0xa38] sm:$0xff]
        %v853 = vld [vmem:[%s284 + $0xa40] sm:$0xff]
        %v854 = vld [vmem:[%s284 + $0xa48] sm:$0xff]
        %v855 = vld [vmem:[%s284 + $0xa50] sm:$0xff]
        %v856 = vld [vmem:[%s284 + $0xa58] sm:$0xff]
        %v857 = vld [vmem:[%s284 + $0xa60] sm:$0xff]
        %v858 = vld [vmem:[%s284 + $0xa68] sm:$0xff]
        %v859 = vld [vmem:[%s284 + $0xa70] sm:$0xff]
        %v860 = vld [vmem:[%s284 + $0xa78] sm:$0xff]
        %v861 = vld [vmem:[%s284 + $0xa80] sm:$0xff]
        %v862 = vld [vmem:[%s284 + $0xa88] sm:$0xff]
        %v863 = vld [vmem:[%s284 + $0xa90] sm:$0xff]
        %v864 = vld [vmem:[%s284 + $0xa98] sm:$0xff]
        %v865 = vld [vmem:[%s284 + $0xaa0] sm:$0xff]
        %v866 = vld [vmem:[%s284 + $0xaa8] sm:$0xff]
        %v867 = vld [vmem:[%s284 + $0xab0] sm:$0xff]
        %v868 = vld [vmem:[%s284 + $0xab8] sm:$0xff]
        %v869 = vld [vmem:[%s284 + $0xac0] sm:$0xff]
        %v870 = vld [vmem:[%s284 + $0xac8] sm:$0xff]
        %v871 = vld [vmem:[%s284 + $0xad0] sm:$0xff]
        %v872 = vld [vmem:[%s284 + $0xad8] sm:$0xff]
        %v873 = vld [vmem:[%s284 + $0xae0] sm:$0xff]
        %v874 = vld [vmem:[%s284 + $0xae8] sm:$0xff]
        %v875 = vld [vmem:[%s284 + $0xaf0] sm:$0xff]
        %v876 = vld [vmem:[%s284 + $0xaf8] sm:$0xff]
        %v877 = vld [vmem:[%s284 + $0xb00] sm:$0xff]
        %v878 = vld [vmem:[%s284 + $0xb08] sm:$0xff]
        %v879 = vld [vmem:[%s284 + $0xb10] sm:$0xff]
        %v880 = vld [vmem:[%s284 + $0xb18] sm:$0xff]
        %v881 = vld [vmem:[%s284 + $0xb20] sm:$0xff]
        %v882 = vld [vmem:[%s284 + $0xb28] sm:$0xff]
        %v883 = vld [vmem:[%s284 + $0xb30] sm:$0xff]
        %v884 = vld [vmem:[%s284 + $0xb38] sm:$0xff]
        %v885 = vld [vmem:[%s284 + $0xb40] sm:$0xff]
        %v886 = vld [vmem:[%s284 + $0xb48] sm:$0xff]
        %v887 = vld [vmem:[%s284 + $0xb50] sm:$0xff]
        %v888 = vld [vmem:[%s284 + $0xb58] sm:$0xff]
        %v889 = vld [vmem:[%s284 + $0xb60] sm:$0xff]
        %v890 = vld [vmem:[%s284 + $0xb68] sm:$0xff]
        %v891 = vld [vmem:[%s284 + $0xb70] sm:$0xff]
        %v892 = vld [vmem:[%s284 + $0xb78] sm:$0xff]
        %v893 = vld [vmem:[%s284 + $0xb80] sm:$0xff]
        %v894 = vld [vmem:[%s284 + $0xb88] sm:$0xff]
        %v895 = vld [vmem:[%s284 + $0xb90] sm:$0xff]
        %v896 = vld [vmem:[%s284 + $0xb98] sm:$0xff]
        %v897 = vld [vmem:[%s284 + $0xba0] sm:$0xff]
        %v898 = vld [vmem:[%s284 + $0xba8] sm:$0xff]
        %v899 = vld [vmem:[%s284 + $0xbb0] sm:$0xff]
        %v900 = vld [vmem:[%s284 + $0xbb8] sm:$0xff]
        %v901 = vld [vmem:[%s284 + $0xbc0] sm:$0xff]
        %v902 = vld [vmem:[%s284 + $0xbc8] sm:$0xff]
        %v903 = vld [vmem:[%s284 + $0xbd0] sm:$0xff]
        %v904 = vld [vmem:[%s284 + $0xbd8] sm:$0xff]
        %v905 = vld [vmem:[%s284 + $0xbe0] sm:$0xff]
        %v906 = vld [vmem:[%s284 + $0xbe8] sm:$0xff]
        %v907 = vld [vmem:[%s284 + $0xbf0] sm:$0xff]
        %v908 = vld [vmem:[%s284 + $0xbf8] sm:$0xff]
        %v909 = vld [vmem:[%s284 + $0xc00] sm:$0xff]
        %v910 = vld [vmem:[%s284 + $0xc08] sm:$0xff]
        %v911 = vld [vmem:[%s284 + $0xc10] sm:$0xff]
        %v912 = vld [vmem:[%s284 + $0xc18] sm:$0xff]
        %v913 = vld [vmem:[%s284 + $0xc20] sm:$0xff]
        %v914 = vld [vmem:[%s284 + $0xc28] sm:$0xff]
        %v915 = vld [vmem:[%s284 + $0xc30] sm:$0xff]
        %v916 = vld [vmem:[%s284 + $0xc38] sm:$0xff]
        %v917 = vld [vmem:[%s284 + $0xc40] sm:$0xff]
        %v918 = vld [vmem:[%s284 + $0xc48] sm:$0xff]
        %v919 = vld [vmem:[%s284 + $0xc50] sm:$0xff]
        %v920 = vld [vmem:[%s284 + $0xc58] sm:$0xff]
        %v921 = vld [vmem:[%s284 + $0xc60] sm:$0xff]
        %v922 = vld [vmem:[%s284 + $0xc68] sm:$0xff]
        %v923 = vld [vmem:[%s284 + $0xc70] sm:$0xff]
        %v924 = vld [vmem:[%s284 + $0xc78] sm:$0xff]
        %v925 = vld [vmem:[%s284 + $0xc80] sm:$0xff]
        %v926 = vld [vmem:[%s284 + $0xc88] sm:$0xff]
        %v927 = vld [vmem:[%s284 + $0xc90] sm:$0xff]
        %v928 = vld [vmem:[%s284 + $0xc98] sm:$0xff]
        %v929 = vld [vmem:[%s284 + $0xca0] sm:$0xff]
        %v930 = vld [vmem:[%s284 + $0xca8] sm:$0xff]
        %v931 = vld [vmem:[%s284 + $0xcb0] sm:$0xff]
        %v932 = vld [vmem:[%s284 + $0xcb8] sm:$0xff]
        %v933 = vld [vmem:[%s284 + $0xcc0] sm:$0xff]
        %v934 = vld [vmem:[%s284 + $0xcc8] sm:$0xff]
        %v935 = vld [vmem:[%s284 + $0xcd0] sm:$0xff]
        %v936 = vld [vmem:[%s284 + $0xcd8] sm:$0xff]
        %v937 = vld [vmem:[%s284 + $0xce0] sm:$0xff]
        %v938 = vld [vmem:[%s284 + $0xce8] sm:$0xff]
        %v939 = vld [vmem:[%s284 + $0xcf0] sm:$0xff]
        %v940 = vld [vmem:[%s284 + $0xcf8] sm:$0xff]
        %v941 = vld [vmem:[%s284 + $0xd00] sm:$0xff]
        %v942 = vld [vmem:[%s284 + $0xd08] sm:$0xff]
        %v943 = vld [vmem:[%s284 + $0xd10] sm:$0xff]
        %v944 = vld [vmem:[%s284 + $0xd18] sm:$0xff]
        %v945 = vld [vmem:[%s284 + $0xd20] sm:$0xff]
        %v946 = vld [vmem:[%s284 + $0xd28] sm:$0xff]
        %v947 = vld [vmem:[%s284 + $0xd30] sm:$0xff]
        %v948 = vld [vmem:[%s284 + $0xd38] sm:$0xff]
        %v949 = vld [vmem:[%s284 + $0xd40] sm:$0xff]
        %v950 = vld [vmem:[%s284 + $0xd48] sm:$0xff]
        %v951 = vld [vmem:[%s284 + $0xd50] sm:$0xff]
        %v952 = vld [vmem:[%s284 + $0xd58] sm:$0xff]
        %v953 = vld [vmem:[%s284 + $0xd60] sm:$0xff]
        %v954 = vld [vmem:[%s284 + $0xd68] sm:$0xff]
        %v955 = vld [vmem:[%s284 + $0xd70] sm:$0xff]
        %v956 = vld [vmem:[%s284 + $0xd78] sm:$0xff]
        %v957 = vld [vmem:[%s284 + $0xd80] sm:$0xff]
        %v958 = vld [vmem:[%s284 + $0xd88] sm:$0xff]
        %v959 = vld [vmem:[%s284 + $0xd90] sm:$0xff]
        %v960 = vld [vmem:[%s284 + $0xd98] sm:$0xff]
        %v961 = vld [vmem:[%s284 + $0xda0] sm:$0xff]
        %v962 = vld [vmem:[%s284 + $0xda8] sm:$0xff]
        %v963 = vld [vmem:[%s284 + $0xdb0] sm:$0xff]
        %v964 = vld [vmem:[%s284 + $0xdb8] sm:$0xff]
        %v965 = vld [vmem:[%s284 + $0xdc0] sm:$0xff]
        %v966 = vld [vmem:[%s284 + $0xdc8] sm:$0xff]
        %v967 = vld [vmem:[%s284 + $0xdd0] sm:$0xff]
        %v968 = vld [vmem:[%s284 + $0xdd8] sm:$0xff]
        %v969 = vld [vmem:[%s284 + $0xde0] sm:$0xff]
        %v970 = vld [vmem:[%s284 + $0xde8] sm:$0xff]
        %v971 = vld [vmem:[%s284 + $0xdf0] sm:$0xff]
        %v972 = vld [vmem:[%s284 + $0xdf8] sm:$0xff]
        %v973 = vld [vmem:[%s284 + $0xe00] sm:$0xff]
        %v974 = vld [vmem:[%s284 + $0xe08] sm:$0xff]
        %v975 = vld [vmem:[%s284 + $0xe10] sm:$0xff]
        %v976 = vld [vmem:[%s284 + $0xe18] sm:$0xff]
        %v977 = vld [vmem:[%s284 + $0xe20] sm:$0xff]
        %v978 = vld [vmem:[%s284 + $0xe28] sm:$0xff]
        %v979 = vld [vmem:[%s284 + $0xe30] sm:$0xff]
        %v980 = vld [vmem:[%s284 + $0xe38] sm:$0xff]
        %v981 = vld [vmem:[%s284 + $0xe40] sm:$0xff]
        %v982 = vld [vmem:[%s284 + $0xe48] sm:$0xff]
        %v983 = vld [vmem:[%s284 + $0xe50] sm:$0xff]
        %v984 = vld [vmem:[%s284 + $0xe58] sm:$0xff]
        %v985 = vld [vmem:[%s284 + $0xe60] sm:$0xff]
        %v986 = vld [vmem:[%s284 + $0xe68] sm:$0xff]
        %v987 = vld [vmem:[%s284 + $0xe70] sm:$0xff]
        %v988 = vld [vmem:[%s284 + $0xe78] sm:$0xff]
        %v989 = vld [vmem:[%s284 + $0xe80] sm:$0xff]
        %v990 = vld [vmem:[%s284 + $0xe88] sm:$0xff]
        %v991 = vld [vmem:[%s284 + $0xe90] sm:$0xff]
        %v992 = vld [vmem:[%s284 + $0xe98] sm:$0xff]
        %v993 = vld [vmem:[%s284 + $0xea0] sm:$0xff]
        %v994 = vld [vmem:[%s284 + $0xea8] sm:$0xff]
        %v995 = vld [vmem:[%s284 + $0xeb0] sm:$0xff]
        %v996 = vld [vmem:[%s284 + $0xeb8] sm:$0xff]
        %v997 = vld [vmem:[%s284 + $0xec0] sm:$0xff]
        %v998 = vld [vmem:[%s284 + $0xec8] sm:$0xff]
        %v999 = vld [vmem:[%s284 + $0xed0] sm:$0xff]
        %v1000 = vld [vmem:[%s284 + $0xed8] sm:$0xff]
        %v1001 = vld [vmem:[%s284 + $0xee0] sm:$0xff]
        %v1002 = vld [vmem:[%s284 + $0xee8] sm:$0xff]
        %v1003 = vld [vmem:[%s284 + $0xef0] sm:$0xff]
        %v1004 = vld [vmem:[%s284 + $0xef8] sm:$0xff]
        %v1005 = vld [vmem:[%s284 + $0xf00] sm:$0xff]
        %v1006 = vld [vmem:[%s284 + $0xf08] sm:$0xff]
        %v1007 = vld [vmem:[%s284 + $0xf10] sm:$0xff]
        %v1008 = vld [vmem:[%s284 + $0xf18] sm:$0xff]
        %v1009 = vld [vmem:[%s284 + $0xf20] sm:$0xff]
        %v1010 = vld [vmem:[%s284 + $0xf28] sm:$0xff]
        %v1011 = vld [vmem:[%s284 + $0xf30] sm:$0xff]
        %v1012 = vld [vmem:[%s284 + $0xf38] sm:$0xff]
        %v1013 = vld [vmem:[%s284 + $0xf40] sm:$0xff]
        %v1014 = vld [vmem:[%s284 + $0xf48] sm:$0xff]
        %v1015 = vld [vmem:[%s284 + $0xf50] sm:$0xff]
        %v1016 = vld [vmem:[%s284 + $0xf58] sm:$0xff]
        %v1017 = vld [vmem:[%s284 + $0xf60] sm:$0xff]
        %v1018 = vld [vmem:[%s284 + $0xf68] sm:$0xff]
        %v1019 = vld [vmem:[%s284 + $0xf70] sm:$0xff]
        %v1020 = vld [vmem:[%s284 + $0xf78] sm:$0xff]
        %v1021 = vld [vmem:[%s284 + $0xf80] sm:$0xff]
        %v1022 = vld [vmem:[%s284 + $0xf88] sm:$0xff]
        %v1023 = vld [vmem:[%s284 + $0xf90] sm:$0xff]
        %v1024 = vld [vmem:[%s284 + $0xf98] sm:$0xff]
        %v1025 = vld [vmem:[%s284 + $0xfa0] sm:$0xff]
        %v1026 = vld [vmem:[%s284 + $0xfa8] sm:$0xff]
        %v1027 = vld [vmem:[%s284 + $0xfb0] sm:$0xff]
        %v1028 = vld [vmem:[%s284 + $0xfb8] sm:$0xff]
        %v1029 = vld [vmem:[%s284 + $0xfc0] sm:$0xff]
        %v1030 = vld [vmem:[%s284 + $0xfc8] sm:$0xff]
        %v1031 = vld [vmem:[%s284 + $0xfd0] sm:$0xff]
        %v1032 = vld [vmem:[%s284 + $0xfd8] sm:$0xff]
        %v1033 = vld [vmem:[%s284 + $0xfe0] sm:$0xff]
        %v1034 = vld [vmem:[%s284 + $0xfe8] sm:$0xff]
        %v1035 = vld [vmem:[%s284 + $0xff0] sm:$0xff]
        %v1036 = vld [vmem:[%s284 + $0xff8] sm:$0xff]
        %v1037 = vld [vmem:[%s284 + $0x1000] sm:$0xff]
        %v1038 = vld [vmem:[%s284 + $0x1008] sm:$0xff]
        %v1039 = vld [vmem:[%s284 + $0x1010] sm:$0xff]
        %v1040 = vld [vmem:[%s284 + $0x1018] sm:$0xff]
        %v1041 = vld [vmem:[%s284 + $0x1020] sm:$0xff]
        %v1042 = vld [vmem:[%s284 + $0x1028] sm:$0xff]
        %v1043 = vld [vmem:[%s284 + $0x1030] sm:$0xff]
        %v1044 = vld [vmem:[%s284 + $0x1038] sm:$0xff]
        %v1045 = vld [vmem:[%s284 + $0x1040] sm:$0xff]
        %v1046 = vld [vmem:[%s284 + $0x1048] sm:$0xff]
        %v1047 = vld [vmem:[%s284 + $0x1050] sm:$0xff]
        %v1048 = vld [vmem:[%s284 + $0x1058] sm:$0xff]
        %v1049 = vld [vmem:[%s284 + $0x1060] sm:$0xff]
        %v1050 = vld [vmem:[%s284 + $0x1068] sm:$0xff]
        %v1051 = vld [vmem:[%s284 + $0x1070] sm:$0xff]
        %v1052 = vld [vmem:[%s284 + $0x1078] sm:$0xff]
        %v1053 = vld [vmem:[%s284 + $0x1080] sm:$0xff]
        %v1054 = vld [vmem:[%s284 + $0x1088] sm:$0xff]
        %v1055 = vld [vmem:[%s284 + $0x1090] sm:$0xff]
        %v1056 = vld [vmem:[%s284 + $0x1098] sm:$0xff]
        %v1057 = vld [vmem:[%s284 + $0x10a0] sm:$0xff]
        %v1058 = vld [vmem:[%s284 + $0x10a8] sm:$0xff]
        %v1059 = vld [vmem:[%s284 + $0x10b0] sm:$0xff]
        %v1060 = vld [vmem:[%s284 + $0x10b8] sm:$0xff]
        %v1061 = vld [vmem:[%s284 + $0x10c0] sm:$0xff]
        %v1062 = vld [vmem:[%s284 + $0x10c8] sm:$0xff]
        %v1063 = vld [vmem:[%s284 + $0x10d0] sm:$0xff]
        %v1064 = vld [vmem:[%s284 + $0x10d8] sm:$0xff]
        %v1065 = vld [vmem:[%s284 + $0x10e0] sm:$0xff]
        %v1066 = vld [vmem:[%s284 + $0x10e8] sm:$0xff]
        %v1067 = vld [vmem:[%s284 + $0x10f0] sm:$0xff]
        %v1068 = vld [vmem:[%s284 + $0x10f8] sm:$0xff]
        %v1069 = vld [vmem:[%s284 + $0x1100] sm:$0xff]
        %v1070 = vld [vmem:[%s284 + $0x1108] sm:$0xff]
        %v1071 = vld [vmem:[%s284 + $0x1110] sm:$0xff]
        %v1072 = vld [vmem:[%s284 + $0x1118] sm:$0xff]
        %v1073 = vld [vmem:[%s284 + $0x1120] sm:$0xff]
        %v1074 = vld [vmem:[%s284 + $0x1128] sm:$0xff]
        %v1075 = vld [vmem:[%s284 + $0x1130] sm:$0xff]
        %v1076 = vld [vmem:[%s284 + $0x1138] sm:$0xff]
        %v1077 = vld [vmem:[%s284 + $0x1140] sm:$0xff]
        %v1078 = vld [vmem:[%s284 + $0x1148] sm:$0xff]
        %v1079 = vld [vmem:[%s284 + $0x1150] sm:$0xff]
        %v1080 = vld [vmem:[%s284 + $0x1158] sm:$0xff]
        %v1081 = vld [vmem:[%s284 + $0x1160] sm:$0xff]
        %v1082 = vld [vmem:[%s284 + $0x1168] sm:$0xff]
        %v1083 = vld [vmem:[%s284 + $0x1170] sm:$0xff]
        %v1084 = vld [vmem:[%s284 + $0x1178] sm:$0xff]
        %v1085 = vld [vmem:[%s284 + $0x1180] sm:$0xff]
        %v1086 = vld [vmem:[%s284 + $0x1188] sm:$0xff]
        %v1087 = vld [vmem:[%s284 + $0x1190] sm:$0xff]
        %v1088 = vld [vmem:[%s284 + $0x1198] sm:$0xff]
        %v1089 = vld [vmem:[%s284 + $0x11a0] sm:$0xff]
        %v1090 = vld [vmem:[%s284 + $0x11a8] sm:$0xff]
        %v1091 = vld [vmem:[%s284 + $0x11b0] sm:$0xff]
        %v1092 = vld [vmem:[%s284 + $0x11b8] sm:$0xff]
        %v1093 = vld [vmem:[%s284 + $0x11c0] sm:$0xff]
        %v1094 = vld [vmem:[%s284 + $0x11c8] sm:$0xff]
        %v1095 = vld [vmem:[%s284 + $0x11d0] sm:$0xff]
        %v1096 = vld [vmem:[%s284 + $0x11d8] sm:$0xff]
        %v1097 = vld [vmem:[%s284 + $0x11e0] sm:$0xff]
        %v1098 = vld [vmem:[%s284 + $0x11e8] sm:$0xff]
        %v1099 = vld [vmem:[%s284 + $0x11f0] sm:$0xff]
        %v1100 = vld [vmem:[%s284 + $0x11f8] sm:$0xff]
        %v1101 = vld [vmem:[%s284 + $0x1200] sm:$0xff]
        %v1102 = vld [vmem:[%s284 + $0x1208] sm:$0xff]
        %v1103 = vld [vmem:[%s284 + $0x1210] sm:$0xff]
        %v1104 = vld [vmem:[%s284 + $0x1218] sm:$0xff]
        %v1105 = vld [vmem:[%s284 + $0x1220] sm:$0xff]
        %v1106 = vld [vmem:[%s284 + $0x1228] sm:$0xff]
        %v1107 = vld [vmem:[%s284 + $0x1230] sm:$0xff]
        %v1108 = vld [vmem:[%s284 + $0x1238] sm:$0xff]
        %v1109 = vld [vmem:[%s284 + $0x1240] sm:$0xff]
        %v1110 = vld [vmem:[%s284 + $0x1248] sm:$0xff]
        %v1111 = vld [vmem:[%s284 + $0x1250] sm:$0xff]
        %v1112 = vld [vmem:[%s284 + $0x1258] sm:$0xff]
        %v1113 = vld [vmem:[%s284 + $0x1260] sm:$0xff]
        %v1114 = vld [vmem:[%s284 + $0x1268] sm:$0xff]
        %v1115 = vld [vmem:[%s284 + $0x1270] sm:$0xff]
        %v1116 = vld [vmem:[%s284 + $0x1278] sm:$0xff]
        %v1117 = vld [vmem:[%s284 + $0x1280] sm:$0xff]
        %v1118 = vld [vmem:[%s284 + $0x1288] sm:$0xff]
        %v1119 = vld [vmem:[%s284 + $0x1290] sm:$0xff]
        %v1120 = vld [vmem:[%s284 + $0x1298] sm:$0xff]
        %v1121 = vld [vmem:[%s284 + $0x12a0] sm:$0xff]
        %v1122 = vld [vmem:[%s284 + $0x12a8] sm:$0xff]
        %v1123 = vld [vmem:[%s284 + $0x12b0] sm:$0xff]
        %v1124 = vld [vmem:[%s284 + $0x12b8] sm:$0xff]
        %v1125 = vld [vmem:[%s284 + $0x12c0] sm:$0xff]
        %v1126 = vld [vmem:[%s284 + $0x12c8] sm:$0xff]
        %v1127 = vld [vmem:[%s284 + $0x12d0] sm:$0xff]
        %v1128 = vld [vmem:[%s284 + $0x12d8] sm:$0xff]
        %v1129 = vld [vmem:[%s284 + $0x12e0] sm:$0xff]
        %v1130 = vld [vmem:[%s284 + $0x12e8] sm:$0xff]
        %v1131 = vld [vmem:[%s284 + $0x12f0] sm:$0xff]
        %v1132 = vld [vmem:[%s284 + $0x12f8] sm:$0xff]
        %v1133 = vld [vmem:[%s284 + $0x1300] sm:$0xff]
        %v1134 = vld [vmem:[%s284 + $0x1308] sm:$0xff]
        %v1135 = vld [vmem:[%s284 + $0x1310] sm:$0xff]
        %v1136 = vld [vmem:[%s284 + $0x1318] sm:$0xff]
        %v1137 = vld [vmem:[%s284 + $0x1320] sm:$0xff]
        %v1138 = vld [vmem:[%s284 + $0x1328] sm:$0xff]
        %v1139 = vld [vmem:[%s284 + $0x1330] sm:$0xff]
        %v1140 = vld [vmem:[%s284 + $0x1338] sm:$0xff]
        %v1141 = vld [vmem:[%s284 + $0x1340] sm:$0xff]
        %v1142 = vld [vmem:[%s284 + $0x1348] sm:$0xff]
        %v1143 = vld [vmem:[%s284 + $0x1350] sm:$0xff]
        %v1144 = vld [vmem:[%s284 + $0x1358] sm:$0xff]
        %v1145 = vld [vmem:[%s284 + $0x1360] sm:$0xff]
        %v1146 = vld [vmem:[%s284 + $0x1368] sm:$0xff]
        %v1147 = vld [vmem:[%s284 + $0x1370] sm:$0xff]
        %v1148 = vld [vmem:[%s284 + $0x1378] sm:$0xff]
        %v1149 = vld [vmem:[%s284 + $0x1380] sm:$0xff]
        %v1150 = vld [vmem:[%s284 + $0x1388] sm:$0xff]
        %v1151 = vld [vmem:[%s284 + $0x1390] sm:$0xff]
        %v1152 = vld [vmem:[%s284 + $0x1398] sm:$0xff]
        %v1153 = vld [vmem:[%s284 + $0x13a0] sm:$0xff]
        %v1154 = vld [vmem:[%s284 + $0x13a8] sm:$0xff]
        %v1155 = vld [vmem:[%s284 + $0x13b0] sm:$0xff]
        %v1156 = vld [vmem:[%s284 + $0x13b8] sm:$0xff]
        %v1157 = vld [vmem:[%s284 + $0x13c0] sm:$0xff]
        %v1158 = vld [vmem:[%s284 + $0x13c8] sm:$0xff]
        %v1159 = vld [vmem:[%s284 + $0x13d0] sm:$0xff]
        %v1160 = vld [vmem:[%s284 + $0x13d8] sm:$0xff]
        %v1161 = vld [vmem:[%s284 + $0x13e0] sm:$0xff]
        %v1162 = vld [vmem:[%s284 + $0x13e8] sm:$0xff]
        %v1163 = vld [vmem:[%s284 + $0x13f0] sm:$0xff]
        %v1164 = vld [vmem:[%s284 + $0x13f8] sm:$0xff]
        %v1165 = vld [vmem:[%s284 + $0x1400] sm:$0xff]
        %v1166 = vld [vmem:[%s284 + $0x1408] sm:$0xff]
        %v1167 = vld [vmem:[%s284 + $0x1410] sm:$0xff]
        %v1168 = vld [vmem:[%s284 + $0x1418] sm:$0xff]
        %v1169 = vld [vmem:[%s284 + $0x1420] sm:$0xff]
        %v1170 = vld [vmem:[%s284 + $0x1428] sm:$0xff]
        %v1171 = vld [vmem:[%s284 + $0x1430] sm:$0xff]
        %v1172 = vld [vmem:[%s284 + $0x1438] sm:$0xff]
        %v1173 = vld [vmem:[%s284 + $0x1440] sm:$0xff]
        %v1174 = vld [vmem:[%s284 + $0x1448] sm:$0xff]
        %v1175 = vld [vmem:[%s284 + $0x1450] sm:$0xff]
        %v1176 = vld [vmem:[%s284 + $0x1458] sm:$0xff]
        %v1177 = vld [vmem:[%s284 + $0x1460] sm:$0xff]
        %v1178 = vld [vmem:[%s284 + $0x1468] sm:$0xff]
        %v1179 = vld [vmem:[%s284 + $0x1470] sm:$0xff]
        %v1180 = vld [vmem:[%s284 + $0x1478] sm:$0xff]
        %v1181 = vld [vmem:[%s284 + $0x1480] sm:$0xff]
        %v1182 = vld [vmem:[%s284 + $0x1488] sm:$0xff]
        %v1183 = vld [vmem:[%s284 + $0x1490] sm:$0xff]
        %v1184 = vld [vmem:[%s284 + $0x1498] sm:$0xff]
        %v1185 = vld [vmem:[%s284 + $0x14a0] sm:$0xff]
        %v1186 = vld [vmem:[%s284 + $0x14a8] sm:$0xff]
        %v1187 = vld [vmem:[%s284 + $0x14b0] sm:$0xff]
        %v1188 = vld [vmem:[%s284 + $0x14b8] sm:$0xff]
        %v1189 = vld [vmem:[%s284 + $0x14c0] sm:$0xff]
        %v1190 = vld [vmem:[%s284 + $0x14c8] sm:$0xff]
        %v1191 = vld [vmem:[%s284 + $0x14d0] sm:$0xff]
        %v1192 = vld [vmem:[%s284 + $0x14d8] sm:$0xff]
        %v1193 = vld [vmem:[%s284 + $0x14e0] sm:$0xff]
        %v1194 = vld [vmem:[%s284 + $0x14e8] sm:$0xff]
        %v1195 = vld [vmem:[%s284 + $0x14f0] sm:$0xff]
        %v1196 = vld [vmem:[%s284 + $0x14f8] sm:$0xff]
        %v1197 = vld [vmem:[%s284 + $0x1500] sm:$0xff]
        %v1198 = vld [vmem:[%s284 + $0x1508] sm:$0xff]
        %v1199 = vld [vmem:[%s284 + $0x1510] sm:$0xff]
        %v1200 = vld [vmem:[%s284 + $0x1518] sm:$0xff]
        %v1201 = vld [vmem:[%s284 + $0x1520] sm:$0xff]
        %v1202 = vld [vmem:[%s284 + $0x1528] sm:$0xff]
        %v1203 = vld [vmem:[%s284 + $0x1530] sm:$0xff]
        %v1204 = vld [vmem:[%s284 + $0x1538] sm:$0xff]
        %v1205 = vld [vmem:[%s284 + $0x1540] sm:$0xff]
        %v1206 = vld [vmem:[%s284 + $0x1548] sm:$0xff]
        %v1207 = vld [vmem:[%s284 + $0x1550] sm:$0xff]
        %v1208 = vld [vmem:[%s284 + $0x1558] sm:$0xff]
        %v1209 = vld [vmem:[%s284 + $0x1560] sm:$0xff]
        %v1210 = vld [vmem:[%s284 + $0x1568] sm:$0xff]
        %v1211 = vld [vmem:[%s284 + $0x1570] sm:$0xff]
        %v1212 = vld [vmem:[%s284 + $0x1578] sm:$0xff]
        %v1213 = vld [vmem:[%s284 + $0x1580] sm:$0xff]
        %v1214 = vld [vmem:[%s284 + $0x1588] sm:$0xff]
        %v1215 = vld [vmem:[%s284 + $0x1590] sm:$0xff]
        %v1216 = vld [vmem:[%s284 + $0x1598] sm:$0xff]
        %v1217 = vld [vmem:[%s284 + $0x15a0] sm:$0xff]
        %v1218 = vld [vmem:[%s284 + $0x15a8] sm:$0xff]
        %v1219 = vld [vmem:[%s284 + $0x15b0] sm:$0xff]
        %v1220 = vld [vmem:[%s284 + $0x15b8] sm:$0xff]
        %v1221 = vld [vmem:[%s284 + $0x15c0] sm:$0xff]
        %v1222 = vld [vmem:[%s284 + $0x15c8] sm:$0xff]
        %v1223 = vld [vmem:[%s284 + $0x15d0] sm:$0xff]
        %v1224 = vld [vmem:[%s284 + $0x15d8] sm:$0xff]
        %v1225 = vld [vmem:[%s284 + $0x15e0] sm:$0xff]
        %v1226 = vld [vmem:[%s284 + $0x15e8] sm:$0xff]
        %v1227 = vld [vmem:[%s284 + $0x15f0] sm:$0xff]
        %v1228 = vld [vmem:[%s284 + $0x15f8] sm:$0xff]
        %v1229 = vld [vmem:[%s284 + $0x1600] sm:$0xff]
        %v1230 = vld [vmem:[%s284 + $0x1608] sm:$0xff]
        %v1231 = vld [vmem:[%s284 + $0x1610] sm:$0xff]
        %v1232 = vld [vmem:[%s284 + $0x1618] sm:$0xff]
        %v1233 = vld [vmem:[%s284 + $0x1620] sm:$0xff]
        %v1234 = vld [vmem:[%s284 + $0x1628] sm:$0xff]
        %v1235 = vld [vmem:[%s284 + $0x1630] sm:$0xff]
        %v1236 = vld [vmem:[%s284 + $0x1638] sm:$0xff]
        %v1237 = vld [vmem:[%s284 + $0x1640] sm:$0xff]
        %v1238 = vld [vmem:[%s284 + $0x1648] sm:$0xff]
        %v1239 = vld [vmem:[%s284 + $0x1650] sm:$0xff]
        %v1240 = vld [vmem:[%s284 + $0x1658] sm:$0xff]
        %v1241 = vld [vmem:[%s284 + $0x1660] sm:$0xff]
        %v1242 = vld [vmem:[%s284 + $0x1668] sm:$0xff]
        %v1243 = vld [vmem:[%s284 + $0x1670] sm:$0xff]
        %v1244 = vld [vmem:[%s284 + $0x1678] sm:$0xff]
        %v1245 = vld [vmem:[%s284 + $0x1680] sm:$0xff]
        %v1246 = vld [vmem:[%s284 + $0x1688] sm:$0xff]
        %v1247 = vld [vmem:[%s284 + $0x1690] sm:$0xff]
        %v1248 = vld [vmem:[%s284 + $0x1698] sm:$0xff]
        %v1249 = vld [vmem:[%s284 + $0x16a0] sm:$0xff]
        %v1250 = vld [vmem:[%s284 + $0x16a8] sm:$0xff]
        %v1251 = vld [vmem:[%s284 + $0x16b0] sm:$0xff]
        %v1252 = vld [vmem:[%s284 + $0x16b8] sm:$0xff]
        %v1253 = vld [vmem:[%s284 + $0x16c0] sm:$0xff]
        %v1254 = vld [vmem:[%s284 + $0x16c8] sm:$0xff]
        %v1255 = vld [vmem:[%s284 + $0x16d0] sm:$0xff]
        %v1256 = vld [vmem:[%s284 + $0x16d8] sm:$0xff]
        %v1257 = vld [vmem:[%s284 + $0x16e0] sm:$0xff]
        %v1258 = vld [vmem:[%s284 + $0x16e8] sm:$0xff]
        %v1259 = vld [vmem:[%s284 + $0x16f0] sm:$0xff]
        %v1260 = vld [vmem:[%s284 + $0x16f8] sm:$0xff]
        %v1261 = vld [vmem:[%s284 + $0x1700] sm:$0xff]
        %v1262 = vld [vmem:[%s284 + $0x1708] sm:$0xff]
        %v1263 = vld [vmem:[%s284 + $0x1710] sm:$0xff]
        %v1264 = vld [vmem:[%s284 + $0x1718] sm:$0xff]
        %v1265 = vld [vmem:[%s284 + $0x1720] sm:$0xff]
        %v1266 = vld [vmem:[%s284 + $0x1728] sm:$0xff]
        %v1267 = vld [vmem:[%s284 + $0x1730] sm:$0xff]
        %v1268 = vld [vmem:[%s284 + $0x1738] sm:$0xff]
        %v1269 = vld [vmem:[%s284 + $0x1740] sm:$0xff]
        %v1270 = vld [vmem:[%s284 + $0x1748] sm:$0xff]
        %v1271 = vld [vmem:[%s284 + $0x1750] sm:$0xff]
        %v1272 = vld [vmem:[%s284 + $0x1758] sm:$0xff]
        %v1273 = vld [vmem:[%s284 + $0x1760] sm:$0xff]
        %v1274 = vld [vmem:[%s284 + $0x1768] sm:$0xff]
        %v1275 = vld [vmem:[%s284 + $0x1770] sm:$0xff]
        %v1276 = vld [vmem:[%s284 + $0x1778] sm:$0xff]
        %v1277 = vld [vmem:[%s284 + $0x1780] sm:$0xff]
        %v1278 = vld [vmem:[%s284 + $0x1788] sm:$0xff]
        %v1279 = vld [vmem:[%s284 + $0x1790] sm:$0xff]
        %v1280 = vld [vmem:[%s284 + $0x1798] sm:$0xff]
        %v1281 = vld [vmem:[%s284 + $0x17a0] sm:$0xff]
        %v1282 = vld [vmem:[%s284 + $0x17a8] sm:$0xff]
        %v1283 = vld [vmem:[%s284 + $0x17b0] sm:$0xff]
        %v1284 = vld [vmem:[%s284 + $0x17b8] sm:$0xff]
        %v1285 = vld [vmem:[%s284 + $0x17c0] sm:$0xff]
        %v1286 = vld [vmem:[%s284 + $0x17c8] sm:$0xff]
        %v1287 = vld [vmem:[%s284 + $0x17d0] sm:$0xff]
        %v1288 = vld [vmem:[%s284 + $0x17d8] sm:$0xff]
        %v1289 = vld [vmem:[%s284 + $0x17e0] sm:$0xff]
        %v1290 = vld [vmem:[%s284 + $0x17e8] sm:$0xff]
        %v1291 = vld [vmem:[%s284 + $0x17f0] sm:$0xff]
        %v1292 = vld [vmem:[%s284 + $0x17f8] sm:$0xff]
        %v1293 = vld [vmem:[%s293] sm:$0x3]
        %v1295 = vlaneseq
        %v1296 = vshrl.u32 %v1295, 7
        %v1297 = vsub.s32 0, %v1296
        %v1298 = vrot.slane %v1293, %v1297
        %v1299 = vlaneseq
        %v1300 = vshrl.u32 %v1299, 7
        %v1301 = vsub.s32 1, %v1300
        %v1302 = vrot.slane %v1293, %v1301
        %1305 = vmatprep.subr.mxu0 %v556
        %1306 = vmatpush1.msra.mxu0 %v555
        %1307 = vmatprep.subr.mxu0 %v554
        %1308 = vmatpush1.msra.mxu0 %v553
        %1309 = vmatprep.subr.mxu0 %v552
        %1310 = vmatpush1.msra.mxu0 %v551
        %1311 = vmatprep.subr.mxu0 %v550
        %1312 = vmatpush1.msra.mxu0 %v549
        %1313 = vmatprep.subr.mxu0 %v548
        %1314 = vmatpush1.msra.mxu0 %v547
        %1315 = vmatprep.subr.mxu0 %v546
        %1316 = vmatpush1.msra.mxu0 %v545
        %1317 = vmatprep.subr.mxu0 %v544
        %1318 = vmatpush1.msra.mxu0 %v543
        %1319 = vmatprep.subr.mxu0 %v542
        %1320 = vmatpush1.msra.mxu0 %v541
        %1321 = vmatprep.subr.mxu0 %v540
        %1322 = vmatpush1.msra.mxu0 %v539
        %1323 = vmatprep.subr.mxu0 %v538
        %1324 = vmatpush1.msra.mxu0 %v537
        %1325 = vmatprep.subr.mxu0 %v536
        %1326 = vmatpush1.msra.mxu0 %v535
        %1327 = vmatprep.subr.mxu0 %v534
        %1328 = vmatpush1.msra.mxu0 %v533
        %1329 = vmatprep.subr.mxu0 %v532
        %1330 = vmatpush1.msra.mxu0 %v531
        %1331 = vmatprep.subr.mxu0 %v530
        %1332 = vmatpush1.msra.mxu0 %v529
        %1333 = vmatprep.subr.mxu0 %v528
        %1334 = vmatpush1.msra.mxu0 %v527
        %1335 = vmatprep.subr.mxu0 %v526
        %1336 = vmatpush1.msra.mxu0 %v525
        %1337 = vmatprep.subr.mxu0 %v588
        %1338 = vmatpush2.msra.mxu0 %v587
        %1339 = vmatprep.subr.mxu0 %v586
        %1340 = vmatpush2.msra.mxu0 %v585
        %1341 = vmatprep.subr.mxu0 %v584
        %1342 = vmatpush2.msra.mxu0 %v583
        %1343 = vmatprep.subr.mxu0 %v582
        %1344 = vmatpush2.msra.mxu0 %v581
        %1345 = vmatprep.subr.mxu0 %v580
        %1346 = vmatpush2.msra.mxu0 %v579
        %1347 = vmatprep.subr.mxu0 %v578
        %1348 = vmatpush2.msra.mxu0 %v577
        %1349 = vmatprep.subr.mxu0 %v576
        %1350 = vmatpush2.msra.mxu0 %v575
        %1351 = vmatprep.subr.mxu0 %v574
        %1352 = vmatpush2.msra.mxu0 %v573
        %1353 = vmatprep.subr.mxu0 %v572
        %1354 = vmatpush2.msra.mxu0 %v571
        %1355 = vmatprep.subr.mxu0 %v570
        %1356 = vmatpush2.msra.mxu0 %v569
        %1357 = vmatprep.subr.mxu0 %v568
        %1358 = vmatpush2.msra.mxu0 %v567
        %1359 = vmatprep.subr.mxu0 %v566
        %1360 = vmatpush2.msra.mxu0 %v565
        %1361 = vmatprep.subr.mxu0 %v564
        %1362 = vmatpush2.msra.mxu0 %v563
        %1363 = vmatprep.subr.mxu0 %v562
        %1364 = vmatpush2.msra.mxu0 %v561
        %1365 = vmatprep.subr.mxu0 %v560
        %1366 = vmatpush2.msra.mxu0 %v559
        %1367 = vmatprep.subr.mxu0 %v558
        %1368 = vmatpush2.msra.mxu0 %v557
        %1369 = vmatprep.mubr.f32.mxu0 %v358
        %1370 = vmatmul.mubr.f32.gmra.mxu0 %v357
        %v1371 = vpop.f32.mrf.mxu0
        %v1372 = vadd.f32 %v1298, %v1371
        %v1373 = vpop.f32.mrf.mxu0
        %v1374 = vadd.f32 %v1302, %v1373
        %1375 = vmatprep.mubr.f32.mxu0 %v382
        %1376 = vmatmul.mubr.f32.gmra.mxu0 %v381
        %v1377 = vpop.f32.mrf.mxu0
        %v1378 = vadd.f32 %v1298, %v1377
        %v1379 = vpop.f32.mrf.mxu0
        %v1380 = vadd.f32 %v1302, %v1379
        %1381 = vmatprep.mubr.f32.mxu0 %v406
        %1382 = vmatmul.mubr.f32.gmra.mxu0 %v405
        %v1383 = vpop.f32.mrf.mxu0
        %v1384 = vadd.f32 %v1298, %v1383
        %v1385 = vpop.f32.mrf.mxu0
        %v1386 = vadd.f32 %v1302, %v1385
        %1387 = vmatprep.mubr.f32.mxu0 %v430
        %1388 = vmatmul.mubr.f32.gmra.mxu0 %v429
        %v1389 = vpop.f32.mrf.mxu0
        %v1390 = vadd.f32 %v1298, %v1389
        %v1391 = vpop.f32.mrf.mxu0
        %v1392 = vadd.f32 %v1302, %v1391
        %1393 = vmatprep.mubr.f32.mxu0 %v454
        %1394 = vmatmul.mubr.f32.gmra.mxu0 %v453
        %v1395 = vpop.f32.mrf.mxu0
        %v1396 = vadd.f32 %v1298, %v1395
        %v1397 = vpop.f32.mrf.mxu0
        %v1398 = vadd.f32 %v1302, %v1397
        %1399 = vmatprep.mubr.f32.mxu0 %v478
        %1400 = vmatmul.mubr.f32.gmra.mxu0 %v477
        %v1401 = vpop.f32.mrf.mxu0
        %v1402 = vadd.f32 %v1298, %v1401
        %v1403 = vpop.f32.mrf.mxu0
        %v1404 = vadd.f32 %v1302, %v1403
        %1405 = vmatprep.mubr.f32.mxu0 %v502
        %1406 = vmatmul.mubr.f32.gmra.mxu0 %v501
        %v1407 = vpop.f32.mrf.mxu0
        %v1408 = vadd.f32 %v1298, %v1407
        %v1409 = vpop.f32.mrf.mxu0
        %v1410 = vadd.f32 %v1302, %v1409
        %1411 = vdwg.mxu0
        %1412 = vmatprep.subr.mxu0 %v620
        %1413 = vmatpush1.msra.mxu0 %v619
        %1414 = vmatprep.subr.mxu0 %v618
        %1415 = vmatpush1.msra.mxu0 %v617
        %1416 = vmatprep.subr.mxu0 %v616
        %1417 = vmatpush1.msra.mxu0 %v615
        %1418 = vmatprep.subr.mxu0 %v614
        %1419 = vmatpush1.msra.mxu0 %v613
        %1420 = vmatprep.subr.mxu0 %v612
        %1421 = vmatpush1.msra.mxu0 %v611
        %1422 = vmatprep.subr.mxu0 %v610
        %1423 = vmatpush1.msra.mxu0 %v609
        %1424 = vmatprep.subr.mxu0 %v608
        %1425 = vmatpush1.msra.mxu0 %v607
        %1426 = vmatprep.subr.mxu0 %v606
        %1427 = vmatpush1.msra.mxu0 %v605
        %1428 = vmatprep.subr.mxu0 %v604
        %1429 = vmatpush1.msra.mxu0 %v603
        %1430 = vmatprep.subr.mxu0 %v602
        %1431 = vmatpush1.msra.mxu0 %v601
        %1432 = vmatprep.subr.mxu0 %v600
        %1433 = vmatpush1.msra.mxu0 %v599
        %1434 = vmatprep.subr.mxu0 %v598
        %1435 = vmatpush1.msra.mxu0 %v597
        %1436 = vmatprep.subr.mxu0 %v596
        %1437 = vmatpush1.msra.mxu0 %v595
        %1438 = vmatprep.subr.mxu0 %v594
        %1439 = vmatpush1.msra.mxu0 %v593
        %1440 = vmatprep.subr.mxu0 %v592
        %1441 = vmatpush1.msra.mxu0 %v591
        %1442 = vmatprep.subr.mxu0 %v590
        %1443 = vmatpush1.msra.mxu0 %v589
        %1444 = vmatprep.subr.mxu0 %v652
        %1445 = vmatpush2.msra.mxu0 %v651
        %1446 = vmatprep.subr.mxu0 %v650
        %1447 = vmatpush2.msra.mxu0 %v649
        %1448 = vmatprep.subr.mxu0 %v648
        %1449 = vmatpush2.msra.mxu0 %v647
        %1450 = vmatprep.subr.mxu0 %v646
        %1451 = vmatpush2.msra.mxu0 %v645
        %1452 = vmatprep.subr.mxu0 %v644
        %1453 = vmatpush2.msra.mxu0 %v643
        %1454 = vmatprep.subr.mxu0 %v642
        %1455 = vmatpush2.msra.mxu0 %v641
        %1456 = vmatprep.subr.mxu0 %v640
        %1457 = vmatpush2.msra.mxu0 %v639
        %1458 = vmatprep.subr.mxu0 %v638
        %1459 = vmatpush2.msra.mxu0 %v637
        %1460 = vmatprep.subr.mxu0 %v636
        %1461 = vmatpush2.msra.mxu0 %v635
        %1462 = vmatprep.subr.mxu0 %v634
        %1463 = vmatpush2.msra.mxu0 %v633
        %1464 = vmatprep.subr.mxu0 %v632
        %1465 = vmatpush2.msra.mxu0 %v631
        %1466 = vmatprep.subr.mxu0 %v630
        %1467 = vmatpush2.msra.mxu0 %v629
        %1468 = vmatprep.subr.mxu0 %v628
        %1469 = vmatpush2.msra.mxu0 %v627
        %1470 = vmatprep.subr.mxu0 %v626
        %1471 = vmatpush2.msra.mxu0 %v625
        %1472 = vmatprep.subr.mxu0 %v624
        %1473 = vmatpush2.msra.mxu0 %v623
        %1474 = vmatprep.subr.mxu0 %v622
        %1475 = vmatpush2.msra.mxu0 %v621
        %1476 = vmatprep.mubr.f32.mxu0 %v360
        %1477 = vmatmul.mubr.f32.gmra.mxu0 %v359
        %v1478 = vpop.f32.mrf.mxu0
        %v1479 = vadd.f32 %v1372, %v1478
        %v1480 = vpop.f32.mrf.mxu0
        %v1481 = vadd.f32 %v1374, %v1480
        %1482 = vmatprep.mubr.f32.mxu0 %v384
        %1483 = vmatmul.mubr.f32.gmra.mxu0 %v383
        %v1484 = vpop.f32.mrf.mxu0
        %v1485 = vadd.f32 %v1378, %v1484
        %v1486 = vpop.f32.mrf.mxu0
        %v1487 = vadd.f32 %v1380, %v1486
        %1488 = vmatprep.mubr.f32.mxu0 %v408
        %1489 = vmatmul.mubr.f32.gmra.mxu0 %v407
        %v1490 = vpop.f32.mrf.mxu0
        %v1491 = vadd.f32 %v1384, %v1490
        %v1492 = vpop.f32.mrf.mxu0
        %v1493 = vadd.f32 %v1386, %v1492
        %1494 = vmatprep.mubr.f32.mxu0 %v432
        %1495 = vmatmul.mubr.f32.gmra.mxu0 %v431
        %v1496 = vpop.f32.mrf.mxu0
        %v1497 = vadd.f32 %v1390, %v1496
        %v1498 = vpop.f32.mrf.mxu0
        %v1499 = vadd.f32 %v1392, %v1498
        %1500 = vmatprep.mubr.f32.mxu0 %v456
        %1501 = vmatmul.mubr.f32.gmra.mxu0 %v455
        %v1502 = vpop.f32.mrf.mxu0
        %v1503 = vadd.f32 %v1396, %v1502
        %v1504 = vpop.f32.mrf.mxu0
        %v1505 = vadd.f32 %v1398, %v1504
        %1506 = vmatprep.mubr.f32.mxu0 %v480
        %1507 = vmatmul.mubr.f32.gmra.mxu0 %v479
        %v1508 = vpop.f32.mrf.mxu0
        %v1509 = vadd.f32 %v1402, %v1508
        %v1510 = vpop.f32.mrf.mxu0
        %v1511 = vadd.f32 %v1404, %v1510
        %1512 = vmatprep.mubr.f32.mxu0 %v504
        %1513 = vmatmul.mubr.f32.gmra.mxu0 %v503
        %v1514 = vpop.f32.mrf.mxu0
        %v1515 = vadd.f32 %v1408, %v1514
        %v1516 = vpop.f32.mrf.mxu0
        %v1517 = vadd.f32 %v1410, %v1516
        %1518 = vdwg.mxu0
        %1519 = vmatprep.subr.mxu0 %v684
        %1520 = vmatpush1.msra.mxu0 %v683
        %1521 = vmatprep.subr.mxu0 %v682
        %1522 = vmatpush1.msra.mxu0 %v681
        %1523 = vmatprep.subr.mxu0 %v680
        %1524 = vmatpush1.msra.mxu0 %v679
        %1525 = vmatprep.subr.mxu0 %v678
        %1526 = vmatpush1.msra.mxu0 %v677
        %1527 = vmatprep.subr.mxu0 %v676
        %1528 = vmatpush1.msra.mxu0 %v675
        %1529 = vmatprep.subr.mxu0 %v674
        %1530 = vmatpush1.msra.mxu0 %v673
        %1531 = vmatprep.subr.mxu0 %v672
        %1532 = vmatpush1.msra.mxu0 %v671
        %1533 = vmatprep.subr.mxu0 %v670
        %1534 = vmatpush1.msra.mxu0 %v669
        %1535 = vmatprep.subr.mxu0 %v668
        %1536 = vmatpush1.msra.mxu0 %v667
        %1537 = vmatprep.subr.mxu0 %v666
        %1538 = vmatpush1.msra.mxu0 %v665
        %1539 = vmatprep.subr.mxu0 %v664
        %1540 = vmatpush1.msra.mxu0 %v663
        %1541 = vmatprep.subr.mxu0 %v662
        %1542 = vmatpush1.msra.mxu0 %v661
        %1543 = vmatprep.subr.mxu0 %v660
        %1544 = vmatpush1.msra.mxu0 %v659
        %1545 = vmatprep.subr.mxu0 %v658
        %1546 = vmatpush1.msra.mxu0 %v657
        %1547 = vmatprep.subr.mxu0 %v656
        %1548 = vmatpush1.msra.mxu0 %v655
        %1549 = vmatprep.subr.mxu0 %v654
        %1550 = vmatpush1.msra.mxu0 %v653
        %1551 = vmatprep.subr.mxu0 %v716
        %1552 = vmatpush2.msra.mxu0 %v715
        %1553 = vmatprep.subr.mxu0 %v714
        %1554 = vmatpush2.msra.mxu0 %v713
        %1555 = vmatprep.subr.mxu0 %v712
        %1556 = vmatpush2.msra.mxu0 %v711
        %1557 = vmatprep.subr.mxu0 %v710
        %1558 = vmatpush2.msra.mxu0 %v709
        %1559 = vmatprep.subr.mxu0 %v708
        %1560 = vmatpush2.msra.mxu0 %v707
        %1561 = vmatprep.subr.mxu0 %v706
        %1562 = vmatpush2.msra.mxu0 %v705
        %1563 = vmatprep.subr.mxu0 %v704
        %1564 = vmatpush2.msra.mxu0 %v703
        %1565 = vmatprep.subr.mxu0 %v702
        %1566 = vmatpush2.msra.mxu0 %v701
        %1567 = vmatprep.subr.mxu0 %v700
        %1568 = vmatpush2.msra.mxu0 %v699
        %1569 = vmatprep.subr.mxu0 %v698
        %1570 = vmatpush2.msra.mxu0 %v697
        %1571 = vmatprep.subr.mxu0 %v696
        %1572 = vmatpush2.msra.mxu0 %v695
        %1573 = vmatprep.subr.mxu0 %v694
        %1574 = vmatpush2.msra.mxu0 %v693
        %1575 = vmatprep.subr.mxu0 %v692
        %1576 = vmatpush2.msra.mxu0 %v691
        %1577 = vmatprep.subr.mxu0 %v690
        %1578 = vmatpush2.msra.mxu0 %v689
        %1579 = vmatprep.subr.mxu0 %v688
        %1580 = vmatpush2.msra.mxu0 %v687
        %1581 = vmatprep.subr.mxu0 %v686
        %1582 = vmatpush2.msra.mxu0 %v685
        %1583 = vmatprep.mubr.f32.mxu0 %v362
        %1584 = vmatmul.mubr.f32.gmra.mxu0 %v361
        %v1585 = vpop.f32.mrf.mxu0
        %v1586 = vadd.f32 %v1479, %v1585
        %v1587 = vpop.f32.mrf.mxu0
        %v1588 = vadd.f32 %v1481, %v1587
        %1589 = vmatprep.mubr.f32.mxu0 %v386
        %1590 = vmatmul.mubr.f32.gmra.mxu0 %v385
        %v1591 = vpop.f32.mrf.mxu0
        %v1592 = vadd.f32 %v1485, %v1591
        %v1593 = vpop.f32.mrf.mxu0
        %v1594 = vadd.f32 %v1487, %v1593
        %1595 = vmatprep.mubr.f32.mxu0 %v410
        %1596 = vmatmul.mubr.f32.gmra.mxu0 %v409
        %v1597 = vpop.f32.mrf.mxu0
        %v1598 = vadd.f32 %v1491, %v1597
        %v1599 = vpop.f32.mrf.mxu0
        %v1600 = vadd.f32 %v1493, %v1599
        %1601 = vmatprep.mubr.f32.mxu0 %v434
        %1602 = vmatmul.mubr.f32.gmra.mxu0 %v433
        %v1603 = vpop.f32.mrf.mxu0
        %v1604 = vadd.f32 %v1497, %v1603
        %v1605 = vpop.f32.mrf.mxu0
        %v1606 = vadd.f32 %v1499, %v1605
        %1607 = vmatprep.mubr.f32.mxu0 %v458
        %1608 = vmatmul.mubr.f32.gmra.mxu0 %v457
        %v1609 = vpop.f32.mrf.mxu0
        %v1610 = vadd.f32 %v1503, %v1609
        %v1611 = vpop.f32.mrf.mxu0
        %v1612 = vadd.f32 %v1505, %v1611
        %1613 = vmatprep.mubr.f32.mxu0 %v482
        %1614 = vmatmul.mubr.f32.gmra.mxu0 %v481
        %v1615 = vpop.f32.mrf.mxu0
        %v1616 = vadd.f32 %v1509, %v1615
        %v1617 = vpop.f32.mrf.mxu0
        %v1618 = vadd.f32 %v1511, %v1617
        %1619 = vmatprep.mubr.f32.mxu0 %v506
        %1620 = vmatmul.mubr.f32.gmra.mxu0 %v505
        %v1621 = vpop.f32.mrf.mxu0
        %v1622 = vadd.f32 %v1515, %v1621
        %v1623 = vpop.f32.mrf.mxu0
        %v1624 = vadd.f32 %v1517, %v1623
        %1625 = vdwg.mxu0
        %1626 = vmatprep.subr.mxu0 %v748
        %1627 = vmatpush1.msra.mxu0 %v747
        %1628 = vmatprep.subr.mxu0 %v746
        %1629 = vmatpush1.msra.mxu0 %v745
        %1630 = vmatprep.subr.mxu0 %v744
        %1631 = vmatpush1.msra.mxu0 %v743
        %1632 = vmatprep.subr.mxu0 %v742
        %1633 = vmatpush1.msra.mxu0 %v741
        %1634 = vmatprep.subr.mxu0 %v740
        %1635 = vmatpush1.msra.mxu0 %v739
        %1636 = vmatprep.subr.mxu0 %v738
        %1637 = vmatpush1.msra.mxu0 %v737
        %1638 = vmatprep.subr.mxu0 %v736
        %1639 = vmatpush1.msra.mxu0 %v735
        %1640 = vmatprep.subr.mxu0 %v734
        %1641 = vmatpush1.msra.mxu0 %v733
        %1642 = vmatprep.subr.mxu0 %v732
        %1643 = vmatpush1.msra.mxu0 %v731
        %1644 = vmatprep.subr.mxu0 %v730
        %1645 = vmatpush1.msra.mxu0 %v729
        %1646 = vmatprep.subr.mxu0 %v728
        %1647 = vmatpush1.msra.mxu0 %v727
        %1648 = vmatprep.subr.mxu0 %v726
        %1649 = vmatpush1.msra.mxu0 %v725
        %1650 = vmatprep.subr.mxu0 %v724
        %1651 = vmatpush1.msra.mxu0 %v723
        %1652 = vmatprep.subr.mxu0 %v722
        %1653 = vmatpush1.msra.mxu0 %v721
        %1654 = vmatprep.subr.mxu0 %v720
        %1655 = vmatpush1.msra.mxu0 %v719
        %1656 = vmatprep.subr.mxu0 %v718
        %1657 = vmatpush1.msra.mxu0 %v717
        %1658 = vmatprep.subr.mxu0 %v780
        %1659 = vmatpush2.msra.mxu0 %v779
        %1660 = vmatprep.subr.mxu0 %v778
        %1661 = vmatpush2.msra.mxu0 %v777
        %1662 = vmatprep.subr.mxu0 %v776
        %1663 = vmatpush2.msra.mxu0 %v775
        %1664 = vmatprep.subr.mxu0 %v774
        %1665 = vmatpush2.msra.mxu0 %v773
        %1666 = vmatprep.subr.mxu0 %v772
        %1667 = vmatpush2.msra.mxu0 %v771
        %1668 = vmatprep.subr.mxu0 %v770
        %1669 = vmatpush2.msra.mxu0 %v769
        %1670 = vmatprep.subr.mxu0 %v768
        %1671 = vmatpush2.msra.mxu0 %v767
        %1672 = vmatprep.subr.mxu0 %v766
        %1673 = vmatpush2.msra.mxu0 %v765
        %1674 = vmatprep.subr.mxu0 %v764
        %1675 = vmatpush2.msra.mxu0 %v763
        %1676 = vmatprep.subr.mxu0 %v762
        %1677 = vmatpush2.msra.mxu0 %v761
        %1678 = vmatprep.subr.mxu0 %v760
        %1679 = vmatpush2.msra.mxu0 %v759
        %1680 = vmatprep.subr.mxu0 %v758
        %1681 = vmatpush2.msra.mxu0 %v757
        %1682 = vmatprep.subr.mxu0 %v756
        %1683 = vmatpush2.msra.mxu0 %v755
        %1684 = vmatprep.subr.mxu0 %v754
        %1685 = vmatpush2.msra.mxu0 %v753
        %1686 = vmatprep.subr.mxu0 %v752
        %1687 = vmatpush2.msra.mxu0 %v751
        %1688 = vmatprep.subr.mxu0 %v750
        %1689 = vmatpush2.msra.mxu0 %v749
        %1690 = vmatprep.mubr.f32.mxu0 %v364
        %1691 = vmatmul.mubr.f32.gmra.mxu0 %v363
        %v1692 = vpop.f32.mrf.mxu0
        %v1693 = vadd.f32 %v1586, %v1692
        %v1694 = vpop.f32.mrf.mxu0
        %v1695 = vadd.f32 %v1588, %v1694
        %1696 = vmatprep.mubr.f32.mxu0 %v388
        %1697 = vmatmul.mubr.f32.gmra.mxu0 %v387
        %v1698 = vpop.f32.mrf.mxu0
        %v1699 = vadd.f32 %v1592, %v1698
        %v1700 = vpop.f32.mrf.mxu0
        %v1701 = vadd.f32 %v1594, %v1700
        %1702 = vmatprep.mubr.f32.mxu0 %v412
        %1703 = vmatmul.mubr.f32.gmra.mxu0 %v411
        %v1704 = vpop.f32.mrf.mxu0
        %v1705 = vadd.f32 %v1598, %v1704
        %v1706 = vpop.f32.mrf.mxu0
        %v1707 = vadd.f32 %v1600, %v1706
        %1708 = vmatprep.mubr.f32.mxu0 %v436
        %1709 = vmatmul.mubr.f32.gmra.mxu0 %v435
        %v1710 = vpop.f32.mrf.mxu0
        %v1711 = vadd.f32 %v1604, %v1710
        %v1712 = vpop.f32.mrf.mxu0
        %v1713 = vadd.f32 %v1606, %v1712
        %1714 = vmatprep.mubr.f32.mxu0 %v460
        %1715 = vmatmul.mubr.f32.gmra.mxu0 %v459
        %v1716 = vpop.f32.mrf.mxu0
        %v1717 = vadd.f32 %v1610, %v1716
        %v1718 = vpop.f32.mrf.mxu0
        %v1719 = vadd.f32 %v1612, %v1718
        %1720 = vmatprep.mubr.f32.mxu0 %v484
        %1721 = vmatmul.mubr.f32.gmra.mxu0 %v483
        %v1722 = vpop.f32.mrf.mxu0
        %v1723 = vadd.f32 %v1616, %v1722
        %v1724 = vpop.f32.mrf.mxu0
        %v1725 = vadd.f32 %v1618, %v1724
        %1726 = vmatprep.mubr.f32.mxu0 %v508
        %1727 = vmatmul.mubr.f32.gmra.mxu0 %v507
        %v1728 = vpop.f32.mrf.mxu0
        %v1729 = vadd.f32 %v1622, %v1728
        %v1730 = vpop.f32.mrf.mxu0
        %v1731 = vadd.f32 %v1624, %v1730
        %1732 = vdwg.mxu0
        %1733 = vmatprep.subr.mxu0 %v812
        %1734 = vmatpush1.msra.mxu0 %v811
        %1735 = vmatprep.subr.mxu0 %v810
        %1736 = vmatpush1.msra.mxu0 %v809
        %1737 = vmatprep.subr.mxu0 %v808
        %1738 = vmatpush1.msra.mxu0 %v807
        %1739 = vmatprep.subr.mxu0 %v806
        %1740 = vmatpush1.msra.mxu0 %v805
        %1741 = vmatprep.subr.mxu0 %v804
        %1742 = vmatpush1.msra.mxu0 %v803
        %1743 = vmatprep.subr.mxu0 %v802
        %1744 = vmatpush1.msra.mxu0 %v801
        %1745 = vmatprep.subr.mxu0 %v800
        %1746 = vmatpush1.msra.mxu0 %v799
        %1747 = vmatprep.subr.mxu0 %v798
        %1748 = vmatpush1.msra.mxu0 %v797
        %1749 = vmatprep.subr.mxu0 %v796
        %1750 = vmatpush1.msra.mxu0 %v795
        %1751 = vmatprep.subr.mxu0 %v794
        %1752 = vmatpush1.msra.mxu0 %v793
        %1753 = vmatprep.subr.mxu0 %v792
        %1754 = vmatpush1.msra.mxu0 %v791
        %1755 = vmatprep.subr.mxu0 %v790
        %1756 = vmatpush1.msra.mxu0 %v789
        %1757 = vmatprep.subr.mxu0 %v788
        %1758 = vmatpush1.msra.mxu0 %v787
        %1759 = vmatprep.subr.mxu0 %v786
        %1760 = vmatpush1.msra.mxu0 %v785
        %1761 = vmatprep.subr.mxu0 %v784
        %1762 = vmatpush1.msra.mxu0 %v783
        %1763 = vmatprep.subr.mxu0 %v782
        %1764 = vmatpush1.msra.mxu0 %v781
        %1765 = vmatprep.subr.mxu0 %v844
        %1766 = vmatpush2.msra.mxu0 %v843
        %1767 = vmatprep.subr.mxu0 %v842
        %1768 = vmatpush2.msra.mxu0 %v841
        %1769 = vmatprep.subr.mxu0 %v840
        %1770 = vmatpush2.msra.mxu0 %v839
        %1771 = vmatprep.subr.mxu0 %v838
        %1772 = vmatpush2.msra.mxu0 %v837
        %1773 = vmatprep.subr.mxu0 %v836
        %1774 = vmatpush2.msra.mxu0 %v835
        %1775 = vmatprep.subr.mxu0 %v834
        %1776 = vmatpush2.msra.mxu0 %v833
        %1777 = vmatprep.subr.mxu0 %v832
        %1778 = vmatpush2.msra.mxu0 %v831
        %1779 = vmatprep.subr.mxu0 %v830
        %1780 = vmatpush2.msra.mxu0 %v829
        %1781 = vmatprep.subr.mxu0 %v828
        %1782 = vmatpush2.msra.mxu0 %v827
        %1783 = vmatprep.subr.mxu0 %v826
        %1784 = vmatpush2.msra.mxu0 %v825
        %1785 = vmatprep.subr.mxu0 %v824
        %1786 = vmatpush2.msra.mxu0 %v823
        %1787 = vmatprep.subr.mxu0 %v822
        %1788 = vmatpush2.msra.mxu0 %v821
        %1789 = vmatprep.subr.mxu0 %v820
        %1790 = vmatpush2.msra.mxu0 %v819
        %1791 = vmatprep.subr.mxu0 %v818
        %1792 = vmatpush2.msra.mxu0 %v817
        %1793 = vmatprep.subr.mxu0 %v816
        %1794 = vmatpush2.msra.mxu0 %v815
        %1795 = vmatprep.subr.mxu0 %v814
        %1796 = vmatpush2.msra.mxu0 %v813
        %1797 = vmatprep.mubr.f32.mxu0 %v366
        %1798 = vmatmul.mubr.f32.gmra.mxu0 %v365
        %v1799 = vpop.f32.mrf.mxu0
        %v1800 = vadd.f32 %v1693, %v1799
        %v1801 = vpop.f32.mrf.mxu0
        %v1802 = vadd.f32 %v1695, %v1801
        %1803 = vmatprep.mubr.f32.mxu0 %v390
        %1804 = vmatmul.mubr.f32.gmra.mxu0 %v389
        %v1805 = vpop.f32.mrf.mxu0
        %v1806 = vadd.f32 %v1699, %v1805
        %v1807 = vpop.f32.mrf.mxu0
        %v1808 = vadd.f32 %v1701, %v1807
        %1809 = vmatprep.mubr.f32.mxu0 %v414
        %1810 = vmatmul.mubr.f32.gmra.mxu0 %v413
        %v1811 = vpop.f32.mrf.mxu0
        %v1812 = vadd.f32 %v1705, %v1811
        %v1813 = vpop.f32.mrf.mxu0
        %v1814 = vadd.f32 %v1707, %v1813
        %1815 = vmatprep.mubr.f32.mxu0 %v438
        %1816 = vmatmul.mubr.f32.gmra.mxu0 %v437
        %v1817 = vpop.f32.mrf.mxu0
        %v1818 = vadd.f32 %v1711, %v1817
        %v1819 = vpop.f32.mrf.mxu0
        %v1820 = vadd.f32 %v1713, %v1819
        %1821 = vmatprep.mubr.f32.mxu0 %v462
        %1822 = vmatmul.mubr.f32.gmra.mxu0 %v461
        %v1823 = vpop.f32.mrf.mxu0
        %v1824 = vadd.f32 %v1717, %v1823
        %v1825 = vpop.f32.mrf.mxu0
        %v1826 = vadd.f32 %v1719, %v1825
        %1827 = vmatprep.mubr.f32.mxu0 %v486
        %1828 = vmatmul.mubr.f32.gmra.mxu0 %v485
        %v1829 = vpop.f32.mrf.mxu0
        %v1830 = vadd.f32 %v1723, %v1829
        %v1831 = vpop.f32.mrf.mxu0
        %v1832 = vadd.f32 %v1725, %v1831
        %1833 = vmatprep.mubr.f32.mxu0 %v510
        %1834 = vmatmul.mubr.f32.gmra.mxu0 %v509
        %v1835 = vpop.f32.mrf.mxu0
        %v1836 = vadd.f32 %v1729, %v1835
        %v1837 = vpop.f32.mrf.mxu0
        %v1838 = vadd.f32 %v1731, %v1837
        %1839 = vdwg.mxu0
        %1840 = vmatprep.subr.mxu0 %v876
        %1841 = vmatpush1.msra.mxu0 %v875
        %1842 = vmatprep.subr.mxu0 %v874
        %1843 = vmatpush1.msra.mxu0 %v873
        %1844 = vmatprep.subr.mxu0 %v872
        %1845 = vmatpush1.msra.mxu0 %v871
        %1846 = vmatprep.subr.mxu0 %v870
        %1847 = vmatpush1.msra.mxu0 %v869
        %1848 = vmatprep.subr.mxu0 %v868
        %1849 = vmatpush1.msra.mxu0 %v867
        %1850 = vmatprep.subr.mxu0 %v866
        %1851 = vmatpush1.msra.mxu0 %v865
        %1852 = vmatprep.subr.mxu0 %v864
        %1853 = vmatpush1.msra.mxu0 %v863
        %1854 = vmatprep.subr.mxu0 %v862
        %1855 = vmatpush1.msra.mxu0 %v861
        %1856 = vmatprep.subr.mxu0 %v860
        %1857 = vmatpush1.msra.mxu0 %v859
        %1858 = vmatprep.subr.mxu0 %v858
        %1859 = vmatpush1.msra.mxu0 %v857
        %1860 = vmatprep.subr.mxu0 %v856
        %1861 = vmatpush1.msra.mxu0 %v855
        %1862 = vmatprep.subr.mxu0 %v854
        %1863 = vmatpush1.msra.mxu0 %v853
        %1864 = vmatprep.subr.mxu0 %v852
        %1865 = vmatpush1.msra.mxu0 %v851
        %1866 = vmatprep.subr.mxu0 %v850
        %1867 = vmatpush1.msra.mxu0 %v849
        %1868 = vmatprep.subr.mxu0 %v848
        %1869 = vmatpush1.msra.mxu0 %v847
        %1870 = vmatprep.subr.mxu0 %v846
        %1871 = vmatpush1.msra.mxu0 %v845
        %1872 = vmatprep.subr.mxu0 %v908
        %1873 = vmatpush2.msra.mxu0 %v907
        %1874 = vmatprep.subr.mxu0 %v906
        %1875 = vmatpush2.msra.mxu0 %v905
        %1876 = vmatprep.subr.mxu0 %v904
        %1877 = vmatpush2.msra.mxu0 %v903
        %1878 = vmatprep.subr.mxu0 %v902
        %1879 = vmatpush2.msra.mxu0 %v901
        %1880 = vmatprep.subr.mxu0 %v900
        %1881 = vmatpush2.msra.mxu0 %v899
        %1882 = vmatprep.subr.mxu0 %v898
        %1883 = vmatpush2.msra.mxu0 %v897
        %1884 = vmatprep.subr.mxu0 %v896
        %1885 = vmatpush2.msra.mxu0 %v895
        %1886 = vmatprep.subr.mxu0 %v894
        %1887 = vmatpush2.msra.mxu0 %v893
        %1888 = vmatprep.subr.mxu0 %v892
        %1889 = vmatpush2.msra.mxu0 %v891
        %1890 = vmatprep.subr.mxu0 %v890
        %1891 = vmatpush2.msra.mxu0 %v889
        %1892 = vmatprep.subr.mxu0 %v888
        %1893 = vmatpush2.msra.mxu0 %v887
        %1894 = vmatprep.subr.mxu0 %v886
        %1895 = vmatpush2.msra.mxu0 %v885
        %1896 = vmatprep.subr.mxu0 %v884
        %1897 = vmatpush2.msra.mxu0 %v883
        %1898 = vmatprep.subr.mxu0 %v882
        %1899 = vmatpush2.msra.mxu0 %v881
        %1900 = vmatprep.subr.mxu0 %v880
        %1901 = vmatpush2.msra.mxu0 %v879
        %1902 = vmatprep.subr.mxu0 %v878
        %1903 = vmatpush2.msra.mxu0 %v877
        %1904 = vmatprep.mubr.f32.mxu0 %v368
        %1905 = vmatmul.mubr.f32.gmra.mxu0 %v367
        %v1906 = vpop.f32.mrf.mxu0
        %v1907 = vadd.f32 %v1800, %v1906
        %v1908 = vpop.f32.mrf.mxu0
        %v1909 = vadd.f32 %v1802, %v1908
        %1910 = vmatprep.mubr.f32.mxu0 %v392
        %1911 = vmatmul.mubr.f32.gmra.mxu0 %v391
        %v1912 = vpop.f32.mrf.mxu0
        %v1913 = vadd.f32 %v1806, %v1912
        %v1914 = vpop.f32.mrf.mxu0
        %v1915 = vadd.f32 %v1808, %v1914
        %1916 = vmatprep.mubr.f32.mxu0 %v416
        %1917 = vmatmul.mubr.f32.gmra.mxu0 %v415
        %v1918 = vpop.f32.mrf.mxu0
        %v1919 = vadd.f32 %v1812, %v1918
        %v1920 = vpop.f32.mrf.mxu0
        %v1921 = vadd.f32 %v1814, %v1920
        %1922 = vmatprep.mubr.f32.mxu0 %v440
        %1923 = vmatmul.mubr.f32.gmra.mxu0 %v439
        %v1924 = vpop.f32.mrf.mxu0
        %v1925 = vadd.f32 %v1818, %v1924
        %v1926 = vpop.f32.mrf.mxu0
        %v1927 = vadd.f32 %v1820, %v1926
        %1928 = vmatprep.mubr.f32.mxu0 %v464
        %1929 = vmatmul.mubr.f32.gmra.mxu0 %v463
        %v1930 = vpop.f32.mrf.mxu0
        %v1931 = vadd.f32 %v1824, %v1930
        %v1932 = vpop.f32.mrf.mxu0
        %v1933 = vadd.f32 %v1826, %v1932
        %1934 = vmatprep.mubr.f32.mxu0 %v488
        %1935 = vmatmul.mubr.f32.gmra.mxu0 %v487
        %v1936 = vpop.f32.mrf.mxu0
        %v1937 = vadd.f32 %v1830, %v1936
        %v1938 = vpop.f32.mrf.mxu0
        %v1939 = vadd.f32 %v1832, %v1938
        %1940 = vmatprep.mubr.f32.mxu0 %v512
        %1941 = vmatmul.mubr.f32.gmra.mxu0 %v511
        %v1942 = vpop.f32.mrf.mxu0
        %v1943 = vadd.f32 %v1836, %v1942
        %v1944 = vpop.f32.mrf.mxu0
        %v1945 = vadd.f32 %v1838, %v1944
        %1946 = vdwg.mxu0
        %1947 = vmatprep.subr.mxu0 %v940
        %1948 = vmatpush1.msra.mxu0 %v939
        %1949 = vmatprep.subr.mxu0 %v938
        %1950 = vmatpush1.msra.mxu0 %v937
        %1951 = vmatprep.subr.mxu0 %v936
        %1952 = vmatpush1.msra.mxu0 %v935
        %1953 = vmatprep.subr.mxu0 %v934
        %1954 = vmatpush1.msra.mxu0 %v933
        %1955 = vmatprep.subr.mxu0 %v932
        %1956 = vmatpush1.msra.mxu0 %v931
        %1957 = vmatprep.subr.mxu0 %v930
        %1958 = vmatpush1.msra.mxu0 %v929
        %1959 = vmatprep.subr.mxu0 %v928
        %1960 = vmatpush1.msra.mxu0 %v927
        %1961 = vmatprep.subr.mxu0 %v926
        %1962 = vmatpush1.msra.mxu0 %v925
        %1963 = vmatprep.subr.mxu0 %v924
        %1964 = vmatpush1.msra.mxu0 %v923
        %1965 = vmatprep.subr.mxu0 %v922
        %1966 = vmatpush1.msra.mxu0 %v921
        %1967 = vmatprep.subr.mxu0 %v920
        %1968 = vmatpush1.msra.mxu0 %v919
        %1969 = vmatprep.subr.mxu0 %v918
        %1970 = vmatpush1.msra.mxu0 %v917
        %1971 = vmatprep.subr.mxu0 %v916
        %1972 = vmatpush1.msra.mxu0 %v915
        %1973 = vmatprep.subr.mxu0 %v914
        %1974 = vmatpush1.msra.mxu0 %v913
        %1975 = vmatprep.subr.mxu0 %v912
        %1976 = vmatpush1.msra.mxu0 %v911
        %1977 = vmatprep.subr.mxu0 %v910
        %1978 = vmatpush1.msra.mxu0 %v909
        %1979 = vmatprep.subr.mxu0 %v972
        %1980 = vmatpush2.msra.mxu0 %v971
        %1981 = vmatprep.subr.mxu0 %v970
        %1982 = vmatpush2.msra.mxu0 %v969
        %1983 = vmatprep.subr.mxu0 %v968
        %1984 = vmatpush2.msra.mxu0 %v967
        %1985 = vmatprep.subr.mxu0 %v966
        %1986 = vmatpush2.msra.mxu0 %v965
        %1987 = vmatprep.subr.mxu0 %v964
        %1988 = vmatpush2.msra.mxu0 %v963
        %1989 = vmatprep.subr.mxu0 %v962
        %1990 = vmatpush2.msra.mxu0 %v961
        %1991 = vmatprep.subr.mxu0 %v960
        %1992 = vmatpush2.msra.mxu0 %v959
        %1993 = vmatprep.subr.mxu0 %v958
        %1994 = vmatpush2.msra.mxu0 %v957
        %1995 = vmatprep.subr.mxu0 %v956
        %1996 = vmatpush2.msra.mxu0 %v955
        %1997 = vmatprep.subr.mxu0 %v954
        %1998 = vmatpush2.msra.mxu0 %v953
        %1999 = vmatprep.subr.mxu0 %v952
        %2000 = vmatpush2.msra.mxu0 %v951
        %2001 = vmatprep.subr.mxu0 %v950
        %2002 = vmatpush2.msra.mxu0 %v949
        %2003 = vmatprep.subr.mxu0 %v948
        %2004 = vmatpush2.msra.mxu0 %v947
        %2005 = vmatprep.subr.mxu0 %v946
        %2006 = vmatpush2.msra.mxu0 %v945
        %2007 = vmatprep.subr.mxu0 %v944
        %2008 = vmatpush2.msra.mxu0 %v943
        %2009 = vmatprep.subr.mxu0 %v942
        %2010 = vmatpush2.msra.mxu0 %v941
        %2011 = vmatprep.mubr.f32.mxu0 %v370
        %2012 = vmatmul.mubr.f32.gmra.mxu0 %v369
        %v2013 = vpop.f32.mrf.mxu0
        %v2014 = vadd.f32 %v1907, %v2013
        %v2015 = vpop.f32.mrf.mxu0
        %v2016 = vadd.f32 %v1909, %v2015
        %2017 = vmatprep.mubr.f32.mxu0 %v394
        %2018 = vmatmul.mubr.f32.gmra.mxu0 %v393
        %v2019 = vpop.f32.mrf.mxu0
        %v2020 = vadd.f32 %v1913, %v2019
        %v2021 = vpop.f32.mrf.mxu0
        %v2022 = vadd.f32 %v1915, %v2021
        %2023 = vmatprep.mubr.f32.mxu0 %v418
        %2024 = vmatmul.mubr.f32.gmra.mxu0 %v417
        %v2025 = vpop.f32.mrf.mxu0
        %v2026 = vadd.f32 %v1919, %v2025
        %v2027 = vpop.f32.mrf.mxu0
        %v2028 = vadd.f32 %v1921, %v2027
        %2029 = vmatprep.mubr.f32.mxu0 %v442
        %2030 = vmatmul.mubr.f32.gmra.mxu0 %v441
        %v2031 = vpop.f32.mrf.mxu0
        %v2032 = vadd.f32 %v1925, %v2031
        %v2033 = vpop.f32.mrf.mxu0
        %v2034 = vadd.f32 %v1927, %v2033
        %2035 = vmatprep.mubr.f32.mxu0 %v466
        %2036 = vmatmul.mubr.f32.gmra.mxu0 %v465
        %v2037 = vpop.f32.mrf.mxu0
        %v2038 = vadd.f32 %v1931, %v2037
        %v2039 = vpop.f32.mrf.mxu0
        %v2040 = vadd.f32 %v1933, %v2039
        %2041 = vmatprep.mubr.f32.mxu0 %v490
        %2042 = vmatmul.mubr.f32.gmra.mxu0 %v489
        %v2043 = vpop.f32.mrf.mxu0
        %v2044 = vadd.f32 %v1937, %v2043
        %v2045 = vpop.f32.mrf.mxu0
        %v2046 = vadd.f32 %v1939, %v2045
        %2047 = vmatprep.mubr.f32.mxu0 %v514
        %2048 = vmatmul.mubr.f32.gmra.mxu0 %v513
        %v2049 = vpop.f32.mrf.mxu0
        %v2050 = vadd.f32 %v1943, %v2049
        %v2051 = vpop.f32.mrf.mxu0
        %v2052 = vadd.f32 %v1945, %v2051
        %2053 = vdwg.mxu0
        %2054 = vmatprep.subr.mxu0 %v1004
        %2055 = vmatpush1.msra.mxu0 %v1003
        %2056 = vmatprep.subr.mxu0 %v1002
        %2057 = vmatpush1.msra.mxu0 %v1001
        %2058 = vmatprep.subr.mxu0 %v1000
        %2059 = vmatpush1.msra.mxu0 %v999
        %2060 = vmatprep.subr.mxu0 %v998
        %2061 = vmatpush1.msra.mxu0 %v997
        %2062 = vmatprep.subr.mxu0 %v996
        %2063 = vmatpush1.msra.mxu0 %v995
        %2064 = vmatprep.subr.mxu0 %v994
        %2065 = vmatpush1.msra.mxu0 %v993
        %2066 = vmatprep.subr.mxu0 %v992
        %2067 = vmatpush1.msra.mxu0 %v991
        %2068 = vmatprep.subr.mxu0 %v990
        %2069 = vmatpush1.msra.mxu0 %v989
        %2070 = vmatprep.subr.mxu0 %v988
        %2071 = vmatpush1.msra.mxu0 %v987
        %2072 = vmatprep.subr.mxu0 %v986
        %2073 = vmatpush1.msra.mxu0 %v985
        %2074 = vmatprep.subr.mxu0 %v984
        %2075 = vmatpush1.msra.mxu0 %v983
        %2076 = vmatprep.subr.mxu0 %v982
        %2077 = vmatpush1.msra.mxu0 %v981
        %2078 = vmatprep.subr.mxu0 %v980
        %2079 = vmatpush1.msra.mxu0 %v979
        %2080 = vmatprep.subr.mxu0 %v978
        %2081 = vmatpush1.msra.mxu0 %v977
        %2082 = vmatprep.subr.mxu0 %v976
        %2083 = vmatpush1.msra.mxu0 %v975
        %2084 = vmatprep.subr.mxu0 %v974
        %2085 = vmatpush1.msra.mxu0 %v973
        %2086 = vmatprep.subr.mxu0 %v1036
        %2087 = vmatpush2.msra.mxu0 %v1035
        %2088 = vmatprep.subr.mxu0 %v1034
        %2089 = vmatpush2.msra.mxu0 %v1033
        %2090 = vmatprep.subr.mxu0 %v1032
        %2091 = vmatpush2.msra.mxu0 %v1031
        %2092 = vmatprep.subr.mxu0 %v1030
        %2093 = vmatpush2.msra.mxu0 %v1029
        %2094 = vmatprep.subr.mxu0 %v1028
        %2095 = vmatpush2.msra.mxu0 %v1027
        %2096 = vmatprep.subr.mxu0 %v1026
        %2097 = vmatpush2.msra.mxu0 %v1025
        %2098 = vmatprep.subr.mxu0 %v1024
        %2099 = vmatpush2.msra.mxu0 %v1023
        %2100 = vmatprep.subr.mxu0 %v1022
        %2101 = vmatpush2.msra.mxu0 %v1021
        %2102 = vmatprep.subr.mxu0 %v1020
        %2103 = vmatpush2.msra.mxu0 %v1019
        %2104 = vmatprep.subr.mxu0 %v1018
        %2105 = vmatpush2.msra.mxu0 %v1017
        %2106 = vmatprep.subr.mxu0 %v1016
        %2107 = vmatpush2.msra.mxu0 %v1015
        %2108 = vmatprep.subr.mxu0 %v1014
        %2109 = vmatpush2.msra.mxu0 %v1013
        %2110 = vmatprep.subr.mxu0 %v1012
        %2111 = vmatpush2.msra.mxu0 %v1011
        %2112 = vmatprep.subr.mxu0 %v1010
        %2113 = vmatpush2.msra.mxu0 %v1009
        %2114 = vmatprep.subr.mxu0 %v1008
        %2115 = vmatpush2.msra.mxu0 %v1007
        %2116 = vmatprep.subr.mxu0 %v1006
        %2117 = vmatpush2.msra.mxu0 %v1005
        %2118 = vmatprep.mubr.f32.mxu0 %v372
        %2119 = vmatmul.mubr.f32.gmra.mxu0 %v371
        %v2120 = vpop.f32.mrf.mxu0
        %v2121 = vadd.f32 %v2014, %v2120
        %v2122 = vpop.f32.mrf.mxu0
        %v2123 = vadd.f32 %v2016, %v2122
        %2124 = vmatprep.mubr.f32.mxu0 %v396
        %2125 = vmatmul.mubr.f32.gmra.mxu0 %v395
        %v2126 = vpop.f32.mrf.mxu0
        %v2127 = vadd.f32 %v2020, %v2126
        %v2128 = vpop.f32.mrf.mxu0
        %v2129 = vadd.f32 %v2022, %v2128
        %2130 = vmatprep.mubr.f32.mxu0 %v420
        %2131 = vmatmul.mubr.f32.gmra.mxu0 %v419
        %v2132 = vpop.f32.mrf.mxu0
        %v2133 = vadd.f32 %v2026, %v2132
        %v2134 = vpop.f32.mrf.mxu0
        %v2135 = vadd.f32 %v2028, %v2134
        %2136 = vmatprep.mubr.f32.mxu0 %v444
        %2137 = vmatmul.mubr.f32.gmra.mxu0 %v443
        %v2138 = vpop.f32.mrf.mxu0
        %v2139 = vadd.f32 %v2032, %v2138
        %v2140 = vpop.f32.mrf.mxu0
        %v2141 = vadd.f32 %v2034, %v2140
        %2142 = vmatprep.mubr.f32.mxu0 %v468
        %2143 = vmatmul.mubr.f32.gmra.mxu0 %v467
        %v2144 = vpop.f32.mrf.mxu0
        %v2145 = vadd.f32 %v2038, %v2144
        %v2146 = vpop.f32.mrf.mxu0
        %v2147 = vadd.f32 %v2040, %v2146
        %2148 = vmatprep.mubr.f32.mxu0 %v492
        %2149 = vmatmul.mubr.f32.gmra.mxu0 %v491
        %v2150 = vpop.f32.mrf.mxu0
        %v2151 = vadd.f32 %v2044, %v2150
        %v2152 = vpop.f32.mrf.mxu0
        %v2153 = vadd.f32 %v2046, %v2152
        %2154 = vmatprep.mubr.f32.mxu0 %v516
        %2155 = vmatmul.mubr.f32.gmra.mxu0 %v515
        %v2156 = vpop.f32.mrf.mxu0
        %v2157 = vadd.f32 %v2050, %v2156
        %v2158 = vpop.f32.mrf.mxu0
        %v2159 = vadd.f32 %v2052, %v2158
        %2160 = vdwg.mxu0
        %2161 = vmatprep.subr.mxu0 %v1068
        %2162 = vmatpush1.msra.mxu0 %v1067
        %2163 = vmatprep.subr.mxu0 %v1066
        %2164 = vmatpush1.msra.mxu0 %v1065
        %2165 = vmatprep.subr.mxu0 %v1064
        %2166 = vmatpush1.msra.mxu0 %v1063
        %2167 = vmatprep.subr.mxu0 %v1062
        %2168 = vmatpush1.msra.mxu0 %v1061
        %2169 = vmatprep.subr.mxu0 %v1060
        %2170 = vmatpush1.msra.mxu0 %v1059
        %2171 = vmatprep.subr.mxu0 %v1058
        %2172 = vmatpush1.msra.mxu0 %v1057
        %2173 = vmatprep.subr.mxu0 %v1056
        %2174 = vmatpush1.msra.mxu0 %v1055
        %2175 = vmatprep.subr.mxu0 %v1054
        %2176 = vmatpush1.msra.mxu0 %v1053
        %2177 = vmatprep.subr.mxu0 %v1052
        %2178 = vmatpush1.msra.mxu0 %v1051
        %2179 = vmatprep.subr.mxu0 %v1050
        %2180 = vmatpush1.msra.mxu0 %v1049
        %2181 = vmatprep.subr.mxu0 %v1048
        %2182 = vmatpush1.msra.mxu0 %v1047
        %2183 = vmatprep.subr.mxu0 %v1046
        %2184 = vmatpush1.msra.mxu0 %v1045
        %2185 = vmatprep.subr.mxu0 %v1044
        %2186 = vmatpush1.msra.mxu0 %v1043
        %2187 = vmatprep.subr.mxu0 %v1042
        %2188 = vmatpush1.msra.mxu0 %v1041
        %2189 = vmatprep.subr.mxu0 %v1040
        %2190 = vmatpush1.msra.mxu0 %v1039
        %2191 = vmatprep.subr.mxu0 %v1038
        %2192 = vmatpush1.msra.mxu0 %v1037
        %2193 = vmatprep.subr.mxu0 %v1100
        %2194 = vmatpush2.msra.mxu0 %v1099
        %2195 = vmatprep.subr.mxu0 %v1098
        %2196 = vmatpush2.msra.mxu0 %v1097
        %2197 = vmatprep.subr.mxu0 %v1096
        %2198 = vmatpush2.msra.mxu0 %v1095
        %2199 = vmatprep.subr.mxu0 %v1094
        %2200 = vmatpush2.msra.mxu0 %v1093
        %2201 = vmatprep.subr.mxu0 %v1092
        %2202 = vmatpush2.msra.mxu0 %v1091
        %2203 = vmatprep.subr.mxu0 %v1090
        %2204 = vmatpush2.msra.mxu0 %v1089
        %2205 = vmatprep.subr.mxu0 %v1088
        %2206 = vmatpush2.msra.mxu0 %v1087
        %2207 = vmatprep.subr.mxu0 %v1086
        %2208 = vmatpush2.msra.mxu0 %v1085
        %2209 = vmatprep.subr.mxu0 %v1084
        %2210 = vmatpush2.msra.mxu0 %v1083
        %2211 = vmatprep.subr.mxu0 %v1082
        %2212 = vmatpush2.msra.mxu0 %v1081
        %2213 = vmatprep.subr.mxu0 %v1080
        %2214 = vmatpush2.msra.mxu0 %v1079
        %2215 = vmatprep.subr.mxu0 %v1078
        %2216 = vmatpush2.msra.mxu0 %v1077
        %2217 = vmatprep.subr.mxu0 %v1076
        %2218 = vmatpush2.msra.mxu0 %v1075
        %2219 = vmatprep.subr.mxu0 %v1074
        %2220 = vmatpush2.msra.mxu0 %v1073
        %2221 = vmatprep.subr.mxu0 %v1072
        %2222 = vmatpush2.msra.mxu0 %v1071
        %2223 = vmatprep.subr.mxu0 %v1070
        %2224 = vmatpush2.msra.mxu0 %v1069
        %2225 = vmatprep.mubr.f32.mxu0 %v374
        %2226 = vmatmul.mubr.f32.gmra.mxu0 %v373
        %v2227 = vpop.f32.mrf.mxu0
        %v2228 = vadd.f32 %v2121, %v2227
        %v2229 = vpop.f32.mrf.mxu0
        %v2230 = vadd.f32 %v2123, %v2229
        %2231 = vmatprep.mubr.f32.mxu0 %v398
        %2232 = vmatmul.mubr.f32.gmra.mxu0 %v397
        %v2233 = vpop.f32.mrf.mxu0
        %v2234 = vadd.f32 %v2127, %v2233
        %v2235 = vpop.f32.mrf.mxu0
        %v2236 = vadd.f32 %v2129, %v2235
        %2237 = vmatprep.mubr.f32.mxu0 %v422
        %2238 = vmatmul.mubr.f32.gmra.mxu0 %v421
        %v2239 = vpop.f32.mrf.mxu0
        %v2240 = vadd.f32 %v2133, %v2239
        %v2241 = vpop.f32.mrf.mxu0
        %v2242 = vadd.f32 %v2135, %v2241
        %2243 = vmatprep.mubr.f32.mxu0 %v446
        %2244 = vmatmul.mubr.f32.gmra.mxu0 %v445
        %v2245 = vpop.f32.mrf.mxu0
        %v2246 = vadd.f32 %v2139, %v2245
        %v2247 = vpop.f32.mrf.mxu0
        %v2248 = vadd.f32 %v2141, %v2247
        %2249 = vmatprep.mubr.f32.mxu0 %v470
        %2250 = vmatmul.mubr.f32.gmra.mxu0 %v469
        %v2251 = vpop.f32.mrf.mxu0
        %v2252 = vadd.f32 %v2145, %v2251
        %v2253 = vpop.f32.mrf.mxu0
        %v2254 = vadd.f32 %v2147, %v2253
        %2255 = vmatprep.mubr.f32.mxu0 %v494
        %2256 = vmatmul.mubr.f32.gmra.mxu0 %v493
        %v2257 = vpop.f32.mrf.mxu0
        %v2258 = vadd.f32 %v2151, %v2257
        %v2259 = vpop.f32.mrf.mxu0
        %v2260 = vadd.f32 %v2153, %v2259
        %2261 = vmatprep.mubr.f32.mxu0 %v518
        %2262 = vmatmul.mubr.f32.gmra.mxu0 %v517
        %v2263 = vpop.f32.mrf.mxu0
        %v2264 = vadd.f32 %v2157, %v2263
        %v2265 = vpop.f32.mrf.mxu0
        %v2266 = vadd.f32 %v2159, %v2265
        %2267 = vdwg.mxu0
        %2268 = vmatprep.subr.mxu0 %v1132
        %2269 = vmatpush1.msra.mxu0 %v1131
        %2270 = vmatprep.subr.mxu0 %v1130
        %2271 = vmatpush1.msra.mxu0 %v1129
        %2272 = vmatprep.subr.mxu0 %v1128
        %2273 = vmatpush1.msra.mxu0 %v1127
        %2274 = vmatprep.subr.mxu0 %v1126
        %2275 = vmatpush1.msra.mxu0 %v1125
        %2276 = vmatprep.subr.mxu0 %v1124
        %2277 = vmatpush1.msra.mxu0 %v1123
        %2278 = vmatprep.subr.mxu0 %v1122
        %2279 = vmatpush1.msra.mxu0 %v1121
        %2280 = vmatprep.subr.mxu0 %v1120
        %2281 = vmatpush1.msra.mxu0 %v1119
        %2282 = vmatprep.subr.mxu0 %v1118
        %2283 = vmatpush1.msra.mxu0 %v1117
        %2284 = vmatprep.subr.mxu0 %v1116
        %2285 = vmatpush1.msra.mxu0 %v1115
        %2286 = vmatprep.subr.mxu0 %v1114
        %2287 = vmatpush1.msra.mxu0 %v1113
        %2288 = vmatprep.subr.mxu0 %v1112
        %2289 = vmatpush1.msra.mxu0 %v1111
        %2290 = vmatprep.subr.mxu0 %v1110
        %2291 = vmatpush1.msra.mxu0 %v1109
        %2292 = vmatprep.subr.mxu0 %v1108
        %2293 = vmatpush1.msra.mxu0 %v1107
        %2294 = vmatprep.subr.mxu0 %v1106
        %2295 = vmatpush1.msra.mxu0 %v1105
        %2296 = vmatprep.subr.mxu0 %v1104
        %2297 = vmatpush1.msra.mxu0 %v1103
        %2298 = vmatprep.subr.mxu0 %v1102
        %2299 = vmatpush1.msra.mxu0 %v1101
        %2300 = vmatprep.subr.mxu0 %v1164
        %2301 = vmatpush2.msra.mxu0 %v1163
        %2302 = vmatprep.subr.mxu0 %v1162
        %2303 = vmatpush2.msra.mxu0 %v1161
        %2304 = vmatprep.subr.mxu0 %v1160
        %2305 = vmatpush2.msra.mxu0 %v1159
        %2306 = vmatprep.subr.mxu0 %v1158
        %2307 = vmatpush2.msra.mxu0 %v1157
        %2308 = vmatprep.subr.mxu0 %v1156
        %2309 = vmatpush2.msra.mxu0 %v1155
        %2310 = vmatprep.subr.mxu0 %v1154
        %2311 = vmatpush2.msra.mxu0 %v1153
        %2312 = vmatprep.subr.mxu0 %v1152
        %2313 = vmatpush2.msra.mxu0 %v1151
        %2314 = vmatprep.subr.mxu0 %v1150
        %2315 = vmatpush2.msra.mxu0 %v1149
        %2316 = vmatprep.subr.mxu0 %v1148
        %2317 = vmatpush2.msra.mxu0 %v1147
        %2318 = vmatprep.subr.mxu0 %v1146
        %2319 = vmatpush2.msra.mxu0 %v1145
        %2320 = vmatprep.subr.mxu0 %v1144
        %2321 = vmatpush2.msra.mxu0 %v1143
        %2322 = vmatprep.subr.mxu0 %v1142
        %2323 = vmatpush2.msra.mxu0 %v1141
        %2324 = vmatprep.subr.mxu0 %v1140
        %2325 = vmatpush2.msra.mxu0 %v1139
        %2326 = vmatprep.subr.mxu0 %v1138
        %2327 = vmatpush2.msra.mxu0 %v1137
        %2328 = vmatprep.subr.mxu0 %v1136
        %2329 = vmatpush2.msra.mxu0 %v1135
        %2330 = vmatprep.subr.mxu0 %v1134
        %2331 = vmatpush2.msra.mxu0 %v1133
        %2332 = vmatprep.mubr.f32.mxu0 %v376
        %2333 = vmatmul.mubr.f32.gmra.mxu0 %v375
        %v2334 = vpop.f32.mrf.mxu0
        %v2335 = vadd.f32 %v2228, %v2334
        %v2336 = vpop.f32.mrf.mxu0
        %v2337 = vadd.f32 %v2230, %v2336
        %2338 = vmatprep.mubr.f32.mxu0 %v400
        %2339 = vmatmul.mubr.f32.gmra.mxu0 %v399
        %v2340 = vpop.f32.mrf.mxu0
        %v2341 = vadd.f32 %v2234, %v2340
        %v2342 = vpop.f32.mrf.mxu0
        %v2343 = vadd.f32 %v2236, %v2342
        %2344 = vmatprep.mubr.f32.mxu0 %v424
        %2345 = vmatmul.mubr.f32.gmra.mxu0 %v423
        %v2346 = vpop.f32.mrf.mxu0
        %v2347 = vadd.f32 %v2240, %v2346
        %v2348 = vpop.f32.mrf.mxu0
        %v2349 = vadd.f32 %v2242, %v2348
        %2350 = vmatprep.mubr.f32.mxu0 %v448
        %2351 = vmatmul.mubr.f32.gmra.mxu0 %v447
        %v2352 = vpop.f32.mrf.mxu0
        %v2353 = vadd.f32 %v2246, %v2352
        %v2354 = vpop.f32.mrf.mxu0
        %v2355 = vadd.f32 %v2248, %v2354
        %2356 = vmatprep.mubr.f32.mxu0 %v472
        %2357 = vmatmul.mubr.f32.gmra.mxu0 %v471
        %v2358 = vpop.f32.mrf.mxu0
        %v2359 = vadd.f32 %v2252, %v2358
        %v2360 = vpop.f32.mrf.mxu0
        %v2361 = vadd.f32 %v2254, %v2360
        %2362 = vmatprep.mubr.f32.mxu0 %v496
        %2363 = vmatmul.mubr.f32.gmra.mxu0 %v495
        %v2364 = vpop.f32.mrf.mxu0
        %v2365 = vadd.f32 %v2258, %v2364
        %v2366 = vpop.f32.mrf.mxu0
        %v2367 = vadd.f32 %v2260, %v2366
        %2368 = vmatprep.mubr.f32.mxu0 %v520
        %2369 = vmatmul.mubr.f32.gmra.mxu0 %v519
        %v2370 = vpop.f32.mrf.mxu0
        %v2371 = vadd.f32 %v2264, %v2370
        %v2372 = vpop.f32.mrf.mxu0
        %v2373 = vadd.f32 %v2266, %v2372
        %2374 = vdwg.mxu0
        %2375 = vmatprep.subr.mxu0 %v1196
        %2376 = vmatpush1.msra.mxu0 %v1195
        %2377 = vmatprep.subr.mxu0 %v1194
        %2378 = vmatpush1.msra.mxu0 %v1193
        %2379 = vmatprep.subr.mxu0 %v1192
        %2380 = vmatpush1.msra.mxu0 %v1191
        %2381 = vmatprep.subr.mxu0 %v1190
        %2382 = vmatpush1.msra.mxu0 %v1189
        %2383 = vmatprep.subr.mxu0 %v1188
        %2384 = vmatpush1.msra.mxu0 %v1187
        %2385 = vmatprep.subr.mxu0 %v1186
        %2386 = vmatpush1.msra.mxu0 %v1185
        %2387 = vmatprep.subr.mxu0 %v1184
        %2388 = vmatpush1.msra.mxu0 %v1183
        %2389 = vmatprep.subr.mxu0 %v1182
        %2390 = vmatpush1.msra.mxu0 %v1181
        %2391 = vmatprep.subr.mxu0 %v1180
        %2392 = vmatpush1.msra.mxu0 %v1179
        %2393 = vmatprep.subr.mxu0 %v1178
        %2394 = vmatpush1.msra.mxu0 %v1177
        %2395 = vmatprep.subr.mxu0 %v1176
        %2396 = vmatpush1.msra.mxu0 %v1175
        %2397 = vmatprep.subr.mxu0 %v1174
        %2398 = vmatpush1.msra.mxu0 %v1173
        %2399 = vmatprep.subr.mxu0 %v1172
        %2400 = vmatpush1.msra.mxu0 %v1171
        %2401 = vmatprep.subr.mxu0 %v1170
        %2402 = vmatpush1.msra.mxu0 %v1169
        %2403 = vmatprep.subr.mxu0 %v1168
        %2404 = vmatpush1.msra.mxu0 %v1167
        %2405 = vmatprep.subr.mxu0 %v1166
        %2406 = vmatpush1.msra.mxu0 %v1165
        %2407 = vmatprep.subr.mxu0 %v1228
        %2408 = vmatpush2.msra.mxu0 %v1227
        %2409 = vmatprep.subr.mxu0 %v1226
        %2410 = vmatpush2.msra.mxu0 %v1225
        %2411 = vmatprep.subr.mxu0 %v1224
        %2412 = vmatpush2.msra.mxu0 %v1223
        %2413 = vmatprep.subr.mxu0 %v1222
        %2414 = vmatpush2.msra.mxu0 %v1221
        %2415 = vmatprep.subr.mxu0 %v1220
        %2416 = vmatpush2.msra.mxu0 %v1219
        %2417 = vmatprep.subr.mxu0 %v1218
        %2418 = vmatpush2.msra.mxu0 %v1217
        %2419 = vmatprep.subr.mxu0 %v1216
        %2420 = vmatpush2.msra.mxu0 %v1215
        %2421 = vmatprep.subr.mxu0 %v1214
        %2422 = vmatpush2.msra.mxu0 %v1213
        %2423 = vmatprep.subr.mxu0 %v1212
        %2424 = vmatpush2.msra.mxu0 %v1211
        %2425 = vmatprep.subr.mxu0 %v1210
        %2426 = vmatpush2.msra.mxu0 %v1209
        %2427 = vmatprep.subr.mxu0 %v1208
        %2428 = vmatpush2.msra.mxu0 %v1207
        %2429 = vmatprep.subr.mxu0 %v1206
        %2430 = vmatpush2.msra.mxu0 %v1205
        %2431 = vmatprep.subr.mxu0 %v1204
        %2432 = vmatpush2.msra.mxu0 %v1203
        %2433 = vmatprep.subr.mxu0 %v1202
        %2434 = vmatpush2.msra.mxu0 %v1201
        %2435 = vmatprep.subr.mxu0 %v1200
        %2436 = vmatpush2.msra.mxu0 %v1199
        %2437 = vmatprep.subr.mxu0 %v1198
        %2438 = vmatpush2.msra.mxu0 %v1197
        %2439 = vmatprep.mubr.f32.mxu0 %v378
        %2440 = vmatmul.mubr.f32.gmra.mxu0 %v377
        %v2441 = vpop.f32.mrf.mxu0
        %v2442 = vadd.f32 %v2335, %v2441
        %v2443 = vpop.f32.mrf.mxu0
        %v2444 = vadd.f32 %v2337, %v2443
        %2445 = vmatprep.mubr.f32.mxu0 %v402
        %2446 = vmatmul.mubr.f32.gmra.mxu0 %v401
        %v2447 = vpop.f32.mrf.mxu0
        %v2448 = vadd.f32 %v2341, %v2447
        %v2449 = vpop.f32.mrf.mxu0
        %v2450 = vadd.f32 %v2343, %v2449
        %2451 = vmatprep.mubr.f32.mxu0 %v426
        %2452 = vmatmul.mubr.f32.gmra.mxu0 %v425
        %v2453 = vpop.f32.mrf.mxu0
        %v2454 = vadd.f32 %v2347, %v2453
        %v2455 = vpop.f32.mrf.mxu0
        %v2456 = vadd.f32 %v2349, %v2455
        %2457 = vmatprep.mubr.f32.mxu0 %v450
        %2458 = vmatmul.mubr.f32.gmra.mxu0 %v449
        %v2459 = vpop.f32.mrf.mxu0
        %v2460 = vadd.f32 %v2353, %v2459
        %v2461 = vpop.f32.mrf.mxu0
        %v2462 = vadd.f32 %v2355, %v2461
        %2463 = vmatprep.mubr.f32.mxu0 %v474
        %2464 = vmatmul.mubr.f32.gmra.mxu0 %v473
        %v2465 = vpop.f32.mrf.mxu0
        %v2466 = vadd.f32 %v2359, %v2465
        %v2467 = vpop.f32.mrf.mxu0
        %v2468 = vadd.f32 %v2361, %v2467
        %2469 = vmatprep.mubr.f32.mxu0 %v498
        %2470 = vmatmul.mubr.f32.gmra.mxu0 %v497
        %v2471 = vpop.f32.mrf.mxu0
        %v2472 = vadd.f32 %v2365, %v2471
        %v2473 = vpop.f32.mrf.mxu0
        %v2474 = vadd.f32 %v2367, %v2473
        %2475 = vmatprep.mubr.f32.mxu0 %v522
        %2476 = vmatmul.mubr.f32.gmra.mxu0 %v521
        %v2477 = vpop.f32.mrf.mxu0
        %v2478 = vadd.f32 %v2371, %v2477
        %v2479 = vpop.f32.mrf.mxu0
        %v2480 = vadd.f32 %v2373, %v2479
        %2481 = vdwg.mxu0
        %2482 = vmatprep.subr.mxu0 %v1260
        %2483 = vmatpush1.msra.mxu0 %v1259
        %2484 = vmatprep.subr.mxu0 %v1258
        %2485 = vmatpush1.msra.mxu0 %v1257
        %2486 = vmatprep.subr.mxu0 %v1256
        %2487 = vmatpush1.msra.mxu0 %v1255
        %2488 = vmatprep.subr.mxu0 %v1254
        %2489 = vmatpush1.msra.mxu0 %v1253
        %2490 = vmatprep.subr.mxu0 %v1252
        %2491 = vmatpush1.msra.mxu0 %v1251
        %2492 = vmatprep.subr.mxu0 %v1250
        %2493 = vmatpush1.msra.mxu0 %v1249
        %2494 = vmatprep.subr.mxu0 %v1248
        %2495 = vmatpush1.msra.mxu0 %v1247
        %2496 = vmatprep.subr.mxu0 %v1246
        %2497 = vmatpush1.msra.mxu0 %v1245
        %2498 = vmatprep.subr.mxu0 %v1244
        %2499 = vmatpush1.msra.mxu0 %v1243
        %2500 = vmatprep.subr.mxu0 %v1242
        %2501 = vmatpush1.msra.mxu0 %v1241
        %2502 = vmatprep.subr.mxu0 %v1240
        %2503 = vmatpush1.msra.mxu0 %v1239
        %2504 = vmatprep.subr.mxu0 %v1238
        %2505 = vmatpush1.msra.mxu0 %v1237
        %2506 = vmatprep.subr.mxu0 %v1236
        %2507 = vmatpush1.msra.mxu0 %v1235
        %2508 = vmatprep.subr.mxu0 %v1234
        %2509 = vmatpush1.msra.mxu0 %v1233
        %2510 = vmatprep.subr.mxu0 %v1232
        %2511 = vmatpush1.msra.mxu0 %v1231
        %2512 = vmatprep.subr.mxu0 %v1230
        %2513 = vmatpush1.msra.mxu0 %v1229
        %2514 = vmatprep.subr.mxu0 %v1292
        %2515 = vmatpush2.msra.mxu0 %v1291
        %2516 = vmatprep.subr.mxu0 %v1290
        %2517 = vmatpush2.msra.mxu0 %v1289
        %2518 = vmatprep.subr.mxu0 %v1288
        %2519 = vmatpush2.msra.mxu0 %v1287
        %2520 = vmatprep.subr.mxu0 %v1286
        %2521 = vmatpush2.msra.mxu0 %v1285
        %2522 = vmatprep.subr.mxu0 %v1284
        %2523 = vmatpush2.msra.mxu0 %v1283
        %2524 = vmatprep.subr.mxu0 %v1282
        %2525 = vmatpush2.msra.mxu0 %v1281
        %2526 = vmatprep.subr.mxu0 %v1280
        %2527 = vmatpush2.msra.mxu0 %v1279
        %2528 = vmatprep.subr.mxu0 %v1278
        %2529 = vmatpush2.msra.mxu0 %v1277
        %2530 = vmatprep.subr.mxu0 %v1276
        %2531 = vmatpush2.msra.mxu0 %v1275
        %2532 = vmatprep.subr.mxu0 %v1274
        %2533 = vmatpush2.msra.mxu0 %v1273
        %2534 = vmatprep.subr.mxu0 %v1272
        %2535 = vmatpush2.msra.mxu0 %v1271
        %2536 = vmatprep.subr.mxu0 %v1270
        %2537 = vmatpush2.msra.mxu0 %v1269
        %2538 = vmatprep.subr.mxu0 %v1268
        %2539 = vmatpush2.msra.mxu0 %v1267
        %2540 = vmatprep.subr.mxu0 %v1266
        %2541 = vmatpush2.msra.mxu0 %v1265
        %2542 = vmatprep.subr.mxu0 %v1264
        %2543 = vmatpush2.msra.mxu0 %v1263
        %2544 = vmatprep.subr.mxu0 %v1262
        %2545 = vmatpush2.msra.mxu0 %v1261
        %2546 = vmatprep.mubr.f32.mxu0 %v380
        %2547 = vmatmul.mubr.f32.gmra.mxu0 %v379
        %v2548 = vpop.f32.mrf.mxu0
        %v2549 = vadd.f32 %v2442, %v2548
        %v2550 = vpop.f32.mrf.mxu0
        %v2551 = vadd.f32 %v2444, %v2550
        %2552 = vmatprep.mubr.f32.mxu0 %v404
        %2553 = vmatmul.mubr.f32.gmra.mxu0 %v403
        %v2554 = vpop.f32.mrf.mxu0
        %v2555 = vadd.f32 %v2448, %v2554
        %v2556 = vpop.f32.mrf.mxu0
        %v2557 = vadd.f32 %v2450, %v2556
        %2558 = vmatprep.mubr.f32.mxu0 %v428
        %2559 = vmatmul.mubr.f32.gmra.mxu0 %v427
        %v2560 = vpop.f32.mrf.mxu0
        %v2561 = vadd.f32 %v2454, %v2560
        %v2562 = vpop.f32.mrf.mxu0
        %v2563 = vadd.f32 %v2456, %v2562
        %2564 = vmatprep.mubr.f32.mxu0 %v452
        %2565 = vmatmul.mubr.f32.gmra.mxu0 %v451
        %v2566 = vpop.f32.mrf.mxu0
        %v2567 = vadd.f32 %v2460, %v2566
        %v2568 = vpop.f32.mrf.mxu0
        %v2569 = vadd.f32 %v2462, %v2568
        %2570 = vmatprep.mubr.f32.mxu0 %v476
        %2571 = vmatmul.mubr.f32.gmra.mxu0 %v475
        %v2572 = vpop.f32.mrf.mxu0
        %v2573 = vadd.f32 %v2466, %v2572
        %v2574 = vpop.f32.mrf.mxu0
        %v2575 = vadd.f32 %v2468, %v2574
        %2576 = vmatprep.mubr.f32.mxu0 %v500
        %2577 = vmatmul.mubr.f32.gmra.mxu0 %v499
        %v2578 = vpop.f32.mrf.mxu0
        %v2579 = vadd.f32 %v2472, %v2578
        %v2580 = vpop.f32.mrf.mxu0
        %v2581 = vadd.f32 %v2474, %v2580
        %2582 = vmatprep.mubr.f32.mxu0 %v524
        %2583 = vmatmul.mubr.f32.gmra.mxu0 %v523
        %v2584 = vpop.f32.mrf.mxu0
        %v2585 = vadd.f32 %v2478, %v2584
        %v2586 = vpop.f32.mrf.mxu0
        %v2587 = vadd.f32 %v2480, %v2586
        %2588 = vdwg.mxu0
        %2589 = vst [vmem:[#allocation2] sm:$0xff] 0.0
        %2590 = vst [vmem:[#allocation2 + $0x8] sm:$0xff] 0.0
        %2591 = vst [vmem:[#allocation2 + $0x10] sm:$0x1f] 0.0
        %2592 = vst [vmem:[#allocation2 + $0x18] sm:$0x1f] 0.0
        %2593 = vst [vmem:[#allocation2 + $0x20] sm:$0xff] 0.0
        %2594 = vst [vmem:[#allocation2 + $0x28] sm:$0xff] 0.0
        %2595 = vst [vmem:[#allocation2 + $0x30] sm:$0x1f] 0.0
        %2596 = vst [vmem:[#allocation2 + $0x38] sm:$0x1f] 0.0
        %2597 = vst [vmem:[#allocation2 + $0x40] sm:$0xff] 0.0
        %2598 = vst [vmem:[#allocation2 + $0x48] sm:$0xff] 0.0
        %2599 = vst [vmem:[#allocation2 + $0x50] sm:$0x1f] 0.0
        %2600 = vst [vmem:[#allocation2 + $0x58] sm:$0x1f] 0.0
        %2601 = vst [vmem:[#allocation2 + $0x60] sm:$0xff] 0.0
        %2602 = vst [vmem:[#allocation2 + $0x68] sm:$0xff] 0.0
        %2603 = vst [vmem:[#allocation2 + $0x70] sm:$0x1f] 0.0
        %2604 = vst [vmem:[#allocation2 + $0x78] sm:$0x1f] 0.0
        %2605 = vst [vmem:[#allocation2 + $0x80] sm:$0xff] 0.0
        %2606 = vst [vmem:[#allocation2 + $0x88] sm:$0xff] 0.0
        %2607 = vst [vmem:[#allocation2 + $0x90] sm:$0x1f] 0.0
        %2608 = vst [vmem:[#allocation2 + $0x98] sm:$0x1f] 0.0
        %2609 = vst [vmem:[#allocation2 + $0xa0] sm:$0xff] 0.0
        %2610 = vst [vmem:[#allocation2 + $0xa8] sm:$0xff] 0.0
        %2611 = vst [vmem:[#allocation2 + $0xb0] sm:$0x1f] 0.0
        %2612 = vst [vmem:[#allocation2 + $0xb8] sm:$0x1f] 0.0
        %2613 = vst [vmem:[#allocation2 + $0xc0] sm:$0xff] 0.0
        %2614 = vst [vmem:[#allocation2 + $0xc8] sm:$0xff] 0.0
        %2615 = vst [vmem:[#allocation2 + $0xd0] sm:$0x1f] 0.0
        %2616 = vst [vmem:[#allocation2 + $0xd8] sm:$0x1f] 0.0
        %2617 = vst [vmem:[#allocation2 + $0xe0] sm:$0xff] 0.0
        %2618 = vst [vmem:[#allocation2 + $0xe8] sm:$0xff] 0.0
        %2619 = vst [vmem:[#allocation2 + $0xf0] sm:$0x1f] 0.0
        %2620 = vst [vmem:[#allocation2 + $0xf8] sm:$0x1f] 0.0
        %2621 = vst [vmem:[#allocation2 + $0x100] sm:$0xff] 0.0
        %2622 = vst [vmem:[#allocation2 + $0x108] sm:$0xff] 0.0
        %2623 = vst [vmem:[#allocation2 + $0x110] sm:$0x1f] 0.0
        %2624 = vst [vmem:[#allocation2 + $0x118] sm:$0x1f] 0.0
        %2625 = vst [vmem:[#allocation2 + $0x120] sm:$0xff] 0.0
        %2626 = vst [vmem:[#allocation2 + $0x128] sm:$0xff] 0.0
        %2627 = vst [vmem:[#allocation2 + $0x130] sm:$0x1f] 0.0
        %2628 = vst [vmem:[#allocation2 + $0x138] sm:$0x1f] 0.0
        %2629 = vst [vmem:[#allocation2 + $0x140] sm:$0xff] 0.0
        %2630 = vst [vmem:[#allocation2 + $0x148] sm:$0xff] 0.0
        %2631 = vst [vmem:[#allocation2 + $0x150] sm:$0x1f] 0.0
        %2632 = vst [vmem:[#allocation2 + $0x158] sm:$0x1f] 0.0
        %2633 = vst [vmem:[#allocation2 + $0x160] sm:$0xff] 0.0
        %2634 = vst [vmem:[#allocation2 + $0x168] sm:$0xff] 0.0
        %2635 = vst [vmem:[#allocation2 + $0x170] sm:$0x1f] 0.0
        %2636 = vst [vmem:[#allocation2 + $0x178] sm:$0x1f] 0.0
        %2637 = vst [vmem:[#allocation2 + $0x180] sm:$0xff] 0.0
        %2638 = vst [vmem:[#allocation2 + $0x188] sm:$0xff] 0.0
        %2639 = vst [vmem:[#allocation2 + $0x190] sm:$0x1f] 0.0
        %2640 = vst [vmem:[#allocation2 + $0x198] sm:$0x1f] 0.0
        %v2643 = vrot.slane %v2549, 5
        %v2644 = vrot.slane %v2551, 5
        %s2647 = scalar_lea.vmem [#allocation2], 96
        %2648 = vst [vmem:[%s2647] sm:$0xf8] %v2643
        %2649 = vst [vmem:[%s2647 + $0x8] sm:$0xf8] %v2644
        %2650 = vst [vmem:[%s2647 + $0x10] sm:$0x3] %v2643
        %2651 = vst [vmem:[%s2647 + $0x18] sm:$0x3] %v2644
        %vm2654 = vcmask 1043456
        %v2655 = vrot.slane %v2549, 4
        %v2656 = vrot.slane %v2555, 4
        %v2657 = vsel %vm2654, %v2655, %v2656
        %v2658 = vrot.slane %v2551, 4
        %v2659 = vrot.slane %v2557, 4
        %v2660 = vsel %vm2654, %v2658, %v2659
        %s2665 = scalar_lea.vmem [#allocation2], 128
        %2666 = vst [vmem:[%s2665] sm:$0xf8] %v2657
        %2667 = vst [vmem:[%s2665 + $0x8] sm:$0xf8] %v2660
        %2668 = vst [vmem:[%s2665 + $0x10] sm:$0x3] %v2656
        %2669 = vst [vmem:[%s2665 + $0x18] sm:$0x3] %v2659
        %vm2672 = vcmask 1044480
        %v2673 = vrot.slane %v2555, 3
        %v2674 = vrot.slane %v2561, 3
        %v2675 = vsel %vm2672, %v2673, %v2674
        %v2676 = vrot.slane %v2557, 3
        %v2677 = vrot.slane %v2563, 3
        %v2678 = vsel %vm2672, %v2676, %v2677
        %s2683 = scalar_lea.vmem [#allocation2], 160
        %2684 = vst [vmem:[%s2683] sm:$0xf8] %v2675
        %2685 = vst [vmem:[%s2683 + $0x8] sm:$0xf8] %v2678
        %2686 = vst [vmem:[%s2683 + $0x10] sm:$0x3] %v2674
        %2687 = vst [vmem:[%s2683 + $0x18] sm:$0x3] %v2677
        %vm2690 = vcmask 1045504
        %v2691 = vrot.slane %v2561, 2
        %v2692 = vrot.slane %v2567, 2
        %v2693 = vsel %vm2690, %v2691, %v2692
        %v2694 = vrot.slane %v2563, 2
        %v2695 = vrot.slane %v2569, 2
        %v2696 = vsel %vm2690, %v2694, %v2695
        %s2701 = scalar_lea.vmem [#allocation2], 192
        %2702 = vst [vmem:[%s2701] sm:$0xf8] %v2693
        %2703 = vst [vmem:[%s2701 + $0x8] sm:$0xf8] %v2696
        %2704 = vst [vmem:[%s2701 + $0x10] sm:$0x3] %v2692
        %2705 = vst [vmem:[%s2701 + $0x18] sm:$0x3] %v2695
        %vm2708 = vcmask 1046528
        %v2709 = vrot.slane %v2567, 1
        %v2710 = vrot.slane %v2573, 1
        %v2711 = vsel %vm2708, %v2709, %v2710
        %v2712 = vrot.slane %v2569, 1
        %v2713 = vrot.slane %v2575, 1
        %v2714 = vsel %vm2708, %v2712, %v2713
        %s2719 = scalar_lea.vmem [#allocation2], 224
        %2720 = vst [vmem:[%s2719] sm:$0xf8] %v2711
        %2721 = vst [vmem:[%s2719 + $0x8] sm:$0xf8] %v2714
        %2722 = vst [vmem:[%s2719 + $0x10] sm:$0x3] %v2710
        %2723 = vst [vmem:[%s2719 + $0x18] sm:$0x3] %v2713
        %s2724 = scalar_lea.vmem [#allocation2], 256
        %2725 = vst [vmem:[%s2724] sm:$0xf8] %v2573
        %2726 = vst [vmem:[%s2724 + $0x8] sm:$0xf8] %v2575
        %2727 = vst [vmem:[%s2724 + $0x10] sm:$0x3] %v2579
        %2728 = vst [vmem:[%s2724 + $0x18] sm:$0x3] %v2581
        %vm2733 = vcmask 1040384
        %v2734 = vrot.slane %v2579, 7
        %v2735 = vrot.slane %v2581, 7
        %v2736 = vrot.slane %v2585, 7
        %v2737 = vsel %vm2733, %v2734, %v2736
        %v2738 = vrot.slane %v2587, 7
        %v2739 = vsel %vm2733, %v2735, %v2738
        %s2744 = scalar_lea.vmem [#allocation2], 288
        %2745 = vst [vmem:[%s2744] sm:$0xf8] %v2734
        %2746 = vst [vmem:[%s2744 + $0x8] sm:$0xf8] %v2735
        %2747 = vst [vmem:[%s2744 + $0x10] sm:$0x3] %v2737
        %2748 = vst [vmem:[%s2744 + $0x18] sm:$0x3] %v2739
        %v2749 = vld [vmem:[#allocation2] sm:$0xff]
        %v2750 = vld [vmem:[#allocation2 + $0x8] sm:$0xff]
        %v2751 = vld [vmem:[#allocation2 + $0x10] sm:$0x1f]
        %v2752 = vld [vmem:[#allocation2 + $0x18] sm:$0x1f]
        %v2753 = vld [vmem:[#allocation2 + $0x20] sm:$0xff]
        %v2754 = vld [vmem:[#allocation2 + $0x28] sm:$0xff]
        %v2755 = vld [vmem:[#allocation2 + $0x30] sm:$0x1f]
        %v2756 = vld [vmem:[#allocation2 + $0x38] sm:$0x1f]
        %v2757 = vld [vmem:[#allocation2 + $0x40] sm:$0xff]
        %v2758 = vld [vmem:[#allocation2 + $0x48] sm:$0xff]
        %v2759 = vld [vmem:[#allocation2 + $0x50] sm:$0x1f]
        %v2760 = vld [vmem:[#allocation2 + $0x58] sm:$0x1f]
        %v2761 = vld [vmem:[#allocation2 + $0x60] sm:$0xff]
        %v2762 = vld [vmem:[#allocation2 + $0x68] sm:$0xff]
        %v2763 = vld [vmem:[#allocation2 + $0x70] sm:$0x1f]
        %v2764 = vld [vmem:[#allocation2 + $0x78] sm:$0x1f]
        %v2765 = vld [vmem:[#allocation2 + $0x80] sm:$0xff]
        %v2766 = vld [vmem:[#allocation2 + $0x88] sm:$0xff]
        %v2767 = vld [vmem:[#allocation2 + $0x90] sm:$0x1f]
        %v2768 = vld [vmem:[#allocation2 + $0x98] sm:$0x1f]
        %v2769 = vld [vmem:[#allocation2 + $0xa0] sm:$0xff]
        %v2770 = vld [vmem:[#allocation2 + $0xa8] sm:$0xff]
        %v2771 = vld [vmem:[#allocation2 + $0xb0] sm:$0x1f]
        %v2772 = vld [vmem:[#allocation2 + $0xb8] sm:$0x1f]
        %v2773 = vld [vmem:[#allocation2 + $0xc0] sm:$0xff]
        %v2774 = vld [vmem:[#allocation2 + $0xc8] sm:$0xff]
        %v2775 = vld [vmem:[#allocation2 + $0xd0] sm:$0x1f]
        %v2776 = vld [vmem:[#allocation2 + $0xd8] sm:$0x1f]
        %v2777 = vld [vmem:[#allocation2 + $0xe0] sm:$0xff]
        %v2778 = vld [vmem:[#allocation2 + $0xe8] sm:$0xff]
        %v2779 = vld [vmem:[#allocation2 + $0xf0] sm:$0x1f]
        %v2780 = vld [vmem:[#allocation2 + $0xf8] sm:$0x1f]
        %v2781 = vld [vmem:[#allocation2 + $0x100] sm:$0xff]
        %v2782 = vld [vmem:[#allocation2 + $0x108] sm:$0xff]
        %v2783 = vld [vmem:[#allocation2 + $0x110] sm:$0x1f]
        %v2784 = vld [vmem:[#allocation2 + $0x118] sm:$0x1f]
        %v2785 = vld [vmem:[#allocation2 + $0x120] sm:$0xff]
        %v2786 = vld [vmem:[#allocation2 + $0x128] sm:$0xff]
        %v2787 = vld [vmem:[#allocation2 + $0x130] sm:$0x1f]
        %v2788 = vld [vmem:[#allocation2 + $0x138] sm:$0x1f]
        %v2789 = vld [vmem:[#allocation2 + $0x140] sm:$0xff]
        %v2790 = vld [vmem:[#allocation2 + $0x148] sm:$0xff]
        %v2791 = vld [vmem:[#allocation2 + $0x150] sm:$0x1f]
        %v2792 = vld [vmem:[#allocation2 + $0x158] sm:$0x1f]
        %v2793 = vld [vmem:[#allocation2 + $0x160] sm:$0xff]
        %v2794 = vld [vmem:[#allocation2 + $0x168] sm:$0xff]
        %v2795 = vld [vmem:[#allocation2 + $0x170] sm:$0x1f]
        %v2796 = vld [vmem:[#allocation2 + $0x178] sm:$0x1f]
        %v2797 = vld [vmem:[#allocation2 + $0x180] sm:$0xff]
        %v2798 = vld [vmem:[#allocation2 + $0x188] sm:$0xff]
        %v2799 = vld [vmem:[#allocation2 + $0x190] sm:$0x1f]
        %v2800 = vld [vmem:[#allocation2 + $0x198] sm:$0x1f]
        %v2801 = vld [vmem:[%s302] sm:$0x7f]
        %v2802 = vld [vmem:[%s302 + $0x8] sm:$0x7f]
        %v2803 = vld [vmem:[%s302 + $0x10] sm:$0x7f]
        %v2804 = vld [vmem:[%s302 + $0x18] sm:$0x7f]
        %v2805 = vld [vmem:[%s302 + $0x20] sm:$0x7f]
        %v2806 = vld [vmem:[%s302 + $0x28] sm:$0x7f]
        %v2807 = vld [vmem:[%s302 + $0x30] sm:$0x7f]
        %v2808 = vld [vmem:[%s302 + $0x38] sm:$0x7f]
        %v2809 = vld [vmem:[%s302 + $0x40] sm:$0x7f]
        %v2810 = vld [vmem:[%s302 + $0x48] sm:$0x7f]
        %v2811 = vld [vmem:[%s302 + $0x50] sm:$0x7f]
        %v2812 = vld [vmem:[%s302 + $0x58] sm:$0x7f]
        %v2813 = vld [vmem:[%s302 + $0x60] sm:$0x7f]
        %v2814 = vld [vmem:[%s302 + $0x68] sm:$0x7f]
        %v2815 = vld [vmem:[%s311] sm:$0x3]
        %v2817 = vlaneseq
        %v2818 = vshrl.u32 %v2817, 7
        %v2819 = vsub.s32 0, %v2818
        %v2820 = vrot.slane %v2815, %v2819
        %v2821 = vlaneseq
        %v2822 = vshrl.u32 %v2821, 7
        %v2823 = vsub.s32 1, %v2822
        %v2824 = vrot.slane %v2815, %v2823
        %v2827 = vlaneseq
        %v2828 = vshrl.u32 %v2827, 7
        %v2829 = vsub.s32 0, %v2828
        %v2830 = vrot.slane %v2801, %v2829
        %v2831 = vlaneseq
        %v2832 = vshrl.u32 %v2831, 7
        %v2833 = vsub.s32 0, %v2832
        %v2834 = vrot.slane %v2802, %v2833
        %v2835 = vmul.f32 %v2749, %v2830
        %v2836 = vmul.f32 %v2750, %v2834
        %v2837 = vmul.f32 %v2753, %v2830
        %v2838 = vmul.f32 %v2754, %v2834
        %v2839 = vmul.f32 %v2757, %v2830
        %v2840 = vmul.f32 %v2758, %v2834
        %v2841 = vmul.f32 %v2761, %v2830
        %v2842 = vmul.f32 %v2762, %v2834
        %v2843 = vmul.f32 %v2765, %v2830
        %v2844 = vmul.f32 %v2766, %v2834
        %v2845 = vmul.f32 %v2769, %v2830
        %v2846 = vmul.f32 %v2770, %v2834
        %v2847 = vmul.f32 %v2773, %v2830
        %v2848 = vmul.f32 %v2774, %v2834
        %v2849 = vadd.f32 %v2820, %v2835
        %v2850 = vadd.f32 %v2824, %v2836
        %v2851 = vadd.f32 %v2820, %v2837
        %v2852 = vadd.f32 %v2824, %v2838
        %v2853 = vadd.f32 %v2820, %v2839
        %v2854 = vadd.f32 %v2824, %v2840
        %v2855 = vadd.f32 %v2820, %v2841
        %v2856 = vadd.f32 %v2824, %v2842
        %v2857 = vadd.f32 %v2820, %v2843
        %v2858 = vadd.f32 %v2824, %v2844
        %v2859 = vadd.f32 %v2820, %v2845
        %v2860 = vadd.f32 %v2824, %v2846
        %v2861 = vadd.f32 %v2820, %v2847
        %v2862 = vadd.f32 %v2824, %v2848
        %v2863 = vlaneseq
        %v2864 = vshrl.u32 %v2863, 7
        %v2865 = vsub.s32 0, %v2864
        %v2866 = vrot.slane %v2803, %v2865
        %v2867 = vlaneseq
        %v2868 = vshrl.u32 %v2867, 7
        %v2869 = vsub.s32 0, %v2868
        %v2870 = vrot.slane %v2804, %v2869
        %v2871 = vmul.f32 %v2753, %v2866
        %v2872 = vmul.f32 %v2754, %v2870
        %v2873 = vmul.f32 %v2757, %v2866
        %v2874 = vmul.f32 %v2758, %v2870
        %v2875 = vmul.f32 %v2761, %v2866
        %v2876 = vmul.f32 %v2762, %v2870
        %v2877 = vmul.f32 %v2765, %v2866
        %v2878 = vmul.f32 %v2766, %v2870
        %v2879 = vmul.f32 %v2769, %v2866
        %v2880 = vmul.f32 %v2770, %v2870
        %v2881 = vmul.f32 %v2773, %v2866
        %v2882 = vmul.f32 %v2774, %v2870
        %v2883 = vmul.f32 %v2777, %v2866
        %v2884 = vmul.f32 %v2778, %v2870
        %v2885 = vadd.f32 %v2849, %v2871
        %v2886 = vadd.f32 %v2850, %v2872
        %v2887 = vadd.f32 %v2851, %v2873
        %v2888 = vadd.f32 %v2852, %v2874
        %v2889 = vadd.f32 %v2853, %v2875
        %v2890 = vadd.f32 %v2854, %v2876
        %v2891 = vadd.f32 %v2855, %v2877
        %v2892 = vadd.f32 %v2856, %v2878
        %v2893 = vadd.f32 %v2857, %v2879
        %v2894 = vadd.f32 %v2858, %v2880
        %v2895 = vadd.f32 %v2859, %v2881
        %v2896 = vadd.f32 %v2860, %v2882
        %v2897 = vadd.f32 %v2861, %v2883
        %v2898 = vadd.f32 %v2862, %v2884
        %v2899 = vlaneseq
        %v2900 = vshrl.u32 %v2899, 7
        %v2901 = vsub.s32 0, %v2900
        %v2902 = vrot.slane %v2805, %v2901
        %v2903 = vlaneseq
        %v2904 = vshrl.u32 %v2903, 7
        %v2905 = vsub.s32 0, %v2904
        %v2906 = vrot.slane %v2806, %v2905
        %v2907 = vmul.f32 %v2757, %v2902
        %v2908 = vmul.f32 %v2758, %v2906
        %v2909 = vmul.f32 %v2761, %v2902
        %v2910 = vmul.f32 %v2762, %v2906
        %v2911 = vmul.f32 %v2765, %v2902
        %v2912 = vmul.f32 %v2766, %v2906
        %v2913 = vmul.f32 %v2769, %v2902
        %v2914 = vmul.f32 %v2770, %v2906
        %v2915 = vmul.f32 %v2773, %v2902
        %v2916 = vmul.f32 %v2774, %v2906
        %v2917 = vmul.f32 %v2777, %v2902
        %v2918 = vmul.f32 %v2778, %v2906
        %v2919 = vmul.f32 %v2781, %v2902
        %v2920 = vmul.f32 %v2782, %v2906
        %v2921 = vadd.f32 %v2885, %v2907
        %v2922 = vadd.f32 %v2886, %v2908
        %v2923 = vadd.f32 %v2887, %v2909
        %v2924 = vadd.f32 %v2888, %v2910
        %v2925 = vadd.f32 %v2889, %v2911
        %v2926 = vadd.f32 %v2890, %v2912
        %v2927 = vadd.f32 %v2891, %v2913
        %v2928 = vadd.f32 %v2892, %v2914
        %v2929 = vadd.f32 %v2893, %v2915
        %v2930 = vadd.f32 %v2894, %v2916
        %v2931 = vadd.f32 %v2895, %v2917
        %v2932 = vadd.f32 %v2896, %v2918
        %v2933 = vadd.f32 %v2897, %v2919
        %v2934 = vadd.f32 %v2898, %v2920
        %v2935 = vlaneseq
        %v2936 = vshrl.u32 %v2935, 7
        %v2937 = vsub.s32 0, %v2936
        %v2938 = vrot.slane %v2807, %v2937
        %v2939 = vlaneseq
        %v2940 = vshrl.u32 %v2939, 7
        %v2941 = vsub.s32 0, %v2940
        %v2942 = vrot.slane %v2808, %v2941
        %v2943 = vmul.f32 %v2761, %v2938
        %v2944 = vmul.f32 %v2762, %v2942
        %v2945 = vmul.f32 %v2765, %v2938
        %v2946 = vmul.f32 %v2766, %v2942
        %v2947 = vmul.f32 %v2769, %v2938
        %v2948 = vmul.f32 %v2770, %v2942
        %v2949 = vmul.f32 %v2773, %v2938
        %v2950 = vmul.f32 %v2774, %v2942
        %v2951 = vmul.f32 %v2777, %v2938
        %v2952 = vmul.f32 %v2778, %v2942
        %v2953 = vmul.f32 %v2781, %v2938
        %v2954 = vmul.f32 %v2782, %v2942
        %v2955 = vmul.f32 %v2785, %v2938
        %v2956 = vmul.f32 %v2786, %v2942
        %v2957 = vadd.f32 %v2921, %v2943
        %v2958 = vadd.f32 %v2922, %v2944
        %v2959 = vadd.f32 %v2923, %v2945
        %v2960 = vadd.f32 %v2924, %v2946
        %v2961 = vadd.f32 %v2925, %v2947
        %v2962 = vadd.f32 %v2926, %v2948
        %v2963 = vadd.f32 %v2927, %v2949
        %v2964 = vadd.f32 %v2928, %v2950
        %v2965 = vadd.f32 %v2929, %v2951
        %v2966 = vadd.f32 %v2930, %v2952
        %v2967 = vadd.f32 %v2931, %v2953
        %v2968 = vadd.f32 %v2932, %v2954
        %v2969 = vadd.f32 %v2933, %v2955
        %v2970 = vadd.f32 %v2934, %v2956
        %v2971 = vlaneseq
        %v2972 = vshrl.u32 %v2971, 7
        %v2973 = vsub.s32 0, %v2972
        %v2974 = vrot.slane %v2809, %v2973
        %v2975 = vlaneseq
        %v2976 = vshrl.u32 %v2975, 7
        %v2977 = vsub.s32 0, %v2976
        %v2978 = vrot.slane %v2810, %v2977
        %v2979 = vmul.f32 %v2765, %v2974
        %v2980 = vmul.f32 %v2766, %v2978
        %v2981 = vmul.f32 %v2769, %v2974
        %v2982 = vmul.f32 %v2770, %v2978
        %v2983 = vmul.f32 %v2773, %v2974
        %v2984 = vmul.f32 %v2774, %v2978
        %v2985 = vmul.f32 %v2777, %v2974
        %v2986 = vmul.f32 %v2778, %v2978
        %v2987 = vmul.f32 %v2781, %v2974
        %v2988 = vmul.f32 %v2782, %v2978
        %v2989 = vmul.f32 %v2785, %v2974
        %v2990 = vmul.f32 %v2786, %v2978
        %v2991 = vmul.f32 %v2789, %v2974
        %v2992 = vmul.f32 %v2790, %v2978
        %v2993 = vadd.f32 %v2957, %v2979
        %v2994 = vadd.f32 %v2958, %v2980
        %v2995 = vadd.f32 %v2959, %v2981
        %v2996 = vadd.f32 %v2960, %v2982
        %v2997 = vadd.f32 %v2961, %v2983
        %v2998 = vadd.f32 %v2962, %v2984
        %v2999 = vadd.f32 %v2963, %v2985
        %v3000 = vadd.f32 %v2964, %v2986
        %v3001 = vadd.f32 %v2965, %v2987
        %v3002 = vadd.f32 %v2966, %v2988
        %v3003 = vadd.f32 %v2967, %v2989
        %v3004 = vadd.f32 %v2968, %v2990
        %v3005 = vadd.f32 %v2969, %v2991
        %v3006 = vadd.f32 %v2970, %v2992
        %v3007 = vlaneseq
        %v3008 = vshrl.u32 %v3007, 7
        %v3009 = vsub.s32 0, %v3008
        %v3010 = vrot.slane %v2811, %v3009
        %v3011 = vlaneseq
        %v3012 = vshrl.u32 %v3011, 7
        %v3013 = vsub.s32 0, %v3012
        %v3014 = vrot.slane %v2812, %v3013
        %v3015 = vmul.f32 %v2769, %v3010
        %v3016 = vmul.f32 %v2770, %v3014
        %v3017 = vmul.f32 %v2773, %v3010
        %v3018 = vmul.f32 %v2774, %v3014
        %v3019 = vmul.f32 %v2777, %v3010
        %v3020 = vmul.f32 %v2778, %v3014
        %v3021 = vmul.f32 %v2781, %v3010
        %v3022 = vmul.f32 %v2782, %v3014
        %v3023 = vmul.f32 %v2785, %v3010
        %v3024 = vmul.f32 %v2786, %v3014
        %v3025 = vmul.f32 %v2789, %v3010
        %v3026 = vmul.f32 %v2790, %v3014
        %v3027 = vmul.f32 %v2793, %v3010
        %v3028 = vmul.f32 %v2794, %v3014
        %v3029 = vadd.f32 %v2993, %v3015
        %v3030 = vadd.f32 %v2994, %v3016
        %v3031 = vadd.f32 %v2995, %v3017
        %v3032 = vadd.f32 %v2996, %v3018
        %v3033 = vadd.f32 %v2997, %v3019
        %v3034 = vadd.f32 %v2998, %v3020
        %v3035 = vadd.f32 %v2999, %v3021
        %v3036 = vadd.f32 %v3000, %v3022
        %v3037 = vadd.f32 %v3001, %v3023
        %v3038 = vadd.f32 %v3002, %v3024
        %v3039 = vadd.f32 %v3003, %v3025
        %v3040 = vadd.f32 %v3004, %v3026
        %v3041 = vadd.f32 %v3005, %v3027
        %v3042 = vadd.f32 %v3006, %v3028
        %v3043 = vlaneseq
        %v3044 = vshrl.u32 %v3043, 7
        %v3045 = vsub.s32 0, %v3044
        %v3046 = vrot.slane %v2813, %v3045
        %v3047 = vlaneseq
        %v3048 = vshrl.u32 %v3047, 7
        %v3049 = vsub.s32 0, %v3048
        %v3050 = vrot.slane %v2814, %v3049
        %v3051 = vmul.f32 %v2773, %v3046
        %v3052 = vmul.f32 %v2774, %v3050
        %v3053 = vmul.f32 %v2777, %v3046
        %v3054 = vmul.f32 %v2778, %v3050
        %v3055 = vmul.f32 %v2781, %v3046
        %v3056 = vmul.f32 %v2782, %v3050
        %v3057 = vmul.f32 %v2785, %v3046
        %v3058 = vmul.f32 %v2786, %v3050
        %v3059 = vmul.f32 %v2789, %v3046
        %v3060 = vmul.f32 %v2790, %v3050
        %v3061 = vmul.f32 %v2793, %v3046
        %v3062 = vmul.f32 %v2794, %v3050
        %v3063 = vmul.f32 %v2797, %v3046
        %v3064 = vmul.f32 %v2798, %v3050
        %v3065 = vadd.f32 %v3029, %v3051
        %v3066 = vadd.f32 %v3030, %v3052
        %v3067 = vadd.f32 %v3031, %v3053
        %v3068 = vadd.f32 %v3032, %v3054
        %v3069 = vadd.f32 %v3033, %v3055
        %v3070 = vadd.f32 %v3034, %v3056
        %v3071 = vadd.f32 %v3035, %v3057
        %v3072 = vadd.f32 %v3036, %v3058
        %v3073 = vadd.f32 %v3037, %v3059
        %v3074 = vadd.f32 %v3038, %v3060
        %v3075 = vadd.f32 %v3039, %v3061
        %v3076 = vadd.f32 %v3040, %v3062
        %v3077 = vadd.f32 %v3041, %v3063
        %v3078 = vadd.f32 %v3042, %v3064
        %v3079 = vlaneseq
        %v3080 = vshrl.u32 %v3079, 7
        %v3081 = vsub.s32 1, %v3080
        %v3082 = vrot.slane %v2801, %v3081
        %v3083 = vlaneseq
        %v3084 = vshrl.u32 %v3083, 7
        %v3085 = vsub.s32 1, %v3084
        %v3086 = vrot.slane %v2802, %v3085
        %v3087 = vmul.f32 %v2749, %v3082
        %v3088 = vmul.f32 %v2750, %v3086
        %v3089 = vmul.f32 %v2753, %v3082
        %v3090 = vmul.f32 %v2754, %v3086
        %v3091 = vmul.f32 %v2757, %v3082
        %v3092 = vmul.f32 %v2758, %v3086
        %v3093 = vmul.f32 %v2761, %v3082
        %v3094 = vmul.f32 %v2762, %v3086
        %v3095 = vmul.f32 %v2765, %v3082
        %v3096 = vmul.f32 %v2766, %v3086
        %v3097 = vmul.f32 %v2769, %v3082
        %v3098 = vmul.f32 %v2770, %v3086
        %v3099 = vmul.f32 %v2773, %v3082
        %v3100 = vmul.f32 %v2774, %v3086
        %v3115 = vrot.slane %v3087, 1
        %v3116 = vrot.slane %v3088, 1
        %v3117 = vrot.slane %v3089, 1
        %v3118 = vrot.slane %v3090, 1
        %v3119 = vrot.slane %v3091, 1
        %v3120 = vrot.slane %v3092, 1
        %v3121 = vrot.slane %v3093, 1
        %v3122 = vrot.slane %v3094, 1
        %v3123 = vrot.slane %v3095, 1
        %v3124 = vrot.slane %v3096, 1
        %v3125 = vrot.slane %v3097, 1
        %v3126 = vrot.slane %v3098, 1
        %v3127 = vrot.slane %v3099, 1
        %v3128 = vrot.slane %v3100, 1
        %v3143 = vadd.f32 %v3065, %v3115
        %v3144 = vadd.f32 %v3066, %v3116
        %v3145 = vadd.f32 %v3067, %v3117
        %v3146 = vadd.f32 %v3068, %v3118
        %v3147 = vadd.f32 %v3069, %v3119
        %v3148 = vadd.f32 %v3070, %v3120
        %v3149 = vadd.f32 %v3071, %v3121
        %v3150 = vadd.f32 %v3072, %v3122
        %v3151 = vadd.f32 %v3073, %v3123
        %v3152 = vadd.f32 %v3074, %v3124
        %v3153 = vadd.f32 %v3075, %v3125
        %v3154 = vadd.f32 %v3076, %v3126
        %v3155 = vadd.f32 %v3077, %v3127
        %v3156 = vadd.f32 %v3078, %v3128
        %v3157 = vlaneseq
        %v3158 = vshrl.u32 %v3157, 7
        %v3159 = vsub.s32 1, %v3158
        %v3160 = vrot.slane %v2803, %v3159
        %v3161 = vlaneseq
        %v3162 = vshrl.u32 %v3161, 7
        %v3163 = vsub.s32 1, %v3162
        %v3164 = vrot.slane %v2804, %v3163
        %v3165 = vmul.f32 %v2753, %v3160
        %v3166 = vmul.f32 %v2754, %v3164
        %v3167 = vmul.f32 %v2757, %v3160
        %v3168 = vmul.f32 %v2758, %v3164
        %v3169 = vmul.f32 %v2761, %v3160
        %v3170 = vmul.f32 %v2762, %v3164
        %v3171 = vmul.f32 %v2765, %v3160
        %v3172 = vmul.f32 %v2766, %v3164
        %v3173 = vmul.f32 %v2769, %v3160
        %v3174 = vmul.f32 %v2770, %v3164
        %v3175 = vmul.f32 %v2773, %v3160
        %v3176 = vmul.f32 %v2774, %v3164
        %v3177 = vmul.f32 %v2777, %v3160
        %v3178 = vmul.f32 %v2778, %v3164
        %v3193 = vrot.slane %v3165, 1
        %v3194 = vrot.slane %v3166, 1
        %v3195 = vrot.slane %v3167, 1
        %v3196 = vrot.slane %v3168, 1
        %v3197 = vrot.slane %v3169, 1
        %v3198 = vrot.slane %v3170, 1
        %v3199 = vrot.slane %v3171, 1
        %v3200 = vrot.slane %v3172, 1
        %v3201 = vrot.slane %v3173, 1
        %v3202 = vrot.slane %v3174, 1
        %v3203 = vrot.slane %v3175, 1
        %v3204 = vrot.slane %v3176, 1
        %v3205 = vrot.slane %v3177, 1
        %v3206 = vrot.slane %v3178, 1
        %v3221 = vadd.f32 %v3143, %v3193
        %v3222 = vadd.f32 %v3144, %v3194
        %v3223 = vadd.f32 %v3145, %v3195
        %v3224 = vadd.f32 %v3146, %v3196
        %v3225 = vadd.f32 %v3147, %v3197
        %v3226 = vadd.f32 %v3148, %v3198
        %v3227 = vadd.f32 %v3149, %v3199
        %v3228 = vadd.f32 %v3150, %v3200
        %v3229 = vadd.f32 %v3151, %v3201
        %v3230 = vadd.f32 %v3152, %v3202
        %v3231 = vadd.f32 %v3153, %v3203
        %v3232 = vadd.f32 %v3154, %v3204
        %v3233 = vadd.f32 %v3155, %v3205
        %v3234 = vadd.f32 %v3156, %v3206
        %v3235 = vlaneseq
        %v3236 = vshrl.u32 %v3235, 7
        %v3237 = vsub.s32 1, %v3236
        %v3238 = vrot.slane %v2805, %v3237
        %v3239 = vlaneseq
        %v3240 = vshrl.u32 %v3239, 7
        %v3241 = vsub.s32 1, %v3240
        %v3242 = vrot.slane %v2806, %v3241
        %v3243 = vmul.f32 %v2757, %v3238
        %v3244 = vmul.f32 %v2758, %v3242
        %v3245 = vmul.f32 %v2761, %v3238
        %v3246 = vmul.f32 %v2762, %v3242
        %v3247 = vmul.f32 %v2765, %v3238
        %v3248 = vmul.f32 %v2766, %v3242
        %v3249 = vmul.f32 %v2769, %v3238
        %v3250 = vmul.f32 %v2770, %v3242
        %v3251 = vmul.f32 %v2773, %v3238
        %v3252 = vmul.f32 %v2774, %v3242
        %v3253 = vmul.f32 %v2777, %v3238
        %v3254 = vmul.f32 %v2778, %v3242
        %v3255 = vmul.f32 %v2781, %v3238
        %v3256 = vmul.f32 %v2782, %v3242
        %v3271 = vrot.slane %v3243, 1
        %v3272 = vrot.slane %v3244, 1
        %v3273 = vrot.slane %v3245, 1
        %v3274 = vrot.slane %v3246, 1
        %v3275 = vrot.slane %v3247, 1
        %v3276 = vrot.slane %v3248, 1
        %v3277 = vrot.slane %v3249, 1
        %v3278 = vrot.slane %v3250, 1
        %v3279 = vrot.slane %v3251, 1
        %v3280 = vrot.slane %v3252, 1
        %v3281 = vrot.slane %v3253, 1
        %v3282 = vrot.slane %v3254, 1
        %v3283 = vrot.slane %v3255, 1
        %v3284 = vrot.slane %v3256, 1
        %v3299 = vadd.f32 %v3221, %v3271
        %v3300 = vadd.f32 %v3222, %v3272
        %v3301 = vadd.f32 %v3223, %v3273
        %v3302 = vadd.f32 %v3224, %v3274
        %v3303 = vadd.f32 %v3225, %v3275
        %v3304 = vadd.f32 %v3226, %v3276
        %v3305 = vadd.f32 %v3227, %v3277
        %v3306 = vadd.f32 %v3228, %v3278
        %v3307 = vadd.f32 %v3229, %v3279
        %v3308 = vadd.f32 %v3230, %v3280
        %v3309 = vadd.f32 %v3231, %v3281
        %v3310 = vadd.f32 %v3232, %v3282
        %v3311 = vadd.f32 %v3233, %v3283
        %v3312 = vadd.f32 %v3234, %v3284
        %v3313 = vlaneseq
        %v3314 = vshrl.u32 %v3313, 7
        %v3315 = vsub.s32 1, %v3314
        %v3316 = vrot.slane %v2807, %v3315
        %v3317 = vlaneseq
        %v3318 = vshrl.u32 %v3317, 7
        %v3319 = vsub.s32 1, %v3318
        %v3320 = vrot.slane %v2808, %v3319
        %v3321 = vmul.f32 %v2761, %v3316
        %v3322 = vmul.f32 %v2762, %v3320
        %v3323 = vmul.f32 %v2765, %v3316
        %v3324 = vmul.f32 %v2766, %v3320
        %v3325 = vmul.f32 %v2769, %v3316
        %v3326 = vmul.f32 %v2770, %v3320
        %v3327 = vmul.f32 %v2773, %v3316
        %v3328 = vmul.f32 %v2774, %v3320
        %v3329 = vmul.f32 %v2777, %v3316
        %v3330 = vmul.f32 %v2778, %v3320
        %v3331 = vmul.f32 %v2781, %v3316
        %v3332 = vmul.f32 %v2782, %v3320
        %v3333 = vmul.f32 %v2785, %v3316
        %v3334 = vmul.f32 %v2786, %v3320
        %v3349 = vrot.slane %v3321, 1
        %v3350 = vrot.slane %v3322, 1
        %v3351 = vrot.slane %v3323, 1
        %v3352 = vrot.slane %v3324, 1
        %v3353 = vrot.slane %v3325, 1
        %v3354 = vrot.slane %v3326, 1
        %v3355 = vrot.slane %v3327, 1
        %v3356 = vrot.slane %v3328, 1
        %v3357 = vrot.slane %v3329, 1
        %v3358 = vrot.slane %v3330, 1
        %v3359 = vrot.slane %v3331, 1
        %v3360 = vrot.slane %v3332, 1
        %v3361 = vrot.slane %v3333, 1
        %v3362 = vrot.slane %v3334, 1
        %v3377 = vadd.f32 %v3299, %v3349
        %v3378 = vadd.f32 %v3300, %v3350
        %v3379 = vadd.f32 %v3301, %v3351
        %v3380 = vadd.f32 %v3302, %v3352
        %v3381 = vadd.f32 %v3303, %v3353
        %v3382 = vadd.f32 %v3304, %v3354
        %v3383 = vadd.f32 %v3305, %v3355
        %v3384 = vadd.f32 %v3306, %v3356
        %v3385 = vadd.f32 %v3307, %v3357
        %v3386 = vadd.f32 %v3308, %v3358
        %v3387 = vadd.f32 %v3309, %v3359
        %v3388 = vadd.f32 %v3310, %v3360
        %v3389 = vadd.f32 %v3311, %v3361
        %v3390 = vadd.f32 %v3312, %v3362
        %v3391 = vlaneseq
        %v3392 = vshrl.u32 %v3391, 7
        %v3393 = vsub.s32 1, %v3392
        %v3394 = vrot.slane %v2809, %v3393
        %v3395 = vlaneseq
        %v3396 = vshrl.u32 %v3395, 7
        %v3397 = vsub.s32 1, %v3396
        %v3398 = vrot.slane %v2810, %v3397
        %v3399 = vmul.f32 %v2765, %v3394
        %v3400 = vmul.f32 %v2766, %v3398
        %v3401 = vmul.f32 %v2769, %v3394
        %v3402 = vmul.f32 %v2770, %v3398
        %v3403 = vmul.f32 %v2773, %v3394
        %v3404 = vmul.f32 %v2774, %v3398
        %v3405 = vmul.f32 %v2777, %v3394
        %v3406 = vmul.f32 %v2778, %v3398
        %v3407 = vmul.f32 %v2781, %v3394
        %v3408 = vmul.f32 %v2782, %v3398
        %v3409 = vmul.f32 %v2785, %v3394
        %v3410 = vmul.f32 %v2786, %v3398
        %v3411 = vmul.f32 %v2789, %v3394
        %v3412 = vmul.f32 %v2790, %v3398
        %v3427 = vrot.slane %v3399, 1
        %v3428 = vrot.slane %v3400, 1
        %v3429 = vrot.slane %v3401, 1
        %v3430 = vrot.slane %v3402, 1
        %v3431 = vrot.slane %v3403, 1
        %v3432 = vrot.slane %v3404, 1
        %v3433 = vrot.slane %v3405, 1
        %v3434 = vrot.slane %v3406, 1
        %v3435 = vrot.slane %v3407, 1
        %v3436 = vrot.slane %v3408, 1
        %v3437 = vrot.slane %v3409, 1
        %v3438 = vrot.slane %v3410, 1
        %v3439 = vrot.slane %v3411, 1
        %v3440 = vrot.slane %v3412, 1
        %v3455 = vadd.f32 %v3377, %v3427
        %v3456 = vadd.f32 %v3378, %v3428
        %v3457 = vadd.f32 %v3379, %v3429
        %v3458 = vadd.f32 %v3380, %v3430
        %v3459 = vadd.f32 %v3381, %v3431
        %v3460 = vadd.f32 %v3382, %v3432
        %v3461 = vadd.f32 %v3383, %v3433
        %v3462 = vadd.f32 %v3384, %v3434
        %v3463 = vadd.f32 %v3385, %v3435
        %v3464 = vadd.f32 %v3386, %v3436
        %v3465 = vadd.f32 %v3387, %v3437
        %v3466 = vadd.f32 %v3388, %v3438
        %v3467 = vadd.f32 %v3389, %v3439
        %v3468 = vadd.f32 %v3390, %v3440
        %v3469 = vlaneseq
        %v3470 = vshrl.u32 %v3469, 7
        %v3471 = vsub.s32 1, %v3470
        %v3472 = vrot.slane %v2811, %v3471
        %v3473 = vlaneseq
        %v3474 = vshrl.u32 %v3473, 7
        %v3475 = vsub.s32 1, %v3474
        %v3476 = vrot.slane %v2812, %v3475
        %v3477 = vmul.f32 %v2769, %v3472
        %v3478 = vmul.f32 %v2770, %v3476
        %v3479 = vmul.f32 %v2773, %v3472
        %v3480 = vmul.f32 %v2774, %v3476
        %v3481 = vmul.f32 %v2777, %v3472
        %v3482 = vmul.f32 %v2778, %v3476
        %v3483 = vmul.f32 %v2781, %v3472
        %v3484 = vmul.f32 %v2782, %v3476
        %v3485 = vmul.f32 %v2785, %v3472
        %v3486 = vmul.f32 %v2786, %v3476
        %v3487 = vmul.f32 %v2789, %v3472
        %v3488 = vmul.f32 %v2790, %v3476
        %v3489 = vmul.f32 %v2793, %v3472
        %v3490 = vmul.f32 %v2794, %v3476
        %v3505 = vrot.slane %v3477, 1
        %v3506 = vrot.slane %v3478, 1
        %v3507 = vrot.slane %v3479, 1
        %v3508 = vrot.slane %v3480, 1
        %v3509 = vrot.slane %v3481, 1
        %v3510 = vrot.slane %v3482, 1
        %v3511 = vrot.slane %v3483, 1
        %v3512 = vrot.slane %v3484, 1
        %v3513 = vrot.slane %v3485, 1
        %v3514 = vrot.slane %v3486, 1
        %v3515 = vrot.slane %v3487, 1
        %v3516 = vrot.slane %v3488, 1
        %v3517 = vrot.slane %v3489, 1
        %v3518 = vrot.slane %v3490, 1
        %v3533 = vadd.f32 %v3455, %v3505
        %v3534 = vadd.f32 %v3456, %v3506
        %v3535 = vadd.f32 %v3457, %v3507
        %v3536 = vadd.f32 %v3458, %v3508
        %v3537 = vadd.f32 %v3459, %v3509
        %v3538 = vadd.f32 %v3460, %v3510
        %v3539 = vadd.f32 %v3461, %v3511
        %v3540 = vadd.f32 %v3462, %v3512
        %v3541 = vadd.f32 %v3463, %v3513
        %v3542 = vadd.f32 %v3464, %v3514
        %v3543 = vadd.f32 %v3465, %v3515
        %v3544 = vadd.f32 %v3466, %v3516
        %v3545 = vadd.f32 %v3467, %v3517
        %v3546 = vadd.f32 %v3468, %v3518
        %v3547 = vlaneseq
        %v3548 = vshrl.u32 %v3547, 7
        %v3549 = vsub.s32 1, %v3548
        %v3550 = vrot.slane %v2813, %v3549
        %v3551 = vlaneseq
        %v3552 = vshrl.u32 %v3551, 7
        %v3553 = vsub.s32 1, %v3552
        %v3554 = vrot.slane %v2814, %v3553
        %v3555 = vmul.f32 %v2773, %v3550
        %v3556 = vmul.f32 %v2774, %v3554
        %v3557 = vmul.f32 %v2777, %v3550
        %v3558 = vmul.f32 %v2778, %v3554
        %v3559 = vmul.f32 %v2781, %v3550
        %v3560 = vmul.f32 %v2782, %v3554
        %v3561 = vmul.f32 %v2785, %v3550
        %v3562 = vmul.f32 %v2786, %v3554
        %v3563 = vmul.f32 %v2789, %v3550
        %v3564 = vmul.f32 %v2790, %v3554
        %v3565 = vmul.f32 %v2793, %v3550
        %v3566 = vmul.f32 %v2794, %v3554
        %v3567 = vmul.f32 %v2797, %v3550
        %v3568 = vmul.f32 %v2798, %v3554
        %v3583 = vrot.slane %v3555, 1
        %v3584 = vrot.slane %v3556, 1
        %v3585 = vrot.slane %v3557, 1
        %v3586 = vrot.slane %v3558, 1
        %v3587 = vrot.slane %v3559, 1
        %v3588 = vrot.slane %v3560, 1
        %v3589 = vrot.slane %v3561, 1
        %v3590 = vrot.slane %v3562, 1
        %v3591 = vrot.slane %v3563, 1
        %v3592 = vrot.slane %v3564, 1
        %v3593 = vrot.slane %v3565, 1
        %v3594 = vrot.slane %v3566, 1
        %v3595 = vrot.slane %v3567, 1
        %v3596 = vrot.slane %v3568, 1
        %v3611 = vadd.f32 %v3533, %v3583
        %v3612 = vadd.f32 %v3534, %v3584
        %v3613 = vadd.f32 %v3535, %v3585
        %v3614 = vadd.f32 %v3536, %v3586
        %v3615 = vadd.f32 %v3537, %v3587
        %v3616 = vadd.f32 %v3538, %v3588
        %v3617 = vadd.f32 %v3539, %v3589
        %v3618 = vadd.f32 %v3540, %v3590
        %v3619 = vadd.f32 %v3541, %v3591
        %v3620 = vadd.f32 %v3542, %v3592
        %v3621 = vadd.f32 %v3543, %v3593
        %v3622 = vadd.f32 %v3544, %v3594
        %v3623 = vadd.f32 %v3545, %v3595
        %v3624 = vadd.f32 %v3546, %v3596
        %v3625 = vlaneseq
        %v3626 = vshrl.u32 %v3625, 7
        %v3627 = vsub.s32 2, %v3626
        %v3628 = vrot.slane %v2801, %v3627
        %v3629 = vlaneseq
        %v3630 = vshrl.u32 %v3629, 7
        %v3631 = vsub.s32 2, %v3630
        %v3632 = vrot.slane %v2802, %v3631
        %v3633 = vmul.f32 %v2749, %v3628
        %v3634 = vmul.f32 %v2750, %v3632
        %v3635 = vmul.f32 %v2751, %v3628
        %v3636 = vmul.f32 %v2752, %v3632
        %v3637 = vmul.f32 %v2753, %v3628
        %v3638 = vmul.f32 %v2754, %v3632
        %v3639 = vmul.f32 %v2755, %v3628
        %v3640 = vmul.f32 %v2756, %v3632
        %v3641 = vmul.f32 %v2757, %v3628
        %v3642 = vmul.f32 %v2758, %v3632
        %v3643 = vmul.f32 %v2759, %v3628
        %v3644 = vmul.f32 %v2760, %v3632
        %v3645 = vmul.f32 %v2761, %v3628
        %v3646 = vmul.f32 %v2762, %v3632
        %v3647 = vmul.f32 %v2763, %v3628
        %v3648 = vmul.f32 %v2764, %v3632
        %v3649 = vmul.f32 %v2765, %v3628
        %v3650 = vmul.f32 %v2766, %v3632
        %v3651 = vmul.f32 %v2767, %v3628
        %v3652 = vmul.f32 %v2768, %v3632
        %v3653 = vmul.f32 %v2769, %v3628
        %v3654 = vmul.f32 %v2770, %v3632
        %v3655 = vmul.f32 %v2771, %v3628
        %v3656 = vmul.f32 %v2772, %v3632
        %v3657 = vmul.f32 %v2773, %v3628
        %v3658 = vmul.f32 %v2774, %v3632
        %v3659 = vmul.f32 %v2775, %v3628
        %v3660 = vmul.f32 %v2776, %v3632
        %v3689 = vrot.slane %v3633, 2
        %v3690 = vrot.slane %v3635, 2
        %v3691 = vsel %vm2690, %v3689, %v3690
        %v3692 = vrot.slane %v3634, 2
        %v3693 = vrot.slane %v3636, 2
        %v3694 = vsel %vm2690, %v3692, %v3693
        %v3695 = vrot.slane %v3637, 2
        %v3696 = vrot.slane %v3639, 2
        %v3697 = vsel %vm2690, %v3695, %v3696
        %v3698 = vrot.slane %v3638, 2
        %v3699 = vrot.slane %v3640, 2
        %v3700 = vsel %vm2690, %v3698, %v3699
        %v3701 = vrot.slane %v3641, 2
        %v3702 = vrot.slane %v3643, 2
        %v3703 = vsel %vm2690, %v3701, %v3702
        %v3704 = vrot.slane %v3642, 2
        %v3705 = vrot.slane %v3644, 2
        %v3706 = vsel %vm2690, %v3704, %v3705
        %v3707 = vrot.slane %v3645, 2
        %v3708 = vrot.slane %v3647, 2
        %v3709 = vsel %vm2690, %v3707, %v3708
        %v3710 = vrot.slane %v3646, 2
        %v3711 = vrot.slane %v3648, 2
        %v3712 = vsel %vm2690, %v3710, %v3711
        %v3713 = vrot.slane %v3649, 2
        %v3714 = vrot.slane %v3651, 2
        %v3715 = vsel %vm2690, %v3713, %v3714
        %v3716 = vrot.slane %v3650, 2
        %v3717 = vrot.slane %v3652, 2
        %v3718 = vsel %vm2690, %v3716, %v3717
        %v3719 = vrot.slane %v3653, 2
        %v3720 = vrot.slane %v3655, 2
        %v3721 = vsel %vm2690, %v3719, %v3720
        %v3722 = vrot.slane %v3654, 2
        %v3723 = vrot.slane %v3656, 2
        %v3724 = vsel %vm2690, %v3722, %v3723
        %v3725 = vrot.slane %v3657, 2
        %v3726 = vrot.slane %v3659, 2
        %v3727 = vsel %vm2690, %v3725, %v3726
        %v3728 = vrot.slane %v3658, 2
        %v3729 = vrot.slane %v3660, 2
        %v3730 = vsel %vm2690, %v3728, %v3729
        %v3745 = vadd.f32 %v3611, %v3691
        %v3746 = vadd.f32 %v3612, %v3694
        %v3747 = vadd.f32 %v3613, %v3697
        %v3748 = vadd.f32 %v3614, %v3700
        %v3749 = vadd.f32 %v3615, %v3703
        %v3750 = vadd.f32 %v3616, %v3706
        %v3751 = vadd.f32 %v3617, %v3709
        %v3752 = vadd.f32 %v3618, %v3712
        %v3753 = vadd.f32 %v3619, %v3715
        %v3754 = vadd.f32 %v3620, %v3718
        %v3755 = vadd.f32 %v3621, %v3721
        %v3756 = vadd.f32 %v3622, %v3724
        %v3757 = vadd.f32 %v3623, %v3727
        %v3758 = vadd.f32 %v3624, %v3730
        %v3759 = vlaneseq
        %v3760 = vshrl.u32 %v3759, 7
        %v3761 = vsub.s32 2, %v3760
        %v3762 = vrot.slane %v2803, %v3761
        %v3763 = vlaneseq
        %v3764 = vshrl.u32 %v3763, 7
        %v3765 = vsub.s32 2, %v3764
        %v3766 = vrot.slane %v2804, %v3765
        %v3767 = vmul.f32 %v2753, %v3762
        %v3768 = vmul.f32 %v2754, %v3766
        %v3769 = vmul.f32 %v2755, %v3762
        %v3770 = vmul.f32 %v2756, %v3766
        %v3771 = vmul.f32 %v2757, %v3762
        %v3772 = vmul.f32 %v2758, %v3766
        %v3773 = vmul.f32 %v2759, %v3762
        %v3774 = vmul.f32 %v2760, %v3766
        %v3775 = vmul.f32 %v2761, %v3762
        %v3776 = vmul.f32 %v2762, %v3766
        %v3777 = vmul.f32 %v2763, %v3762
        %v3778 = vmul.f32 %v2764, %v3766
        %v3779 = vmul.f32 %v2765, %v3762
        %v3780 = vmul.f32 %v2766, %v3766
        %v3781 = vmul.f32 %v2767, %v3762
        %v3782 = vmul.f32 %v2768, %v3766
        %v3783 = vmul.f32 %v2769, %v3762
        %v3784 = vmul.f32 %v2770, %v3766
        %v3785 = vmul.f32 %v2771, %v3762
        %v3786 = vmul.f32 %v2772, %v3766
        %v3787 = vmul.f32 %v2773, %v3762
        %v3788 = vmul.f32 %v2774, %v3766
        %v3789 = vmul.f32 %v2775, %v3762
        %v3790 = vmul.f32 %v2776, %v3766
        %v3791 = vmul.f32 %v2777, %v3762
        %v3792 = vmul.f32 %v2778, %v3766
        %v3793 = vmul.f32 %v2779, %v3762
        %v3794 = vmul.f32 %v2780, %v3766
        %v3823 = vrot.slane %v3767, 2
        %v3824 = vrot.slane %v3769, 2
        %v3825 = vsel %vm2690, %v3823, %v3824
        %v3826 = vrot.slane %v3768, 2
        %v3827 = vrot.slane %v3770, 2
        %v3828 = vsel %vm2690, %v3826, %v3827
        %v3829 = vrot.slane %v3771, 2
        %v3830 = vrot.slane %v3773, 2
        %v3831 = vsel %vm2690, %v3829, %v3830
        %v3832 = vrot.slane %v3772, 2
        %v3833 = vrot.slane %v3774, 2
        %v3834 = vsel %vm2690, %v3832, %v3833
        %v3835 = vrot.slane %v3775, 2
        %v3836 = vrot.slane %v3777, 2
        %v3837 = vsel %vm2690, %v3835, %v3836
        %v3838 = vrot.slane %v3776, 2
        %v3839 = vrot.slane %v3778, 2
        %v3840 = vsel %vm2690, %v3838, %v3839
        %v3841 = vrot.slane %v3779, 2
        %v3842 = vrot.slane %v3781, 2
        %v3843 = vsel %vm2690, %v3841, %v3842
        %v3844 = vrot.slane %v3780, 2
        %v3845 = vrot.slane %v3782, 2
        %v3846 = vsel %vm2690, %v3844, %v3845
        %v3847 = vrot.slane %v3783, 2
        %v3848 = vrot.slane %v3785, 2
        %v3849 = vsel %vm2690, %v3847, %v3848
        %v3850 = vrot.slane %v3784, 2
        %v3851 = vrot.slane %v3786, 2
        %v3852 = vsel %vm2690, %v3850, %v3851
        %v3853 = vrot.slane %v3787, 2
        %v3854 = vrot.slane %v3789, 2
        %v3855 = vsel %vm2690, %v3853, %v3854
        %v3856 = vrot.slane %v3788, 2
        %v3857 = vrot.slane %v3790, 2
        %v3858 = vsel %vm2690, %v3856, %v3857
        %v3859 = vrot.slane %v3791, 2
        %v3860 = vrot.slane %v3793, 2
        %v3861 = vsel %vm2690, %v3859, %v3860
        %v3862 = vrot.slane %v3792, 2
        %v3863 = vrot.slane %v3794, 2
        %v3864 = vsel %vm2690, %v3862, %v3863
        %v3879 = vadd.f32 %v3745, %v3825
        %v3880 = vadd.f32 %v3746, %v3828
        %v3881 = vadd.f32 %v3747, %v3831
        %v3882 = vadd.f32 %v3748, %v3834
        %v3883 = vadd.f32 %v3749, %v3837
        %v3884 = vadd.f32 %v3750, %v3840
        %v3885 = vadd.f32 %v3751, %v3843
        %v3886 = vadd.f32 %v3752, %v3846
        %v3887 = vadd.f32 %v3753, %v3849
        %v3888 = vadd.f32 %v3754, %v3852
        %v3889 = vadd.f32 %v3755, %v3855
        %v3890 = vadd.f32 %v3756, %v3858
        %v3891 = vadd.f32 %v3757, %v3861
        %v3892 = vadd.f32 %v3758, %v3864
        %v3893 = vlaneseq
        %v3894 = vshrl.u32 %v3893, 7
        %v3895 = vsub.s32 2, %v3894
        %v3896 = vrot.slane %v2805, %v3895
        %v3897 = vlaneseq
        %v3898 = vshrl.u32 %v3897, 7
        %v3899 = vsub.s32 2, %v3898
        %v3900 = vrot.slane %v2806, %v3899
        %v3901 = vmul.f32 %v2757, %v3896
        %v3902 = vmul.f32 %v2758, %v3900
        %v3903 = vmul.f32 %v2759, %v3896
        %v3904 = vmul.f32 %v2760, %v3900
        %v3905 = vmul.f32 %v2761, %v3896
        %v3906 = vmul.f32 %v2762, %v3900
        %v3907 = vmul.f32 %v2763, %v3896
        %v3908 = vmul.f32 %v2764, %v3900
        %v3909 = vmul.f32 %v2765, %v3896
        %v3910 = vmul.f32 %v2766, %v3900
        %v3911 = vmul.f32 %v2767, %v3896
        %v3912 = vmul.f32 %v2768, %v3900
        %v3913 = vmul.f32 %v2769, %v3896
        %v3914 = vmul.f32 %v2770, %v3900
        %v3915 = vmul.f32 %v2771, %v3896
        %v3916 = vmul.f32 %v2772, %v3900
        %v3917 = vmul.f32 %v2773, %v3896
        %v3918 = vmul.f32 %v2774, %v3900
        %v3919 = vmul.f32 %v2775, %v3896
        %v3920 = vmul.f32 %v2776, %v3900
        %v3921 = vmul.f32 %v2777, %v3896
        %v3922 = vmul.f32 %v2778, %v3900
        %v3923 = vmul.f32 %v2779, %v3896
        %v3924 = vmul.f32 %v2780, %v3900
        %v3925 = vmul.f32 %v2781, %v3896
        %v3926 = vmul.f32 %v2782, %v3900
        %v3927 = vmul.f32 %v2783, %v3896
        %v3928 = vmul.f32 %v2784, %v3900
        %v3957 = vrot.slane %v3901, 2
        %v3958 = vrot.slane %v3903, 2
        %v3959 = vsel %vm2690, %v3957, %v3958
        %v3960 = vrot.slane %v3902, 2
        %v3961 = vrot.slane %v3904, 2
        %v3962 = vsel %vm2690, %v3960, %v3961
        %v3963 = vrot.slane %v3905, 2
        %v3964 = vrot.slane %v3907, 2
        %v3965 = vsel %vm2690, %v3963, %v3964
        %v3966 = vrot.slane %v3906, 2
        %v3967 = vrot.slane %v3908, 2
        %v3968 = vsel %vm2690, %v3966, %v3967
        %v3969 = vrot.slane %v3909, 2
        %v3970 = vrot.slane %v3911, 2
        %v3971 = vsel %vm2690, %v3969, %v3970
        %v3972 = vrot.slane %v3910, 2
        %v3973 = vrot.slane %v3912, 2
        %v3974 = vsel %vm2690, %v3972, %v3973
        %v3975 = vrot.slane %v3913, 2
        %v3976 = vrot.slane %v3915, 2
        %v3977 = vsel %vm2690, %v3975, %v3976
        %v3978 = vrot.slane %v3914, 2
        %v3979 = vrot.slane %v3916, 2
        %v3980 = vsel %vm2690, %v3978, %v3979
        %v3981 = vrot.slane %v3917, 2
        %v3982 = vrot.slane %v3919, 2
        %v3983 = vsel %vm2690, %v3981, %v3982
        %v3984 = vrot.slane %v3918, 2
        %v3985 = vrot.slane %v3920, 2
        %v3986 = vsel %vm2690, %v3984, %v3985
        %v3987 = vrot.slane %v3921, 2
        %v3988 = vrot.slane %v3923, 2
        %v3989 = vsel %vm2690, %v3987, %v3988
        %v3990 = vrot.slane %v3922, 2
        %v3991 = vrot.slane %v3924, 2
        %v3992 = vsel %vm2690, %v3990, %v3991
        %v3993 = vrot.slane %v3925, 2
        %v3994 = vrot.slane %v3927, 2
        %v3995 = vsel %vm2690, %v3993, %v3994
        %v3996 = vrot.slane %v3926, 2
        %v3997 = vrot.slane %v3928, 2
        %v3998 = vsel %vm2690, %v3996, %v3997
        %v4013 = vadd.f32 %v3879, %v3959
        %v4014 = vadd.f32 %v3880, %v3962
        %v4015 = vadd.f32 %v3881, %v3965
        %v4016 = vadd.f32 %v3882, %v3968
        %v4017 = vadd.f32 %v3883, %v3971
        %v4018 = vadd.f32 %v3884, %v3974
        %v4019 = vadd.f32 %v3885, %v3977
        %v4020 = vadd.f32 %v3886, %v3980
        %v4021 = vadd.f32 %v3887, %v3983
        %v4022 = vadd.f32 %v3888, %v3986
        %v4023 = vadd.f32 %v3889, %v3989
        %v4024 = vadd.f32 %v3890, %v3992
        %v4025 = vadd.f32 %v3891, %v3995
        %v4026 = vadd.f32 %v3892, %v3998
        %v4027 = vlaneseq
        %v4028 = vshrl.u32 %v4027, 7
        %v4029 = vsub.s32 2, %v4028
        %v4030 = vrot.slane %v2807, %v4029
        %v4031 = vlaneseq
        %v4032 = vshrl.u32 %v4031, 7
        %v4033 = vsub.s32 2, %v4032
        %v4034 = vrot.slane %v2808, %v4033
        %v4035 = vmul.f32 %v2761, %v4030
        %v4036 = vmul.f32 %v2762, %v4034
        %v4037 = vmul.f32 %v2763, %v4030
        %v4038 = vmul.f32 %v2764, %v4034
        %v4039 = vmul.f32 %v2765, %v4030
        %v4040 = vmul.f32 %v2766, %v4034
        %v4041 = vmul.f32 %v2767, %v4030
        %v4042 = vmul.f32 %v2768, %v4034
        %v4043 = vmul.f32 %v2769, %v4030
        %v4044 = vmul.f32 %v2770, %v4034
        %v4045 = vmul.f32 %v2771, %v4030
        %v4046 = vmul.f32 %v2772, %v4034
        %v4047 = vmul.f32 %v2773, %v4030
        %v4048 = vmul.f32 %v2774, %v4034
        %v4049 = vmul.f32 %v2775, %v4030
        %v4050 = vmul.f32 %v2776, %v4034
        %v4051 = vmul.f32 %v2777, %v4030
        %v4052 = vmul.f32 %v2778, %v4034
        %v4053 = vmul.f32 %v2779, %v4030
        %v4054 = vmul.f32 %v2780, %v4034
        %v4055 = vmul.f32 %v2781, %v4030
        %v4056 = vmul.f32 %v2782, %v4034
        %v4057 = vmul.f32 %v2783, %v4030
        %v4058 = vmul.f32 %v2784, %v4034
        %v4059 = vmul.f32 %v2785, %v4030
        %v4060 = vmul.f32 %v2786, %v4034
        %v4061 = vmul.f32 %v2787, %v4030
        %v4062 = vmul.f32 %v2788, %v4034
        %v4091 = vrot.slane %v4035, 2
        %v4092 = vrot.slane %v4037, 2
        %v4093 = vsel %vm2690, %v4091, %v4092
        %v4094 = vrot.slane %v4036, 2
        %v4095 = vrot.slane %v4038, 2
        %v4096 = vsel %vm2690, %v4094, %v4095
        %v4097 = vrot.slane %v4039, 2
        %v4098 = vrot.slane %v4041, 2
        %v4099 = vsel %vm2690, %v4097, %v4098
        %v4100 = vrot.slane %v4040, 2
        %v4101 = vrot.slane %v4042, 2
        %v4102 = vsel %vm2690, %v4100, %v4101
        %v4103 = vrot.slane %v4043, 2
        %v4104 = vrot.slane %v4045, 2
        %v4105 = vsel %vm2690, %v4103, %v4104
        %v4106 = vrot.slane %v4044, 2
        %v4107 = vrot.slane %v4046, 2
        %v4108 = vsel %vm2690, %v4106, %v4107
        %v4109 = vrot.slane %v4047, 2
        %v4110 = vrot.slane %v4049, 2
        %v4111 = vsel %vm2690, %v4109, %v4110
        %v4112 = vrot.slane %v4048, 2
        %v4113 = vrot.slane %v4050, 2
        %v4114 = vsel %vm2690, %v4112, %v4113
        %v4115 = vrot.slane %v4051, 2
        %v4116 = vrot.slane %v4053, 2
        %v4117 = vsel %vm2690, %v4115, %v4116
        %v4118 = vrot.slane %v4052, 2
        %v4119 = vrot.slane %v4054, 2
        %v4120 = vsel %vm2690, %v4118, %v4119
        %v4121 = vrot.slane %v4055, 2
        %v4122 = vrot.slane %v4057, 2
        %v4123 = vsel %vm2690, %v4121, %v4122
        %v4124 = vrot.slane %v4056, 2
        %v4125 = vrot.slane %v4058, 2
        %v4126 = vsel %vm2690, %v4124, %v4125
        %v4127 = vrot.slane %v4059, 2
        %v4128 = vrot.slane %v4061, 2
        %v4129 = vsel %vm2690, %v4127, %v4128
        %v4130 = vrot.slane %v4060, 2
        %v4131 = vrot.slane %v4062, 2
        %v4132 = vsel %vm2690, %v4130, %v4131
        %v4147 = vadd.f32 %v4013, %v4093
        %v4148 = vadd.f32 %v4014, %v4096
        %v4149 = vadd.f32 %v4015, %v4099
        %v4150 = vadd.f32 %v4016, %v4102
        %v4151 = vadd.f32 %v4017, %v4105
        %v4152 = vadd.f32 %v4018, %v4108
        %v4153 = vadd.f32 %v4019, %v4111
        %v4154 = vadd.f32 %v4020, %v4114
        %v4155 = vadd.f32 %v4021, %v4117
        %v4156 = vadd.f32 %v4022, %v4120
        %v4157 = vadd.f32 %v4023, %v4123
        %v4158 = vadd.f32 %v4024, %v4126
        %v4159 = vadd.f32 %v4025, %v4129
        %v4160 = vadd.f32 %v4026, %v4132
        %v4161 = vlaneseq
        %v4162 = vshrl.u32 %v4161, 7
        %v4163 = vsub.s32 2, %v4162
        %v4164 = vrot.slane %v2809, %v4163
        %v4165 = vlaneseq
        %v4166 = vshrl.u32 %v4165, 7
        %v4167 = vsub.s32 2, %v4166
        %v4168 = vrot.slane %v2810, %v4167
        %v4169 = vmul.f32 %v2765, %v4164
        %v4170 = vmul.f32 %v2766, %v4168
        %v4171 = vmul.f32 %v2767, %v4164
        %v4172 = vmul.f32 %v2768, %v4168
        %v4173 = vmul.f32 %v2769, %v4164
        %v4174 = vmul.f32 %v2770, %v4168
        %v4175 = vmul.f32 %v2771, %v4164
        %v4176 = vmul.f32 %v2772, %v4168
        %v4177 = vmul.f32 %v2773, %v4164
        %v4178 = vmul.f32 %v2774, %v4168
        %v4179 = vmul.f32 %v2775, %v4164
        %v4180 = vmul.f32 %v2776, %v4168
        %v4181 = vmul.f32 %v2777, %v4164
        %v4182 = vmul.f32 %v2778, %v4168
        %v4183 = vmul.f32 %v2779, %v4164
        %v4184 = vmul.f32 %v2780, %v4168
        %v4185 = vmul.f32 %v2781, %v4164
        %v4186 = vmul.f32 %v2782, %v4168
        %v4187 = vmul.f32 %v2783, %v4164
        %v4188 = vmul.f32 %v2784, %v4168
        %v4189 = vmul.f32 %v2785, %v4164
        %v4190 = vmul.f32 %v2786, %v4168
        %v4191 = vmul.f32 %v2787, %v4164
        %v4192 = vmul.f32 %v2788, %v4168
        %v4193 = vmul.f32 %v2789, %v4164
        %v4194 = vmul.f32 %v2790, %v4168
        %v4195 = vmul.f32 %v2791, %v4164
        %v4196 = vmul.f32 %v2792, %v4168
        %v4225 = vrot.slane %v4169, 2
        %v4226 = vrot.slane %v4171, 2
        %v4227 = vsel %vm2690, %v4225, %v4226
        %v4228 = vrot.slane %v4170, 2
        %v4229 = vrot.slane %v4172, 2
        %v4230 = vsel %vm2690, %v4228, %v4229
        %v4231 = vrot.slane %v4173, 2
        %v4232 = vrot.slane %v4175, 2
        %v4233 = vsel %vm2690, %v4231, %v4232
        %v4234 = vrot.slane %v4174, 2
        %v4235 = vrot.slane %v4176, 2
        %v4236 = vsel %vm2690, %v4234, %v4235
        %v4237 = vrot.slane %v4177, 2
        %v4238 = vrot.slane %v4179, 2
        %v4239 = vsel %vm2690, %v4237, %v4238
        %v4240 = vrot.slane %v4178, 2
        %v4241 = vrot.slane %v4180, 2
        %v4242 = vsel %vm2690, %v4240, %v4241
        %v4243 = vrot.slane %v4181, 2
        %v4244 = vrot.slane %v4183, 2
        %v4245 = vsel %vm2690, %v4243, %v4244
        %v4246 = vrot.slane %v4182, 2
        %v4247 = vrot.slane %v4184, 2
        %v4248 = vsel %vm2690, %v4246, %v4247
        %v4249 = vrot.slane %v4185, 2
        %v4250 = vrot.slane %v4187, 2
        %v4251 = vsel %vm2690, %v4249, %v4250
        %v4252 = vrot.slane %v4186, 2
        %v4253 = vrot.slane %v4188, 2
        %v4254 = vsel %vm2690, %v4252, %v4253
        %v4255 = vrot.slane %v4189, 2
        %v4256 = vrot.slane %v4191, 2
        %v4257 = vsel %vm2690, %v4255, %v4256
        %v4258 = vrot.slane %v4190, 2
        %v4259 = vrot.slane %v4192, 2
        %v4260 = vsel %vm2690, %v4258, %v4259
        %v4261 = vrot.slane %v4193, 2
        %v4262 = vrot.slane %v4195, 2
        %v4263 = vsel %vm2690, %v4261, %v4262
        %v4264 = vrot.slane %v4194, 2
        %v4265 = vrot.slane %v4196, 2
        %v4266 = vsel %vm2690, %v4264, %v4265
        %v4281 = vadd.f32 %v4147, %v4227
        %v4282 = vadd.f32 %v4148, %v4230
        %v4283 = vadd.f32 %v4149, %v4233
        %v4284 = vadd.f32 %v4150, %v4236
        %v4285 = vadd.f32 %v4151, %v4239
        %v4286 = vadd.f32 %v4152, %v4242
        %v4287 = vadd.f32 %v4153, %v4245
        %v4288 = vadd.f32 %v4154, %v4248
        %v4289 = vadd.f32 %v4155, %v4251
        %v4290 = vadd.f32 %v4156, %v4254
        %v4291 = vadd.f32 %v4157, %v4257
        %v4292 = vadd.f32 %v4158, %v4260
        %v4293 = vadd.f32 %v4159, %v4263
        %v4294 = vadd.f32 %v4160, %v4266
        %v4295 = vlaneseq
        %v4296 = vshrl.u32 %v4295, 7
        %v4297 = vsub.s32 2, %v4296
        %v4298 = vrot.slane %v2811, %v4297
        %v4299 = vlaneseq
        %v4300 = vshrl.u32 %v4299, 7
        %v4301 = vsub.s32 2, %v4300
        %v4302 = vrot.slane %v2812, %v4301
        %v4303 = vmul.f32 %v2769, %v4298
        %v4304 = vmul.f32 %v2770, %v4302
        %v4305 = vmul.f32 %v2771, %v4298
        %v4306 = vmul.f32 %v2772, %v4302
        %v4307 = vmul.f32 %v2773, %v4298
        %v4308 = vmul.f32 %v2774, %v4302
        %v4309 = vmul.f32 %v2775, %v4298
        %v4310 = vmul.f32 %v2776, %v4302
        %v4311 = vmul.f32 %v2777, %v4298
        %v4312 = vmul.f32 %v2778, %v4302
        %v4313 = vmul.f32 %v2779, %v4298
        %v4314 = vmul.f32 %v2780, %v4302
        %v4315 = vmul.f32 %v2781, %v4298
        %v4316 = vmul.f32 %v2782, %v4302
        %v4317 = vmul.f32 %v2783, %v4298
        %v4318 = vmul.f32 %v2784, %v4302
        %v4319 = vmul.f32 %v2785, %v4298
        %v4320 = vmul.f32 %v2786, %v4302
        %v4321 = vmul.f32 %v2787, %v4298
        %v4322 = vmul.f32 %v2788, %v4302
        %v4323 = vmul.f32 %v2789, %v4298
        %v4324 = vmul.f32 %v2790, %v4302
        %v4325 = vmul.f32 %v2791, %v4298
        %v4326 = vmul.f32 %v2792, %v4302
        %v4327 = vmul.f32 %v2793, %v4298
        %v4328 = vmul.f32 %v2794, %v4302
        %v4329 = vmul.f32 %v2795, %v4298
        %v4330 = vmul.f32 %v2796, %v4302
        %v4359 = vrot.slane %v4303, 2
        %v4360 = vrot.slane %v4305, 2
        %v4361 = vsel %vm2690, %v4359, %v4360
        %v4362 = vrot.slane %v4304, 2
        %v4363 = vrot.slane %v4306, 2
        %v4364 = vsel %vm2690, %v4362, %v4363
        %v4365 = vrot.slane %v4307, 2
        %v4366 = vrot.slane %v4309, 2
        %v4367 = vsel %vm2690, %v4365, %v4366
        %v4368 = vrot.slane %v4308, 2
        %v4369 = vrot.slane %v4310, 2
        %v4370 = vsel %vm2690, %v4368, %v4369
        %v4371 = vrot.slane %v4311, 2
        %v4372 = vrot.slane %v4313, 2
        %v4373 = vsel %vm2690, %v4371, %v4372
        %v4374 = vrot.slane %v4312, 2
        %v4375 = vrot.slane %v4314, 2
        %v4376 = vsel %vm2690, %v4374, %v4375
        %v4377 = vrot.slane %v4315, 2
        %v4378 = vrot.slane %v4317, 2
        %v4379 = vsel %vm2690, %v4377, %v4378
        %v4380 = vrot.slane %v4316, 2
        %v4381 = vrot.slane %v4318, 2
        %v4382 = vsel %vm2690, %v4380, %v4381
        %v4383 = vrot.slane %v4319, 2
        %v4384 = vrot.slane %v4321, 2
        %v4385 = vsel %vm2690, %v4383, %v4384
        %v4386 = vrot.slane %v4320, 2
        %v4387 = vrot.slane %v4322, 2
        %v4388 = vsel %vm2690, %v4386, %v4387
        %v4389 = vrot.slane %v4323, 2
        %v4390 = vrot.slane %v4325, 2
        %v4391 = vsel %vm2690, %v4389, %v4390
        %v4392 = vrot.slane %v4324, 2
        %v4393 = vrot.slane %v4326, 2
        %v4394 = vsel %vm2690, %v4392, %v4393
        %v4395 = vrot.slane %v4327, 2
        %v4396 = vrot.slane %v4329, 2
        %v4397 = vsel %vm2690, %v4395, %v4396
        %v4398 = vrot.slane %v4328, 2
        %v4399 = vrot.slane %v4330, 2
        %v4400 = vsel %vm2690, %v4398, %v4399
        %v4415 = vadd.f32 %v4281, %v4361
        %v4416 = vadd.f32 %v4282, %v4364
        %v4417 = vadd.f32 %v4283, %v4367
        %v4418 = vadd.f32 %v4284, %v4370
        %v4419 = vadd.f32 %v4285, %v4373
        %v4420 = vadd.f32 %v4286, %v4376
        %v4421 = vadd.f32 %v4287, %v4379
        %v4422 = vadd.f32 %v4288, %v4382
        %v4423 = vadd.f32 %v4289, %v4385
        %v4424 = vadd.f32 %v4290, %v4388
        %v4425 = vadd.f32 %v4291, %v4391
        %v4426 = vadd.f32 %v4292, %v4394
        %v4427 = vadd.f32 %v4293, %v4397
        %v4428 = vadd.f32 %v4294, %v4400
        %v4429 = vlaneseq
        %v4430 = vshrl.u32 %v4429, 7
        %v4431 = vsub.s32 2, %v4430
        %v4432 = vrot.slane %v2813, %v4431
        %v4433 = vlaneseq
        %v4434 = vshrl.u32 %v4433, 7
        %v4435 = vsub.s32 2, %v4434
        %v4436 = vrot.slane %v2814, %v4435
        %v4437 = vmul.f32 %v2773, %v4432
        %v4438 = vmul.f32 %v2774, %v4436
        %v4439 = vmul.f32 %v2775, %v4432
        %v4440 = vmul.f32 %v2776, %v4436
        %v4441 = vmul.f32 %v2777, %v4432
        %v4442 = vmul.f32 %v2778, %v4436
        %v4443 = vmul.f32 %v2779, %v4432
        %v4444 = vmul.f32 %v2780, %v4436
        %v4445 = vmul.f32 %v2781, %v4432
        %v4446 = vmul.f32 %v2782, %v4436
        %v4447 = vmul.f32 %v2783, %v4432
        %v4448 = vmul.f32 %v2784, %v4436
        %v4449 = vmul.f32 %v2785, %v4432
        %v4450 = vmul.f32 %v2786, %v4436
        %v4451 = vmul.f32 %v2787, %v4432
        %v4452 = vmul.f32 %v2788, %v4436
        %v4453 = vmul.f32 %v2789, %v4432
        %v4454 = vmul.f32 %v2790, %v4436
        %v4455 = vmul.f32 %v2791, %v4432
        %v4456 = vmul.f32 %v2792, %v4436
        %v4457 = vmul.f32 %v2793, %v4432
        %v4458 = vmul.f32 %v2794, %v4436
        %v4459 = vmul.f32 %v2795, %v4432
        %v4460 = vmul.f32 %v2796, %v4436
        %v4461 = vmul.f32 %v2797, %v4432
        %v4462 = vmul.f32 %v2798, %v4436
        %v4463 = vmul.f32 %v2799, %v4432
        %v4464 = vmul.f32 %v2800, %v4436
        %v4493 = vrot.slane %v4437, 2
        %v4494 = vrot.slane %v4439, 2
        %v4495 = vsel %vm2690, %v4493, %v4494
        %v4496 = vrot.slane %v4438, 2
        %v4497 = vrot.slane %v4440, 2
        %v4498 = vsel %vm2690, %v4496, %v4497
        %v4499 = vrot.slane %v4441, 2
        %v4500 = vrot.slane %v4443, 2
        %v4501 = vsel %vm2690, %v4499, %v4500
        %v4502 = vrot.slane %v4442, 2
        %v4503 = vrot.slane %v4444, 2
        %v4504 = vsel %vm2690, %v4502, %v4503
        %v4505 = vrot.slane %v4445, 2
        %v4506 = vrot.slane %v4447, 2
        %v4507 = vsel %vm2690, %v4505, %v4506
        %v4508 = vrot.slane %v4446, 2
        %v4509 = vrot.slane %v4448, 2
        %v4510 = vsel %vm2690, %v4508, %v4509
        %v4511 = vrot.slane %v4449, 2
        %v4512 = vrot.slane %v4451, 2
        %v4513 = vsel %vm2690, %v4511, %v4512
        %v4514 = vrot.slane %v4450, 2
        %v4515 = vrot.slane %v4452, 2
        %v4516 = vsel %vm2690, %v4514, %v4515
        %v4517 = vrot.slane %v4453, 2
        %v4518 = vrot.slane %v4455, 2
        %v4519 = vsel %vm2690, %v4517, %v4518
        %v4520 = vrot.slane %v4454, 2
        %v4521 = vrot.slane %v4456, 2
        %v4522 = vsel %vm2690, %v4520, %v4521
        %v4523 = vrot.slane %v4457, 2
        %v4524 = vrot.slane %v4459, 2
        %v4525 = vsel %vm2690, %v4523, %v4524
        %v4526 = vrot.slane %v4458, 2
        %v4527 = vrot.slane %v4460, 2
        %v4528 = vsel %vm2690, %v4526, %v4527
        %v4529 = vrot.slane %v4461, 2
        %v4530 = vrot.slane %v4463, 2
        %v4531 = vsel %vm2690, %v4529, %v4530
        %v4532 = vrot.slane %v4462, 2
        %v4533 = vrot.slane %v4464, 2
        %v4534 = vsel %vm2690, %v4532, %v4533
        %v4549 = vadd.f32 %v4415, %v4495
        %v4550 = vadd.f32 %v4416, %v4498
        %v4551 = vadd.f32 %v4417, %v4501
        %v4552 = vadd.f32 %v4418, %v4504
        %v4553 = vadd.f32 %v4419, %v4507
        %v4554 = vadd.f32 %v4420, %v4510
        %v4555 = vadd.f32 %v4421, %v4513
        %v4556 = vadd.f32 %v4422, %v4516
        %v4557 = vadd.f32 %v4423, %v4519
        %v4558 = vadd.f32 %v4424, %v4522
        %v4559 = vadd.f32 %v4425, %v4525
        %v4560 = vadd.f32 %v4426, %v4528
        %v4561 = vadd.f32 %v4427, %v4531
        %v4562 = vadd.f32 %v4428, %v4534
        %v4563 = vlaneseq
        %v4564 = vshrl.u32 %v4563, 7
        %v4565 = vsub.s32 3, %v4564
        %v4566 = vrot.slane %v2801, %v4565
        %v4567 = vlaneseq
        %v4568 = vshrl.u32 %v4567, 7
        %v4569 = vsub.s32 3, %v4568
        %v4570 = vrot.slane %v2802, %v4569
        %v4571 = vmul.f32 %v2749, %v4566
        %v4572 = vmul.f32 %v2750, %v4570
        %v4573 = vmul.f32 %v2751, %v4566
        %v4574 = vmul.f32 %v2752, %v4570
        %v4575 = vmul.f32 %v2753, %v4566
        %v4576 = vmul.f32 %v2754, %v4570
        %v4577 = vmul.f32 %v2755, %v4566
        %v4578 = vmul.f32 %v2756, %v4570
        %v4579 = vmul.f32 %v2757, %v4566
        %v4580 = vmul.f32 %v2758, %v4570
        %v4581 = vmul.f32 %v2759, %v4566
        %v4582 = vmul.f32 %v2760, %v4570
        %v4583 = vmul.f32 %v2761, %v4566
        %v4584 = vmul.f32 %v2762, %v4570
        %v4585 = vmul.f32 %v2763, %v4566
        %v4586 = vmul.f32 %v2764, %v4570
        %v4587 = vmul.f32 %v2765, %v4566
        %v4588 = vmul.f32 %v2766, %v4570
        %v4589 = vmul.f32 %v2767, %v4566
        %v4590 = vmul.f32 %v2768, %v4570
        %v4591 = vmul.f32 %v2769, %v4566
        %v4592 = vmul.f32 %v2770, %v4570
        %v4593 = vmul.f32 %v2771, %v4566
        %v4594 = vmul.f32 %v2772, %v4570
        %v4595 = vmul.f32 %v2773, %v4566
        %v4596 = vmul.f32 %v2774, %v4570
        %v4597 = vmul.f32 %v2775, %v4566
        %v4598 = vmul.f32 %v2776, %v4570
        %v4627 = vrot.slane %v4571, 3
        %v4628 = vrot.slane %v4573, 3
        %v4629 = vsel %vm2672, %v4627, %v4628
        %v4630 = vrot.slane %v4572, 3
        %v4631 = vrot.slane %v4574, 3
        %v4632 = vsel %vm2672, %v4630, %v4631
        %v4633 = vrot.slane %v4575, 3
        %v4634 = vrot.slane %v4577, 3
        %v4635 = vsel %vm2672, %v4633, %v4634
        %v4636 = vrot.slane %v4576, 3
        %v4637 = vrot.slane %v4578, 3
        %v4638 = vsel %vm2672, %v4636, %v4637
        %v4639 = vrot.slane %v4579, 3
        %v4640 = vrot.slane %v4581, 3
        %v4641 = vsel %vm2672, %v4639, %v4640
        %v4642 = vrot.slane %v4580, 3
        %v4643 = vrot.slane %v4582, 3
        %v4644 = vsel %vm2672, %v4642, %v4643
        %v4645 = vrot.slane %v4583, 3
        %v4646 = vrot.slane %v4585, 3
        %v4647 = vsel %vm2672, %v4645, %v4646
        %v4648 = vrot.slane %v4584, 3
        %v4649 = vrot.slane %v4586, 3
        %v4650 = vsel %vm2672, %v4648, %v4649
        %v4651 = vrot.slane %v4587, 3
        %v4652 = vrot.slane %v4589, 3
        %v4653 = vsel %vm2672, %v4651, %v4652
        %v4654 = vrot.slane %v4588, 3
        %v4655 = vrot.slane %v4590, 3
        %v4656 = vsel %vm2672, %v4654, %v4655
        %v4657 = vrot.slane %v4591, 3
        %v4658 = vrot.slane %v4593, 3
        %v4659 = vsel %vm2672, %v4657, %v4658
        %v4660 = vrot.slane %v4592, 3
        %v4661 = vrot.slane %v4594, 3
        %v4662 = vsel %vm2672, %v4660, %v4661
        %v4663 = vrot.slane %v4595, 3
        %v4664 = vrot.slane %v4597, 3
        %v4665 = vsel %vm2672, %v4663, %v4664
        %v4666 = vrot.slane %v4596, 3
        %v4667 = vrot.slane %v4598, 3
        %v4668 = vsel %vm2672, %v4666, %v4667
        %v4683 = vadd.f32 %v4549, %v4629
        %v4684 = vadd.f32 %v4550, %v4632
        %v4685 = vadd.f32 %v4551, %v4635
        %v4686 = vadd.f32 %v4552, %v4638
        %v4687 = vadd.f32 %v4553, %v4641
        %v4688 = vadd.f32 %v4554, %v4644
        %v4689 = vadd.f32 %v4555, %v4647
        %v4690 = vadd.f32 %v4556, %v4650
        %v4691 = vadd.f32 %v4557, %v4653
        %v4692 = vadd.f32 %v4558, %v4656
        %v4693 = vadd.f32 %v4559, %v4659
        %v4694 = vadd.f32 %v4560, %v4662
        %v4695 = vadd.f32 %v4561, %v4665
        %v4696 = vadd.f32 %v4562, %v4668
        %v4697 = vlaneseq
        %v4698 = vshrl.u32 %v4697, 7
        %v4699 = vsub.s32 3, %v4698
        %v4700 = vrot.slane %v2803, %v4699
        %v4701 = vlaneseq
        %v4702 = vshrl.u32 %v4701, 7
        %v4703 = vsub.s32 3, %v4702
        %v4704 = vrot.slane %v2804, %v4703
        %v4705 = vmul.f32 %v2753, %v4700
        %v4706 = vmul.f32 %v2754, %v4704
        %v4707 = vmul.f32 %v2755, %v4700
        %v4708 = vmul.f32 %v2756, %v4704
        %v4709 = vmul.f32 %v2757, %v4700
        %v4710 = vmul.f32 %v2758, %v4704
        %v4711 = vmul.f32 %v2759, %v4700
        %v4712 = vmul.f32 %v2760, %v4704
        %v4713 = vmul.f32 %v2761, %v4700
        %v4714 = vmul.f32 %v2762, %v4704
        %v4715 = vmul.f32 %v2763, %v4700
        %v4716 = vmul.f32 %v2764, %v4704
        %v4717 = vmul.f32 %v2765, %v4700
        %v4718 = vmul.f32 %v2766, %v4704
        %v4719 = vmul.f32 %v2767, %v4700
        %v4720 = vmul.f32 %v2768, %v4704
        %v4721 = vmul.f32 %v2769, %v4700
        %v4722 = vmul.f32 %v2770, %v4704
        %v4723 = vmul.f32 %v2771, %v4700
        %v4724 = vmul.f32 %v2772, %v4704
        %v4725 = vmul.f32 %v2773, %v4700
        %v4726 = vmul.f32 %v2774, %v4704
        %v4727 = vmul.f32 %v2775, %v4700
        %v4728 = vmul.f32 %v2776, %v4704
        %v4729 = vmul.f32 %v2777, %v4700
        %v4730 = vmul.f32 %v2778, %v4704
        %v4731 = vmul.f32 %v2779, %v4700
        %v4732 = vmul.f32 %v2780, %v4704
        %v4761 = vrot.slane %v4705, 3
        %v4762 = vrot.slane %v4707, 3
        %v4763 = vsel %vm2672, %v4761, %v4762
        %v4764 = vrot.slane %v4706, 3
        %v4765 = vrot.slane %v4708, 3
        %v4766 = vsel %vm2672, %v4764, %v4765
        %v4767 = vrot.slane %v4709, 3
        %v4768 = vrot.slane %v4711, 3
        %v4769 = vsel %vm2672, %v4767, %v4768
        %v4770 = vrot.slane %v4710, 3
        %v4771 = vrot.slane %v4712, 3
        %v4772 = vsel %vm2672, %v4770, %v4771
        %v4773 = vrot.slane %v4713, 3
        %v4774 = vrot.slane %v4715, 3
        %v4775 = vsel %vm2672, %v4773, %v4774
        %v4776 = vrot.slane %v4714, 3
        %v4777 = vrot.slane %v4716, 3
        %v4778 = vsel %vm2672, %v4776, %v4777
        %v4779 = vrot.slane %v4717, 3
        %v4780 = vrot.slane %v4719, 3
        %v4781 = vsel %vm2672, %v4779, %v4780
        %v4782 = vrot.slane %v4718, 3
        %v4783 = vrot.slane %v4720, 3
        %v4784 = vsel %vm2672, %v4782, %v4783
        %v4785 = vrot.slane %v4721, 3
        %v4786 = vrot.slane %v4723, 3
        %v4787 = vsel %vm2672, %v4785, %v4786
        %v4788 = vrot.slane %v4722, 3
        %v4789 = vrot.slane %v4724, 3
        %v4790 = vsel %vm2672, %v4788, %v4789
        %v4791 = vrot.slane %v4725, 3
        %v4792 = vrot.slane %v4727, 3
        %v4793 = vsel %vm2672, %v4791, %v4792
        %v4794 = vrot.slane %v4726, 3
        %v4795 = vrot.slane %v4728, 3
        %v4796 = vsel %vm2672, %v4794, %v4795
        %v4797 = vrot.slane %v4729, 3
        %v4798 = vrot.slane %v4731, 3
        %v4799 = vsel %vm2672, %v4797, %v4798
        %v4800 = vrot.slane %v4730, 3
        %v4801 = vrot.slane %v4732, 3
        %v4802 = vsel %vm2672, %v4800, %v4801
        %v4817 = vadd.f32 %v4683, %v4763
        %v4818 = vadd.f32 %v4684, %v4766
        %v4819 = vadd.f32 %v4685, %v4769
        %v4820 = vadd.f32 %v4686, %v4772
        %v4821 = vadd.f32 %v4687, %v4775
        %v4822 = vadd.f32 %v4688, %v4778
        %v4823 = vadd.f32 %v4689, %v4781
        %v4824 = vadd.f32 %v4690, %v4784
        %v4825 = vadd.f32 %v4691, %v4787
        %v4826 = vadd.f32 %v4692, %v4790
        %v4827 = vadd.f32 %v4693, %v4793
        %v4828 = vadd.f32 %v4694, %v4796
        %v4829 = vadd.f32 %v4695, %v4799
        %v4830 = vadd.f32 %v4696, %v4802
        %v4831 = vlaneseq
        %v4832 = vshrl.u32 %v4831, 7
        %v4833 = vsub.s32 3, %v4832
        %v4834 = vrot.slane %v2805, %v4833
        %v4835 = vlaneseq
        %v4836 = vshrl.u32 %v4835, 7
        %v4837 = vsub.s32 3, %v4836
        %v4838 = vrot.slane %v2806, %v4837
        %v4839 = vmul.f32 %v2757, %v4834
        %v4840 = vmul.f32 %v2758, %v4838
        %v4841 = vmul.f32 %v2759, %v4834
        %v4842 = vmul.f32 %v2760, %v4838
        %v4843 = vmul.f32 %v2761, %v4834
        %v4844 = vmul.f32 %v2762, %v4838
        %v4845 = vmul.f32 %v2763, %v4834
        %v4846 = vmul.f32 %v2764, %v4838
        %v4847 = vmul.f32 %v2765, %v4834
        %v4848 = vmul.f32 %v2766, %v4838
        %v4849 = vmul.f32 %v2767, %v4834
        %v4850 = vmul.f32 %v2768, %v4838
        %v4851 = vmul.f32 %v2769, %v4834
        %v4852 = vmul.f32 %v2770, %v4838
        %v4853 = vmul.f32 %v2771, %v4834
        %v4854 = vmul.f32 %v2772, %v4838
        %v4855 = vmul.f32 %v2773, %v4834
        %v4856 = vmul.f32 %v2774, %v4838
        %v4857 = vmul.f32 %v2775, %v4834
        %v4858 = vmul.f32 %v2776, %v4838
        %v4859 = vmul.f32 %v2777, %v4834
        %v4860 = vmul.f32 %v2778, %v4838
        %v4861 = vmul.f32 %v2779, %v4834
        %v4862 = vmul.f32 %v2780, %v4838
        %v4863 = vmul.f32 %v2781, %v4834
        %v4864 = vmul.f32 %v2782, %v4838
        %v4865 = vmul.f32 %v2783, %v4834
        %v4866 = vmul.f32 %v2784, %v4838
        %v4895 = vrot.slane %v4839, 3
        %v4896 = vrot.slane %v4841, 3
        %v4897 = vsel %vm2672, %v4895, %v4896
        %v4898 = vrot.slane %v4840, 3
        %v4899 = vrot.slane %v4842, 3
        %v4900 = vsel %vm2672, %v4898, %v4899
        %v4901 = vrot.slane %v4843, 3
        %v4902 = vrot.slane %v4845, 3
        %v4903 = vsel %vm2672, %v4901, %v4902
        %v4904 = vrot.slane %v4844, 3
        %v4905 = vrot.slane %v4846, 3
        %v4906 = vsel %vm2672, %v4904, %v4905
        %v4907 = vrot.slane %v4847, 3
        %v4908 = vrot.slane %v4849, 3
        %v4909 = vsel %vm2672, %v4907, %v4908
        %v4910 = vrot.slane %v4848, 3
        %v4911 = vrot.slane %v4850, 3
        %v4912 = vsel %vm2672, %v4910, %v4911
        %v4913 = vrot.slane %v4851, 3
        %v4914 = vrot.slane %v4853, 3
        %v4915 = vsel %vm2672, %v4913, %v4914
        %v4916 = vrot.slane %v4852, 3
        %v4917 = vrot.slane %v4854, 3
        %v4918 = vsel %vm2672, %v4916, %v4917
        %v4919 = vrot.slane %v4855, 3
        %v4920 = vrot.slane %v4857, 3
        %v4921 = vsel %vm2672, %v4919, %v4920
        %v4922 = vrot.slane %v4856, 3
        %v4923 = vrot.slane %v4858, 3
        %v4924 = vsel %vm2672, %v4922, %v4923
        %v4925 = vrot.slane %v4859, 3
        %v4926 = vrot.slane %v4861, 3
        %v4927 = vsel %vm2672, %v4925, %v4926
        %v4928 = vrot.slane %v4860, 3
        %v4929 = vrot.slane %v4862, 3
        %v4930 = vsel %vm2672, %v4928, %v4929
        %v4931 = vrot.slane %v4863, 3
        %v4932 = vrot.slane %v4865, 3
        %v4933 = vsel %vm2672, %v4931, %v4932
        %v4934 = vrot.slane %v4864, 3
        %v4935 = vrot.slane %v4866, 3
        %v4936 = vsel %vm2672, %v4934, %v4935
        %v4951 = vadd.f32 %v4817, %v4897
        %v4952 = vadd.f32 %v4818, %v4900
        %v4953 = vadd.f32 %v4819, %v4903
        %v4954 = vadd.f32 %v4820, %v4906
        %v4955 = vadd.f32 %v4821, %v4909
        %v4956 = vadd.f32 %v4822, %v4912
        %v4957 = vadd.f32 %v4823, %v4915
        %v4958 = vadd.f32 %v4824, %v4918
        %v4959 = vadd.f32 %v4825, %v4921
        %v4960 = vadd.f32 %v4826, %v4924
        %v4961 = vadd.f32 %v4827, %v4927
        %v4962 = vadd.f32 %v4828, %v4930
        %v4963 = vadd.f32 %v4829, %v4933
        %v4964 = vadd.f32 %v4830, %v4936
        %v4965 = vlaneseq
        %v4966 = vshrl.u32 %v4965, 7
        %v4967 = vsub.s32 3, %v4966
        %v4968 = vrot.slane %v2807, %v4967
        %v4969 = vlaneseq
        %v4970 = vshrl.u32 %v4969, 7
        %v4971 = vsub.s32 3, %v4970
        %v4972 = vrot.slane %v2808, %v4971
        %v4973 = vmul.f32 %v2761, %v4968
        %v4974 = vmul.f32 %v2762, %v4972
        %v4975 = vmul.f32 %v2763, %v4968
        %v4976 = vmul.f32 %v2764, %v4972
        %v4977 = vmul.f32 %v2765, %v4968
        %v4978 = vmul.f32 %v2766, %v4972
        %v4979 = vmul.f32 %v2767, %v4968
        %v4980 = vmul.f32 %v2768, %v4972
        %v4981 = vmul.f32 %v2769, %v4968
        %v4982 = vmul.f32 %v2770, %v4972
        %v4983 = vmul.f32 %v2771, %v4968
        %v4984 = vmul.f32 %v2772, %v4972
        %v4985 = vmul.f32 %v2773, %v4968
        %v4986 = vmul.f32 %v2774, %v4972
        %v4987 = vmul.f32 %v2775, %v4968
        %v4988 = vmul.f32 %v2776, %v4972
        %v4989 = vmul.f32 %v2777, %v4968
        %v4990 = vmul.f32 %v2778, %v4972
        %v4991 = vmul.f32 %v2779, %v4968
        %v4992 = vmul.f32 %v2780, %v4972
        %v4993 = vmul.f32 %v2781, %v4968
        %v4994 = vmul.f32 %v2782, %v4972
        %v4995 = vmul.f32 %v2783, %v4968
        %v4996 = vmul.f32 %v2784, %v4972
        %v4997 = vmul.f32 %v2785, %v4968
        %v4998 = vmul.f32 %v2786, %v4972
        %v4999 = vmul.f32 %v2787, %v4968
        %v5000 = vmul.f32 %v2788, %v4972
        %v5029 = vrot.slane %v4973, 3
        %v5030 = vrot.slane %v4975, 3
        %v5031 = vsel %vm2672, %v5029, %v5030
        %v5032 = vrot.slane %v4974, 3
        %v5033 = vrot.slane %v4976, 3
        %v5034 = vsel %vm2672, %v5032, %v5033
        %v5035 = vrot.slane %v4977, 3
        %v5036 = vrot.slane %v4979, 3
        %v5037 = vsel %vm2672, %v5035, %v5036
        %v5038 = vrot.slane %v4978, 3
        %v5039 = vrot.slane %v4980, 3
        %v5040 = vsel %vm2672, %v5038, %v5039
        %v5041 = vrot.slane %v4981, 3
        %v5042 = vrot.slane %v4983, 3
        %v5043 = vsel %vm2672, %v5041, %v5042
        %v5044 = vrot.slane %v4982, 3
        %v5045 = vrot.slane %v4984, 3
        %v5046 = vsel %vm2672, %v5044, %v5045
        %v5047 = vrot.slane %v4985, 3
        %v5048 = vrot.slane %v4987, 3
        %v5049 = vsel %vm2672, %v5047, %v5048
        %v5050 = vrot.slane %v4986, 3
        %v5051 = vrot.slane %v4988, 3
        %v5052 = vsel %vm2672, %v5050, %v5051
        %v5053 = vrot.slane %v4989, 3
        %v5054 = vrot.slane %v4991, 3
        %v5055 = vsel %vm2672, %v5053, %v5054
        %v5056 = vrot.slane %v4990, 3
        %v5057 = vrot.slane %v4992, 3
        %v5058 = vsel %vm2672, %v5056, %v5057
        %v5059 = vrot.slane %v4993, 3
        %v5060 = vrot.slane %v4995, 3
        %v5061 = vsel %vm2672, %v5059, %v5060
        %v5062 = vrot.slane %v4994, 3
        %v5063 = vrot.slane %v4996, 3
        %v5064 = vsel %vm2672, %v5062, %v5063
        %v5065 = vrot.slane %v4997, 3
        %v5066 = vrot.slane %v4999, 3
        %v5067 = vsel %vm2672, %v5065, %v5066
        %v5068 = vrot.slane %v4998, 3
        %v5069 = vrot.slane %v5000, 3
        %v5070 = vsel %vm2672, %v5068, %v5069
        %v5085 = vadd.f32 %v4951, %v5031
        %v5086 = vadd.f32 %v4952, %v5034
        %v5087 = vadd.f32 %v4953, %v5037
        %v5088 = vadd.f32 %v4954, %v5040
        %v5089 = vadd.f32 %v4955, %v5043
        %v5090 = vadd.f32 %v4956, %v5046
        %v5091 = vadd.f32 %v4957, %v5049
        %v5092 = vadd.f32 %v4958, %v5052
        %v5093 = vadd.f32 %v4959, %v5055
        %v5094 = vadd.f32 %v4960, %v5058
        %v5095 = vadd.f32 %v4961, %v5061
        %v5096 = vadd.f32 %v4962, %v5064
        %v5097 = vadd.f32 %v4963, %v5067
        %v5098 = vadd.f32 %v4964, %v5070
        %v5099 = vlaneseq
        %v5100 = vshrl.u32 %v5099, 7
        %v5101 = vsub.s32 3, %v5100
        %v5102 = vrot.slane %v2809, %v5101
        %v5103 = vlaneseq
        %v5104 = vshrl.u32 %v5103, 7
        %v5105 = vsub.s32 3, %v5104
        %v5106 = vrot.slane %v2810, %v5105
        %v5107 = vmul.f32 %v2765, %v5102
        %v5108 = vmul.f32 %v2766, %v5106
        %v5109 = vmul.f32 %v2767, %v5102
        %v5110 = vmul.f32 %v2768, %v5106
        %v5111 = vmul.f32 %v2769, %v5102
        %v5112 = vmul.f32 %v2770, %v5106
        %v5113 = vmul.f32 %v2771, %v5102
        %v5114 = vmul.f32 %v2772, %v5106
        %v5115 = vmul.f32 %v2773, %v5102
        %v5116 = vmul.f32 %v2774, %v5106
        %v5117 = vmul.f32 %v2775, %v5102
        %v5118 = vmul.f32 %v2776, %v5106
        %v5119 = vmul.f32 %v2777, %v5102
        %v5120 = vmul.f32 %v2778, %v5106
        %v5121 = vmul.f32 %v2779, %v5102
        %v5122 = vmul.f32 %v2780, %v5106
        %v5123 = vmul.f32 %v2781, %v5102
        %v5124 = vmul.f32 %v2782, %v5106
        %v5125 = vmul.f32 %v2783, %v5102
        %v5126 = vmul.f32 %v2784, %v5106
        %v5127 = vmul.f32 %v2785, %v5102
        %v5128 = vmul.f32 %v2786, %v5106
        %v5129 = vmul.f32 %v2787, %v5102
        %v5130 = vmul.f32 %v2788, %v5106
        %v5131 = vmul.f32 %v2789, %v5102
        %v5132 = vmul.f32 %v2790, %v5106
        %v5133 = vmul.f32 %v2791, %v5102
        %v5134 = vmul.f32 %v2792, %v5106
        %v5163 = vrot.slane %v5107, 3
        %v5164 = vrot.slane %v5109, 3
        %v5165 = vsel %vm2672, %v5163, %v5164
        %v5166 = vrot.slane %v5108, 3
        %v5167 = vrot.slane %v5110, 3
        %v5168 = vsel %vm2672, %v5166, %v5167
        %v5169 = vrot.slane %v5111, 3
        %v5170 = vrot.slane %v5113, 3
        %v5171 = vsel %vm2672, %v5169, %v5170
        %v5172 = vrot.slane %v5112, 3
        %v5173 = vrot.slane %v5114, 3
        %v5174 = vsel %vm2672, %v5172, %v5173
        %v5175 = vrot.slane %v5115, 3
        %v5176 = vrot.slane %v5117, 3
        %v5177 = vsel %vm2672, %v5175, %v5176
        %v5178 = vrot.slane %v5116, 3
        %v5179 = vrot.slane %v5118, 3
        %v5180 = vsel %vm2672, %v5178, %v5179
        %v5181 = vrot.slane %v5119, 3
        %v5182 = vrot.slane %v5121, 3
        %v5183 = vsel %vm2672, %v5181, %v5182
        %v5184 = vrot.slane %v5120, 3
        %v5185 = vrot.slane %v5122, 3
        %v5186 = vsel %vm2672, %v5184, %v5185
        %v5187 = vrot.slane %v5123, 3
        %v5188 = vrot.slane %v5125, 3
        %v5189 = vsel %vm2672, %v5187, %v5188
        %v5190 = vrot.slane %v5124, 3
        %v5191 = vrot.slane %v5126, 3
        %v5192 = vsel %vm2672, %v5190, %v5191
        %v5193 = vrot.slane %v5127, 3
        %v5194 = vrot.slane %v5129, 3
        %v5195 = vsel %vm2672, %v5193, %v5194
        %v5196 = vrot.slane %v5128, 3
        %v5197 = vrot.slane %v5130, 3
        %v5198 = vsel %vm2672, %v5196, %v5197
        %v5199 = vrot.slane %v5131, 3
        %v5200 = vrot.slane %v5133, 3
        %v5201 = vsel %vm2672, %v5199, %v5200
        %v5202 = vrot.slane %v5132, 3
        %v5203 = vrot.slane %v5134, 3
        %v5204 = vsel %vm2672, %v5202, %v5203
        %v5219 = vadd.f32 %v5085, %v5165
        %v5220 = vadd.f32 %v5086, %v5168
        %v5221 = vadd.f32 %v5087, %v5171
        %v5222 = vadd.f32 %v5088, %v5174
        %v5223 = vadd.f32 %v5089, %v5177
        %v5224 = vadd.f32 %v5090, %v5180
        %v5225 = vadd.f32 %v5091, %v5183
        %v5226 = vadd.f32 %v5092, %v5186
        %v5227 = vadd.f32 %v5093, %v5189
        %v5228 = vadd.f32 %v5094, %v5192
        %v5229 = vadd.f32 %v5095, %v5195
        %v5230 = vadd.f32 %v5096, %v5198
        %v5231 = vadd.f32 %v5097, %v5201
        %v5232 = vadd.f32 %v5098, %v5204
        %v5233 = vlaneseq
        %v5234 = vshrl.u32 %v5233, 7
        %v5235 = vsub.s32 3, %v5234
        %v5236 = vrot.slane %v2811, %v5235
        %v5237 = vlaneseq
        %v5238 = vshrl.u32 %v5237, 7
        %v5239 = vsub.s32 3, %v5238
        %v5240 = vrot.slane %v2812, %v5239
        %v5241 = vmul.f32 %v2769, %v5236
        %v5242 = vmul.f32 %v2770, %v5240
        %v5243 = vmul.f32 %v2771, %v5236
        %v5244 = vmul.f32 %v2772, %v5240
        %v5245 = vmul.f32 %v2773, %v5236
        %v5246 = vmul.f32 %v2774, %v5240
        %v5247 = vmul.f32 %v2775, %v5236
        %v5248 = vmul.f32 %v2776, %v5240
        %v5249 = vmul.f32 %v2777, %v5236
        %v5250 = vmul.f32 %v2778, %v5240
        %v5251 = vmul.f32 %v2779, %v5236
        %v5252 = vmul.f32 %v2780, %v5240
        %v5253 = vmul.f32 %v2781, %v5236
        %v5254 = vmul.f32 %v2782, %v5240
        %v5255 = vmul.f32 %v2783, %v5236
        %v5256 = vmul.f32 %v2784, %v5240
        %v5257 = vmul.f32 %v2785, %v5236
        %v5258 = vmul.f32 %v2786, %v5240
        %v5259 = vmul.f32 %v2787, %v5236
        %v5260 = vmul.f32 %v2788, %v5240
        %v5261 = vmul.f32 %v2789, %v5236
        %v5262 = vmul.f32 %v2790, %v5240
        %v5263 = vmul.f32 %v2791, %v5236
        %v5264 = vmul.f32 %v2792, %v5240
        %v5265 = vmul.f32 %v2793, %v5236
        %v5266 = vmul.f32 %v2794, %v5240
        %v5267 = vmul.f32 %v2795, %v5236
        %v5268 = vmul.f32 %v2796, %v5240
        %v5297 = vrot.slane %v5241, 3
        %v5298 = vrot.slane %v5243, 3
        %v5299 = vsel %vm2672, %v5297, %v5298
        %v5300 = vrot.slane %v5242, 3
        %v5301 = vrot.slane %v5244, 3
        %v5302 = vsel %vm2672, %v5300, %v5301
        %v5303 = vrot.slane %v5245, 3
        %v5304 = vrot.slane %v5247, 3
        %v5305 = vsel %vm2672, %v5303, %v5304
        %v5306 = vrot.slane %v5246, 3
        %v5307 = vrot.slane %v5248, 3
        %v5308 = vsel %vm2672, %v5306, %v5307
        %v5309 = vrot.slane %v5249, 3
        %v5310 = vrot.slane %v5251, 3
        %v5311 = vsel %vm2672, %v5309, %v5310
        %v5312 = vrot.slane %v5250, 3
        %v5313 = vrot.slane %v5252, 3
        %v5314 = vsel %vm2672, %v5312, %v5313
        %v5315 = vrot.slane %v5253, 3
        %v5316 = vrot.slane %v5255, 3
        %v5317 = vsel %vm2672, %v5315, %v5316
        %v5318 = vrot.slane %v5254, 3
        %v5319 = vrot.slane %v5256, 3
        %v5320 = vsel %vm2672, %v5318, %v5319
        %v5321 = vrot.slane %v5257, 3
        %v5322 = vrot.slane %v5259, 3
        %v5323 = vsel %vm2672, %v5321, %v5322
        %v5324 = vrot.slane %v5258, 3
        %v5325 = vrot.slane %v5260, 3
        %v5326 = vsel %vm2672, %v5324, %v5325
        %v5327 = vrot.slane %v5261, 3
        %v5328 = vrot.slane %v5263, 3
        %v5329 = vsel %vm2672, %v5327, %v5328
        %v5330 = vrot.slane %v5262, 3
        %v5331 = vrot.slane %v5264, 3
        %v5332 = vsel %vm2672, %v5330, %v5331
        %v5333 = vrot.slane %v5265, 3
        %v5334 = vrot.slane %v5267, 3
        %v5335 = vsel %vm2672, %v5333, %v5334
        %v5336 = vrot.slane %v5266, 3
        %v5337 = vrot.slane %v5268, 3
        %v5338 = vsel %vm2672, %v5336, %v5337
        %v5353 = vadd.f32 %v5219, %v5299
        %v5354 = vadd.f32 %v5220, %v5302
        %v5355 = vadd.f32 %v5221, %v5305
        %v5356 = vadd.f32 %v5222, %v5308
        %v5357 = vadd.f32 %v5223, %v5311
        %v5358 = vadd.f32 %v5224, %v5314
        %v5359 = vadd.f32 %v5225, %v5317
        %v5360 = vadd.f32 %v5226, %v5320
        %v5361 = vadd.f32 %v5227, %v5323
        %v5362 = vadd.f32 %v5228, %v5326
        %v5363 = vadd.f32 %v5229, %v5329
        %v5364 = vadd.f32 %v5230, %v5332
        %v5365 = vadd.f32 %v5231, %v5335
        %v5366 = vadd.f32 %v5232, %v5338
        %v5367 = vlaneseq
        %v5368 = vshrl.u32 %v5367, 7
        %v5369 = vsub.s32 3, %v5368
        %v5370 = vrot.slane %v2813, %v5369
        %v5371 = vlaneseq
        %v5372 = vshrl.u32 %v5371, 7
        %v5373 = vsub.s32 3, %v5372
        %v5374 = vrot.slane %v2814, %v5373
        %v5375 = vmul.f32 %v2773, %v5370
        %v5376 = vmul.f32 %v2774, %v5374
        %v5377 = vmul.f32 %v2775, %v5370
        %v5378 = vmul.f32 %v2776, %v5374
        %v5379 = vmul.f32 %v2777, %v5370
        %v5380 = vmul.f32 %v2778, %v5374
        %v5381 = vmul.f32 %v2779, %v5370
        %v5382 = vmul.f32 %v2780, %v5374
        %v5383 = vmul.f32 %v2781, %v5370
        %v5384 = vmul.f32 %v2782, %v5374
        %v5385 = vmul.f32 %v2783, %v5370
        %v5386 = vmul.f32 %v2784, %v5374
        %v5387 = vmul.f32 %v2785, %v5370
        %v5388 = vmul.f32 %v2786, %v5374
        %v5389 = vmul.f32 %v2787, %v5370
        %v5390 = vmul.f32 %v2788, %v5374
        %v5391 = vmul.f32 %v2789, %v5370
        %v5392 = vmul.f32 %v2790, %v5374
        %v5393 = vmul.f32 %v2791, %v5370
        %v5394 = vmul.f32 %v2792, %v5374
        %v5395 = vmul.f32 %v2793, %v5370
        %v5396 = vmul.f32 %v2794, %v5374
        %v5397 = vmul.f32 %v2795, %v5370
        %v5398 = vmul.f32 %v2796, %v5374
        %v5399 = vmul.f32 %v2797, %v5370
        %v5400 = vmul.f32 %v2798, %v5374
        %v5401 = vmul.f32 %v2799, %v5370
        %v5402 = vmul.f32 %v2800, %v5374
        %v5431 = vrot.slane %v5375, 3
        %v5432 = vrot.slane %v5377, 3
        %v5433 = vsel %vm2672, %v5431, %v5432
        %v5434 = vrot.slane %v5376, 3
        %v5435 = vrot.slane %v5378, 3
        %v5436 = vsel %vm2672, %v5434, %v5435
        %v5437 = vrot.slane %v5379, 3
        %v5438 = vrot.slane %v5381, 3
        %v5439 = vsel %vm2672, %v5437, %v5438
        %v5440 = vrot.slane %v5380, 3
        %v5441 = vrot.slane %v5382, 3
        %v5442 = vsel %vm2672, %v5440, %v5441
        %v5443 = vrot.slane %v5383, 3
        %v5444 = vrot.slane %v5385, 3
        %v5445 = vsel %vm2672, %v5443, %v5444
        %v5446 = vrot.slane %v5384, 3
        %v5447 = vrot.slane %v5386, 3
        %v5448 = vsel %vm2672, %v5446, %v5447
        %v5449 = vrot.slane %v5387, 3
        %v5450 = vrot.slane %v5389, 3
        %v5451 = vsel %vm2672, %v5449, %v5450
        %v5452 = vrot.slane %v5388, 3
        %v5453 = vrot.slane %v5390, 3
        %v5454 = vsel %vm2672, %v5452, %v5453
        %v5455 = vrot.slane %v5391, 3
        %v5456 = vrot.slane %v5393, 3
        %v5457 = vsel %vm2672, %v5455, %v5456
        %v5458 = vrot.slane %v5392, 3
        %v5459 = vrot.slane %v5394, 3
        %v5460 = vsel %vm2672, %v5458, %v5459
        %v5461 = vrot.slane %v5395, 3
        %v5462 = vrot.slane %v5397, 3
        %v5463 = vsel %vm2672, %v5461, %v5462
        %v5464 = vrot.slane %v5396, 3
        %v5465 = vrot.slane %v5398, 3
        %v5466 = vsel %vm2672, %v5464, %v5465
        %v5467 = vrot.slane %v5399, 3
        %v5468 = vrot.slane %v5401, 3
        %v5469 = vsel %vm2672, %v5467, %v5468
        %v5470 = vrot.slane %v5400, 3
        %v5471 = vrot.slane %v5402, 3
        %v5472 = vsel %vm2672, %v5470, %v5471
        %v5487 = vadd.f32 %v5353, %v5433
        %v5488 = vadd.f32 %v5354, %v5436
        %v5489 = vadd.f32 %v5355, %v5439
        %v5490 = vadd.f32 %v5356, %v5442
        %v5491 = vadd.f32 %v5357, %v5445
        %v5492 = vadd.f32 %v5358, %v5448
        %v5493 = vadd.f32 %v5359, %v5451
        %v5494 = vadd.f32 %v5360, %v5454
        %v5495 = vadd.f32 %v5361, %v5457
        %v5496 = vadd.f32 %v5362, %v5460
        %v5497 = vadd.f32 %v5363, %v5463
        %v5498 = vadd.f32 %v5364, %v5466
        %v5499 = vadd.f32 %v5365, %v5469
        %v5500 = vadd.f32 %v5366, %v5472
        %v5501 = vlaneseq
        %v5502 = vshrl.u32 %v5501, 7
        %v5503 = vsub.s32 4, %v5502
        %v5504 = vrot.slane %v2801, %v5503
        %v5505 = vlaneseq
        %v5506 = vshrl.u32 %v5505, 7
        %v5507 = vsub.s32 4, %v5506
        %v5508 = vrot.slane %v2802, %v5507
        %v5509 = vmul.f32 %v2749, %v5504
        %v5510 = vmul.f32 %v2750, %v5508
        %v5511 = vmul.f32 %v2751, %v5504
        %v5512 = vmul.f32 %v2752, %v5508
        %v5513 = vmul.f32 %v2753, %v5504
        %v5514 = vmul.f32 %v2754, %v5508
        %v5515 = vmul.f32 %v2755, %v5504
        %v5516 = vmul.f32 %v2756, %v5508
        %v5517 = vmul.f32 %v2757, %v5504
        %v5518 = vmul.f32 %v2758, %v5508
        %v5519 = vmul.f32 %v2759, %v5504
        %v5520 = vmul.f32 %v2760, %v5508
        %v5521 = vmul.f32 %v2761, %v5504
        %v5522 = vmul.f32 %v2762, %v5508
        %v5523 = vmul.f32 %v2763, %v5504
        %v5524 = vmul.f32 %v2764, %v5508
        %v5525 = vmul.f32 %v2765, %v5504
        %v5526 = vmul.f32 %v2766, %v5508
        %v5527 = vmul.f32 %v2767, %v5504
        %v5528 = vmul.f32 %v2768, %v5508
        %v5529 = vmul.f32 %v2769, %v5504
        %v5530 = vmul.f32 %v2770, %v5508
        %v5531 = vmul.f32 %v2771, %v5504
        %v5532 = vmul.f32 %v2772, %v5508
        %v5533 = vmul.f32 %v2773, %v5504
        %v5534 = vmul.f32 %v2774, %v5508
        %v5535 = vmul.f32 %v2775, %v5504
        %v5536 = vmul.f32 %v2776, %v5508
        %v5565 = vrot.slane %v5509, 4
        %v5566 = vrot.slane %v5511, 4
        %v5567 = vsel %vm2654, %v5565, %v5566
        %v5568 = vrot.slane %v5510, 4
        %v5569 = vrot.slane %v5512, 4
        %v5570 = vsel %vm2654, %v5568, %v5569
        %v5571 = vrot.slane %v5513, 4
        %v5572 = vrot.slane %v5515, 4
        %v5573 = vsel %vm2654, %v5571, %v5572
        %v5574 = vrot.slane %v5514, 4
        %v5575 = vrot.slane %v5516, 4
        %v5576 = vsel %vm2654, %v5574, %v5575
        %v5577 = vrot.slane %v5517, 4
        %v5578 = vrot.slane %v5519, 4
        %v5579 = vsel %vm2654, %v5577, %v5578
        %v5580 = vrot.slane %v5518, 4
        %v5581 = vrot.slane %v5520, 4
        %v5582 = vsel %vm2654, %v5580, %v5581
        %v5583 = vrot.slane %v5521, 4
        %v5584 = vrot.slane %v5523, 4
        %v5585 = vsel %vm2654, %v5583, %v5584
        %v5586 = vrot.slane %v5522, 4
        %v5587 = vrot.slane %v5524, 4
        %v5588 = vsel %vm2654, %v5586, %v5587
        %v5589 = vrot.slane %v5525, 4
        %v5590 = vrot.slane %v5527, 4
        %v5591 = vsel %vm2654, %v5589, %v5590
        %v5592 = vrot.slane %v5526, 4
        %v5593 = vrot.slane %v5528, 4
        %v5594 = vsel %vm2654, %v5592, %v5593
        %v5595 = vrot.slane %v5529, 4
        %v5596 = vrot.slane %v5531, 4
        %v5597 = vsel %vm2654, %v5595, %v5596
        %v5598 = vrot.slane %v5530, 4
        %v5599 = vrot.slane %v5532, 4
        %v5600 = vsel %vm2654, %v5598, %v5599
        %v5601 = vrot.slane %v5533, 4
        %v5602 = vrot.slane %v5535, 4
        %v5603 = vsel %vm2654, %v5601, %v5602
        %v5604 = vrot.slane %v5534, 4
        %v5605 = vrot.slane %v5536, 4
        %v5606 = vsel %vm2654, %v5604, %v5605
        %v5621 = vadd.f32 %v5487, %v5567
        %v5622 = vadd.f32 %v5488, %v5570
        %v5623 = vadd.f32 %v5489, %v5573
        %v5624 = vadd.f32 %v5490, %v5576
        %v5625 = vadd.f32 %v5491, %v5579
        %v5626 = vadd.f32 %v5492, %v5582
        %v5627 = vadd.f32 %v5493, %v5585
        %v5628 = vadd.f32 %v5494, %v5588
        %v5629 = vadd.f32 %v5495, %v5591
        %v5630 = vadd.f32 %v5496, %v5594
        %v5631 = vadd.f32 %v5497, %v5597
        %v5632 = vadd.f32 %v5498, %v5600
        %v5633 = vadd.f32 %v5499, %v5603
        %v5634 = vadd.f32 %v5500, %v5606
        %v5635 = vlaneseq
        %v5636 = vshrl.u32 %v5635, 7
        %v5637 = vsub.s32 4, %v5636
        %v5638 = vrot.slane %v2803, %v5637
        %v5639 = vlaneseq
        %v5640 = vshrl.u32 %v5639, 7
        %v5641 = vsub.s32 4, %v5640
        %v5642 = vrot.slane %v2804, %v5641
        %v5643 = vmul.f32 %v2753, %v5638
        %v5644 = vmul.f32 %v2754, %v5642
        %v5645 = vmul.f32 %v2755, %v5638
        %v5646 = vmul.f32 %v2756, %v5642
        %v5647 = vmul.f32 %v2757, %v5638
        %v5648 = vmul.f32 %v2758, %v5642
        %v5649 = vmul.f32 %v2759, %v5638
        %v5650 = vmul.f32 %v2760, %v5642
        %v5651 = vmul.f32 %v2761, %v5638
        %v5652 = vmul.f32 %v2762, %v5642
        %v5653 = vmul.f32 %v2763, %v5638
        %v5654 = vmul.f32 %v2764, %v5642
        %v5655 = vmul.f32 %v2765, %v5638
        %v5656 = vmul.f32 %v2766, %v5642
        %v5657 = vmul.f32 %v2767, %v5638
        %v5658 = vmul.f32 %v2768, %v5642
        %v5659 = vmul.f32 %v2769, %v5638
        %v5660 = vmul.f32 %v2770, %v5642
        %v5661 = vmul.f32 %v2771, %v5638
        %v5662 = vmul.f32 %v2772, %v5642
        %v5663 = vmul.f32 %v2773, %v5638
        %v5664 = vmul.f32 %v2774, %v5642
        %v5665 = vmul.f32 %v2775, %v5638
        %v5666 = vmul.f32 %v2776, %v5642
        %v5667 = vmul.f32 %v2777, %v5638
        %v5668 = vmul.f32 %v2778, %v5642
        %v5669 = vmul.f32 %v2779, %v5638
        %v5670 = vmul.f32 %v2780, %v5642
        %v5699 = vrot.slane %v5643, 4
        %v5700 = vrot.slane %v5645, 4
        %v5701 = vsel %vm2654, %v5699, %v5700
        %v5702 = vrot.slane %v5644, 4
        %v5703 = vrot.slane %v5646, 4
        %v5704 = vsel %vm2654, %v5702, %v5703
        %v5705 = vrot.slane %v5647, 4
        %v5706 = vrot.slane %v5649, 4
        %v5707 = vsel %vm2654, %v5705, %v5706
        %v5708 = vrot.slane %v5648, 4
        %v5709 = vrot.slane %v5650, 4
        %v5710 = vsel %vm2654, %v5708, %v5709
        %v5711 = vrot.slane %v5651, 4
        %v5712 = vrot.slane %v5653, 4
        %v5713 = vsel %vm2654, %v5711, %v5712
        %v5714 = vrot.slane %v5652, 4
        %v5715 = vrot.slane %v5654, 4
        %v5716 = vsel %vm2654, %v5714, %v5715
        %v5717 = vrot.slane %v5655, 4
        %v5718 = vrot.slane %v5657, 4
        %v5719 = vsel %vm2654, %v5717, %v5718
        %v5720 = vrot.slane %v5656, 4
        %v5721 = vrot.slane %v5658, 4
        %v5722 = vsel %vm2654, %v5720, %v5721
        %v5723 = vrot.slane %v5659, 4
        %v5724 = vrot.slane %v5661, 4
        %v5725 = vsel %vm2654, %v5723, %v5724
        %v5726 = vrot.slane %v5660, 4
        %v5727 = vrot.slane %v5662, 4
        %v5728 = vsel %vm2654, %v5726, %v5727
        %v5729 = vrot.slane %v5663, 4
        %v5730 = vrot.slane %v5665, 4
        %v5731 = vsel %vm2654, %v5729, %v5730
        %v5732 = vrot.slane %v5664, 4
        %v5733 = vrot.slane %v5666, 4
        %v5734 = vsel %vm2654, %v5732, %v5733
        %v5735 = vrot.slane %v5667, 4
        %v5736 = vrot.slane %v5669, 4
        %v5737 = vsel %vm2654, %v5735, %v5736
        %v5738 = vrot.slane %v5668, 4
        %v5739 = vrot.slane %v5670, 4
        %v5740 = vsel %vm2654, %v5738, %v5739
        %v5755 = vadd.f32 %v5621, %v5701
        %v5756 = vadd.f32 %v5622, %v5704
        %v5757 = vadd.f32 %v5623, %v5707
        %v5758 = vadd.f32 %v5624, %v5710
        %v5759 = vadd.f32 %v5625, %v5713
        %v5760 = vadd.f32 %v5626, %v5716
        %v5761 = vadd.f32 %v5627, %v5719
        %v5762 = vadd.f32 %v5628, %v5722
        %v5763 = vadd.f32 %v5629, %v5725
        %v5764 = vadd.f32 %v5630, %v5728
        %v5765 = vadd.f32 %v5631, %v5731
        %v5766 = vadd.f32 %v5632, %v5734
        %v5767 = vadd.f32 %v5633, %v5737
        %v5768 = vadd.f32 %v5634, %v5740
        %v5769 = vlaneseq
        %v5770 = vshrl.u32 %v5769, 7
        %v5771 = vsub.s32 4, %v5770
        %v5772 = vrot.slane %v2805, %v5771
        %v5773 = vlaneseq
        %v5774 = vshrl.u32 %v5773, 7
        %v5775 = vsub.s32 4, %v5774
        %v5776 = vrot.slane %v2806, %v5775
        %v5777 = vmul.f32 %v2757, %v5772
        %v5778 = vmul.f32 %v2758, %v5776
        %v5779 = vmul.f32 %v2759, %v5772
        %v5780 = vmul.f32 %v2760, %v5776
        %v5781 = vmul.f32 %v2761, %v5772
        %v5782 = vmul.f32 %v2762, %v5776
        %v5783 = vmul.f32 %v2763, %v5772
        %v5784 = vmul.f32 %v2764, %v5776
        %v5785 = vmul.f32 %v2765, %v5772
        %v5786 = vmul.f32 %v2766, %v5776
        %v5787 = vmul.f32 %v2767, %v5772
        %v5788 = vmul.f32 %v2768, %v5776
        %v5789 = vmul.f32 %v2769, %v5772
        %v5790 = vmul.f32 %v2770, %v5776
        %v5791 = vmul.f32 %v2771, %v5772
        %v5792 = vmul.f32 %v2772, %v5776
        %v5793 = vmul.f32 %v2773, %v5772
        %v5794 = vmul.f32 %v2774, %v5776
        %v5795 = vmul.f32 %v2775, %v5772
        %v5796 = vmul.f32 %v2776, %v5776
        %v5797 = vmul.f32 %v2777, %v5772
        %v5798 = vmul.f32 %v2778, %v5776
        %v5799 = vmul.f32 %v2779, %v5772
        %v5800 = vmul.f32 %v2780, %v5776
        %v5801 = vmul.f32 %v2781, %v5772
        %v5802 = vmul.f32 %v2782, %v5776
        %v5803 = vmul.f32 %v2783, %v5772
        %v5804 = vmul.f32 %v2784, %v5776
        %v5833 = vrot.slane %v5777, 4
        %v5834 = vrot.slane %v5779, 4
        %v5835 = vsel %vm2654, %v5833, %v5834
        %v5836 = vrot.slane %v5778, 4
        %v5837 = vrot.slane %v5780, 4
        %v5838 = vsel %vm2654, %v5836, %v5837
        %v5839 = vrot.slane %v5781, 4
        %v5840 = vrot.slane %v5783, 4
        %v5841 = vsel %vm2654, %v5839, %v5840
        %v5842 = vrot.slane %v5782, 4
        %v5843 = vrot.slane %v5784, 4
        %v5844 = vsel %vm2654, %v5842, %v5843
        %v5845 = vrot.slane %v5785, 4
        %v5846 = vrot.slane %v5787, 4
        %v5847 = vsel %vm2654, %v5845, %v5846
        %v5848 = vrot.slane %v5786, 4
        %v5849 = vrot.slane %v5788, 4
        %v5850 = vsel %vm2654, %v5848, %v5849
        %v5851 = vrot.slane %v5789, 4
        %v5852 = vrot.slane %v5791, 4
        %v5853 = vsel %vm2654, %v5851, %v5852
        %v5854 = vrot.slane %v5790, 4
        %v5855 = vrot.slane %v5792, 4
        %v5856 = vsel %vm2654, %v5854, %v5855
        %v5857 = vrot.slane %v5793, 4
        %v5858 = vrot.slane %v5795, 4
        %v5859 = vsel %vm2654, %v5857, %v5858
        %v5860 = vrot.slane %v5794, 4
        %v5861 = vrot.slane %v5796, 4
        %v5862 = vsel %vm2654, %v5860, %v5861
        %v5863 = vrot.slane %v5797, 4
        %v5864 = vrot.slane %v5799, 4
        %v5865 = vsel %vm2654, %v5863, %v5864
        %v5866 = vrot.slane %v5798, 4
        %v5867 = vrot.slane %v5800, 4
        %v5868 = vsel %vm2654, %v5866, %v5867
        %v5869 = vrot.slane %v5801, 4
        %v5870 = vrot.slane %v5803, 4
        %v5871 = vsel %vm2654, %v5869, %v5870
        %v5872 = vrot.slane %v5802, 4
        %v5873 = vrot.slane %v5804, 4
        %v5874 = vsel %vm2654, %v5872, %v5873
        %v5889 = vadd.f32 %v5755, %v5835
        %v5890 = vadd.f32 %v5756, %v5838
        %v5891 = vadd.f32 %v5757, %v5841
        %v5892 = vadd.f32 %v5758, %v5844
        %v5893 = vadd.f32 %v5759, %v5847
        %v5894 = vadd.f32 %v5760, %v5850
        %v5895 = vadd.f32 %v5761, %v5853
        %v5896 = vadd.f32 %v5762, %v5856
        %v5897 = vadd.f32 %v5763, %v5859
        %v5898 = vadd.f32 %v5764, %v5862
        %v5899 = vadd.f32 %v5765, %v5865
        %v5900 = vadd.f32 %v5766, %v5868
        %v5901 = vadd.f32 %v5767, %v5871
        %v5902 = vadd.f32 %v5768, %v5874
        %v5903 = vlaneseq
        %v5904 = vshrl.u32 %v5903, 7
        %v5905 = vsub.s32 4, %v5904
        %v5906 = vrot.slane %v2807, %v5905
        %v5907 = vlaneseq
        %v5908 = vshrl.u32 %v5907, 7
        %v5909 = vsub.s32 4, %v5908
        %v5910 = vrot.slane %v2808, %v5909
        %v5911 = vmul.f32 %v2761, %v5906
        %v5912 = vmul.f32 %v2762, %v5910
        %v5913 = vmul.f32 %v2763, %v5906
        %v5914 = vmul.f32 %v2764, %v5910
        %v5915 = vmul.f32 %v2765, %v5906
        %v5916 = vmul.f32 %v2766, %v5910
        %v5917 = vmul.f32 %v2767, %v5906
        %v5918 = vmul.f32 %v2768, %v5910
        %v5919 = vmul.f32 %v2769, %v5906
        %v5920 = vmul.f32 %v2770, %v5910
        %v5921 = vmul.f32 %v2771, %v5906
        %v5922 = vmul.f32 %v2772, %v5910
        %v5923 = vmul.f32 %v2773, %v5906
        %v5924 = vmul.f32 %v2774, %v5910
        %v5925 = vmul.f32 %v2775, %v5906
        %v5926 = vmul.f32 %v2776, %v5910
        %v5927 = vmul.f32 %v2777, %v5906
        %v5928 = vmul.f32 %v2778, %v5910
        %v5929 = vmul.f32 %v2779, %v5906
        %v5930 = vmul.f32 %v2780, %v5910
        %v5931 = vmul.f32 %v2781, %v5906
        %v5932 = vmul.f32 %v2782, %v5910
        %v5933 = vmul.f32 %v2783, %v5906
        %v5934 = vmul.f32 %v2784, %v5910
        %v5935 = vmul.f32 %v2785, %v5906
        %v5936 = vmul.f32 %v2786, %v5910
        %v5937 = vmul.f32 %v2787, %v5906
        %v5938 = vmul.f32 %v2788, %v5910
        %v5967 = vrot.slane %v5911, 4
        %v5968 = vrot.slane %v5913, 4
        %v5969 = vsel %vm2654, %v5967, %v5968
        %v5970 = vrot.slane %v5912, 4
        %v5971 = vrot.slane %v5914, 4
        %v5972 = vsel %vm2654, %v5970, %v5971
        %v5973 = vrot.slane %v5915, 4
        %v5974 = vrot.slane %v5917, 4
        %v5975 = vsel %vm2654, %v5973, %v5974
        %v5976 = vrot.slane %v5916, 4
        %v5977 = vrot.slane %v5918, 4
        %v5978 = vsel %vm2654, %v5976, %v5977
        %v5979 = vrot.slane %v5919, 4
        %v5980 = vrot.slane %v5921, 4
        %v5981 = vsel %vm2654, %v5979, %v5980
        %v5982 = vrot.slane %v5920, 4
        %v5983 = vrot.slane %v5922, 4
        %v5984 = vsel %vm2654, %v5982, %v5983
        %v5985 = vrot.slane %v5923, 4
        %v5986 = vrot.slane %v5925, 4
        %v5987 = vsel %vm2654, %v5985, %v5986
        %v5988 = vrot.slane %v5924, 4
        %v5989 = vrot.slane %v5926, 4
        %v5990 = vsel %vm2654, %v5988, %v5989
        %v5991 = vrot.slane %v5927, 4
        %v5992 = vrot.slane %v5929, 4
        %v5993 = vsel %vm2654, %v5991, %v5992
        %v5994 = vrot.slane %v5928, 4
        %v5995 = vrot.slane %v5930, 4
        %v5996 = vsel %vm2654, %v5994, %v5995
        %v5997 = vrot.slane %v5931, 4
        %v5998 = vrot.slane %v5933, 4
        %v5999 = vsel %vm2654, %v5997, %v5998
        %v6000 = vrot.slane %v5932, 4
        %v6001 = vrot.slane %v5934, 4
        %v6002 = vsel %vm2654, %v6000, %v6001
        %v6003 = vrot.slane %v5935, 4
        %v6004 = vrot.slane %v5937, 4
        %v6005 = vsel %vm2654, %v6003, %v6004
        %v6006 = vrot.slane %v5936, 4
        %v6007 = vrot.slane %v5938, 4
        %v6008 = vsel %vm2654, %v6006, %v6007
        %v6023 = vadd.f32 %v5889, %v5969
        %v6024 = vadd.f32 %v5890, %v5972
        %v6025 = vadd.f32 %v5891, %v5975
        %v6026 = vadd.f32 %v5892, %v5978
        %v6027 = vadd.f32 %v5893, %v5981
        %v6028 = vadd.f32 %v5894, %v5984
        %v6029 = vadd.f32 %v5895, %v5987
        %v6030 = vadd.f32 %v5896, %v5990
        %v6031 = vadd.f32 %v5897, %v5993
        %v6032 = vadd.f32 %v5898, %v5996
        %v6033 = vadd.f32 %v5899, %v5999
        %v6034 = vadd.f32 %v5900, %v6002
        %v6035 = vadd.f32 %v5901, %v6005
        %v6036 = vadd.f32 %v5902, %v6008
        %v6037 = vlaneseq
        %v6038 = vshrl.u32 %v6037, 7
        %v6039 = vsub.s32 4, %v6038
        %v6040 = vrot.slane %v2809, %v6039
        %v6041 = vlaneseq
        %v6042 = vshrl.u32 %v6041, 7
        %v6043 = vsub.s32 4, %v6042
        %v6044 = vrot.slane %v2810, %v6043
        %v6045 = vmul.f32 %v2765, %v6040
        %v6046 = vmul.f32 %v2766, %v6044
        %v6047 = vmul.f32 %v2767, %v6040
        %v6048 = vmul.f32 %v2768, %v6044
        %v6049 = vmul.f32 %v2769, %v6040
        %v6050 = vmul.f32 %v2770, %v6044
        %v6051 = vmul.f32 %v2771, %v6040
        %v6052 = vmul.f32 %v2772, %v6044
        %v6053 = vmul.f32 %v2773, %v6040
        %v6054 = vmul.f32 %v2774, %v6044
        %v6055 = vmul.f32 %v2775, %v6040
        %v6056 = vmul.f32 %v2776, %v6044
        %v6057 = vmul.f32 %v2777, %v6040
        %v6058 = vmul.f32 %v2778, %v6044
        %v6059 = vmul.f32 %v2779, %v6040
        %v6060 = vmul.f32 %v2780, %v6044
        %v6061 = vmul.f32 %v2781, %v6040
        %v6062 = vmul.f32 %v2782, %v6044
        %v6063 = vmul.f32 %v2783, %v6040
        %v6064 = vmul.f32 %v2784, %v6044
        %v6065 = vmul.f32 %v2785, %v6040
        %v6066 = vmul.f32 %v2786, %v6044
        %v6067 = vmul.f32 %v2787, %v6040
        %v6068 = vmul.f32 %v2788, %v6044
        %v6069 = vmul.f32 %v2789, %v6040
        %v6070 = vmul.f32 %v2790, %v6044
        %v6071 = vmul.f32 %v2791, %v6040
        %v6072 = vmul.f32 %v2792, %v6044
        %v6101 = vrot.slane %v6045, 4
        %v6102 = vrot.slane %v6047, 4
        %v6103 = vsel %vm2654, %v6101, %v6102
        %v6104 = vrot.slane %v6046, 4
        %v6105 = vrot.slane %v6048, 4
        %v6106 = vsel %vm2654, %v6104, %v6105
        %v6107 = vrot.slane %v6049, 4
        %v6108 = vrot.slane %v6051, 4
        %v6109 = vsel %vm2654, %v6107, %v6108
        %v6110 = vrot.slane %v6050, 4
        %v6111 = vrot.slane %v6052, 4
        %v6112 = vsel %vm2654, %v6110, %v6111
        %v6113 = vrot.slane %v6053, 4
        %v6114 = vrot.slane %v6055, 4
        %v6115 = vsel %vm2654, %v6113, %v6114
        %v6116 = vrot.slane %v6054, 4
        %v6117 = vrot.slane %v6056, 4
        %v6118 = vsel %vm2654, %v6116, %v6117
        %v6119 = vrot.slane %v6057, 4
        %v6120 = vrot.slane %v6059, 4
        %v6121 = vsel %vm2654, %v6119, %v6120
        %v6122 = vrot.slane %v6058, 4
        %v6123 = vrot.slane %v6060, 4
        %v6124 = vsel %vm2654, %v6122, %v6123
        %v6125 = vrot.slane %v6061, 4
        %v6126 = vrot.slane %v6063, 4
        %v6127 = vsel %vm2654, %v6125, %v6126
        %v6128 = vrot.slane %v6062, 4
        %v6129 = vrot.slane %v6064, 4
        %v6130 = vsel %vm2654, %v6128, %v6129
        %v6131 = vrot.slane %v6065, 4
        %v6132 = vrot.slane %v6067, 4
        %v6133 = vsel %vm2654, %v6131, %v6132
        %v6134 = vrot.slane %v6066, 4
        %v6135 = vrot.slane %v6068, 4
        %v6136 = vsel %vm2654, %v6134, %v6135
        %v6137 = vrot.slane %v6069, 4
        %v6138 = vrot.slane %v6071, 4
        %v6139 = vsel %vm2654, %v6137, %v6138
        %v6140 = vrot.slane %v6070, 4
        %v6141 = vrot.slane %v6072, 4
        %v6142 = vsel %vm2654, %v6140, %v6141
        %v6157 = vadd.f32 %v6023, %v6103
        %v6158 = vadd.f32 %v6024, %v6106
        %v6159 = vadd.f32 %v6025, %v6109
        %v6160 = vadd.f32 %v6026, %v6112
        %v6161 = vadd.f32 %v6027, %v6115
        %v6162 = vadd.f32 %v6028, %v6118
        %v6163 = vadd.f32 %v6029, %v6121
        %v6164 = vadd.f32 %v6030, %v6124
        %v6165 = vadd.f32 %v6031, %v6127
        %v6166 = vadd.f32 %v6032, %v6130
        %v6167 = vadd.f32 %v6033, %v6133
        %v6168 = vadd.f32 %v6034, %v6136
        %v6169 = vadd.f32 %v6035, %v6139
        %v6170 = vadd.f32 %v6036, %v6142
        %v6171 = vlaneseq
        %v6172 = vshrl.u32 %v6171, 7
        %v6173 = vsub.s32 4, %v6172
        %v6174 = vrot.slane %v2811, %v6173
        %v6175 = vlaneseq
        %v6176 = vshrl.u32 %v6175, 7
        %v6177 = vsub.s32 4, %v6176
        %v6178 = vrot.slane %v2812, %v6177
        %v6179 = vmul.f32 %v2769, %v6174
        %v6180 = vmul.f32 %v2770, %v6178
        %v6181 = vmul.f32 %v2771, %v6174
        %v6182 = vmul.f32 %v2772, %v6178
        %v6183 = vmul.f32 %v2773, %v6174
        %v6184 = vmul.f32 %v2774, %v6178
        %v6185 = vmul.f32 %v2775, %v6174
        %v6186 = vmul.f32 %v2776, %v6178
        %v6187 = vmul.f32 %v2777, %v6174
        %v6188 = vmul.f32 %v2778, %v6178
        %v6189 = vmul.f32 %v2779, %v6174
        %v6190 = vmul.f32 %v2780, %v6178
        %v6191 = vmul.f32 %v2781, %v6174
        %v6192 = vmul.f32 %v2782, %v6178
        %v6193 = vmul.f32 %v2783, %v6174
        %v6194 = vmul.f32 %v2784, %v6178
        %v6195 = vmul.f32 %v2785, %v6174
        %v6196 = vmul.f32 %v2786, %v6178
        %v6197 = vmul.f32 %v2787, %v6174
        %v6198 = vmul.f32 %v2788, %v6178
        %v6199 = vmul.f32 %v2789, %v6174
        %v6200 = vmul.f32 %v2790, %v6178
        %v6201 = vmul.f32 %v2791, %v6174
        %v6202 = vmul.f32 %v2792, %v6178
        %v6203 = vmul.f32 %v2793, %v6174
        %v6204 = vmul.f32 %v2794, %v6178
        %v6205 = vmul.f32 %v2795, %v6174
        %v6206 = vmul.f32 %v2796, %v6178
        %v6235 = vrot.slane %v6179, 4
        %v6236 = vrot.slane %v6181, 4
        %v6237 = vsel %vm2654, %v6235, %v6236
        %v6238 = vrot.slane %v6180, 4
        %v6239 = vrot.slane %v6182, 4
        %v6240 = vsel %vm2654, %v6238, %v6239
        %v6241 = vrot.slane %v6183, 4
        %v6242 = vrot.slane %v6185, 4
        %v6243 = vsel %vm2654, %v6241, %v6242
        %v6244 = vrot.slane %v6184, 4
        %v6245 = vrot.slane %v6186, 4
        %v6246 = vsel %vm2654, %v6244, %v6245
        %v6247 = vrot.slane %v6187, 4
        %v6248 = vrot.slane %v6189, 4
        %v6249 = vsel %vm2654, %v6247, %v6248
        %v6250 = vrot.slane %v6188, 4
        %v6251 = vrot.slane %v6190, 4
        %v6252 = vsel %vm2654, %v6250, %v6251
        %v6253 = vrot.slane %v6191, 4
        %v6254 = vrot.slane %v6193, 4
        %v6255 = vsel %vm2654, %v6253, %v6254
        %v6256 = vrot.slane %v6192, 4
        %v6257 = vrot.slane %v6194, 4
        %v6258 = vsel %vm2654, %v6256, %v6257
        %v6259 = vrot.slane %v6195, 4
        %v6260 = vrot.slane %v6197, 4
        %v6261 = vsel %vm2654, %v6259, %v6260
        %v6262 = vrot.slane %v6196, 4
        %v6263 = vrot.slane %v6198, 4
        %v6264 = vsel %vm2654, %v6262, %v6263
        %v6265 = vrot.slane %v6199, 4
        %v6266 = vrot.slane %v6201, 4
        %v6267 = vsel %vm2654, %v6265, %v6266
        %v6268 = vrot.slane %v6200, 4
        %v6269 = vrot.slane %v6202, 4
        %v6270 = vsel %vm2654, %v6268, %v6269
        %v6271 = vrot.slane %v6203, 4
        %v6272 = vrot.slane %v6205, 4
        %v6273 = vsel %vm2654, %v6271, %v6272
        %v6274 = vrot.slane %v6204, 4
        %v6275 = vrot.slane %v6206, 4
        %v6276 = vsel %vm2654, %v6274, %v6275
        %v6291 = vadd.f32 %v6157, %v6237
        %v6292 = vadd.f32 %v6158, %v6240
        %v6293 = vadd.f32 %v6159, %v6243
        %v6294 = vadd.f32 %v6160, %v6246
        %v6295 = vadd.f32 %v6161, %v6249
        %v6296 = vadd.f32 %v6162, %v6252
        %v6297 = vadd.f32 %v6163, %v6255
        %v6298 = vadd.f32 %v6164, %v6258
        %v6299 = vadd.f32 %v6165, %v6261
        %v6300 = vadd.f32 %v6166, %v6264
        %v6301 = vadd.f32 %v6167, %v6267
        %v6302 = vadd.f32 %v6168, %v6270
        %v6303 = vadd.f32 %v6169, %v6273
        %v6304 = vadd.f32 %v6170, %v6276
        %v6305 = vlaneseq
        %v6306 = vshrl.u32 %v6305, 7
        %v6307 = vsub.s32 4, %v6306
        %v6308 = vrot.slane %v2813, %v6307
        %v6309 = vlaneseq
        %v6310 = vshrl.u32 %v6309, 7
        %v6311 = vsub.s32 4, %v6310
        %v6312 = vrot.slane %v2814, %v6311
        %v6313 = vmul.f32 %v2773, %v6308
        %v6314 = vmul.f32 %v2774, %v6312
        %v6315 = vmul.f32 %v2775, %v6308
        %v6316 = vmul.f32 %v2776, %v6312
        %v6317 = vmul.f32 %v2777, %v6308
        %v6318 = vmul.f32 %v2778, %v6312
        %v6319 = vmul.f32 %v2779, %v6308
        %v6320 = vmul.f32 %v2780, %v6312
        %v6321 = vmul.f32 %v2781, %v6308
        %v6322 = vmul.f32 %v2782, %v6312
        %v6323 = vmul.f32 %v2783, %v6308
        %v6324 = vmul.f32 %v2784, %v6312
        %v6325 = vmul.f32 %v2785, %v6308
        %v6326 = vmul.f32 %v2786, %v6312
        %v6327 = vmul.f32 %v2787, %v6308
        %v6328 = vmul.f32 %v2788, %v6312
        %v6329 = vmul.f32 %v2789, %v6308
        %v6330 = vmul.f32 %v2790, %v6312
        %v6331 = vmul.f32 %v2791, %v6308
        %v6332 = vmul.f32 %v2792, %v6312
        %v6333 = vmul.f32 %v2793, %v6308
        %v6334 = vmul.f32 %v2794, %v6312
        %v6335 = vmul.f32 %v2795, %v6308
        %v6336 = vmul.f32 %v2796, %v6312
        %v6337 = vmul.f32 %v2797, %v6308
        %v6338 = vmul.f32 %v2798, %v6312
        %v6339 = vmul.f32 %v2799, %v6308
        %v6340 = vmul.f32 %v2800, %v6312
        %v6369 = vrot.slane %v6313, 4
        %v6370 = vrot.slane %v6315, 4
        %v6371 = vsel %vm2654, %v6369, %v6370
        %v6372 = vrot.slane %v6314, 4
        %v6373 = vrot.slane %v6316, 4
        %v6374 = vsel %vm2654, %v6372, %v6373
        %v6375 = vrot.slane %v6317, 4
        %v6376 = vrot.slane %v6319, 4
        %v6377 = vsel %vm2654, %v6375, %v6376
        %v6378 = vrot.slane %v6318, 4
        %v6379 = vrot.slane %v6320, 4
        %v6380 = vsel %vm2654, %v6378, %v6379
        %v6381 = vrot.slane %v6321, 4
        %v6382 = vrot.slane %v6323, 4
        %v6383 = vsel %vm2654, %v6381, %v6382
        %v6384 = vrot.slane %v6322, 4
        %v6385 = vrot.slane %v6324, 4
        %v6386 = vsel %vm2654, %v6384, %v6385
        %v6387 = vrot.slane %v6325, 4
        %v6388 = vrot.slane %v6327, 4
        %v6389 = vsel %vm2654, %v6387, %v6388
        %v6390 = vrot.slane %v6326, 4
        %v6391 = vrot.slane %v6328, 4
        %v6392 = vsel %vm2654, %v6390, %v6391
        %v6393 = vrot.slane %v6329, 4
        %v6394 = vrot.slane %v6331, 4
        %v6395 = vsel %vm2654, %v6393, %v6394
        %v6396 = vrot.slane %v6330, 4
        %v6397 = vrot.slane %v6332, 4
        %v6398 = vsel %vm2654, %v6396, %v6397
        %v6399 = vrot.slane %v6333, 4
        %v6400 = vrot.slane %v6335, 4
        %v6401 = vsel %vm2654, %v6399, %v6400
        %v6402 = vrot.slane %v6334, 4
        %v6403 = vrot.slane %v6336, 4
        %v6404 = vsel %vm2654, %v6402, %v6403
        %v6405 = vrot.slane %v6337, 4
        %v6406 = vrot.slane %v6339, 4
        %v6407 = vsel %vm2654, %v6405, %v6406
        %v6408 = vrot.slane %v6338, 4
        %v6409 = vrot.slane %v6340, 4
        %v6410 = vsel %vm2654, %v6408, %v6409
        %v6425 = vadd.f32 %v6291, %v6371
        %v6426 = vadd.f32 %v6292, %v6374
        %v6427 = vadd.f32 %v6293, %v6377
        %v6428 = vadd.f32 %v6294, %v6380
        %v6429 = vadd.f32 %v6295, %v6383
        %v6430 = vadd.f32 %v6296, %v6386
        %v6431 = vadd.f32 %v6297, %v6389
        %v6432 = vadd.f32 %v6298, %v6392
        %v6433 = vadd.f32 %v6299, %v6395
        %v6434 = vadd.f32 %v6300, %v6398
        %v6435 = vadd.f32 %v6301, %v6401
        %v6436 = vadd.f32 %v6302, %v6404
        %v6437 = vadd.f32 %v6303, %v6407
        %v6438 = vadd.f32 %v6304, %v6410
        %v6439 = vlaneseq
        %v6440 = vshrl.u32 %v6439, 7
        %v6441 = vsub.s32 5, %v6440
        %v6442 = vrot.slane %v2801, %v6441
        %v6443 = vlaneseq
        %v6444 = vshrl.u32 %v6443, 7
        %v6445 = vsub.s32 5, %v6444
        %v6446 = vrot.slane %v2802, %v6445
        %v6447 = vmul.f32 %v2749, %v6442
        %v6448 = vmul.f32 %v2750, %v6446
        %v6449 = vmul.f32 %v2751, %v6442
        %v6450 = vmul.f32 %v2752, %v6446
        %v6451 = vmul.f32 %v2753, %v6442
        %v6452 = vmul.f32 %v2754, %v6446
        %v6453 = vmul.f32 %v2755, %v6442
        %v6454 = vmul.f32 %v2756, %v6446
        %v6455 = vmul.f32 %v2757, %v6442
        %v6456 = vmul.f32 %v2758, %v6446
        %v6457 = vmul.f32 %v2759, %v6442
        %v6458 = vmul.f32 %v2760, %v6446
        %v6459 = vmul.f32 %v2761, %v6442
        %v6460 = vmul.f32 %v2762, %v6446
        %v6461 = vmul.f32 %v2763, %v6442
        %v6462 = vmul.f32 %v2764, %v6446
        %v6463 = vmul.f32 %v2765, %v6442
        %v6464 = vmul.f32 %v2766, %v6446
        %v6465 = vmul.f32 %v2767, %v6442
        %v6466 = vmul.f32 %v2768, %v6446
        %v6467 = vmul.f32 %v2769, %v6442
        %v6468 = vmul.f32 %v2770, %v6446
        %v6469 = vmul.f32 %v2771, %v6442
        %v6470 = vmul.f32 %v2772, %v6446
        %v6471 = vmul.f32 %v2773, %v6442
        %v6472 = vmul.f32 %v2774, %v6446
        %v6473 = vmul.f32 %v2775, %v6442
        %v6474 = vmul.f32 %v2776, %v6446
        %vm6503 = vcmask 1042432
        %v6504 = vrot.slane %v6447, 5
        %v6505 = vrot.slane %v6449, 5
        %v6506 = vsel %vm6503, %v6504, %v6505
        %v6507 = vrot.slane %v6448, 5
        %v6508 = vrot.slane %v6450, 5
        %v6509 = vsel %vm6503, %v6507, %v6508
        %v6510 = vrot.slane %v6451, 5
        %v6511 = vrot.slane %v6453, 5
        %v6512 = vsel %vm6503, %v6510, %v6511
        %v6513 = vrot.slane %v6452, 5
        %v6514 = vrot.slane %v6454, 5
        %v6515 = vsel %vm6503, %v6513, %v6514
        %v6516 = vrot.slane %v6455, 5
        %v6517 = vrot.slane %v6457, 5
        %v6518 = vsel %vm6503, %v6516, %v6517
        %v6519 = vrot.slane %v6456, 5
        %v6520 = vrot.slane %v6458, 5
        %v6521 = vsel %vm6503, %v6519, %v6520
        %v6522 = vrot.slane %v6459, 5
        %v6523 = vrot.slane %v6461, 5
        %v6524 = vsel %vm6503, %v6522, %v6523
        %v6525 = vrot.slane %v6460, 5
        %v6526 = vrot.slane %v6462, 5
        %v6527 = vsel %vm6503, %v6525, %v6526
        %v6528 = vrot.slane %v6463, 5
        %v6529 = vrot.slane %v6465, 5
        %v6530 = vsel %vm6503, %v6528, %v6529
        %v6531 = vrot.slane %v6464, 5
        %v6532 = vrot.slane %v6466, 5
        %v6533 = vsel %vm6503, %v6531, %v6532
        %v6534 = vrot.slane %v6467, 5
        %v6535 = vrot.slane %v6469, 5
        %v6536 = vsel %vm6503, %v6534, %v6535
        %v6537 = vrot.slane %v6468, 5
        %v6538 = vrot.slane %v6470, 5
        %v6539 = vsel %vm6503, %v6537, %v6538
        %v6540 = vrot.slane %v6471, 5
        %v6541 = vrot.slane %v6473, 5
        %v6542 = vsel %vm6503, %v6540, %v6541
        %v6543 = vrot.slane %v6472, 5
        %v6544 = vrot.slane %v6474, 5
        %v6545 = vsel %vm6503, %v6543, %v6544
        %v6560 = vadd.f32 %v6425, %v6506
        %v6561 = vadd.f32 %v6426, %v6509
        %v6562 = vadd.f32 %v6427, %v6512
        %v6563 = vadd.f32 %v6428, %v6515
        %v6564 = vadd.f32 %v6429, %v6518
        %v6565 = vadd.f32 %v6430, %v6521
        %v6566 = vadd.f32 %v6431, %v6524
        %v6567 = vadd.f32 %v6432, %v6527
        %v6568 = vadd.f32 %v6433, %v6530
        %v6569 = vadd.f32 %v6434, %v6533
        %v6570 = vadd.f32 %v6435, %v6536
        %v6571 = vadd.f32 %v6436, %v6539
        %v6572 = vadd.f32 %v6437, %v6542
        %v6573 = vadd.f32 %v6438, %v6545
        %v6574 = vlaneseq
        %v6575 = vshrl.u32 %v6574, 7
        %v6576 = vsub.s32 5, %v6575
        %v6577 = vrot.slane %v2803, %v6576
        %v6578 = vlaneseq
        %v6579 = vshrl.u32 %v6578, 7
        %v6580 = vsub.s32 5, %v6579
        %v6581 = vrot.slane %v2804, %v6580
        %v6582 = vmul.f32 %v2753, %v6577
        %v6583 = vmul.f32 %v2754, %v6581
        %v6584 = vmul.f32 %v2755, %v6577
        %v6585 = vmul.f32 %v2756, %v6581
        %v6586 = vmul.f32 %v2757, %v6577
        %v6587 = vmul.f32 %v2758, %v6581
        %v6588 = vmul.f32 %v2759, %v6577
        %v6589 = vmul.f32 %v2760, %v6581
        %v6590 = vmul.f32 %v2761, %v6577
        %v6591 = vmul.f32 %v2762, %v6581
        %v6592 = vmul.f32 %v2763, %v6577
        %v6593 = vmul.f32 %v2764, %v6581
        %v6594 = vmul.f32 %v2765, %v6577
        %v6595 = vmul.f32 %v2766, %v6581
        %v6596 = vmul.f32 %v2767, %v6577
        %v6597 = vmul.f32 %v2768, %v6581
        %v6598 = vmul.f32 %v2769, %v6577
        %v6599 = vmul.f32 %v2770, %v6581
        %v6600 = vmul.f32 %v2771, %v6577
        %v6601 = vmul.f32 %v2772, %v6581
        %v6602 = vmul.f32 %v2773, %v6577
        %v6603 = vmul.f32 %v2774, %v6581
        %v6604 = vmul.f32 %v2775, %v6577
        %v6605 = vmul.f32 %v2776, %v6581
        %v6606 = vmul.f32 %v2777, %v6577
        %v6607 = vmul.f32 %v2778, %v6581
        %v6608 = vmul.f32 %v2779, %v6577
        %v6609 = vmul.f32 %v2780, %v6581
        %v6638 = vrot.slane %v6582, 5
        %v6639 = vrot.slane %v6584, 5
        %v6640 = vsel %vm6503, %v6638, %v6639
        %v6641 = vrot.slane %v6583, 5
        %v6642 = vrot.slane %v6585, 5
        %v6643 = vsel %vm6503, %v6641, %v6642
        %v6644 = vrot.slane %v6586, 5
        %v6645 = vrot.slane %v6588, 5
        %v6646 = vsel %vm6503, %v6644, %v6645
        %v6647 = vrot.slane %v6587, 5
        %v6648 = vrot.slane %v6589, 5
        %v6649 = vsel %vm6503, %v6647, %v6648
        %v6650 = vrot.slane %v6590, 5
        %v6651 = vrot.slane %v6592, 5
        %v6652 = vsel %vm6503, %v6650, %v6651
        %v6653 = vrot.slane %v6591, 5
        %v6654 = vrot.slane %v6593, 5
        %v6655 = vsel %vm6503, %v6653, %v6654
        %v6656 = vrot.slane %v6594, 5
        %v6657 = vrot.slane %v6596, 5
        %v6658 = vsel %vm6503, %v6656, %v6657
        %v6659 = vrot.slane %v6595, 5
        %v6660 = vrot.slane %v6597, 5
        %v6661 = vsel %vm6503, %v6659, %v6660
        %v6662 = vrot.slane %v6598, 5
        %v6663 = vrot.slane %v6600, 5
        %v6664 = vsel %vm6503, %v6662, %v6663
        %v6665 = vrot.slane %v6599, 5
        %v6666 = vrot.slane %v6601, 5
        %v6667 = vsel %vm6503, %v6665, %v6666
        %v6668 = vrot.slane %v6602, 5
        %v6669 = vrot.slane %v6604, 5
        %v6670 = vsel %vm6503, %v6668, %v6669
        %v6671 = vrot.slane %v6603, 5
        %v6672 = vrot.slane %v6605, 5
        %v6673 = vsel %vm6503, %v6671, %v6672
        %v6674 = vrot.slane %v6606, 5
        %v6675 = vrot.slane %v6608, 5
        %v6676 = vsel %vm6503, %v6674, %v6675
        %v6677 = vrot.slane %v6607, 5
        %v6678 = vrot.slane %v6609, 5
        %v6679 = vsel %vm6503, %v6677, %v6678
        %v6694 = vadd.f32 %v6560, %v6640
        %v6695 = vadd.f32 %v6561, %v6643
        %v6696 = vadd.f32 %v6562, %v6646
        %v6697 = vadd.f32 %v6563, %v6649
        %v6698 = vadd.f32 %v6564, %v6652
        %v6699 = vadd.f32 %v6565, %v6655
        %v6700 = vadd.f32 %v6566, %v6658
        %v6701 = vadd.f32 %v6567, %v6661
        %v6702 = vadd.f32 %v6568, %v6664
        %v6703 = vadd.f32 %v6569, %v6667
        %v6704 = vadd.f32 %v6570, %v6670
        %v6705 = vadd.f32 %v6571, %v6673
        %v6706 = vadd.f32 %v6572, %v6676
        %v6707 = vadd.f32 %v6573, %v6679
        %v6708 = vlaneseq
        %v6709 = vshrl.u32 %v6708, 7
        %v6710 = vsub.s32 5, %v6709
        %v6711 = vrot.slane %v2805, %v6710
        %v6712 = vlaneseq
        %v6713 = vshrl.u32 %v6712, 7
        %v6714 = vsub.s32 5, %v6713
        %v6715 = vrot.slane %v2806, %v6714
        %v6716 = vmul.f32 %v2757, %v6711
        %v6717 = vmul.f32 %v2758, %v6715
        %v6718 = vmul.f32 %v2759, %v6711
        %v6719 = vmul.f32 %v2760, %v6715
        %v6720 = vmul.f32 %v2761, %v6711
        %v6721 = vmul.f32 %v2762, %v6715
        %v6722 = vmul.f32 %v2763, %v6711
        %v6723 = vmul.f32 %v2764, %v6715
        %v6724 = vmul.f32 %v2765, %v6711
        %v6725 = vmul.f32 %v2766, %v6715
        %v6726 = vmul.f32 %v2767, %v6711
        %v6727 = vmul.f32 %v2768, %v6715
        %v6728 = vmul.f32 %v2769, %v6711
        %v6729 = vmul.f32 %v2770, %v6715
        %v6730 = vmul.f32 %v2771, %v6711
        %v6731 = vmul.f32 %v2772, %v6715
        %v6732 = vmul.f32 %v2773, %v6711
        %v6733 = vmul.f32 %v2774, %v6715
        %v6734 = vmul.f32 %v2775, %v6711
        %v6735 = vmul.f32 %v2776, %v6715
        %v6736 = vmul.f32 %v2777, %v6711
        %v6737 = vmul.f32 %v2778, %v6715
        %v6738 = vmul.f32 %v2779, %v6711
        %v6739 = vmul.f32 %v2780, %v6715
        %v6740 = vmul.f32 %v2781, %v6711
        %v6741 = vmul.f32 %v2782, %v6715
        %v6742 = vmul.f32 %v2783, %v6711
        %v6743 = vmul.f32 %v2784, %v6715
        %v6772 = vrot.slane %v6716, 5
        %v6773 = vrot.slane %v6718, 5
        %v6774 = vsel %vm6503, %v6772, %v6773
        %v6775 = vrot.slane %v6717, 5
        %v6776 = vrot.slane %v6719, 5
        %v6777 = vsel %vm6503, %v6775, %v6776
        %v6778 = vrot.slane %v6720, 5
        %v6779 = vrot.slane %v6722, 5
        %v6780 = vsel %vm6503, %v6778, %v6779
        %v6781 = vrot.slane %v6721, 5
        %v6782 = vrot.slane %v6723, 5
        %v6783 = vsel %vm6503, %v6781, %v6782
        %v6784 = vrot.slane %v6724, 5
        %v6785 = vrot.slane %v6726, 5
        %v6786 = vsel %vm6503, %v6784, %v6785
        %v6787 = vrot.slane %v6725, 5
        %v6788 = vrot.slane %v6727, 5
        %v6789 = vsel %vm6503, %v6787, %v6788
        %v6790 = vrot.slane %v6728, 5
        %v6791 = vrot.slane %v6730, 5
        %v6792 = vsel %vm6503, %v6790, %v6791
        %v6793 = vrot.slane %v6729, 5
        %v6794 = vrot.slane %v6731, 5
        %v6795 = vsel %vm6503, %v6793, %v6794
        %v6796 = vrot.slane %v6732, 5
        %v6797 = vrot.slane %v6734, 5
        %v6798 = vsel %vm6503, %v6796, %v6797
        %v6799 = vrot.slane %v6733, 5
        %v6800 = vrot.slane %v6735, 5
        %v6801 = vsel %vm6503, %v6799, %v6800
        %v6802 = vrot.slane %v6736, 5
        %v6803 = vrot.slane %v6738, 5
        %v6804 = vsel %vm6503, %v6802, %v6803
        %v6805 = vrot.slane %v6737, 5
        %v6806 = vrot.slane %v6739, 5
        %v6807 = vsel %vm6503, %v6805, %v6806
        %v6808 = vrot.slane %v6740, 5
        %v6809 = vrot.slane %v6742, 5
        %v6810 = vsel %vm6503, %v6808, %v6809
        %v6811 = vrot.slane %v6741, 5
        %v6812 = vrot.slane %v6743, 5
        %v6813 = vsel %vm6503, %v6811, %v6812
        %v6828 = vadd.f32 %v6694, %v6774
        %v6829 = vadd.f32 %v6695, %v6777
        %v6830 = vadd.f32 %v6696, %v6780
        %v6831 = vadd.f32 %v6697, %v6783
        %v6832 = vadd.f32 %v6698, %v6786
        %v6833 = vadd.f32 %v6699, %v6789
        %v6834 = vadd.f32 %v6700, %v6792
        %v6835 = vadd.f32 %v6701, %v6795
        %v6836 = vadd.f32 %v6702, %v6798
        %v6837 = vadd.f32 %v6703, %v6801
        %v6838 = vadd.f32 %v6704, %v6804
        %v6839 = vadd.f32 %v6705, %v6807
        %v6840 = vadd.f32 %v6706, %v6810
        %v6841 = vadd.f32 %v6707, %v6813
        %v6842 = vlaneseq
        %v6843 = vshrl.u32 %v6842, 7
        %v6844 = vsub.s32 5, %v6843
        %v6845 = vrot.slane %v2807, %v6844
        %v6846 = vlaneseq
        %v6847 = vshrl.u32 %v6846, 7
        %v6848 = vsub.s32 5, %v6847
        %v6849 = vrot.slane %v2808, %v6848
        %v6850 = vmul.f32 %v2761, %v6845
        %v6851 = vmul.f32 %v2762, %v6849
        %v6852 = vmul.f32 %v2763, %v6845
        %v6853 = vmul.f32 %v2764, %v6849
        %v6854 = vmul.f32 %v2765, %v6845
        %v6855 = vmul.f32 %v2766, %v6849
        %v6856 = vmul.f32 %v2767, %v6845
        %v6857 = vmul.f32 %v2768, %v6849
        %v6858 = vmul.f32 %v2769, %v6845
        %v6859 = vmul.f32 %v2770, %v6849
        %v6860 = vmul.f32 %v2771, %v6845
        %v6861 = vmul.f32 %v2772, %v6849
        %v6862 = vmul.f32 %v2773, %v6845
        %v6863 = vmul.f32 %v2774, %v6849
        %v6864 = vmul.f32 %v2775, %v6845
        %v6865 = vmul.f32 %v2776, %v6849
        %v6866 = vmul.f32 %v2777, %v6845
        %v6867 = vmul.f32 %v2778, %v6849
        %v6868 = vmul.f32 %v2779, %v6845
        %v6869 = vmul.f32 %v2780, %v6849
        %v6870 = vmul.f32 %v2781, %v6845
        %v6871 = vmul.f32 %v2782, %v6849
        %v6872 = vmul.f32 %v2783, %v6845
        %v6873 = vmul.f32 %v2784, %v6849
        %v6874 = vmul.f32 %v2785, %v6845
        %v6875 = vmul.f32 %v2786, %v6849
        %v6876 = vmul.f32 %v2787, %v6845
        %v6877 = vmul.f32 %v2788, %v6849
        %v6906 = vrot.slane %v6850, 5
        %v6907 = vrot.slane %v6852, 5
        %v6908 = vsel %vm6503, %v6906, %v6907
        %v6909 = vrot.slane %v6851, 5
        %v6910 = vrot.slane %v6853, 5
        %v6911 = vsel %vm6503, %v6909, %v6910
        %v6912 = vrot.slane %v6854, 5
        %v6913 = vrot.slane %v6856, 5
        %v6914 = vsel %vm6503, %v6912, %v6913
        %v6915 = vrot.slane %v6855, 5
        %v6916 = vrot.slane %v6857, 5
        %v6917 = vsel %vm6503, %v6915, %v6916
        %v6918 = vrot.slane %v6858, 5
        %v6919 = vrot.slane %v6860, 5
        %v6920 = vsel %vm6503, %v6918, %v6919
        %v6921 = vrot.slane %v6859, 5
        %v6922 = vrot.slane %v6861, 5
        %v6923 = vsel %vm6503, %v6921, %v6922
        %v6924 = vrot.slane %v6862, 5
        %v6925 = vrot.slane %v6864, 5
        %v6926 = vsel %vm6503, %v6924, %v6925
        %v6927 = vrot.slane %v6863, 5
        %v6928 = vrot.slane %v6865, 5
        %v6929 = vsel %vm6503, %v6927, %v6928
        %v6930 = vrot.slane %v6866, 5
        %v6931 = vrot.slane %v6868, 5
        %v6932 = vsel %vm6503, %v6930, %v6931
        %v6933 = vrot.slane %v6867, 5
        %v6934 = vrot.slane %v6869, 5
        %v6935 = vsel %vm6503, %v6933, %v6934
        %v6936 = vrot.slane %v6870, 5
        %v6937 = vrot.slane %v6872, 5
        %v6938 = vsel %vm6503, %v6936, %v6937
        %v6939 = vrot.slane %v6871, 5
        %v6940 = vrot.slane %v6873, 5
        %v6941 = vsel %vm6503, %v6939, %v6940
        %v6942 = vrot.slane %v6874, 5
        %v6943 = vrot.slane %v6876, 5
        %v6944 = vsel %vm6503, %v6942, %v6943
        %v6945 = vrot.slane %v6875, 5
        %v6946 = vrot.slane %v6877, 5
        %v6947 = vsel %vm6503, %v6945, %v6946
        %v6962 = vadd.f32 %v6828, %v6908
        %v6963 = vadd.f32 %v6829, %v6911
        %v6964 = vadd.f32 %v6830, %v6914
        %v6965 = vadd.f32 %v6831, %v6917
        %v6966 = vadd.f32 %v6832, %v6920
        %v6967 = vadd.f32 %v6833, %v6923
        %v6968 = vadd.f32 %v6834, %v6926
        %v6969 = vadd.f32 %v6835, %v6929
        %v6970 = vadd.f32 %v6836, %v6932
        %v6971 = vadd.f32 %v6837, %v6935
        %v6972 = vadd.f32 %v6838, %v6938
        %v6973 = vadd.f32 %v6839, %v6941
        %v6974 = vadd.f32 %v6840, %v6944
        %v6975 = vadd.f32 %v6841, %v6947
        %v6976 = vlaneseq
        %v6977 = vshrl.u32 %v6976, 7
        %v6978 = vsub.s32 5, %v6977
        %v6979 = vrot.slane %v2809, %v6978
        %v6980 = vlaneseq
        %v6981 = vshrl.u32 %v6980, 7
        %v6982 = vsub.s32 5, %v6981
        %v6983 = vrot.slane %v2810, %v6982
        %v6984 = vmul.f32 %v2765, %v6979
        %v6985 = vmul.f32 %v2766, %v6983
        %v6986 = vmul.f32 %v2767, %v6979
        %v6987 = vmul.f32 %v2768, %v6983
        %v6988 = vmul.f32 %v2769, %v6979
        %v6989 = vmul.f32 %v2770, %v6983
        %v6990 = vmul.f32 %v2771, %v6979
        %v6991 = vmul.f32 %v2772, %v6983
        %v6992 = vmul.f32 %v2773, %v6979
        %v6993 = vmul.f32 %v2774, %v6983
        %v6994 = vmul.f32 %v2775, %v6979
        %v6995 = vmul.f32 %v2776, %v6983
        %v6996 = vmul.f32 %v2777, %v6979
        %v6997 = vmul.f32 %v2778, %v6983
        %v6998 = vmul.f32 %v2779, %v6979
        %v6999 = vmul.f32 %v2780, %v6983
        %v7000 = vmul.f32 %v2781, %v6979
        %v7001 = vmul.f32 %v2782, %v6983
        %v7002 = vmul.f32 %v2783, %v6979
        %v7003 = vmul.f32 %v2784, %v6983
        %v7004 = vmul.f32 %v2785, %v6979
        %v7005 = vmul.f32 %v2786, %v6983
        %v7006 = vmul.f32 %v2787, %v6979
        %v7007 = vmul.f32 %v2788, %v6983
        %v7008 = vmul.f32 %v2789, %v6979
        %v7009 = vmul.f32 %v2790, %v6983
        %v7010 = vmul.f32 %v2791, %v6979
        %v7011 = vmul.f32 %v2792, %v6983
        %v7040 = vrot.slane %v6984, 5
        %v7041 = vrot.slane %v6986, 5
        %v7042 = vsel %vm6503, %v7040, %v7041
        %v7043 = vrot.slane %v6985, 5
        %v7044 = vrot.slane %v6987, 5
        %v7045 = vsel %vm6503, %v7043, %v7044
        %v7046 = vrot.slane %v6988, 5
        %v7047 = vrot.slane %v6990, 5
        %v7048 = vsel %vm6503, %v7046, %v7047
        %v7049 = vrot.slane %v6989, 5
        %v7050 = vrot.slane %v6991, 5
        %v7051 = vsel %vm6503, %v7049, %v7050
        %v7052 = vrot.slane %v6992, 5
        %v7053 = vrot.slane %v6994, 5
        %v7054 = vsel %vm6503, %v7052, %v7053
        %v7055 = vrot.slane %v6993, 5
        %v7056 = vrot.slane %v6995, 5
        %v7057 = vsel %vm6503, %v7055, %v7056
        %v7058 = vrot.slane %v6996, 5
        %v7059 = vrot.slane %v6998, 5
        %v7060 = vsel %vm6503, %v7058, %v7059
        %v7061 = vrot.slane %v6997, 5
        %v7062 = vrot.slane %v6999, 5
        %v7063 = vsel %vm6503, %v7061, %v7062
        %v7064 = vrot.slane %v7000, 5
        %v7065 = vrot.slane %v7002, 5
        %v7066 = vsel %vm6503, %v7064, %v7065
        %v7067 = vrot.slane %v7001, 5
        %v7068 = vrot.slane %v7003, 5
        %v7069 = vsel %vm6503, %v7067, %v7068
        %v7070 = vrot.slane %v7004, 5
        %v7071 = vrot.slane %v7006, 5
        %v7072 = vsel %vm6503, %v7070, %v7071
        %v7073 = vrot.slane %v7005, 5
        %v7074 = vrot.slane %v7007, 5
        %v7075 = vsel %vm6503, %v7073, %v7074
        %v7076 = vrot.slane %v7008, 5
        %v7077 = vrot.slane %v7010, 5
        %v7078 = vsel %vm6503, %v7076, %v7077
        %v7079 = vrot.slane %v7009, 5
        %v7080 = vrot.slane %v7011, 5
        %v7081 = vsel %vm6503, %v7079, %v7080
        %v7096 = vadd.f32 %v6962, %v7042
        %v7097 = vadd.f32 %v6963, %v7045
        %v7098 = vadd.f32 %v6964, %v7048
        %v7099 = vadd.f32 %v6965, %v7051
        %v7100 = vadd.f32 %v6966, %v7054
        %v7101 = vadd.f32 %v6967, %v7057
        %v7102 = vadd.f32 %v6968, %v7060
        %v7103 = vadd.f32 %v6969, %v7063
        %v7104 = vadd.f32 %v6970, %v7066
        %v7105 = vadd.f32 %v6971, %v7069
        %v7106 = vadd.f32 %v6972, %v7072
        %v7107 = vadd.f32 %v6973, %v7075
        %v7108 = vadd.f32 %v6974, %v7078
        %v7109 = vadd.f32 %v6975, %v7081
        %v7110 = vlaneseq
        %v7111 = vshrl.u32 %v7110, 7
        %v7112 = vsub.s32 5, %v7111
        %v7113 = vrot.slane %v2811, %v7112
        %v7114 = vlaneseq
        %v7115 = vshrl.u32 %v7114, 7
        %v7116 = vsub.s32 5, %v7115
        %v7117 = vrot.slane %v2812, %v7116
        %v7118 = vmul.f32 %v2769, %v7113
        %v7119 = vmul.f32 %v2770, %v7117
        %v7120 = vmul.f32 %v2771, %v7113
        %v7121 = vmul.f32 %v2772, %v7117
        %v7122 = vmul.f32 %v2773, %v7113
        %v7123 = vmul.f32 %v2774, %v7117
        %v7124 = vmul.f32 %v2775, %v7113
        %v7125 = vmul.f32 %v2776, %v7117
        %v7126 = vmul.f32 %v2777, %v7113
        %v7127 = vmul.f32 %v2778, %v7117
        %v7128 = vmul.f32 %v2779, %v7113
        %v7129 = vmul.f32 %v2780, %v7117
        %v7130 = vmul.f32 %v2781, %v7113
        %v7131 = vmul.f32 %v2782, %v7117
        %v7132 = vmul.f32 %v2783, %v7113
        %v7133 = vmul.f32 %v2784, %v7117
        %v7134 = vmul.f32 %v2785, %v7113
        %v7135 = vmul.f32 %v2786, %v7117
        %v7136 = vmul.f32 %v2787, %v7113
        %v7137 = vmul.f32 %v2788, %v7117
        %v7138 = vmul.f32 %v2789, %v7113
        %v7139 = vmul.f32 %v2790, %v7117
        %v7140 = vmul.f32 %v2791, %v7113
        %v7141 = vmul.f32 %v2792, %v7117
        %v7142 = vmul.f32 %v2793, %v7113
        %v7143 = vmul.f32 %v2794, %v7117
        %v7144 = vmul.f32 %v2795, %v7113
        %v7145 = vmul.f32 %v2796, %v7117
        %v7174 = vrot.slane %v7118, 5
        %v7175 = vrot.slane %v7120, 5
        %v7176 = vsel %vm6503, %v7174, %v7175
        %v7177 = vrot.slane %v7119, 5
        %v7178 = vrot.slane %v7121, 5
        %v7179 = vsel %vm6503, %v7177, %v7178
        %v7180 = vrot.slane %v7122, 5
        %v7181 = vrot.slane %v7124, 5
        %v7182 = vsel %vm6503, %v7180, %v7181
        %v7183 = vrot.slane %v7123, 5
        %v7184 = vrot.slane %v7125, 5
        %v7185 = vsel %vm6503, %v7183, %v7184
        %v7186 = vrot.slane %v7126, 5
        %v7187 = vrot.slane %v7128, 5
        %v7188 = vsel %vm6503, %v7186, %v7187
        %v7189 = vrot.slane %v7127, 5
        %v7190 = vrot.slane %v7129, 5
        %v7191 = vsel %vm6503, %v7189, %v7190
        %v7192 = vrot.slane %v7130, 5
        %v7193 = vrot.slane %v7132, 5
        %v7194 = vsel %vm6503, %v7192, %v7193
        %v7195 = vrot.slane %v7131, 5
        %v7196 = vrot.slane %v7133, 5
        %v7197 = vsel %vm6503, %v7195, %v7196
        %v7198 = vrot.slane %v7134, 5
        %v7199 = vrot.slane %v7136, 5
        %v7200 = vsel %vm6503, %v7198, %v7199
        %v7201 = vrot.slane %v7135, 5
        %v7202 = vrot.slane %v7137, 5
        %v7203 = vsel %vm6503, %v7201, %v7202
        %v7204 = vrot.slane %v7138, 5
        %v7205 = vrot.slane %v7140, 5
        %v7206 = vsel %vm6503, %v7204, %v7205
        %v7207 = vrot.slane %v7139, 5
        %v7208 = vrot.slane %v7141, 5
        %v7209 = vsel %vm6503, %v7207, %v7208
        %v7210 = vrot.slane %v7142, 5
        %v7211 = vrot.slane %v7144, 5
        %v7212 = vsel %vm6503, %v7210, %v7211
        %v7213 = vrot.slane %v7143, 5
        %v7214 = vrot.slane %v7145, 5
        %v7215 = vsel %vm6503, %v7213, %v7214
        %v7230 = vadd.f32 %v7096, %v7176
        %v7231 = vadd.f32 %v7097, %v7179
        %v7232 = vadd.f32 %v7098, %v7182
        %v7233 = vadd.f32 %v7099, %v7185
        %v7234 = vadd.f32 %v7100, %v7188
        %v7235 = vadd.f32 %v7101, %v7191
        %v7236 = vadd.f32 %v7102, %v7194
        %v7237 = vadd.f32 %v7103, %v7197
        %v7238 = vadd.f32 %v7104, %v7200
        %v7239 = vadd.f32 %v7105, %v7203
        %v7240 = vadd.f32 %v7106, %v7206
        %v7241 = vadd.f32 %v7107, %v7209
        %v7242 = vadd.f32 %v7108, %v7212
        %v7243 = vadd.f32 %v7109, %v7215
        %v7244 = vlaneseq
        %v7245 = vshrl.u32 %v7244, 7
        %v7246 = vsub.s32 5, %v7245
        %v7247 = vrot.slane %v2813, %v7246
        %v7248 = vlaneseq
        %v7249 = vshrl.u32 %v7248, 7
        %v7250 = vsub.s32 5, %v7249
        %v7251 = vrot.slane %v2814, %v7250
        %v7252 = vmul.f32 %v2773, %v7247
        %v7253 = vmul.f32 %v2774, %v7251
        %v7254 = vmul.f32 %v2775, %v7247
        %v7255 = vmul.f32 %v2776, %v7251
        %v7256 = vmul.f32 %v2777, %v7247
        %v7257 = vmul.f32 %v2778, %v7251
        %v7258 = vmul.f32 %v2779, %v7247
        %v7259 = vmul.f32 %v2780, %v7251
        %v7260 = vmul.f32 %v2781, %v7247
        %v7261 = vmul.f32 %v2782, %v7251
        %v7262 = vmul.f32 %v2783, %v7247
        %v7263 = vmul.f32 %v2784, %v7251
        %v7264 = vmul.f32 %v2785, %v7247
        %v7265 = vmul.f32 %v2786, %v7251
        %v7266 = vmul.f32 %v2787, %v7247
        %v7267 = vmul.f32 %v2788, %v7251
        %v7268 = vmul.f32 %v2789, %v7247
        %v7269 = vmul.f32 %v2790, %v7251
        %v7270 = vmul.f32 %v2791, %v7247
        %v7271 = vmul.f32 %v2792, %v7251
        %v7272 = vmul.f32 %v2793, %v7247
        %v7273 = vmul.f32 %v2794, %v7251
        %v7274 = vmul.f32 %v2795, %v7247
        %v7275 = vmul.f32 %v2796, %v7251
        %v7276 = vmul.f32 %v2797, %v7247
        %v7277 = vmul.f32 %v2798, %v7251
        %v7278 = vmul.f32 %v2799, %v7247
        %v7279 = vmul.f32 %v2800, %v7251
        %v7308 = vrot.slane %v7252, 5
        %v7309 = vrot.slane %v7254, 5
        %v7310 = vsel %vm6503, %v7308, %v7309
        %v7311 = vrot.slane %v7253, 5
        %v7312 = vrot.slane %v7255, 5
        %v7313 = vsel %vm6503, %v7311, %v7312
        %v7314 = vrot.slane %v7256, 5
        %v7315 = vrot.slane %v7258, 5
        %v7316 = vsel %vm6503, %v7314, %v7315
        %v7317 = vrot.slane %v7257, 5
        %v7318 = vrot.slane %v7259, 5
        %v7319 = vsel %vm6503, %v7317, %v7318
        %v7320 = vrot.slane %v7260, 5
        %v7321 = vrot.slane %v7262, 5
        %v7322 = vsel %vm6503, %v7320, %v7321
        %v7323 = vrot.slane %v7261, 5
        %v7324 = vrot.slane %v7263, 5
        %v7325 = vsel %vm6503, %v7323, %v7324
        %v7326 = vrot.slane %v7264, 5
        %v7327 = vrot.slane %v7266, 5
        %v7328 = vsel %vm6503, %v7326, %v7327
        %v7329 = vrot.slane %v7265, 5
        %v7330 = vrot.slane %v7267, 5
        %v7331 = vsel %vm6503, %v7329, %v7330
        %v7332 = vrot.slane %v7268, 5
        %v7333 = vrot.slane %v7270, 5
        %v7334 = vsel %vm6503, %v7332, %v7333
        %v7335 = vrot.slane %v7269, 5
        %v7336 = vrot.slane %v7271, 5
        %v7337 = vsel %vm6503, %v7335, %v7336
        %v7338 = vrot.slane %v7272, 5
        %v7339 = vrot.slane %v7274, 5
        %v7340 = vsel %vm6503, %v7338, %v7339
        %v7341 = vrot.slane %v7273, 5
        %v7342 = vrot.slane %v7275, 5
        %v7343 = vsel %vm6503, %v7341, %v7342
        %v7344 = vrot.slane %v7276, 5
        %v7345 = vrot.slane %v7278, 5
        %v7346 = vsel %vm6503, %v7344, %v7345
        %v7347 = vrot.slane %v7277, 5
        %v7348 = vrot.slane %v7279, 5
        %v7349 = vsel %vm6503, %v7347, %v7348
        %v7364 = vadd.f32 %v7230, %v7310
        %v7365 = vadd.f32 %v7231, %v7313
        %v7366 = vadd.f32 %v7232, %v7316
        %v7367 = vadd.f32 %v7233, %v7319
        %v7368 = vadd.f32 %v7234, %v7322
        %v7369 = vadd.f32 %v7235, %v7325
        %v7370 = vadd.f32 %v7236, %v7328
        %v7371 = vadd.f32 %v7237, %v7331
        %v7372 = vadd.f32 %v7238, %v7334
        %v7373 = vadd.f32 %v7239, %v7337
        %v7374 = vadd.f32 %v7240, %v7340
        %v7375 = vadd.f32 %v7241, %v7343
        %v7376 = vadd.f32 %v7242, %v7346
        %v7377 = vadd.f32 %v7243, %v7349
        %v7378 = vlaneseq
        %v7379 = vshrl.u32 %v7378, 7
        %v7380 = vsub.s32 6, %v7379
        %v7381 = vrot.slane %v2801, %v7380
        %v7382 = vlaneseq
        %v7383 = vshrl.u32 %v7382, 7
        %v7384 = vsub.s32 6, %v7383
        %v7385 = vrot.slane %v2802, %v7384
        %v7386 = vmul.f32 %v2749, %v7381
        %v7387 = vmul.f32 %v2750, %v7385
        %v7388 = vmul.f32 %v2751, %v7381
        %v7389 = vmul.f32 %v2752, %v7385
        %v7390 = vmul.f32 %v2753, %v7381
        %v7391 = vmul.f32 %v2754, %v7385
        %v7392 = vmul.f32 %v2755, %v7381
        %v7393 = vmul.f32 %v2756, %v7385
        %v7394 = vmul.f32 %v2757, %v7381
        %v7395 = vmul.f32 %v2758, %v7385
        %v7396 = vmul.f32 %v2759, %v7381
        %v7397 = vmul.f32 %v2760, %v7385
        %v7398 = vmul.f32 %v2761, %v7381
        %v7399 = vmul.f32 %v2762, %v7385
        %v7400 = vmul.f32 %v2763, %v7381
        %v7401 = vmul.f32 %v2764, %v7385
        %v7402 = vmul.f32 %v2765, %v7381
        %v7403 = vmul.f32 %v2766, %v7385
        %v7404 = vmul.f32 %v2767, %v7381
        %v7405 = vmul.f32 %v2768, %v7385
        %v7406 = vmul.f32 %v2769, %v7381
        %v7407 = vmul.f32 %v2770, %v7385
        %v7408 = vmul.f32 %v2771, %v7381
        %v7409 = vmul.f32 %v2772, %v7385
        %v7410 = vmul.f32 %v2773, %v7381
        %v7411 = vmul.f32 %v2774, %v7385
        %v7412 = vmul.f32 %v2775, %v7381
        %v7413 = vmul.f32 %v2776, %v7385
        %vm7442 = vcmask 1041408
        %v7443 = vrot.slane %v7386, 6
        %v7444 = vrot.slane %v7388, 6
        %v7445 = vsel %vm7442, %v7443, %v7444
        %v7446 = vrot.slane %v7387, 6
        %v7447 = vrot.slane %v7389, 6
        %v7448 = vsel %vm7442, %v7446, %v7447
        %v7449 = vrot.slane %v7390, 6
        %v7450 = vrot.slane %v7392, 6
        %v7451 = vsel %vm7442, %v7449, %v7450
        %v7452 = vrot.slane %v7391, 6
        %v7453 = vrot.slane %v7393, 6
        %v7454 = vsel %vm7442, %v7452, %v7453
        %v7455 = vrot.slane %v7394, 6
        %v7456 = vrot.slane %v7396, 6
        %v7457 = vsel %vm7442, %v7455, %v7456
        %v7458 = vrot.slane %v7395, 6
        %v7459 = vrot.slane %v7397, 6
        %v7460 = vsel %vm7442, %v7458, %v7459
        %v7461 = vrot.slane %v7398, 6
        %v7462 = vrot.slane %v7400, 6
        %v7463 = vsel %vm7442, %v7461, %v7462
        %v7464 = vrot.slane %v7399, 6
        %v7465 = vrot.slane %v7401, 6
        %v7466 = vsel %vm7442, %v7464, %v7465
        %v7467 = vrot.slane %v7402, 6
        %v7468 = vrot.slane %v7404, 6
        %v7469 = vsel %vm7442, %v7467, %v7468
        %v7470 = vrot.slane %v7403, 6
        %v7471 = vrot.slane %v7405, 6
        %v7472 = vsel %vm7442, %v7470, %v7471
        %v7473 = vrot.slane %v7406, 6
        %v7474 = vrot.slane %v7408, 6
        %v7475 = vsel %vm7442, %v7473, %v7474
        %v7476 = vrot.slane %v7407, 6
        %v7477 = vrot.slane %v7409, 6
        %v7478 = vsel %vm7442, %v7476, %v7477
        %v7479 = vrot.slane %v7410, 6
        %v7480 = vrot.slane %v7412, 6
        %v7481 = vsel %vm7442, %v7479, %v7480
        %v7482 = vrot.slane %v7411, 6
        %v7483 = vrot.slane %v7413, 6
        %v7484 = vsel %vm7442, %v7482, %v7483
        %v7499 = vadd.f32 %v7364, %v7445
        %v7500 = vadd.f32 %v7365, %v7448
        %v7501 = vadd.f32 %v7366, %v7451
        %v7502 = vadd.f32 %v7367, %v7454
        %v7503 = vadd.f32 %v7368, %v7457
        %v7504 = vadd.f32 %v7369, %v7460
        %v7505 = vadd.f32 %v7370, %v7463
        %v7506 = vadd.f32 %v7371, %v7466
        %v7507 = vadd.f32 %v7372, %v7469
        %v7508 = vadd.f32 %v7373, %v7472
        %v7509 = vadd.f32 %v7374, %v7475
        %v7510 = vadd.f32 %v7375, %v7478
        %v7511 = vadd.f32 %v7376, %v7481
        %v7512 = vadd.f32 %v7377, %v7484
        %v7513 = vlaneseq
        %v7514 = vshrl.u32 %v7513, 7
        %v7515 = vsub.s32 6, %v7514
        %v7516 = vrot.slane %v2803, %v7515
        %v7517 = vlaneseq
        %v7518 = vshrl.u32 %v7517, 7
        %v7519 = vsub.s32 6, %v7518
        %v7520 = vrot.slane %v2804, %v7519
        %v7521 = vmul.f32 %v2753, %v7516
        %v7522 = vmul.f32 %v2754, %v7520
        %v7523 = vmul.f32 %v2755, %v7516
        %v7524 = vmul.f32 %v2756, %v7520
        %v7525 = vmul.f32 %v2757, %v7516
        %v7526 = vmul.f32 %v2758, %v7520
        %v7527 = vmul.f32 %v2759, %v7516
        %v7528 = vmul.f32 %v2760, %v7520
        %v7529 = vmul.f32 %v2761, %v7516
        %v7530 = vmul.f32 %v2762, %v7520
        %v7531 = vmul.f32 %v2763, %v7516
        %v7532 = vmul.f32 %v2764, %v7520
        %v7533 = vmul.f32 %v2765, %v7516
        %v7534 = vmul.f32 %v2766, %v7520
        %v7535 = vmul.f32 %v2767, %v7516
        %v7536 = vmul.f32 %v2768, %v7520
        %v7537 = vmul.f32 %v2769, %v7516
        %v7538 = vmul.f32 %v2770, %v7520
        %v7539 = vmul.f32 %v2771, %v7516
        %v7540 = vmul.f32 %v2772, %v7520
        %v7541 = vmul.f32 %v2773, %v7516
        %v7542 = vmul.f32 %v2774, %v7520
        %v7543 = vmul.f32 %v2775, %v7516
        %v7544 = vmul.f32 %v2776, %v7520
        %v7545 = vmul.f32 %v2777, %v7516
        %v7546 = vmul.f32 %v2778, %v7520
        %v7547 = vmul.f32 %v2779, %v7516
        %v7548 = vmul.f32 %v2780, %v7520
        %v7577 = vrot.slane %v7521, 6
        %v7578 = vrot.slane %v7523, 6
        %v7579 = vsel %vm7442, %v7577, %v7578
        %v7580 = vrot.slane %v7522, 6
        %v7581 = vrot.slane %v7524, 6
        %v7582 = vsel %vm7442, %v7580, %v7581
        %v7583 = vrot.slane %v7525, 6
        %v7584 = vrot.slane %v7527, 6
        %v7585 = vsel %vm7442, %v7583, %v7584
        %v7586 = vrot.slane %v7526, 6
        %v7587 = vrot.slane %v7528, 6
        %v7588 = vsel %vm7442, %v7586, %v7587
        %v7589 = vrot.slane %v7529, 6
        %v7590 = vrot.slane %v7531, 6
        %v7591 = vsel %vm7442, %v7589, %v7590
        %v7592 = vrot.slane %v7530, 6
        %v7593 = vrot.slane %v7532, 6
        %v7594 = vsel %vm7442, %v7592, %v7593
        %v7595 = vrot.slane %v7533, 6
        %v7596 = vrot.slane %v7535, 6
        %v7597 = vsel %vm7442, %v7595, %v7596
        %v7598 = vrot.slane %v7534, 6
        %v7599 = vrot.slane %v7536, 6
        %v7600 = vsel %vm7442, %v7598, %v7599
        %v7601 = vrot.slane %v7537, 6
        %v7602 = vrot.slane %v7539, 6
        %v7603 = vsel %vm7442, %v7601, %v7602
        %v7604 = vrot.slane %v7538, 6
        %v7605 = vrot.slane %v7540, 6
        %v7606 = vsel %vm7442, %v7604, %v7605
        %v7607 = vrot.slane %v7541, 6
        %v7608 = vrot.slane %v7543, 6
        %v7609 = vsel %vm7442, %v7607, %v7608
        %v7610 = vrot.slane %v7542, 6
        %v7611 = vrot.slane %v7544, 6
        %v7612 = vsel %vm7442, %v7610, %v7611
        %v7613 = vrot.slane %v7545, 6
        %v7614 = vrot.slane %v7547, 6
        %v7615 = vsel %vm7442, %v7613, %v7614
        %v7616 = vrot.slane %v7546, 6
        %v7617 = vrot.slane %v7548, 6
        %v7618 = vsel %vm7442, %v7616, %v7617
        %v7633 = vadd.f32 %v7499, %v7579
        %v7634 = vadd.f32 %v7500, %v7582
        %v7635 = vadd.f32 %v7501, %v7585
        %v7636 = vadd.f32 %v7502, %v7588
        %v7637 = vadd.f32 %v7503, %v7591
        %v7638 = vadd.f32 %v7504, %v7594
        %v7639 = vadd.f32 %v7505, %v7597
        %v7640 = vadd.f32 %v7506, %v7600
        %v7641 = vadd.f32 %v7507, %v7603
        %v7642 = vadd.f32 %v7508, %v7606
        %v7643 = vadd.f32 %v7509, %v7609
        %v7644 = vadd.f32 %v7510, %v7612
        %v7645 = vadd.f32 %v7511, %v7615
        %v7646 = vadd.f32 %v7512, %v7618
        %v7647 = vlaneseq
        %v7648 = vshrl.u32 %v7647, 7
        %v7649 = vsub.s32 6, %v7648
        %v7650 = vrot.slane %v2805, %v7649
        %v7651 = vlaneseq
        %v7652 = vshrl.u32 %v7651, 7
        %v7653 = vsub.s32 6, %v7652
        %v7654 = vrot.slane %v2806, %v7653
        %v7655 = vmul.f32 %v2757, %v7650
        %v7656 = vmul.f32 %v2758, %v7654
        %v7657 = vmul.f32 %v2759, %v7650
        %v7658 = vmul.f32 %v2760, %v7654
        %v7659 = vmul.f32 %v2761, %v7650
        %v7660 = vmul.f32 %v2762, %v7654
        %v7661 = vmul.f32 %v2763, %v7650
        %v7662 = vmul.f32 %v2764, %v7654
        %v7663 = vmul.f32 %v2765, %v7650
        %v7664 = vmul.f32 %v2766, %v7654
        %v7665 = vmul.f32 %v2767, %v7650
        %v7666 = vmul.f32 %v2768, %v7654
        %v7667 = vmul.f32 %v2769, %v7650
        %v7668 = vmul.f32 %v2770, %v7654
        %v7669 = vmul.f32 %v2771, %v7650
        %v7670 = vmul.f32 %v2772, %v7654
        %v7671 = vmul.f32 %v2773, %v7650
        %v7672 = vmul.f32 %v2774, %v7654
        %v7673 = vmul.f32 %v2775, %v7650
        %v7674 = vmul.f32 %v2776, %v7654
        %v7675 = vmul.f32 %v2777, %v7650
        %v7676 = vmul.f32 %v2778, %v7654
        %v7677 = vmul.f32 %v2779, %v7650
        %v7678 = vmul.f32 %v2780, %v7654
        %v7679 = vmul.f32 %v2781, %v7650
        %v7680 = vmul.f32 %v2782, %v7654
        %v7681 = vmul.f32 %v2783, %v7650
        %v7682 = vmul.f32 %v2784, %v7654
        %v7711 = vrot.slane %v7655, 6
        %v7712 = vrot.slane %v7657, 6
        %v7713 = vsel %vm7442, %v7711, %v7712
        %v7714 = vrot.slane %v7656, 6
        %v7715 = vrot.slane %v7658, 6
        %v7716 = vsel %vm7442, %v7714, %v7715
        %v7717 = vrot.slane %v7659, 6
        %v7718 = vrot.slane %v7661, 6
        %v7719 = vsel %vm7442, %v7717, %v7718
        %v7720 = vrot.slane %v7660, 6
        %v7721 = vrot.slane %v7662, 6
        %v7722 = vsel %vm7442, %v7720, %v7721
        %v7723 = vrot.slane %v7663, 6
        %v7724 = vrot.slane %v7665, 6
        %v7725 = vsel %vm7442, %v7723, %v7724
        %v7726 = vrot.slane %v7664, 6
        %v7727 = vrot.slane %v7666, 6
        %v7728 = vsel %vm7442, %v7726, %v7727
        %v7729 = vrot.slane %v7667, 6
        %v7730 = vrot.slane %v7669, 6
        %v7731 = vsel %vm7442, %v7729, %v7730
        %v7732 = vrot.slane %v7668, 6
        %v7733 = vrot.slane %v7670, 6
        %v7734 = vsel %vm7442, %v7732, %v7733
        %v7735 = vrot.slane %v7671, 6
        %v7736 = vrot.slane %v7673, 6
        %v7737 = vsel %vm7442, %v7735, %v7736
        %v7738 = vrot.slane %v7672, 6
        %v7739 = vrot.slane %v7674, 6
        %v7740 = vsel %vm7442, %v7738, %v7739
        %v7741 = vrot.slane %v7675, 6
        %v7742 = vrot.slane %v7677, 6
        %v7743 = vsel %vm7442, %v7741, %v7742
        %v7744 = vrot.slane %v7676, 6
        %v7745 = vrot.slane %v7678, 6
        %v7746 = vsel %vm7442, %v7744, %v7745
        %v7747 = vrot.slane %v7679, 6
        %v7748 = vrot.slane %v7681, 6
        %v7749 = vsel %vm7442, %v7747, %v7748
        %v7750 = vrot.slane %v7680, 6
        %v7751 = vrot.slane %v7682, 6
        %v7752 = vsel %vm7442, %v7750, %v7751
        %v7767 = vadd.f32 %v7633, %v7713
        %v7768 = vadd.f32 %v7634, %v7716
        %v7769 = vadd.f32 %v7635, %v7719
        %v7770 = vadd.f32 %v7636, %v7722
        %v7771 = vadd.f32 %v7637, %v7725
        %v7772 = vadd.f32 %v7638, %v7728
        %v7773 = vadd.f32 %v7639, %v7731
        %v7774 = vadd.f32 %v7640, %v7734
        %v7775 = vadd.f32 %v7641, %v7737
        %v7776 = vadd.f32 %v7642, %v7740
        %v7777 = vadd.f32 %v7643, %v7743
        %v7778 = vadd.f32 %v7644, %v7746
        %v7779 = vadd.f32 %v7645, %v7749
        %v7780 = vadd.f32 %v7646, %v7752
        %v7781 = vlaneseq
        %v7782 = vshrl.u32 %v7781, 7
        %v7783 = vsub.s32 6, %v7782
        %v7784 = vrot.slane %v2807, %v7783
        %v7785 = vlaneseq
        %v7786 = vshrl.u32 %v7785, 7
        %v7787 = vsub.s32 6, %v7786
        %v7788 = vrot.slane %v2808, %v7787
        %v7789 = vmul.f32 %v2761, %v7784
        %v7790 = vmul.f32 %v2762, %v7788
        %v7791 = vmul.f32 %v2763, %v7784
        %v7792 = vmul.f32 %v2764, %v7788
        %v7793 = vmul.f32 %v2765, %v7784
        %v7794 = vmul.f32 %v2766, %v7788
        %v7795 = vmul.f32 %v2767, %v7784
        %v7796 = vmul.f32 %v2768, %v7788
        %v7797 = vmul.f32 %v2769, %v7784
        %v7798 = vmul.f32 %v2770, %v7788
        %v7799 = vmul.f32 %v2771, %v7784
        %v7800 = vmul.f32 %v2772, %v7788
        %v7801 = vmul.f32 %v2773, %v7784
        %v7802 = vmul.f32 %v2774, %v7788
        %v7803 = vmul.f32 %v2775, %v7784
        %v7804 = vmul.f32 %v2776, %v7788
        %v7805 = vmul.f32 %v2777, %v7784
        %v7806 = vmul.f32 %v2778, %v7788
        %v7807 = vmul.f32 %v2779, %v7784
        %v7808 = vmul.f32 %v2780, %v7788
        %v7809 = vmul.f32 %v2781, %v7784
        %v7810 = vmul.f32 %v2782, %v7788
        %v7811 = vmul.f32 %v2783, %v7784
        %v7812 = vmul.f32 %v2784, %v7788
        %v7813 = vmul.f32 %v2785, %v7784
        %v7814 = vmul.f32 %v2786, %v7788
        %v7815 = vmul.f32 %v2787, %v7784
        %v7816 = vmul.f32 %v2788, %v7788
        %v7845 = vrot.slane %v7789, 6
        %v7846 = vrot.slane %v7791, 6
        %v7847 = vsel %vm7442, %v7845, %v7846
        %v7848 = vrot.slane %v7790, 6
        %v7849 = vrot.slane %v7792, 6
        %v7850 = vsel %vm7442, %v7848, %v7849
        %v7851 = vrot.slane %v7793, 6
        %v7852 = vrot.slane %v7795, 6
        %v7853 = vsel %vm7442, %v7851, %v7852
        %v7854 = vrot.slane %v7794, 6
        %v7855 = vrot.slane %v7796, 6
        %v7856 = vsel %vm7442, %v7854, %v7855
        %v7857 = vrot.slane %v7797, 6
        %v7858 = vrot.slane %v7799, 6
        %v7859 = vsel %vm7442, %v7857, %v7858
        %v7860 = vrot.slane %v7798, 6
        %v7861 = vrot.slane %v7800, 6
        %v7862 = vsel %vm7442, %v7860, %v7861
        %v7863 = vrot.slane %v7801, 6
        %v7864 = vrot.slane %v7803, 6
        %v7865 = vsel %vm7442, %v7863, %v7864
        %v7866 = vrot.slane %v7802, 6
        %v7867 = vrot.slane %v7804, 6
        %v7868 = vsel %vm7442, %v7866, %v7867
        %v7869 = vrot.slane %v7805, 6
        %v7870 = vrot.slane %v7807, 6
        %v7871 = vsel %vm7442, %v7869, %v7870
        %v7872 = vrot.slane %v7806, 6
        %v7873 = vrot.slane %v7808, 6
        %v7874 = vsel %vm7442, %v7872, %v7873
        %v7875 = vrot.slane %v7809, 6
        %v7876 = vrot.slane %v7811, 6
        %v7877 = vsel %vm7442, %v7875, %v7876
        %v7878 = vrot.slane %v7810, 6
        %v7879 = vrot.slane %v7812, 6
        %v7880 = vsel %vm7442, %v7878, %v7879
        %v7881 = vrot.slane %v7813, 6
        %v7882 = vrot.slane %v7815, 6
        %v7883 = vsel %vm7442, %v7881, %v7882
        %v7884 = vrot.slane %v7814, 6
        %v7885 = vrot.slane %v7816, 6
        %v7886 = vsel %vm7442, %v7884, %v7885
        %v7901 = vadd.f32 %v7767, %v7847
        %v7902 = vadd.f32 %v7768, %v7850
        %v7903 = vadd.f32 %v7769, %v7853
        %v7904 = vadd.f32 %v7770, %v7856
        %v7905 = vadd.f32 %v7771, %v7859
        %v7906 = vadd.f32 %v7772, %v7862
        %v7907 = vadd.f32 %v7773, %v7865
        %v7908 = vadd.f32 %v7774, %v7868
        %v7909 = vadd.f32 %v7775, %v7871
        %v7910 = vadd.f32 %v7776, %v7874
        %v7911 = vadd.f32 %v7777, %v7877
        %v7912 = vadd.f32 %v7778, %v7880
        %v7913 = vadd.f32 %v7779, %v7883
        %v7914 = vadd.f32 %v7780, %v7886
        %v7915 = vlaneseq
        %v7916 = vshrl.u32 %v7915, 7
        %v7917 = vsub.s32 6, %v7916
        %v7918 = vrot.slane %v2809, %v7917
        %v7919 = vlaneseq
        %v7920 = vshrl.u32 %v7919, 7
        %v7921 = vsub.s32 6, %v7920
        %v7922 = vrot.slane %v2810, %v7921
        %v7923 = vmul.f32 %v2765, %v7918
        %v7924 = vmul.f32 %v2766, %v7922
        %v7925 = vmul.f32 %v2767, %v7918
        %v7926 = vmul.f32 %v2768, %v7922
        %v7927 = vmul.f32 %v2769, %v7918
        %v7928 = vmul.f32 %v2770, %v7922
        %v7929 = vmul.f32 %v2771, %v7918
        %v7930 = vmul.f32 %v2772, %v7922
        %v7931 = vmul.f32 %v2773, %v7918
        %v7932 = vmul.f32 %v2774, %v7922
        %v7933 = vmul.f32 %v2775, %v7918
        %v7934 = vmul.f32 %v2776, %v7922
        %v7935 = vmul.f32 %v2777, %v7918
        %v7936 = vmul.f32 %v2778, %v7922
        %v7937 = vmul.f32 %v2779, %v7918
        %v7938 = vmul.f32 %v2780, %v7922
        %v7939 = vmul.f32 %v2781, %v7918
        %v7940 = vmul.f32 %v2782, %v7922
        %v7941 = vmul.f32 %v2783, %v7918
        %v7942 = vmul.f32 %v2784, %v7922
        %v7943 = vmul.f32 %v2785, %v7918
        %v7944 = vmul.f32 %v2786, %v7922
        %v7945 = vmul.f32 %v2787, %v7918
        %v7946 = vmul.f32 %v2788, %v7922
        %v7947 = vmul.f32 %v2789, %v7918
        %v7948 = vmul.f32 %v2790, %v7922
        %v7949 = vmul.f32 %v2791, %v7918
        %v7950 = vmul.f32 %v2792, %v7922
        %v7979 = vrot.slane %v7923, 6
        %v7980 = vrot.slane %v7925, 6
        %v7981 = vsel %vm7442, %v7979, %v7980
        %v7982 = vrot.slane %v7924, 6
        %v7983 = vrot.slane %v7926, 6
        %v7984 = vsel %vm7442, %v7982, %v7983
        %v7985 = vrot.slane %v7927, 6
        %v7986 = vrot.slane %v7929, 6
        %v7987 = vsel %vm7442, %v7985, %v7986
        %v7988 = vrot.slane %v7928, 6
        %v7989 = vrot.slane %v7930, 6
        %v7990 = vsel %vm7442, %v7988, %v7989
        %v7991 = vrot.slane %v7931, 6
        %v7992 = vrot.slane %v7933, 6
        %v7993 = vsel %vm7442, %v7991, %v7992
        %v7994 = vrot.slane %v7932, 6
        %v7995 = vrot.slane %v7934, 6
        %v7996 = vsel %vm7442, %v7994, %v7995
        %v7997 = vrot.slane %v7935, 6
        %v7998 = vrot.slane %v7937, 6
        %v7999 = vsel %vm7442, %v7997, %v7998
        %v8000 = vrot.slane %v7936, 6
        %v8001 = vrot.slane %v7938, 6
        %v8002 = vsel %vm7442, %v8000, %v8001
        %v8003 = vrot.slane %v7939, 6
        %v8004 = vrot.slane %v7941, 6
        %v8005 = vsel %vm7442, %v8003, %v8004
        %v8006 = vrot.slane %v7940, 6
        %v8007 = vrot.slane %v7942, 6
        %v8008 = vsel %vm7442, %v8006, %v8007
        %v8009 = vrot.slane %v7943, 6
        %v8010 = vrot.slane %v7945, 6
        %v8011 = vsel %vm7442, %v8009, %v8010
        %v8012 = vrot.slane %v7944, 6
        %v8013 = vrot.slane %v7946, 6
        %v8014 = vsel %vm7442, %v8012, %v8013
        %v8015 = vrot.slane %v7947, 6
        %v8016 = vrot.slane %v7949, 6
        %v8017 = vsel %vm7442, %v8015, %v8016
        %v8018 = vrot.slane %v7948, 6
        %v8019 = vrot.slane %v7950, 6
        %v8020 = vsel %vm7442, %v8018, %v8019
        %v8035 = vadd.f32 %v7901, %v7981
        %v8036 = vadd.f32 %v7902, %v7984
        %v8037 = vadd.f32 %v7903, %v7987
        %v8038 = vadd.f32 %v7904, %v7990
        %v8039 = vadd.f32 %v7905, %v7993
        %v8040 = vadd.f32 %v7906, %v7996
        %v8041 = vadd.f32 %v7907, %v7999
        %v8042 = vadd.f32 %v7908, %v8002
        %v8043 = vadd.f32 %v7909, %v8005
        %v8044 = vadd.f32 %v7910, %v8008
        %v8045 = vadd.f32 %v7911, %v8011
        %v8046 = vadd.f32 %v7912, %v8014
        %v8047 = vadd.f32 %v7913, %v8017
        %v8048 = vadd.f32 %v7914, %v8020
        %v8049 = vlaneseq
        %v8050 = vshrl.u32 %v8049, 7
        %v8051 = vsub.s32 6, %v8050
        %v8052 = vrot.slane %v2811, %v8051
        %v8053 = vlaneseq
        %v8054 = vshrl.u32 %v8053, 7
        %v8055 = vsub.s32 6, %v8054
        %v8056 = vrot.slane %v2812, %v8055
        %v8057 = vmul.f32 %v2769, %v8052
        %v8058 = vmul.f32 %v2770, %v8056
        %v8059 = vmul.f32 %v2771, %v8052
        %v8060 = vmul.f32 %v2772, %v8056
        %v8061 = vmul.f32 %v2773, %v8052
        %v8062 = vmul.f32 %v2774, %v8056
        %v8063 = vmul.f32 %v2775, %v8052
        %v8064 = vmul.f32 %v2776, %v8056
        %v8065 = vmul.f32 %v2777, %v8052
        %v8066 = vmul.f32 %v2778, %v8056
        %v8067 = vmul.f32 %v2779, %v8052
        %v8068 = vmul.f32 %v2780, %v8056
        %v8069 = vmul.f32 %v2781, %v8052
        %v8070 = vmul.f32 %v2782, %v8056
        %v8071 = vmul.f32 %v2783, %v8052
        %v8072 = vmul.f32 %v2784, %v8056
        %v8073 = vmul.f32 %v2785, %v8052
        %v8074 = vmul.f32 %v2786, %v8056
        %v8075 = vmul.f32 %v2787, %v8052
        %v8076 = vmul.f32 %v2788, %v8056
        %v8077 = vmul.f32 %v2789, %v8052
        %v8078 = vmul.f32 %v2790, %v8056
        %v8079 = vmul.f32 %v2791, %v8052
        %v8080 = vmul.f32 %v2792, %v8056
        %v8081 = vmul.f32 %v2793, %v8052
        %v8082 = vmul.f32 %v2794, %v8056
        %v8083 = vmul.f32 %v2795, %v8052
        %v8084 = vmul.f32 %v2796, %v8056
        %v8113 = vrot.slane %v8057, 6
        %v8114 = vrot.slane %v8059, 6
        %v8115 = vsel %vm7442, %v8113, %v8114
        %v8116 = vrot.slane %v8058, 6
        %v8117 = vrot.slane %v8060, 6
        %v8118 = vsel %vm7442, %v8116, %v8117
        %v8119 = vrot.slane %v8061, 6
        %v8120 = vrot.slane %v8063, 6
        %v8121 = vsel %vm7442, %v8119, %v8120
        %v8122 = vrot.slane %v8062, 6
        %v8123 = vrot.slane %v8064, 6
        %v8124 = vsel %vm7442, %v8122, %v8123
        %v8125 = vrot.slane %v8065, 6
        %v8126 = vrot.slane %v8067, 6
        %v8127 = vsel %vm7442, %v8125, %v8126
        %v8128 = vrot.slane %v8066, 6
        %v8129 = vrot.slane %v8068, 6
        %v8130 = vsel %vm7442, %v8128, %v8129
        %v8131 = vrot.slane %v8069, 6
        %v8132 = vrot.slane %v8071, 6
        %v8133 = vsel %vm7442, %v8131, %v8132
        %v8134 = vrot.slane %v8070, 6
        %v8135 = vrot.slane %v8072, 6
        %v8136 = vsel %vm7442, %v8134, %v8135
        %v8137 = vrot.slane %v8073, 6
        %v8138 = vrot.slane %v8075, 6
        %v8139 = vsel %vm7442, %v8137, %v8138
        %v8140 = vrot.slane %v8074, 6
        %v8141 = vrot.slane %v8076, 6
        %v8142 = vsel %vm7442, %v8140, %v8141
        %v8143 = vrot.slane %v8077, 6
        %v8144 = vrot.slane %v8079, 6
        %v8145 = vsel %vm7442, %v8143, %v8144
        %v8146 = vrot.slane %v8078, 6
        %v8147 = vrot.slane %v8080, 6
        %v8148 = vsel %vm7442, %v8146, %v8147
        %v8149 = vrot.slane %v8081, 6
        %v8150 = vrot.slane %v8083, 6
        %v8151 = vsel %vm7442, %v8149, %v8150
        %v8152 = vrot.slane %v8082, 6
        %v8153 = vrot.slane %v8084, 6
        %v8154 = vsel %vm7442, %v8152, %v8153
        %v8169 = vadd.f32 %v8035, %v8115
        %v8170 = vadd.f32 %v8036, %v8118
        %v8171 = vadd.f32 %v8037, %v8121
        %v8172 = vadd.f32 %v8038, %v8124
        %v8173 = vadd.f32 %v8039, %v8127
        %v8174 = vadd.f32 %v8040, %v8130
        %v8175 = vadd.f32 %v8041, %v8133
        %v8176 = vadd.f32 %v8042, %v8136
        %v8177 = vadd.f32 %v8043, %v8139
        %v8178 = vadd.f32 %v8044, %v8142
        %v8179 = vadd.f32 %v8045, %v8145
        %v8180 = vadd.f32 %v8046, %v8148
        %v8181 = vadd.f32 %v8047, %v8151
        %v8182 = vadd.f32 %v8048, %v8154
        %v8183 = vlaneseq
        %v8184 = vshrl.u32 %v8183, 7
        %v8185 = vsub.s32 6, %v8184
        %v8186 = vrot.slane %v2813, %v8185
        %v8187 = vlaneseq
        %v8188 = vshrl.u32 %v8187, 7
        %v8189 = vsub.s32 6, %v8188
        %v8190 = vrot.slane %v2814, %v8189
        %v8191 = vmul.f32 %v2773, %v8186
        %v8192 = vmul.f32 %v2774, %v8190
        %v8193 = vmul.f32 %v2775, %v8186
        %v8194 = vmul.f32 %v2776, %v8190
        %v8195 = vmul.f32 %v2777, %v8186
        %v8196 = vmul.f32 %v2778, %v8190
        %v8197 = vmul.f32 %v2779, %v8186
        %v8198 = vmul.f32 %v2780, %v8190
        %v8199 = vmul.f32 %v2781, %v8186
        %v8200 = vmul.f32 %v2782, %v8190
        %v8201 = vmul.f32 %v2783, %v8186
        %v8202 = vmul.f32 %v2784, %v8190
        %v8203 = vmul.f32 %v2785, %v8186
        %v8204 = vmul.f32 %v2786, %v8190
        %v8205 = vmul.f32 %v2787, %v8186
        %v8206 = vmul.f32 %v2788, %v8190
        %v8207 = vmul.f32 %v2789, %v8186
        %v8208 = vmul.f32 %v2790, %v8190
        %v8209 = vmul.f32 %v2791, %v8186
        %v8210 = vmul.f32 %v2792, %v8190
        %v8211 = vmul.f32 %v2793, %v8186
        %v8212 = vmul.f32 %v2794, %v8190
        %v8213 = vmul.f32 %v2795, %v8186
        %v8214 = vmul.f32 %v2796, %v8190
        %v8215 = vmul.f32 %v2797, %v8186
        %v8216 = vmul.f32 %v2798, %v8190
        %v8217 = vmul.f32 %v2799, %v8186
        %v8218 = vmul.f32 %v2800, %v8190
        %v8247 = vrot.slane %v8191, 6
        %v8248 = vrot.slane %v8193, 6
        %v8249 = vsel %vm7442, %v8247, %v8248
        %v8250 = vrot.slane %v8192, 6
        %v8251 = vrot.slane %v8194, 6
        %v8252 = vsel %vm7442, %v8250, %v8251
        %v8253 = vrot.slane %v8195, 6
        %v8254 = vrot.slane %v8197, 6
        %v8255 = vsel %vm7442, %v8253, %v8254
        %v8256 = vrot.slane %v8196, 6
        %v8257 = vrot.slane %v8198, 6
        %v8258 = vsel %vm7442, %v8256, %v8257
        %v8259 = vrot.slane %v8199, 6
        %v8260 = vrot.slane %v8201, 6
        %v8261 = vsel %vm7442, %v8259, %v8260
        %v8262 = vrot.slane %v8200, 6
        %v8263 = vrot.slane %v8202, 6
        %v8264 = vsel %vm7442, %v8262, %v8263
        %v8265 = vrot.slane %v8203, 6
        %v8266 = vrot.slane %v8205, 6
        %v8267 = vsel %vm7442, %v8265, %v8266
        %v8268 = vrot.slane %v8204, 6
        %v8269 = vrot.slane %v8206, 6
        %v8270 = vsel %vm7442, %v8268, %v8269
        %v8271 = vrot.slane %v8207, 6
        %v8272 = vrot.slane %v8209, 6
        %v8273 = vsel %vm7442, %v8271, %v8272
        %v8274 = vrot.slane %v8208, 6
        %v8275 = vrot.slane %v8210, 6
        %v8276 = vsel %vm7442, %v8274, %v8275
        %v8277 = vrot.slane %v8211, 6
        %v8278 = vrot.slane %v8213, 6
        %v8279 = vsel %vm7442, %v8277, %v8278
        %v8280 = vrot.slane %v8212, 6
        %v8281 = vrot.slane %v8214, 6
        %v8282 = vsel %vm7442, %v8280, %v8281
        %v8283 = vrot.slane %v8215, 6
        %v8284 = vrot.slane %v8217, 6
        %v8285 = vsel %vm7442, %v8283, %v8284
        %v8286 = vrot.slane %v8216, 6
        %v8287 = vrot.slane %v8218, 6
        %v8288 = vsel %vm7442, %v8286, %v8287
        %v8303 = vadd.f32 %v8169, %v8249
        %v8304 = vadd.f32 %v8170, %v8252
        %v8305 = vadd.f32 %v8171, %v8255
        %v8306 = vadd.f32 %v8172, %v8258
        %v8307 = vadd.f32 %v8173, %v8261
        %v8308 = vadd.f32 %v8174, %v8264
        %v8309 = vadd.f32 %v8175, %v8267
        %v8310 = vadd.f32 %v8176, %v8270
        %v8311 = vadd.f32 %v8177, %v8273
        %v8312 = vadd.f32 %v8178, %v8276
        %v8313 = vadd.f32 %v8179, %v8279
        %v8314 = vadd.f32 %v8180, %v8282
        %v8315 = vadd.f32 %v8181, %v8285
        %v8316 = vadd.f32 %v8182, %v8288
        %8317 = vst [vmem:[%s351] sm:$0x7f] %v8303
        %8318 = vst [vmem:[%s351 + $0x8] sm:$0x7f] %v8304
        %8319 = vst [vmem:[%s351 + $0x10] sm:$0x7f] %v8305
        %8320 = vst [vmem:[%s351 + $0x18] sm:$0x7f] %v8306
        %8321 = vst [vmem:[%s351 + $0x20] sm:$0x7f] %v8307
        %8322 = vst [vmem:[%s351 + $0x28] sm:$0x7f] %v8308
        %8323 = vst [vmem:[%s351 + $0x30] sm:$0x7f] %v8309
        %8324 = vst [vmem:[%s351 + $0x38] sm:$0x7f] %v8310
        %8325 = vst [vmem:[%s351 + $0x40] sm:$0x7f] %v8311
        %8326 = vst [vmem:[%s351 + $0x48] sm:$0x7f] %v8312
        %8327 = vst [vmem:[%s351 + $0x50] sm:$0x7f] %v8313
        %8328 = vst [vmem:[%s351 + $0x58] sm:$0x7f] %v8314
        %8329 = vst [vmem:[%s351 + $0x60] sm:$0x7f] %v8315
        %8330 = vst [vmem:[%s351 + $0x68] sm:$0x7f] %v8316
        %s8331 = sand.u32 %s158, 1
        %s8332 = sand.u32 %s158, 1
        %s8333 = smul.addr %s8332, 112
        %s8334 = scalar_lea.vmem [#allocation10], %s8333
        // Predicated region
        $region57: #{forward.1} parent=39 // pred_check
          %p8335 = pneg %p168
        $region58: #{forward.1} parent=39 // pred_check_branch
          %8337 = sbr.rel (%p8335) target = $region60
        $region59: #{forward.1} parent=39 // pred_region
          %s8338 = smul.u32 2, %s25
          %s8339 = smul.addr %s8338, 8
          %s8340 = scalar_lea.vmem %s5, %s8339
          // Predicated region
          $region61: #{forward.1} parent=59 // pred_check
            _
          $region62: #{forward.1} parent=59 // pred_check_branch
            %8342 = sbr.rel (0) target = $region64
          $region63: #{forward.1} parent=59 // pred_region
            // Predicated region
            $region65: #{forward.1} parent=63 // pred_check
              _
            $region66: #{forward.1} parent=63 // pred_check_branch
              %8344 = sbr.rel (0) target = $region68
            $region67: #{forward.1} parent=63 // pred_region
              loop: start=0, step=1, limit=1
              $region69: #{forward.1} parent=67 // loop_pre_header
                _
              $region70: #{forward.1} parent=67 // loop_header
                %s8346 = sphi 0, %s8350
                %p8347 = scmp.ge.s32.totalorder %s8346, 1
                %s8351 = sphi %s8334, %s8334
                %s8352 = sphi %s8340, %s8340
              $region71: #{forward.1} parent=67 // loop_header_branch
                %8349 = sbr.rel (%p8347) target = $region75
              $region72: #{forward.1} parent=67 // loop_body
                %v8353 = vld [vmem:[%s8351] sm:$0xff]
                %8354 = vst [vmem:[%s8352] sm:$0xff] %v8353
                %v8355 = vld [vmem:[%s8351 + $0x8] sm:$0xff]
                %8356 = vst [vmem:[%s8352 + $0x8] sm:$0xff] %v8355
                %v8357 = vld [vmem:[%s8351 + $0x10] sm:$0xff]
                %8358 = vst [vmem:[%s8352 + $0x60] sm:$0xff] %v8357
                %v8359 = vld [vmem:[%s8351 + $0x18] sm:$0xff]
                %8360 = vst [vmem:[%s8352 + $0x68] sm:$0xff] %v8359
                %v8361 = vld [vmem:[%s8351 + $0x20] sm:$0xff]
                %8362 = vst [vmem:[%s8352 + $0xc0] sm:$0xff] %v8361
                %v8363 = vld [vmem:[%s8351 + $0x28] sm:$0xff]
                %8364 = vst [vmem:[%s8352 + $0xc8] sm:$0xff] %v8363
                %v8365 = vld [vmem:[%s8351 + $0x30] sm:$0xff]
                %8366 = vst [vmem:[%s8352 + $0x120] sm:$0xff] %v8365
                %v8367 = vld [vmem:[%s8351 + $0x38] sm:$0xff]
                %8368 = vst [vmem:[%s8352 + $0x128] sm:$0xff] %v8367
                %v8369 = vld [vmem:[%s8351 + $0x40] sm:$0xff]
                %8370 = vst [vmem:[%s8352 + $0x180] sm:$0xff] %v8369
                %v8371 = vld [vmem:[%s8351 + $0x48] sm:$0xff]
                %8372 = vst [vmem:[%s8352 + $0x188] sm:$0xff] %v8371
                %v8373 = vld [vmem:[%s8351 + $0x50] sm:$0xff]
                %8374 = vst [vmem:[%s8352 + $0x1e0] sm:$0xff] %v8373
                %v8375 = vld [vmem:[%s8351 + $0x58] sm:$0xff]
                %8376 = vst [vmem:[%s8352 + $0x1e8] sm:$0xff] %v8375
                %v8377 = vld [vmem:[%s8351 + $0x60] sm:$0xff]
                %8378 = vst [vmem:[%s8352 + $0x240] sm:$0xff] %v8377
                %v8379 = vld [vmem:[%s8351 + $0x68] sm:$0xff]
                %8380 = vst [vmem:[%s8352 + $0x248] sm:$0xff] %v8379
              $region73: #{forward.1} parent=67 // loop_footer
                %s8350 = sadd.s32 1, %s8346
              $region74: #{forward.1} parent=67 // loop_footer_branch
                %8345 = sbr.rel target = $region70
              $region75: #{forward.1} parent=67 // loop_exit
                _
            $region68: #{forward.1} parent=63 // pred_fallthru
              _
            // Predicated region
            $region76: #{forward.1} parent=63 // pred_check
              _
            $region77: #{forward.1} parent=63 // pred_check_branch
              %8382 = sbr.rel target = $region79
            $region78: #{forward.1} parent=63 // pred_region
              _
            $region79: #{forward.1} parent=63 // pred_fallthru
              _
          $region64: #{forward.1} parent=59 // pred_fallthru
            _
          %8383 = vnop
        $region60: #{forward.1} parent=39 // pred_fallthru
          _
      $region40: #{forward.1} parent=5 // pred_fallthru
        _
      %p8384 = scmp.le.s32.totalorder 2, %s20
      // Predicated region
      $region80: #{forward.1} parent=5 // pred_check
        %p8385 = pneg %p8384
      $region81: #{forward.1} parent=5 // pred_check_branch
        %8387 = sbr.rel (%p8385) target = $region83
      $region82: #{forward.1} parent=5 // pred_region
        %s8388 = ssub.s32 %s20, 2
        // Predicated region
        $region84: #{forward.1} parent=82 // pred_check
          %p8389 = pneg %p174
        $region85: #{forward.1} parent=82 // pred_check_branch
          %8391 = sbr.rel (%p8389) target = $region87
        $region86: #{forward.1} parent=82 // pred_region
          %s8392 = sand.u32 %s159, 1
          %s8393 = sand.u32 %s159, 1
          %s8394 = smul.addr %s8393, 112
          %s8395 = scalar_lea.vmem [#allocation10], %s8394
        $region87: #{forward.1} parent=82 // pred_fallthru
          _
      $region83: #{forward.1} parent=5 // pred_fallthru
        _
    $region6: #{forward.1} parent=1 // loop_footer
      %s24 = sadd.s32 1, %s20
    $region7: #{forward.1} parent=1 // loop_footer_branch
      %19 = sbr.rel target = $region3
    $region8: #{forward.1} parent=1 // loop_exit
      _
    %8396 = vsyncpa [#allocation4], 1
    %s8397 = scalar_lea.sflag [#allocation4], 1
    %8398 = vsyncpa %s8397, 1
    %8399 = vsyncpa [#allocation6], 1
    %s8400 = scalar_lea.sflag [#allocation6], 1
    %8401 = vsyncpa %s8400, 1
    %8402 = vsyncpa [#allocation9], 1
    %s8403 = scalar_lea.sflag [#allocation9], 1
    %8404 = vsyncpa %s8403, 1

</llo_original>
